<compile_context>
chip_gen: v5e
topology: v5e:2x2
jax: 0.10.0
libtpu: 0.0.40
codegen_flags: <defaults>
</compile_context>

<pallas_src>
import jax
import jax.numpy as jnp
from jax.experimental import pallas as pl
from jax.experimental.pallas import tpu as pltpu

LANE = 128


def _round_up(x, m):
    return (x + m - 1) // m * m


def _pick_row_tile(oh, max_tile=8):
    """Largest divisor of oh that is <= max_tile (keeps tail-free tiling)."""
    for tr in range(min(oh, max_tile), 0, -1):
        if oh % tr == 0:
            return tr
    return 1


def _use_flat_rows(tr, ow, coutp):
    """Flatten TR output rows into one matmul per tap when the reshape is
    layout-preserving (OW % 8 == 0) and the f32 accumulator stays small."""
    return (ow % 8 == 0) and (tr * ow * coutp * 4 <= 128 * 1024)


def _instance_norm_lrelu(y, apply_norm, apply_relu, eps, slope):
    """InstanceNorm2d (biased var, no affine) + LeakyReLU on [OH, OW, C] f32."""
    if apply_norm:
        n_sp = y.shape[0] * y.shape[1]
        s1 = jnp.sum(jnp.sum(y, axis=1, keepdims=True), axis=0, keepdims=True)
        mean = s1 / n_sp
        d = y - mean
        s2 = jnp.sum(jnp.sum(d * d, axis=1, keepdims=True),
                     axis=0, keepdims=True)
        y = d * jax.lax.rsqrt(s2 / n_sp + eps)
    if apply_relu:
        y = jnp.where(y >= 0, y, slope * y)
    return y


def _emit_conv_rows(x_ref, w_ref, acc_ref, t, *, TR, Keff, OW, Win, Cin_e,
                    Coutp, flat):
    """Accumulate TR output rows of a stride-1 direct conv into acc_ref.

    x_ref is the full padded image (resident across the row-tile grid axis);
    the row window for this tile is sliced with pl.ds inside the kernel.
    """
    rb = t * TR                                   # first output row of tile
    if flat:
        # One (TR*OW, Cin) x (Cin, Coutp) matmul per filter tap.
        acc = jnp.zeros((TR * OW, Coutp), jnp.float32)
        for kh in range(Keff):
            for kw in range(Keff):
                a = x_ref[0, pl.ds(rb + kh, TR), kw:kw + OW, :]
                a = a.reshape(TR * OW, Cin_e)
                acc = acc + jnp.dot(a, w_ref[kh * Keff + kw],
                                    preferred_element_type=jnp.float32)
        acc_ref[pl.ds(rb, TR)] = acc.reshape(TR, OW, Coutp)
    else:
        # Per-output-row matmuls (used when OW is not sublane-aligned).
        for r in range(TR):
            acc = jnp.zeros((OW, Coutp), jnp.float32)
            for kh in range(Keff):
                xrow = x_ref[0, pl.ds(rb + r + kh, 1), :, :]
                xrow = xrow.reshape(Win, Cin_e)
                for kw in range(Keff):
                    acc = acc + jnp.dot(xrow[kw:kw + OW],
                                        w_ref[kh * Keff + kw],
                                        preferred_element_type=jnp.float32)
            acc_ref[rb + r] = acc


def _make_conv_kernel(T, TR, Keff, OW, Win, Cin_e, Coutp, flat,
                      apply_norm, apply_relu, eps=1e-5, slope=0.2):
    """Fused direct-conv (+bias, +InstanceNorm, +LeakyReLU) kernel body."""

    def kernel(x_ref, w_ref, b_ref, o_ref, acc_ref):
        # x_ref  : (1, Hin, Win, Cin_e)      bf16, resident across t
        # w_ref  : (Keff*Keff, Cin_e, Coutp) bf16, resident
        # b_ref  : (1, Coutp)                f32,  resident
        # o_ref  : (1, OH, OW, Coutp)        written at last row tile
        # acc_ref: (OH, OW, Coutp) f32       VMEM accumulator (persists over t)
        t = pl.program_id(1)
        _emit_conv_rows(x_ref, w_ref, acc_ref, t, TR=TR, Keff=Keff, OW=OW,
                        Win=Win, Cin_e=Cin_e, Coutp=Coutp, flat=flat)

        @pl.when(t == T - 1)
        def _epilogue():
            y = acc_ref[...] + b_ref[...].astype(jnp.float32)
            y = _instance_norm_lrelu(y, apply_norm, apply_relu, eps, slope)
            o_ref[0] = y.astype(o_ref.dtype)

    return kernel


def _make_final_kernel(T, TR, Keff, OW, Win, Cin_e, Coutp, flat,
                       K2, OH, OH2, OW2, Coutp2, eps=1e-5, slope=0.2):
    """Downsample-4 (conv+bias+IN+LeakyReLU) fused with the last Cout=1 conv."""

    def kernel(x_ref, w_ref, b_ref, w2_ref, b2_ref, o_ref, acc_ref, pad_ref):
        # x_ref  : (1, Hin, Win, Cin_e)       bf16 padded layer-3 activation
        # w_ref  : (Keff*Keff, Cin_e, Coutp)  bf16 layer-4 weights
        # b_ref  : (1, Coutp)                 f32  layer-4 bias
        # w2_ref : (K2*K2, Coutp, Coutp2)     bf16 last-conv weights
        # b2_ref : (1, Coutp2)                f32  last-conv bias
        # o_ref  : (1, OH2, OW2, Coutp2)      f32  final output
        # acc_ref: (OH, OW, Coutp)            f32  layer-4 accumulator
        # pad_ref: (OH+2, OW+2, Coutp)        f32  padded layer-4 activation
        t = pl.program_id(1)
        _emit_conv_rows(x_ref, w_ref, acc_ref, t, TR=TR, Keff=Keff, OW=OW,
                        Win=Win, Cin_e=Cin_e, Coutp=Coutp, flat=flat)

        @pl.when(t == T - 1)
        def _epilogue():
            # Downsample-4 epilogue: bias + InstanceNorm + LeakyReLU (f32).
            y = acc_ref[...] + b_ref[...].astype(jnp.float32)
            y = _instance_norm_lrelu(y, True, True, eps, slope)
            # Spatially padded (pad=1) copy in VMEM; the final Cout=1 conv is
            # computed straight from it, so the layer-4 activation never
            # touches HBM.
            pad_ref[...] = jnp.zeros_like(pad_ref)
            pad_ref[1:1 + OH, 1:1 + OW, :] = y
            for i in range(OH2):                       # final conv, per row
                acc2 = jnp.zeros((OW2, Coutp2), jnp.float32)
                for kh in range(K2):
                    for kw in range(K2):
                        a = pad_ref[i + kh, kw:kw + OW2, :].astype(jnp.bfloat16)
                        acc2 = acc2 + jnp.dot(a, w2_ref[kh * K2 + kw],
                                              preferred_element_type=jnp.float32)
                o_ref[0, i] = (acc2 + b2_ref[...]).astype(o_ref.dtype)

    return kernel


def conv_block(a, w, b, *, stride, apply_norm, apply_relu,
               out_dtype=jnp.bfloat16):
    """One Downsample block on channels-last input a: [N, H, W, C]."""
    N, H, W, C = a.shape
    Cout, Cin, K, _ = w.shape
    assert Cin <= C
    pad = 1
    Coutp = _round_up(Cout, LANE)

    # Spatial zero pad (fused by XLA with the s2d / cast pass below).
    xp = jnp.pad(a, ((0, 0), (pad, pad), (pad, pad), (0, 0)))
    wt = jnp.transpose(w, (2, 3, 1, 0)).astype(jnp.float32)   # [kh, kw, ci, co]

    if stride == 2:
        # Space-to-depth by 2: stride-2 K=4 conv -> stride-1 Keff=2 conv.
        assert K % 2 == 0 and (H + 2 * pad) % 2 == 0 and (W + 2 * pad) % 2 == 0
        Hp, Wp = H + 2 * pad, W + 2 * pad
        xs = xp.reshape(N, Hp // 2, 2, Wp // 2, 2, C)
        xs = xs.transpose(0, 1, 3, 2, 4, 5).reshape(N, Hp // 2, Wp // 2, 4 * C)
        Keff, Cin_e = K // 2, 4 * C
        w2 = jnp.zeros((Keff, Keff, Cin_e, Coutp), jnp.float32)
        for py in range(2):
            for px in range(2):
                sub = wt[py::2, px::2, :, :]          # [Keff, Keff, Cin, Cout]
                off = (py * 2 + px) * C
                w2 = w2.at[:, :, off:off + Cin, :Cout].set(sub)
    else:
        xs = xp
        Keff, Cin_e = K, C
        w2 = jnp.zeros((Keff, Keff, Cin_e, Coutp), jnp.float32)
        w2 = w2.at[:, :, :Cin, :Cout].set(wt)

    xs = xs.astype(jnp.bfloat16)
    Hin, Win = xs.shape[1], xs.shape[2]
    OH, OW = Hin - Keff + 1, Win - Keff + 1

    TR = _pick_row_tile(OH)                 # output-row tile
    T = OH // TR
    flat = _use_flat_rows(TR, OW, Coutp)

    w2 = w2.reshape(Keff * Keff, Cin_e, Coutp).astype(jnp.bfloat16)
    b2 = jnp.zeros((1, Coutp), jnp.float32).at[0, :Cout].set(
        b.astype(jnp.float32))

    flops = 2 * N * OH * OW * Keff * Keff * Cin_e * Coutp
    bytes_accessed = (xs.size * 2 + w2.size * 2 + b2.size * 4
                      + N * OH * OW * Coutp * jnp.dtype(out_dtype).itemsize)

    out = pl.pallas_call(
        _make_conv_kernel(T, TR, Keff, OW, Win, Cin_e, Coutp, flat,
                          apply_norm, apply_relu),
        out_shape=jax.ShapeDtypeStruct((N, OH, OW, Coutp), out_dtype),
        grid_spec=pltpu.PrefetchScalarGridSpec(
            num_scalar_prefetch=0,
            grid=(N, T),
            in_specs=[
                pl.BlockSpec((1, Hin, Win, Cin_e), lambda n, t: (n, 0, 0, 0)),
                pl.BlockSpec((Keff * Keff, Cin_e, Coutp),
                             lambda n, t: (0, 0, 0)),
                pl.BlockSpec((1, Coutp), lambda n, t: (0, 0)),
            ],
            out_specs=pl.BlockSpec((1, OH, OW, Coutp),
                                   lambda n, t: (n, 0, 0, 0)),
            scratch_shapes=[pltpu.VMEM((OH, OW, Coutp), jnp.float32)],
        ),
        compiler_params=pltpu.CompilerParams(
            dimension_semantics=("parallel", "arbitrary"),
            vmem_limit_bytes=32 * 1024 * 1024,
        ),
        cost_estimate=pl.CostEstimate(flops=int(flops), transcendentals=0,
                                      bytes_accessed=int(bytes_accessed)),
    )(xs, w2, b2)
    # Slice back to the real channel count so the next layer does not contract
    # over lane-padding zeros (pure wrapper-level slice, fused by XLA).
    return out[..., :Cout]


def final_block(a, w4, b4, w5, b5, eps=1e-5, slope=0.2):
    """Downsample(4f->8f, k4, s1) + IN + LeakyReLU fused with Conv2d(8f->1, k4, s1, p1)."""
    N, H, W, C = a.shape
    Cout4, Cin4, K, _ = w4.shape
    Cout5, Cin5, K5, _ = w5.shape
    assert Cin4 <= C and Cin5 == Cout4 and K5 == K
    pad = 1
    Coutp4 = _round_up(Cout4, LANE)
    Coutp5 = _round_up(Cout5, LANE)

    xp = jnp.pad(a, ((0, 0), (pad, pad), (pad, pad), (0, 0))).astype(jnp.bfloat16)
    Hin, Win = H + 2 * pad, W + 2 * pad
    Keff, Cin_e = K, C
    OH, OW = Hin - K + 1, Win - K + 1                       # Downsample-4 out
    OH2, OW2 = OH + 2 * pad - K + 1, OW + 2 * pad - K + 1   # final output

    w4t = jnp.transpose(w4, (2, 3, 1, 0)).astype(jnp.float32)
    w4e = jnp.zeros((K, K, Cin_e, Coutp4), jnp.float32)
    w4e = w4e.at[:, :, :Cin4, :Cout4].set(w4t)
    w4e = w4e.reshape(K * K, Cin_e, Coutp4).astype(jnp.bfloat16)
    b4e = jnp.zeros((1, Coutp4), jnp.float32).at[0, :Cout4].set(
        b4.astype(jnp.float32))

    w5t = jnp.transpose(w5, (2, 3, 1, 0)).astype(jnp.float32)
    w5e = jnp.zeros((K, K, Coutp4, Coutp5), jnp.float32)
    w5e = w5e.at[:, :, :Cin5, :Cout5].set(w5t)
    w5e = w5e.reshape(K * K, Coutp4, Coutp5).astype(jnp.bfloat16)
    b5e = jnp.zeros((1, Coutp5), jnp.float32).at[0, :Cout5].set(
        b5.astype(jnp.float32))

    TR = _pick_row_tile(OH)
    T = OH // TR
    flat = _use_flat_rows(TR, OW, Coutp4)

    flops = (2 * N * OH * OW * K * K * Cin_e * Coutp4
             + 2 * N * OH2 * OW2 * K * K * Coutp4 * Coutp5)
    bytes_accessed = (xp.size * 2 + w4e.size * 2 + w5e.size * 2
                      + (b4e.size + b5e.size) * 4
                      + N * OH2 * OW2 * Coutp5 * 4)

    out = pl.pallas_call(
        _make_final_kernel(T, TR, Keff, OW, Win, Cin_e, Coutp4, flat,
                           K, OH, OH2, OW2, Coutp5, eps, slope),
        out_shape=jax.ShapeDtypeStruct((N, OH2, OW2, Coutp5), jnp.float32),
        grid_spec=pltpu.PrefetchScalarGridSpec(
            num_scalar_prefetch=0,
            grid=(N, T),
            in_specs=[
                pl.BlockSpec((1, Hin, Win, Cin_e), lambda n, t: (n, 0, 0, 0)),
                pl.BlockSpec((K * K, Cin_e, Coutp4), lambda n, t: (0, 0, 0)),
                pl.BlockSpec((1, Coutp4), lambda n, t: (0, 0)),
                pl.BlockSpec((K * K, Coutp4, Coutp5), lambda n, t: (0, 0, 0)),
                pl.BlockSpec((1, Coutp5), lambda n, t: (0, 0)),
            ],
            out_specs=pl.BlockSpec((1, OH2, OW2, Coutp5),
                                   lambda n, t: (n, 0, 0, 0)),
            scratch_shapes=[
                pltpu.VMEM((OH, OW, Coutp4), jnp.float32),
                pltpu.VMEM((OH + 2 * pad, OW + 2 * pad, Coutp4), jnp.float32),
            ],
        ),
        compiler_params=pltpu.CompilerParams(
            dimension_semantics=("parallel", "arbitrary"),
            vmem_limit_bytes=32 * 1024 * 1024,
        ),
        cost_estimate=pl.CostEstimate(flops=int(flops), transcendentals=0,
                                      bytes_accessed=int(bytes_accessed)),
    )(xp, w4e, b4e, w5e, b5e)
    return out[..., :Cout5]


def init_discriminator_params(key, filter=64):
    """Deterministic synthetic parameters (same shapes as the PyTorch module)."""
    specs = [
        (3, filter, 4),
        (filter, filter * 2, 4),
        (filter * 2, filter * 4, 4),
        (filter * 4, filter * 8, 4),
        (filter * 8, 1, 4),
    ]
    params = []
    for i, (cin, cout, k) in enumerate(specs):
        kw_key, kb_key = jax.random.split(jax.random.fold_in(key, i))
        w = 0.05 * jax.random.normal(kw_key, (cout, cin, k, k), jnp.float32)
        b = 0.05 * jax.random.normal(kb_key, (cout,), jnp.float32)
        params.append((w, b))
    return params


@jax.jit
def discriminator_forward(x, params):
    (w1, b1), (w2, b2), (w3, b3), (w4, b4), (w5, b5) = params
    # NCHW -> channels-last bf16 once, at the model boundary.
    a = jnp.transpose(x, (0, 2, 3, 1)).astype(jnp.bfloat16)
    # Downsample(3, f, k4, s2, p1, no norm) -> LeakyReLU
    a = conv_block(a, w1, b1, stride=2, apply_norm=False, apply_relu=True)
    # Downsample(f, 2f, k4, s2, p1) -> IN -> LeakyReLU
    a = conv_block(a, w2, b2, stride=2, apply_norm=True, apply_relu=True)
    # Downsample(2f, 4f, k4, s2, p1) -> IN -> LeakyReLU
    a = conv_block(a, w3, b3, stride=2, apply_norm=True, apply_relu=True)
    # Downsample(4f, 8f, k4, s1, p1) -> IN -> LeakyReLU fused with
    # Conv2d(8f, 1, k4, s1, p1): one kernel, no HBM round trip in between.
    a = final_block(a, w4, b4, w5, b5)
    # channels-last (single real channel) -> NCHW.
    return jnp.transpose(a, (0, 3, 1, 2))


if __name__ == "__main__":
    key = jax.random.PRNGKey(0)
    k_in, k_par = jax.random.split(key)

    # Small shapes: batch=2, RGB input, 32x32 spatial, filter=8
    FILTER = 8
    x = jax.random.normal(k_in, (2, 3, 32, 32), jnp.float32)   # NCHW
    params = init_discriminator_params(k_par, filter=FILTER)

    y = discriminator_forward(x, params)
    y = jax.block_until_ready(y)

    # Expected output spatial: 32 -> 16 -> 8 -> 4 -> 3 -> 2 ; channels -> 1
    assert y.shape == (2, 1, 2, 2), y.shape
    assert jnp.all(jnp.isfinite(y))
    print("KERNEL_OK")
</pallas_src>

<mosaic_0001>
module attributes {stable_mosaic.version = 11 : i64} {
  func.func @kernel(%arg0: i32, %arg1: i32, %arg2: memref<1x17x17x12xbf16, #tpu.memory_space<vmem>>, %arg3: memref<4x12x128xbf16, #tpu.memory_space<vmem>>, %arg4: memref<1x128xf32, #tpu.memory_space<vmem>>, %arg5: memref<1x16x16x128xbf16, #tpu.memory_space<vmem>>, %arg6: memref<16x16x128xf32, #tpu.memory_space<vmem>>) attributes {dimension_semantics = [#tpu.dimension_semantics<parallel>, #tpu.dimension_semantics<arbitrary>], iteration_bounds = array<i64: 2, 2>, scalar_prefetch = 0 : i64, scratch_operands = 1 : i64, tpu.core_type = #tpu.core_type<tc>, window_params = [{transform_indices = @transform_0, window_bounds = array<i64: 1, 17, 17, 12>}, {pipeline_mode = #tpu.pipeline_mode<synchronous>, transform_indices = @transform_1, window_bounds = array<i64: 4, 12, 128>}, {pipeline_mode = #tpu.pipeline_mode<synchronous>, transform_indices = @transform_2, window_bounds = array<i64: 1, 128>}, {transform_indices = @transform_3, window_bounds = array<i64: 1, 16, 16, 128>}]} {
    %c8_i32 = arith.constant 8 : i32
    %0 = arith.muli %arg1, %c8_i32 : i32
    %cst = arith.constant 0.000000e+00 : f32
    %1 = vector.broadcast %cst : f32 to vector<128x128xf32>
    %c0_i32 = arith.constant 0 : i32
    %2 = arith.addi %0, %c0_i32 : i32
    %c0 = arith.constant 0 : index
    %3 = arith.index_cast %2 : i32 to index
    %c0_0 = arith.constant 0 : index
    %c0_1 = arith.constant 0 : index
    %4 = vector.load %arg2[%c0, %3, %c0_0, %c0_1] : memref<1x17x17x12xbf16, #tpu.memory_space<vmem>>, vector<1x8x16x12xbf16>
    %5 = vector.shape_cast %4 : vector<1x8x16x12xbf16> to vector<8x16x12xbf16>
    %6 = vector.shape_cast %5 : vector<8x16x12xbf16> to vector<128x12xbf16>
    %c0_2 = arith.constant 0 : index
    %c0_3 = arith.constant 0 : index
    %c0_4 = arith.constant 0 : index
    %7 = vector.load %arg3[%c0_2, %c0_3, %c0_4] : memref<4x12x128xbf16, #tpu.memory_space<vmem>>, vector<1x12x128xbf16>
    %8 = vector.shape_cast %7 : vector<1x12x128xbf16> to vector<12x128xbf16>
    %cst_5 = arith.constant dense<0.000000e+00> : vector<128x128xf32>
    %9 = tpu.matmul %6, %8, %cst_5 {dimension_numbers = #tpu.dot_dimension_numbers<[1], [0], [0], [1], [0, 0, 1, 1], [], []>} : vector<128x12xbf16>, vector<12x128xbf16>, vector<128x128xf32> -> vector<128x128xf32>
    %10 = arith.addf %1, %9 : vector<128x128xf32>
    %c0_i32_6 = arith.constant 0 : i32
    %11 = arith.addi %0, %c0_i32_6 : i32
    %c0_7 = arith.constant 0 : index
    %12 = arith.index_cast %11 : i32 to index
    %c1 = arith.constant 1 : index
    %c0_8 = arith.constant 0 : index
    %13 = vector.load %arg2[%c0_7, %12, %c1, %c0_8] : memref<1x17x17x12xbf16, #tpu.memory_space<vmem>>, vector<1x8x16x12xbf16>
    %14 = vector.shape_cast %13 : vector<1x8x16x12xbf16> to vector<8x16x12xbf16>
    %15 = vector.shape_cast %14 : vector<8x16x12xbf16> to vector<128x12xbf16>
    %c1_9 = arith.constant 1 : index
    %c0_10 = arith.constant 0 : index
    %c0_11 = arith.constant 0 : index
    %16 = vector.load %arg3[%c1_9, %c0_10, %c0_11] : memref<4x12x128xbf16, #tpu.memory_space<vmem>>, vector<1x12x128xbf16>
    %17 = vector.shape_cast %16 : vector<1x12x128xbf16> to vector<12x128xbf16>
    %cst_12 = arith.constant dense<0.000000e+00> : vector<128x128xf32>
    %18 = tpu.matmul %15, %17, %cst_12 {dimension_numbers = #tpu.dot_dimension_numbers<[1], [0], [0], [1], [0, 0, 1, 1], [], []>} : vector<128x12xbf16>, vector<12x128xbf16>, vector<128x128xf32> -> vector<128x128xf32>
    %19 = arith.addf %10, %18 : vector<128x128xf32>
    %c1_i32 = arith.constant 1 : i32
    %20 = arith.addi %0, %c1_i32 : i32
    %c0_13 = arith.constant 0 : index
    %21 = arith.index_cast %20 : i32 to index
    %c0_14 = arith.constant 0 : index
    %c0_15 = arith.constant 0 : index
    %22 = vector.load %arg2[%c0_13, %21, %c0_14, %c0_15] : memref<1x17x17x12xbf16, #tpu.memory_space<vmem>>, vector<1x8x16x12xbf16>
    %23 = vector.shape_cast %22 : vector<1x8x16x12xbf16> to vector<8x16x12xbf16>
    %24 = vector.shape_cast %23 : vector<8x16x12xbf16> to vector<128x12xbf16>
    %c2 = arith.constant 2 : index
    %c0_16 = arith.constant 0 : index
    %c0_17 = arith.constant 0 : index
    %25 = vector.load %arg3[%c2, %c0_16, %c0_17] : memref<4x12x128xbf16, #tpu.memory_space<vmem>>, vector<1x12x128xbf16>
    %26 = vector.shape_cast %25 : vector<1x12x128xbf16> to vector<12x128xbf16>
    %cst_18 = arith.constant dense<0.000000e+00> : vector<128x128xf32>
    %27 = tpu.matmul %24, %26, %cst_18 {dimension_numbers = #tpu.dot_dimension_numbers<[1], [0], [0], [1], [0, 0, 1, 1], [], []>} : vector<128x12xbf16>, vector<12x128xbf16>, vector<128x128xf32> -> vector<128x128xf32>
    %28 = arith.addf %19, %27 : vector<128x128xf32>
    %c1_i32_19 = arith.constant 1 : i32
    %29 = arith.addi %0, %c1_i32_19 : i32
    %c0_20 = arith.constant 0 : index
    %30 = arith.index_cast %29 : i32 to index
    %c1_21 = arith.constant 1 : index
    %c0_22 = arith.constant 0 : index
    %31 = vector.load %arg2[%c0_20, %30, %c1_21, %c0_22] : memref<1x17x17x12xbf16, #tpu.memory_space<vmem>>, vector<1x8x16x12xbf16>
    %32 = vector.shape_cast %31 : vector<1x8x16x12xbf16> to vector<8x16x12xbf16>
    %33 = vector.shape_cast %32 : vector<8x16x12xbf16> to vector<128x12xbf16>
    %c3 = arith.constant 3 : index
    %c0_23 = arith.constant 0 : index
    %c0_24 = arith.constant 0 : index
    %34 = vector.load %arg3[%c3, %c0_23, %c0_24] : memref<4x12x128xbf16, #tpu.memory_space<vmem>>, vector<1x12x128xbf16>
    %35 = vector.shape_cast %34 : vector<1x12x128xbf16> to vector<12x128xbf16>
    %cst_25 = arith.constant dense<0.000000e+00> : vector<128x128xf32>
    %36 = tpu.matmul %33, %35, %cst_25 {dimension_numbers = #tpu.dot_dimension_numbers<[1], [0], [0], [1], [0, 0, 1, 1], [], []>} : vector<128x12xbf16>, vector<12x128xbf16>, vector<128x128xf32> -> vector<128x128xf32>
    %37 = arith.addf %28, %36 : vector<128x128xf32>
    %38 = vector.shape_cast %37 : vector<128x128xf32> to vector<8x16x128xf32>
    %39 = arith.index_cast %0 : i32 to index
    %c0_26 = arith.constant 0 : index
    %c0_27 = arith.constant 0 : index
    %40 = vector.load %arg6[%39, %c0_26, %c0_27] : memref<16x16x128xf32, #tpu.memory_space<vmem>>, vector<8x16x128xf32>
    tpu.vector_store %arg6[%39, %c0_26, %c0_27], %38 {strides = array<i32>} : memref<16x16x128xf32, #tpu.memory_space<vmem>>, vector<8x16x128xf32>,
    %c1_i32_28 = arith.constant 1 : i32
    %41 = arith.cmpi eq, %arg1, %c1_i32_28 : i32
    %42 = arith.extui %41 : i1 to i32
    %c0_i32_29 = arith.constant 0 : i32
    %43 = arith.cmpi ne, %42, %c0_i32_29 : i32
    scf.if %43 {
      %c0_30 = arith.constant 0 : index
      %c0_31 = arith.constant 0 : index
      %c0_32 = arith.constant 0 : index
      %44 = vector.load %arg6[%c0_30, %c0_31, %c0_32] : memref<16x16x128xf32, #tpu.memory_space<vmem>>, vector<16x16x128xf32>
      %c0_33 = arith.constant 0 : index
      %c0_34 = arith.constant 0 : index
      %45 = vector.load %arg4[%c0_33, %c0_34] : memref<1x128xf32, #tpu.memory_space<vmem>>, vector<1x128xf32>
      %46 = vector.shape_cast %45 : vector<1x128xf32> to vector<1x1x128xf32>
      %47 = vector.broadcast %46 : vector<1x1x128xf32> to vector<16x16x128xf32>
      %48 = arith.addf %44, %47 : vector<16x16x128xf32>
      %cst_35 = arith.constant 0.000000e+00 : f32
      %49 = vector.broadcast %cst_35 : f32 to vector<16x16x128xf32>
      %50 = arith.cmpf oge, %48, %49 : vector<16x16x128xf32>
      %cst_36 = arith.constant 2.000000e-01 : f32
      %51 = vector.broadcast %cst_36 : f32 to vector<16x16x128xf32>
      %52 = arith.mulf %51, %48 : vector<16x16x128xf32>
      %53 = arith.select %50, %48, %52 : vector<16x16x128xi1>, vector<16x16x128xf32>
      %54 = arith.truncf %53 : vector<16x16x128xf32> to vector<16x16x128xbf16>
      %c0_37 = arith.constant 0 : index
      %c0_38 = arith.constant 0 : index
      %c0_39 = arith.constant 0 : index
      %c0_40 = arith.constant 0 : index
      %55 = vector.load %arg5[%c0_37, %c0_38, %c0_39, %c0_40] : memref<1x16x16x128xbf16, #tpu.memory_space<vmem>>, vector<1x16x16x128xbf16>
      %56 = vector.shape_cast %55 : vector<1x16x16x128xbf16> to vector<16x16x128xbf16>
      %57 = vector.shape_cast %54 : vector<16x16x128xbf16> to vector<1x16x16x128xbf16>
      tpu.vector_store %arg5[%c0_37, %c0_38, %c0_39, %c0_40], %57 {strides = array<i32>} : memref<1x16x16x128xbf16, #tpu.memory_space<vmem>>, vector<1x16x16x128xbf16>,
    } else {
    }
    return
  }
  func.func @transform_0(%arg0: i32, %arg1: i32) -> (i32, i32, i32, i32) {
    %c0_i32 = arith.constant 0 : i32
    %c0_i32_0 = arith.constant 0 : i32
    %c0_i32_1 = arith.constant 0 : i32
    %c0_i32_2 = arith.constant 0 : i32
    return %arg0, %c0_i32, %c0_i32_0, %c0_i32_1 : i32, i32, i32, i32
  }
  func.func @transform_1(%arg0: i32, %arg1: i32) -> (i32, i32, i32) {
    %c0_i32 = arith.constant 0 : i32
    %c0_i32_0 = arith.constant 0 : i32
    %c0_i32_1 = arith.constant 0 : i32
    %c0_i32_2 = arith.constant 0 : i32
    return %c0_i32, %c0_i32_0, %c0_i32_1 : i32, i32, i32
  }
  func.func @transform_2(%arg0: i32, %arg1: i32) -> (i32, i32) {
    %c0_i32 = arith.constant 0 : i32
    %c0_i32_0 = arith.constant 0 : i32
    %c0_i32_1 = arith.constant 0 : i32
    return %c0_i32, %c0_i32_0 : i32, i32
  }
  func.func @transform_3(%arg0: i32, %arg1: i32) -> (i32, i32, i32, i32) {
    %c0_i32 = arith.constant 0 : i32
    %c0_i32_0 = arith.constant 0 : i32
    %c0_i32_1 = arith.constant 0 : i32
    %c0_i32_2 = arith.constant 0 : i32
    return %arg0, %c0_i32, %c0_i32_0, %c0_i32_1 : i32, i32, i32, i32
  }
}

module attributes {stable_mosaic.version = 11 : i64} {
  func.func @kernel(%arg0: i32, %arg1: i32, %arg2: memref<1x9x9x32xbf16, #tpu.memory_space<vmem>>, %arg3: memref<4x32x128xbf16, #tpu.memory_space<vmem>>, %arg4: memref<1x128xf32, #tpu.memory_space<vmem>>, %arg5: memref<1x8x8x128xbf16, #tpu.memory_space<vmem>>, %arg6: memref<8x8x128xf32, #tpu.memory_space<vmem>>) attributes {dimension_semantics = [#tpu.dimension_semantics<parallel>, #tpu.dimension_semantics<arbitrary>], iteration_bounds = array<i64: 2, 1>, scalar_prefetch = 0 : i64, scratch_operands = 1 : i64, tpu.core_type = #tpu.core_type<tc>, window_params = [{transform_indices = @transform_0, window_bounds = array<i64: 1, 9, 9, 32>}, {pipeline_mode = #tpu.pipeline_mode<synchronous>, transform_indices = @transform_1, window_bounds = array<i64: 4, 32, 128>}, {pipeline_mode = #tpu.pipeline_mode<synchronous>, transform_indices = @transform_2, window_bounds = array<i64: 1, 128>}, {transform_indices = @transform_3, window_bounds = array<i64: 1, 8, 8, 128>}]} {
    %c8_i32 = arith.constant 8 : i32
    %0 = arith.muli %arg1, %c8_i32 : i32
    %cst = arith.constant 0.000000e+00 : f32
    %1 = vector.broadcast %cst : f32 to vector<64x128xf32>
    %c0_i32 = arith.constant 0 : i32
    %2 = arith.addi %0, %c0_i32 : i32
    %c0 = arith.constant 0 : index
    %3 = arith.index_cast %2 : i32 to index
    %c0_0 = arith.constant 0 : index
    %c0_1 = arith.constant 0 : index
    %4 = vector.load %arg2[%c0, %3, %c0_0, %c0_1] : memref<1x9x9x32xbf16, #tpu.memory_space<vmem>>, vector<1x8x8x32xbf16>
    %5 = vector.shape_cast %4 : vector<1x8x8x32xbf16> to vector<8x8x32xbf16>
    %6 = vector.shape_cast %5 : vector<8x8x32xbf16> to vector<64x32xbf16>
    %c0_2 = arith.constant 0 : index
    %c0_3 = arith.constant 0 : index
    %c0_4 = arith.constant 0 : index
    %7 = vector.load %arg3[%c0_2, %c0_3, %c0_4] : memref<4x32x128xbf16, #tpu.memory_space<vmem>>, vector<1x32x128xbf16>
    %8 = vector.shape_cast %7 : vector<1x32x128xbf16> to vector<32x128xbf16>
    %cst_5 = arith.constant dense<0.000000e+00> : vector<64x128xf32>
    %9 = tpu.matmul %6, %8, %cst_5 {dimension_numbers = #tpu.dot_dimension_numbers<[1], [0], [0], [1], [0, 0, 1, 1], [], []>} : vector<64x32xbf16>, vector<32x128xbf16>, vector<64x128xf32> -> vector<64x128xf32>
    %10 = arith.addf %1, %9 : vector<64x128xf32>
    %c0_i32_6 = arith.constant 0 : i32
    %11 = arith.addi %0, %c0_i32_6 : i32
    %c0_7 = arith.constant 0 : index
    %12 = arith.index_cast %11 : i32 to index
    %c1 = arith.constant 1 : index
    %c0_8 = arith.constant 0 : index
    %13 = vector.load %arg2[%c0_7, %12, %c1, %c0_8] : memref<1x9x9x32xbf16, #tpu.memory_space<vmem>>, vector<1x8x8x32xbf16>
    %14 = vector.shape_cast %13 : vector<1x8x8x32xbf16> to vector<8x8x32xbf16>
    %15 = vector.shape_cast %14 : vector<8x8x32xbf16> to vector<64x32xbf16>
    %c1_9 = arith.constant 1 : index
    %c0_10 = arith.constant 0 : index
    %c0_11 = arith.constant 0 : index
    %16 = vector.load %arg3[%c1_9, %c0_10, %c0_11] : memref<4x32x128xbf16, #tpu.memory_space<vmem>>, vector<1x32x128xbf16>
    %17 = vector.shape_cast %16 : vector<1x32x128xbf16> to vector<32x128xbf16>
    %cst_12 = arith.constant dense<0.000000e+00> : vector<64x128xf32>
    %18 = tpu.matmul %15, %17, %cst_12 {dimension_numbers = #tpu.dot_dimension_numbers<[1], [0], [0], [1], [0, 0, 1, 1], [], []>} : vector<64x32xbf16>, vector<32x128xbf16>, vector<64x128xf32> -> vector<64x128xf32>
    %19 = arith.addf %10, %18 : vector<64x128xf32>
    %c1_i32 = arith.constant 1 : i32
    %20 = arith.addi %0, %c1_i32 : i32
    %c0_13 = arith.constant 0 : index
    %21 = arith.index_cast %20 : i32 to index
    %c0_14 = arith.constant 0 : index
    %c0_15 = arith.constant 0 : index
    %22 = vector.load %arg2[%c0_13, %21, %c0_14, %c0_15] : memref<1x9x9x32xbf16, #tpu.memory_space<vmem>>, vector<1x8x8x32xbf16>
    %23 = vector.shape_cast %22 : vector<1x8x8x32xbf16> to vector<8x8x32xbf16>
    %24 = vector.shape_cast %23 : vector<8x8x32xbf16> to vector<64x32xbf16>
    %c2 = arith.constant 2 : index
    %c0_16 = arith.constant 0 : index
    %c0_17 = arith.constant 0 : index
    %25 = vector.load %arg3[%c2, %c0_16, %c0_17] : memref<4x32x128xbf16, #tpu.memory_space<vmem>>, vector<1x32x128xbf16>
    %26 = vector.shape_cast %25 : vector<1x32x128xbf16> to vector<32x128xbf16>
    %cst_18 = arith.constant dense<0.000000e+00> : vector<64x128xf32>
    %27 = tpu.matmul %24, %26, %cst_18 {dimension_numbers = #tpu.dot_dimension_numbers<[1], [0], [0], [1], [0, 0, 1, 1], [], []>} : vector<64x32xbf16>, vector<32x128xbf16>, vector<64x128xf32> -> vector<64x128xf32>
    %28 = arith.addf %19, %27 : vector<64x128xf32>
    %c1_i32_19 = arith.constant 1 : i32
    %29 = arith.addi %0, %c1_i32_19 : i32
    %c0_20 = arith.constant 0 : index
    %30 = arith.index_cast %29 : i32 to index
    %c1_21 = arith.constant 1 : index
    %c0_22 = arith.constant 0 : index
    %31 = vector.load %arg2[%c0_20, %30, %c1_21, %c0_22] : memref<1x9x9x32xbf16, #tpu.memory_space<vmem>>, vector<1x8x8x32xbf16>
    %32 = vector.shape_cast %31 : vector<1x8x8x32xbf16> to vector<8x8x32xbf16>
    %33 = vector.shape_cast %32 : vector<8x8x32xbf16> to vector<64x32xbf16>
    %c3 = arith.constant 3 : index
    %c0_23 = arith.constant 0 : index
    %c0_24 = arith.constant 0 : index
    %34 = vector.load %arg3[%c3, %c0_23, %c0_24] : memref<4x32x128xbf16, #tpu.memory_space<vmem>>, vector<1x32x128xbf16>
    %35 = vector.shape_cast %34 : vector<1x32x128xbf16> to vector<32x128xbf16>
    %cst_25 = arith.constant dense<0.000000e+00> : vector<64x128xf32>
    %36 = tpu.matmul %33, %35, %cst_25 {dimension_numbers = #tpu.dot_dimension_numbers<[1], [0], [0], [1], [0, 0, 1, 1], [], []>} : vector<64x32xbf16>, vector<32x128xbf16>, vector<64x128xf32> -> vector<64x128xf32>
    %37 = arith.addf %28, %36 : vector<64x128xf32>
    %38 = vector.shape_cast %37 : vector<64x128xf32> to vector<8x8x128xf32>
    %39 = arith.index_cast %0 : i32 to index
    %c0_26 = arith.constant 0 : index
    %c0_27 = arith.constant 0 : index
    %40 = vector.load %arg6[%39, %c0_26, %c0_27] : memref<8x8x128xf32, #tpu.memory_space<vmem>>, vector<8x8x128xf32>
    tpu.vector_store %arg6[%39, %c0_26, %c0_27], %38 {strides = array<i32>} : memref<8x8x128xf32, #tpu.memory_space<vmem>>, vector<8x8x128xf32>,
    %c0_i32_28 = arith.constant 0 : i32
    %41 = arith.cmpi eq, %arg1, %c0_i32_28 : i32
    %42 = arith.extui %41 : i1 to i32
    %c0_i32_29 = arith.constant 0 : i32
    %43 = arith.cmpi ne, %42, %c0_i32_29 : i32
    scf.if %43 {
      %c0_30 = arith.constant 0 : index
      %c0_31 = arith.constant 0 : index
      %c0_32 = arith.constant 0 : index
      %44 = vector.load %arg6[%c0_30, %c0_31, %c0_32] : memref<8x8x128xf32, #tpu.memory_space<vmem>>, vector<8x8x128xf32>
      %c0_33 = arith.constant 0 : index
      %c0_34 = arith.constant 0 : index
      %45 = vector.load %arg4[%c0_33, %c0_34] : memref<1x128xf32, #tpu.memory_space<vmem>>, vector<1x128xf32>
      %46 = vector.shape_cast %45 : vector<1x128xf32> to vector<1x1x128xf32>
      %47 = vector.broadcast %46 : vector<1x1x128xf32> to vector<8x8x128xf32>
      %48 = arith.addf %44, %47 : vector<8x8x128xf32>
      %cst_35 = arith.constant dense<0.000000e+00> : vector<8x128xf32>
      %49 = vector.multi_reduction <add>, %48, %cst_35 [1] : vector<8x8x128xf32> to vector<8x128xf32>
      %50 = vector.shape_cast %49 : vector<8x128xf32> to vector<8x1x128xf32>
      %cst_36 = arith.constant dense<0.000000e+00> : vector<1x128xf32>
      %51 = vector.multi_reduction <add>, %50, %cst_36 [0] : vector<8x1x128xf32> to vector<1x128xf32>
      %52 = vector.shape_cast %51 : vector<1x128xf32> to vector<1x1x128xf32>
      %cst_37 = arith.constant 6.400000e+01 : f32
      %53 = vector.broadcast %cst_37 : f32 to vector<1x1x128xf32>
      %54 = arith.divf %52, %53 : vector<1x1x128xf32>
      %55 = vector.broadcast %54 : vector<1x1x128xf32> to vector<8x8x128xf32>
      %56 = arith.subf %48, %55 : vector<8x8x128xf32>
      %57 = arith.mulf %56, %56 : vector<8x8x128xf32>
      %cst_38 = arith.constant dense<0.000000e+00> : vector<8x128xf32>
      %58 = vector.multi_reduction <add>, %57, %cst_38 [1] : vector<8x8x128xf32> to vector<8x128xf32>
      %59 = vector.shape_cast %58 : vector<8x128xf32> to vector<8x1x128xf32>
      %cst_39 = arith.constant dense<0.000000e+00> : vector<1x128xf32>
      %60 = vector.multi_reduction <add>, %59, %cst_39 [0] : vector<8x1x128xf32> to vector<1x128xf32>
      %61 = vector.shape_cast %60 : vector<1x128xf32> to vector<1x1x128xf32>
      %cst_40 = arith.constant 6.400000e+01 : f32
      %62 = vector.broadcast %cst_40 : f32 to vector<1x1x128xf32>
      %63 = arith.divf %61, %62 : vector<1x1x128xf32>
      %cst_41 = arith.constant 9.99999974E-6 : f32
      %64 = vector.broadcast %cst_41 : f32 to vector<1x1x128xf32>
      %65 = arith.addf %63, %64 : vector<1x1x128xf32>
      %66 = math.rsqrt %65 : vector<1x1x128xf32>
      %67 = vector.broadcast %66 : vector<1x1x128xf32> to vector<8x8x128xf32>
      %68 = arith.mulf %56, %67 : vector<8x8x128xf32>
      %cst_42 = arith.constant 0.000000e+00 : f32
      %69 = vector.broadcast %cst_42 : f32 to vector<8x8x128xf32>
      %70 = arith.cmpf oge, %68, %69 : vector<8x8x128xf32>
      %cst_43 = arith.constant 2.000000e-01 : f32
      %71 = vector.broadcast %cst_43 : f32 to vector<8x8x128xf32>
      %72 = arith.mulf %71, %68 : vector<8x8x128xf32>
      %73 = arith.select %70, %68, %72 : vector<8x8x128xi1>, vector<8x8x128xf32>
      %74 = arith.truncf %73 : vector<8x8x128xf32> to vector<8x8x128xbf16>
      %c0_44 = arith.constant 0 : index
      %c0_45 = arith.constant 0 : index
      %c0_46 = arith.constant 0 : index
      %c0_47 = arith.constant 0 : index
      %75 = vector.load %arg5[%c0_44, %c0_45, %c0_46, %c0_47] : memref<1x8x8x128xbf16, #tpu.memory_space<vmem>>, vector<1x8x8x128xbf16>
      %76 = vector.shape_cast %75 : vector<1x8x8x128xbf16> to vector<8x8x128xbf16>
      %77 = vector.shape_cast %74 : vector<8x8x128xbf16> to vector<1x8x8x128xbf16>
      tpu.vector_store %arg5[%c0_44, %c0_45, %c0_46, %c0_47], %77 {strides = array<i32>} : memref<1x8x8x128xbf16, #tpu.memory_space<vmem>>, vector<1x8x8x128xbf16>,
    } else {
    }
    return
  }
  func.func @transform_0(%arg0: i32, %arg1: i32) -> (i32, i32, i32, i32) {
    %c0_i32 = arith.constant 0 : i32
    %c0_i32_0 = arith.constant 0 : i32
    %c0_i32_1 = arith.constant 0 : i32
    %c0_i32_2 = arith.constant 0 : i32
    return %arg0, %c0_i32, %c0_i32_0, %c0_i32_1 : i32, i32, i32, i32
  }
  func.func @transform_1(%arg0: i32, %arg1: i32) -> (i32, i32, i32) {
    %c0_i32 = arith.constant 0 : i32
    %c0_i32_0 = arith.constant 0 : i32
    %c0_i32_1 = arith.constant 0 : i32
    %c0_i32_2 = arith.constant 0 : i32
    return %c0_i32, %c0_i32_0, %c0_i32_1 : i32, i32, i32
  }
  func.func @transform_2(%arg0: i32, %arg1: i32) -> (i32, i32) {
    %c0_i32 = arith.constant 0 : i32
    %c0_i32_0 = arith.constant 0 : i32
    %c0_i32_1 = arith.constant 0 : i32
    return %c0_i32, %c0_i32_0 : i32, i32
  }
  func.func @transform_3(%arg0: i32, %arg1: i32) -> (i32, i32, i32, i32) {
    %c0_i32 = arith.constant 0 : i32
    %c0_i32_0 = arith.constant 0 : i32
    %c0_i32_1 = arith.constant 0 : i32
    %c0_i32_2 = arith.constant 0 : i32
    return %arg0, %c0_i32, %c0_i32_0, %c0_i32_1 : i32, i32, i32, i32
  }
}

module attributes {stable_mosaic.version = 11 : i64} {
  func.func @kernel(%arg0: i32, %arg1: i32, %arg2: memref<1x5x5x64xbf16, #tpu.memory_space<vmem>>, %arg3: memref<4x64x128xbf16, #tpu.memory_space<vmem>>, %arg4: memref<1x128xf32, #tpu.memory_space<vmem>>, %arg5: memref<1x4x4x128xbf16, #tpu.memory_space<vmem>>, %arg6: memref<4x4x128xf32, #tpu.memory_space<vmem>>) attributes {dimension_semantics = [#tpu.dimension_semantics<parallel>, #tpu.dimension_semantics<arbitrary>], iteration_bounds = array<i64: 2, 1>, scalar_prefetch = 0 : i64, scratch_operands = 1 : i64, tpu.core_type = #tpu.core_type<tc>, window_params = [{transform_indices = @transform_0, window_bounds = array<i64: 1, 5, 5, 64>}, {pipeline_mode = #tpu.pipeline_mode<synchronous>, transform_indices = @transform_1, window_bounds = array<i64: 4, 64, 128>}, {pipeline_mode = #tpu.pipeline_mode<synchronous>, transform_indices = @transform_2, window_bounds = array<i64: 1, 128>}, {transform_indices = @transform_3, window_bounds = array<i64: 1, 4, 4, 128>}]} {
    %c4_i32 = arith.constant 4 : i32
    %0 = arith.muli %arg1, %c4_i32 : i32
    %cst = arith.constant 0.000000e+00 : f32
    %1 = vector.broadcast %cst : f32 to vector<4x128xf32>
    %c0_i32 = arith.constant 0 : i32
    %2 = arith.addi %0, %c0_i32 : i32
    %c0_i32_0 = arith.constant 0 : i32
    %3 = arith.addi %2, %c0_i32_0 : i32
    %c0 = arith.constant 0 : index
    %4 = arith.index_cast %3 : i32 to index
    %c0_1 = arith.constant 0 : index
    %c0_2 = arith.constant 0 : index
    %5 = vector.load %arg2[%c0, %4, %c0_1, %c0_2] : memref<1x5x5x64xbf16, #tpu.memory_space<vmem>>, vector<1x1x5x64xbf16>
    %6 = vector.shape_cast %5 : vector<1x1x5x64xbf16> to vector<1x5x64xbf16>
    %7 = vector.shape_cast %6 : vector<1x5x64xbf16> to vector<5x64xbf16>
    %8 = vector.extract_strided_slice %7 {offsets = [0, 0], sizes = [4, 64], strides = [1, 1]} : vector<5x64xbf16> to vector<4x64xbf16>
    %c0_3 = arith.constant 0 : index
    %c0_4 = arith.constant 0 : index
    %c0_5 = arith.constant 0 : index
    %9 = vector.load %arg3[%c0_3, %c0_4, %c0_5] : memref<4x64x128xbf16, #tpu.memory_space<vmem>>, vector<1x64x128xbf16>
    %10 = vector.shape_cast %9 : vector<1x64x128xbf16> to vector<64x128xbf16>
    %cst_6 = arith.constant dense<0.000000e+00> : vector<4x128xf32>
    %11 = tpu.matmul %8, %10, %cst_6 {dimension_numbers = #tpu.dot_dimension_numbers<[1], [0], [0], [1], [0, 0, 1, 1], [], []>} : vector<4x64xbf16>, vector<64x128xbf16>, vector<4x128xf32> -> vector<4x128xf32>
    %12 = arith.addf %1, %11 : vector<4x128xf32>
    %13 = vector.extract_strided_slice %7 {offsets = [1, 0], sizes = [4, 64], strides = [1, 1]} : vector<5x64xbf16> to vector<4x64xbf16>
    %c1 = arith.constant 1 : index
    %c0_7 = arith.constant 0 : index
    %c0_8 = arith.constant 0 : index
    %14 = vector.load %arg3[%c1, %c0_7, %c0_8] : memref<4x64x128xbf16, #tpu.memory_space<vmem>>, vector<1x64x128xbf16>
    %15 = vector.shape_cast %14 : vector<1x64x128xbf16> to vector<64x128xbf16>
    %cst_9 = arith.constant dense<0.000000e+00> : vector<4x128xf32>
    %16 = tpu.matmul %13, %15, %cst_9 {dimension_numbers = #tpu.dot_dimension_numbers<[1], [0], [0], [1], [0, 0, 1, 1], [], []>} : vector<4x64xbf16>, vector<64x128xbf16>, vector<4x128xf32> -> vector<4x128xf32>
    %17 = arith.addf %12, %16 : vector<4x128xf32>
    %c0_i32_10 = arith.constant 0 : i32
    %18 = arith.addi %0, %c0_i32_10 : i32
    %c1_i32 = arith.constant 1 : i32
    %19 = arith.addi %18, %c1_i32 : i32
    %c0_11 = arith.constant 0 : index
    %20 = arith.index_cast %19 : i32 to index
    %c0_12 = arith.constant 0 : index
    %c0_13 = arith.constant 0 : index
    %21 = vector.load %arg2[%c0_11, %20, %c0_12, %c0_13] : memref<1x5x5x64xbf16, #tpu.memory_space<vmem>>, vector<1x1x5x64xbf16>
    %22 = vector.shape_cast %21 : vector<1x1x5x64xbf16> to vector<1x5x64xbf16>
    %23 = vector.shape_cast %22 : vector<1x5x64xbf16> to vector<5x64xbf16>
    %24 = vector.extract_strided_slice %23 {offsets = [0, 0], sizes = [4, 64], strides = [1, 1]} : vector<5x64xbf16> to vector<4x64xbf16>
    %c2 = arith.constant 2 : index
    %c0_14 = arith.constant 0 : index
    %c0_15 = arith.constant 0 : index
    %25 = vector.load %arg3[%c2, %c0_14, %c0_15] : memref<4x64x128xbf16, #tpu.memory_space<vmem>>, vector<1x64x128xbf16>
    %26 = vector.shape_cast %25 : vector<1x64x128xbf16> to vector<64x128xbf16>
    %cst_16 = arith.constant dense<0.000000e+00> : vector<4x128xf32>
    %27 = tpu.matmul %24, %26, %cst_16 {dimension_numbers = #tpu.dot_dimension_numbers<[1], [0], [0], [1], [0, 0, 1, 1], [], []>} : vector<4x64xbf16>, vector<64x128xbf16>, vector<4x128xf32> -> vector<4x128xf32>
    %28 = arith.addf %17, %27 : vector<4x128xf32>
    %29 = vector.extract_strided_slice %23 {offsets = [1, 0], sizes = [4, 64], strides = [1, 1]} : vector<5x64xbf16> to vector<4x64xbf16>
    %c3 = arith.constant 3 : index
    %c0_17 = arith.constant 0 : index
    %c0_18 = arith.constant 0 : index
    %30 = vector.load %arg3[%c3, %c0_17, %c0_18] : memref<4x64x128xbf16, #tpu.memory_space<vmem>>, vector<1x64x128xbf16>
    %31 = vector.shape_cast %30 : vector<1x64x128xbf16> to vector<64x128xbf16>
    %cst_19 = arith.constant dense<0.000000e+00> : vector<4x128xf32>
    %32 = tpu.matmul %29, %31, %cst_19 {dimension_numbers = #tpu.dot_dimension_numbers<[1], [0], [0], [1], [0, 0, 1, 1], [], []>} : vector<4x64xbf16>, vector<64x128xbf16>, vector<4x128xf32> -> vector<4x128xf32>
    %33 = arith.addf %28, %32 : vector<4x128xf32>
    %c0_i32_20 = arith.constant 0 : i32
    %34 = arith.addi %0, %c0_i32_20 : i32
    %35 = arith.index_cast %34 : i32 to index
    %c0_21 = arith.constant 0 : index
    %c0_22 = arith.constant 0 : index
    %36 = vector.load %arg6[%35, %c0_21, %c0_22] : memref<4x4x128xf32, #tpu.memory_space<vmem>>, vector<1x4x128xf32>
    %37 = vector.shape_cast %36 : vector<1x4x128xf32> to vector<4x128xf32>
    %38 = vector.shape_cast %33 : vector<4x128xf32> to vector<1x4x128xf32>
    tpu.vector_store %arg6[%35, %c0_21, %c0_22], %38 {strides = array<i32>} : memref<4x4x128xf32, #tpu.memory_space<vmem>>, vector<1x4x128xf32>,
    %cst_23 = arith.constant 0.000000e+00 : f32
    %39 = vector.broadcast %cst_23 : f32 to vector<4x128xf32>
    %c1_i32_24 = arith.constant 1 : i32
    %40 = arith.addi %0, %c1_i32_24 : i32
    %c0_i32_25 = arith.constant 0 : i32
    %41 = arith.addi %40, %c0_i32_25 : i32
    %c0_26 = arith.constant 0 : index
    %42 = arith.index_cast %41 : i32 to index
    %c0_27 = arith.constant 0 : index
    %c0_28 = arith.constant 0 : index
    %43 = vector.load %arg2[%c0_26, %42, %c0_27, %c0_28] : memref<1x5x5x64xbf16, #tpu.memory_space<vmem>>, vector<1x1x5x64xbf16>
    %44 = vector.shape_cast %43 : vector<1x1x5x64xbf16> to vector<1x5x64xbf16>
    %45 = vector.shape_cast %44 : vector<1x5x64xbf16> to vector<5x64xbf16>
    %46 = vector.extract_strided_slice %45 {offsets = [0, 0], sizes = [4, 64], strides = [1, 1]} : vector<5x64xbf16> to vector<4x64xbf16>
    %c0_29 = arith.constant 0 : index
    %c0_30 = arith.constant 0 : index
    %c0_31 = arith.constant 0 : index
    %47 = vector.load %arg3[%c0_29, %c0_30, %c0_31] : memref<4x64x128xbf16, #tpu.memory_space<vmem>>, vector<1x64x128xbf16>
    %48 = vector.shape_cast %47 : vector<1x64x128xbf16> to vector<64x128xbf16>
    %cst_32 = arith.constant dense<0.000000e+00> : vector<4x128xf32>
    %49 = tpu.matmul %46, %48, %cst_32 {dimension_numbers = #tpu.dot_dimension_numbers<[1], [0], [0], [1], [0, 0, 1, 1], [], []>} : vector<4x64xbf16>, vector<64x128xbf16>, vector<4x128xf32> -> vector<4x128xf32>
    %50 = arith.addf %39, %49 : vector<4x128xf32>
    %51 = vector.extract_strided_slice %45 {offsets = [1, 0], sizes = [4, 64], strides = [1, 1]} : vector<5x64xbf16> to vector<4x64xbf16>
    %c1_33 = arith.constant 1 : index
    %c0_34 = arith.constant 0 : index
    %c0_35 = arith.constant 0 : index
    %52 = vector.load %arg3[%c1_33, %c0_34, %c0_35] : memref<4x64x128xbf16, #tpu.memory_space<vmem>>, vector<1x64x128xbf16>
    %53 = vector.shape_cast %52 : vector<1x64x128xbf16> to vector<64x128xbf16>
    %cst_36 = arith.constant dense<0.000000e+00> : vector<4x128xf32>
    %54 = tpu.matmul %51, %53, %cst_36 {dimension_numbers = #tpu.dot_dimension_numbers<[1], [0], [0], [1], [0, 0, 1, 1], [], []>} : vector<4x64xbf16>, vector<64x128xbf16>, vector<4x128xf32> -> vector<4x128xf32>
    %55 = arith.addf %50, %54 : vector<4x128xf32>
    %c1_i32_37 = arith.constant 1 : i32
    %56 = arith.addi %0, %c1_i32_37 : i32
    %c1_i32_38 = arith.constant 1 : i32
    %57 = arith.addi %56, %c1_i32_38 : i32
    %c0_39 = arith.constant 0 : index
    %58 = arith.index_cast %57 : i32 to index
    %c0_40 = arith.constant 0 : index
    %c0_41 = arith.constant 0 : index
    %59 = vector.load %arg2[%c0_39, %58, %c0_40, %c0_41] : memref<1x5x5x64xbf16, #tpu.memory_space<vmem>>, vector<1x1x5x64xbf16>
    %60 = vector.shape_cast %59 : vector<1x1x5x64xbf16> to vector<1x5x64xbf16>
    %61 = vector.shape_cast %60 : vector<1x5x64xbf16> to vector<5x64xbf16>
    %62 = vector.extract_strided_slice %61 {offsets = [0, 0], sizes = [4, 64], strides = [1, 1]} : vector<5x64xbf16> to vector<4x64xbf16>
    %c2_42 = arith.constant 2 : index
    %c0_43 = arith.constant 0 : index
    %c0_44 = arith.constant 0 : index
    %63 = vector.load %arg3[%c2_42, %c0_43, %c0_44] : memref<4x64x128xbf16, #tpu.memory_space<vmem>>, vector<1x64x128xbf16>
    %64 = vector.shape_cast %63 : vector<1x64x128xbf16> to vector<64x128xbf16>
    %cst_45 = arith.constant dense<0.000000e+00> : vector<4x128xf32>
    %65 = tpu.matmul %62, %64, %cst_45 {dimension_numbers = #tpu.dot_dimension_numbers<[1], [0], [0], [1], [0, 0, 1, 1], [], []>} : vector<4x64xbf16>, vector<64x128xbf16>, vector<4x128xf32> -> vector<4x128xf32>
    %66 = arith.addf %55, %65 : vector<4x128xf32>
    %67 = vector.extract_strided_slice %61 {offsets = [1, 0], sizes = [4, 64], strides = [1, 1]} : vector<5x64xbf16> to vector<4x64xbf16>
    %c3_46 = arith.constant 3 : index
    %c0_47 = arith.constant 0 : index
    %c0_48 = arith.constant 0 : index
    %68 = vector.load %arg3[%c3_46, %c0_47, %c0_48] : memref<4x64x128xbf16, #tpu.memory_space<vmem>>, vector<1x64x128xbf16>
    %69 = vector.shape_cast %68 : vector<1x64x128xbf16> to vector<64x128xbf16>
    %cst_49 = arith.constant dense<0.000000e+00> : vector<4x128xf32>
    %70 = tpu.matmul %67, %69, %cst_49 {dimension_numbers = #tpu.dot_dimension_numbers<[1], [0], [0], [1], [0, 0, 1, 1], [], []>} : vector<4x64xbf16>, vector<64x128xbf16>, vector<4x128xf32> -> vector<4x128xf32>
    %71 = arith.addf %66, %70 : vector<4x128xf32>
    %c1_i32_50 = arith.constant 1 : i32
    %72 = arith.addi %0, %c1_i32_50 : i32
    %73 = arith.index_cast %72 : i32 to index
    %c0_51 = arith.constant 0 : index
    %c0_52 = arith.constant 0 : index
    %74 = vector.load %arg6[%73, %c0_51, %c0_52] : memref<4x4x128xf32, #tpu.memory_space<vmem>>, vector<1x4x128xf32>
    %75 = vector.shape_cast %74 : vector<1x4x128xf32> to vector<4x128xf32>
    %76 = vector.shape_cast %71 : vector<4x128xf32> to vector<1x4x128xf32>
    tpu.vector_store %arg6[%73, %c0_51, %c0_52], %76 {strides = array<i32>} : memref<4x4x128xf32, #tpu.memory_space<vmem>>, vector<1x4x128xf32>,
    %cst_53 = arith.constant 0.000000e+00 : f32
    %77 = vector.broadcast %cst_53 : f32 to vector<4x128xf32>
    %c2_i32 = arith.constant 2 : i32
    %78 = arith.addi %0, %c2_i32 : i32
    %c0_i32_54 = arith.constant 0 : i32
    %79 = arith.addi %78, %c0_i32_54 : i32
    %c0_55 = arith.constant 0 : index
    %80 = arith.index_cast %79 : i32 to index
    %c0_56 = arith.constant 0 : index
    %c0_57 = arith.constant 0 : index
    %81 = vector.load %arg2[%c0_55, %80, %c0_56, %c0_57] : memref<1x5x5x64xbf16, #tpu.memory_space<vmem>>, vector<1x1x5x64xbf16>
    %82 = vector.shape_cast %81 : vector<1x1x5x64xbf16> to vector<1x5x64xbf16>
    %83 = vector.shape_cast %82 : vector<1x5x64xbf16> to vector<5x64xbf16>
    %84 = vector.extract_strided_slice %83 {offsets = [0, 0], sizes = [4, 64], strides = [1, 1]} : vector<5x64xbf16> to vector<4x64xbf16>
    %c0_58 = arith.constant 0 : index
    %c0_59 = arith.constant 0 : index
    %c0_60 = arith.constant 0 : index
    %85 = vector.load %arg3[%c0_58, %c0_59, %c0_60] : memref<4x64x128xbf16, #tpu.memory_space<vmem>>, vector<1x64x128xbf16>
    %86 = vector.shape_cast %85 : vector<1x64x128xbf16> to vector<64x128xbf16>
    %cst_61 = arith.constant dense<0.000000e+00> : vector<4x128xf32>
    %87 = tpu.matmul %84, %86, %cst_61 {dimension_numbers = #tpu.dot_dimension_numbers<[1], [0], [0], [1], [0, 0, 1, 1], [], []>} : vector<4x64xbf16>, vector<64x128xbf16>, vector<4x128xf32> -> vector<4x128xf32>
    %88 = arith.addf %77, %87 : vector<4x128xf32>
    %89 = vector.extract_strided_slice %83 {offsets = [1, 0], sizes = [4, 64], strides = [1, 1]} : vector<5x64xbf16> to vector<4x64xbf16>
    %c1_62 = arith.constant 1 : index
    %c0_63 = arith.constant 0 : index
    %c0_64 = arith.constant 0 : index
    %90 = vector.load %arg3[%c1_62, %c0_63, %c0_64] : memref<4x64x128xbf16, #tpu.memory_space<vmem>>, vector<1x64x128xbf16>
    %91 = vector.shape_cast %90 : vector<1x64x128xbf16> to vector<64x128xbf16>
    %cst_65 = arith.constant dense<0.000000e+00> : vector<4x128xf32>
    %92 = tpu.matmul %89, %91, %cst_65 {dimension_numbers = #tpu.dot_dimension_numbers<[1], [0], [0], [1], [0, 0, 1, 1], [], []>} : vector<4x64xbf16>, vector<64x128xbf16>, vector<4x128xf32> -> vector<4x128xf32>
    %93 = arith.addf %88, %92 : vector<4x128xf32>
    %c2_i32_66 = arith.constant 2 : i32
    %94 = arith.addi %0, %c2_i32_66 : i32
    %c1_i32_67 = arith.constant 1 : i32
    %95 = arith.addi %94, %c1_i32_67 : i32
    %c0_68 = arith.constant 0 : index
    %96 = arith.index_cast %95 : i32 to index
    %c0_69 = arith.constant 0 : index
    %c0_70 = arith.constant 0 : index
    %97 = vector.load %arg2[%c0_68, %96, %c0_69, %c0_70] : memref<1x5x5x64xbf16, #tpu.memory_space<vmem>>, vector<1x1x5x64xbf16>
    %98 = vector.shape_cast %97 : vector<1x1x5x64xbf16> to vector<1x5x64xbf16>
    %99 = vector.shape_cast %98 : vector<1x5x64xbf16> to vector<5x64xbf16>
    %100 = vector.extract_strided_slice %99 {offsets = [0, 0], sizes = [4, 64], strides = [1, 1]} : vector<5x64xbf16> to vector<4x64xbf16>
    %c2_71 = arith.constant 2 : index
    %c0_72 = arith.constant 0 : index
    %c0_73 = arith.constant 0 : index
    %101 = vector.load %arg3[%c2_71, %c0_72, %c0_73] : memref<4x64x128xbf16, #tpu.memory_space<vmem>>, vector<1x64x128xbf16>
    %102 = vector.shape_cast %101 : vector<1x64x128xbf16> to vector<64x128xbf16>
    %cst_74 = arith.constant dense<0.000000e+00> : vector<4x128xf32>
    %103 = tpu.matmul %100, %102, %cst_74 {dimension_numbers = #tpu.dot_dimension_numbers<[1], [0], [0], [1], [0, 0, 1, 1], [], []>} : vector<4x64xbf16>, vector<64x128xbf16>, vector<4x128xf32> -> vector<4x128xf32>
    %104 = arith.addf %93, %103 : vector<4x128xf32>
    %105 = vector.extract_strided_slice %99 {offsets = [1, 0], sizes = [4, 64], strides = [1, 1]} : vector<5x64xbf16> to vector<4x64xbf16>
    %c3_75 = arith.constant 3 : index
    %c0_76 = arith.constant 0 : index
    %c0_77 = arith.constant 0 : index
    %106 = vector.load %arg3[%c3_75, %c0_76, %c0_77] : memref<4x64x128xbf16, #tpu.memory_space<vmem>>, vector<1x64x128xbf16>
    %107 = vector.shape_cast %106 : vector<1x64x128xbf16> to vector<64x128xbf16>
    %cst_78 = arith.constant dense<0.000000e+00> : vector<4x128xf32>
    %108 = tpu.matmul %105, %107, %cst_78 {dimension_numbers = #tpu.dot_dimension_numbers<[1], [0], [0], [1], [0, 0, 1, 1], [], []>} : vector<4x64xbf16>, vector<64x128xbf16>, vector<4x128xf32> -> vector<4x128xf32>
    %109 = arith.addf %104, %108 : vector<4x128xf32>
    %c2_i32_79 = arith.constant 2 : i32
    %110 = arith.addi %0, %c2_i32_79 : i32
    %111 = arith.index_cast %110 : i32 to index
    %c0_80 = arith.constant 0 : index
    %c0_81 = arith.constant 0 : index
    %112 = vector.load %arg6[%111, %c0_80, %c0_81] : memref<4x4x128xf32, #tpu.memory_space<vmem>>, vector<1x4x128xf32>
    %113 = vector.shape_cast %112 : vector<1x4x128xf32> to vector<4x128xf32>
    %114 = vector.shape_cast %109 : vector<4x128xf32> to vector<1x4x128xf32>
    tpu.vector_store %arg6[%111, %c0_80, %c0_81], %114 {strides = array<i32>} : memref<4x4x128xf32, #tpu.memory_space<vmem>>, vector<1x4x128xf32>,
    %cst_82 = arith.constant 0.000000e+00 : f32
    %115 = vector.broadcast %cst_82 : f32 to vector<4x128xf32>
    %c3_i32 = arith.constant 3 : i32
    %116 = arith.addi %0, %c3_i32 : i32
    %c0_i32_83 = arith.constant 0 : i32
    %117 = arith.addi %116, %c0_i32_83 : i32
    %c0_84 = arith.constant 0 : index
    %118 = arith.index_cast %117 : i32 to index
    %c0_85 = arith.constant 0 : index
    %c0_86 = arith.constant 0 : index
    %119 = vector.load %arg2[%c0_84, %118, %c0_85, %c0_86] : memref<1x5x5x64xbf16, #tpu.memory_space<vmem>>, vector<1x1x5x64xbf16>
    %120 = vector.shape_cast %119 : vector<1x1x5x64xbf16> to vector<1x5x64xbf16>
    %121 = vector.shape_cast %120 : vector<1x5x64xbf16> to vector<5x64xbf16>
    %122 = vector.extract_strided_slice %121 {offsets = [0, 0], sizes = [4, 64], strides = [1, 1]} : vector<5x64xbf16> to vector<4x64xbf16>
    %c0_87 = arith.constant 0 : index
    %c0_88 = arith.constant 0 : index
    %c0_89 = arith.constant 0 : index
    %123 = vector.load %arg3[%c0_87, %c0_88, %c0_89] : memref<4x64x128xbf16, #tpu.memory_space<vmem>>, vector<1x64x128xbf16>
    %124 = vector.shape_cast %123 : vector<1x64x128xbf16> to vector<64x128xbf16>
    %cst_90 = arith.constant dense<0.000000e+00> : vector<4x128xf32>
    %125 = tpu.matmul %122, %124, %cst_90 {dimension_numbers = #tpu.dot_dimension_numbers<[1], [0], [0], [1], [0, 0, 1, 1], [], []>} : vector<4x64xbf16>, vector<64x128xbf16>, vector<4x128xf32> -> vector<4x128xf32>
    %126 = arith.addf %115, %125 : vector<4x128xf32>
    %127 = vector.extract_strided_slice %121 {offsets = [1, 0], sizes = [4, 64], strides = [1, 1]} : vector<5x64xbf16> to vector<4x64xbf16>
    %c1_91 = arith.constant 1 : index
    %c0_92 = arith.constant 0 : index
    %c0_93 = arith.constant 0 : index
    %128 = vector.load %arg3[%c1_91, %c0_92, %c0_93] : memref<4x64x128xbf16, #tpu.memory_space<vmem>>, vector<1x64x128xbf16>
    %129 = vector.shape_cast %128 : vector<1x64x128xbf16> to vector<64x128xbf16>
    %cst_94 = arith.constant dense<0.000000e+00> : vector<4x128xf32>
    %130 = tpu.matmul %127, %129, %cst_94 {dimension_numbers = #tpu.dot_dimension_numbers<[1], [0], [0], [1], [0, 0, 1, 1], [], []>} : vector<4x64xbf16>, vector<64x128xbf16>, vector<4x128xf32> -> vector<4x128xf32>
    %131 = arith.addf %126, %130 : vector<4x128xf32>
    %c3_i32_95 = arith.constant 3 : i32
    %132 = arith.addi %0, %c3_i32_95 : i32
    %c1_i32_96 = arith.constant 1 : i32
    %133 = arith.addi %132, %c1_i32_96 : i32
    %c0_97 = arith.constant 0 : index
    %134 = arith.index_cast %133 : i32 to index
    %c0_98 = arith.constant 0 : index
    %c0_99 = arith.constant 0 : index
    %135 = vector.load %arg2[%c0_97, %134, %c0_98, %c0_99] : memref<1x5x5x64xbf16, #tpu.memory_space<vmem>>, vector<1x1x5x64xbf16>
    %136 = vector.shape_cast %135 : vector<1x1x5x64xbf16> to vector<1x5x64xbf16>
    %137 = vector.shape_cast %136 : vector<1x5x64xbf16> to vector<5x64xbf16>
    %138 = vector.extract_strided_slice %137 {offsets = [0, 0], sizes = [4, 64], strides = [1, 1]} : vector<5x64xbf16> to vector<4x64xbf16>
    %c2_100 = arith.constant 2 : index
    %c0_101 = arith.constant 0 : index
    %c0_102 = arith.constant 0 : index
    %139 = vector.load %arg3[%c2_100, %c0_101, %c0_102] : memref<4x64x128xbf16, #tpu.memory_space<vmem>>, vector<1x64x128xbf16>
    %140 = vector.shape_cast %139 : vector<1x64x128xbf16> to vector<64x128xbf16>
    %cst_103 = arith.constant dense<0.000000e+00> : vector<4x128xf32>
    %141 = tpu.matmul %138, %140, %cst_103 {dimension_numbers = #tpu.dot_dimension_numbers<[1], [0], [0], [1], [0, 0, 1, 1], [], []>} : vector<4x64xbf16>, vector<64x128xbf16>, vector<4x128xf32> -> vector<4x128xf32>
    %142 = arith.addf %131, %141 : vector<4x128xf32>
    %143 = vector.extract_strided_slice %137 {offsets = [1, 0], sizes = [4, 64], strides = [1, 1]} : vector<5x64xbf16> to vector<4x64xbf16>
    %c3_104 = arith.constant 3 : index
    %c0_105 = arith.constant 0 : index
    %c0_106 = arith.constant 0 : index
    %144 = vector.load %arg3[%c3_104, %c0_105, %c0_106] : memref<4x64x128xbf16, #tpu.memory_space<vmem>>, vector<1x64x128xbf16>
    %145 = vector.shape_cast %144 : vector<1x64x128xbf16> to vector<64x128xbf16>
    %cst_107 = arith.constant dense<0.000000e+00> : vector<4x128xf32>
    %146 = tpu.matmul %143, %145, %cst_107 {dimension_numbers = #tpu.dot_dimension_numbers<[1], [0], [0], [1], [0, 0, 1, 1], [], []>} : vector<4x64xbf16>, vector<64x128xbf16>, vector<4x128xf32> -> vector<4x128xf32>
    %147 = arith.addf %142, %146 : vector<4x128xf32>
    %c3_i32_108 = arith.constant 3 : i32
    %148 = arith.addi %0, %c3_i32_108 : i32
    %149 = arith.index_cast %148 : i32 to index
    %c0_109 = arith.constant 0 : index
    %c0_110 = arith.constant 0 : index
    %150 = vector.load %arg6[%149, %c0_109, %c0_110] : memref<4x4x128xf32, #tpu.memory_space<vmem>>, vector<1x4x128xf32>
    %151 = vector.shape_cast %150 : vector<1x4x128xf32> to vector<4x128xf32>
    %152 = vector.shape_cast %147 : vector<4x128xf32> to vector<1x4x128xf32>
    tpu.vector_store %arg6[%149, %c0_109, %c0_110], %152 {strides = array<i32>} : memref<4x4x128xf32, #tpu.memory_space<vmem>>, vector<1x4x128xf32>,
    %c0_i32_111 = arith.constant 0 : i32
    %153 = arith.cmpi eq, %arg1, %c0_i32_111 : i32
    %154 = arith.extui %153 : i1 to i32
    %c0_i32_112 = arith.constant 0 : i32
    %155 = arith.cmpi ne, %154, %c0_i32_112 : i32
    scf.if %155 {
      %c0_113 = arith.constant 0 : index
      %c0_114 = arith.constant 0 : index
      %c0_115 = arith.constant 0 : index
      %156 = vector.load %arg6[%c0_113, %c0_114, %c0_115] : memref<4x4x128xf32, #tpu.memory_space<vmem>>, vector<4x4x128xf32>
      %c0_116 = arith.constant 0 : index
      %c0_117 = arith.constant 0 : index
      %157 = vector.load %arg4[%c0_116, %c0_117] : memref<1x128xf32, #tpu.memory_space<vmem>>, vector<1x128xf32>
      %158 = vector.shape_cast %157 : vector<1x128xf32> to vector<1x1x128xf32>
      %159 = vector.broadcast %158 : vector<1x1x128xf32> to vector<4x4x128xf32>
      %160 = arith.addf %156, %159 : vector<4x4x128xf32>
      %cst_118 = arith.constant dense<0.000000e+00> : vector<4x128xf32>
      %161 = vector.multi_reduction <add>, %160, %cst_118 [1] : vector<4x4x128xf32> to vector<4x128xf32>
      %162 = vector.shape_cast %161 : vector<4x128xf32> to vector<4x1x128xf32>
      %cst_119 = arith.constant dense<0.000000e+00> : vector<1x128xf32>
      %163 = vector.multi_reduction <add>, %162, %cst_119 [0] : vector<4x1x128xf32> to vector<1x128xf32>
      %164 = vector.shape_cast %163 : vector<1x128xf32> to vector<1x1x128xf32>
      %cst_120 = arith.constant 1.600000e+01 : f32
      %165 = vector.broadcast %cst_120 : f32 to vector<1x1x128xf32>
      %166 = arith.divf %164, %165 : vector<1x1x128xf32>
      %167 = vector.broadcast %166 : vector<1x1x128xf32> to vector<4x4x128xf32>
      %168 = arith.subf %160, %167 : vector<4x4x128xf32>
      %169 = arith.mulf %168, %168 : vector<4x4x128xf32>
      %cst_121 = arith.constant dense<0.000000e+00> : vector<4x128xf32>
      %170 = vector.multi_reduction <add>, %169, %cst_121 [1] : vector<4x4x128xf32> to vector<4x128xf32>
      %171 = vector.shape_cast %170 : vector<4x128xf32> to vector<4x1x128xf32>
      %cst_122 = arith.constant dense<0.000000e+00> : vector<1x128xf32>
      %172 = vector.multi_reduction <add>, %171, %cst_122 [0] : vector<4x1x128xf32> to vector<1x128xf32>
      %173 = vector.shape_cast %172 : vector<1x128xf32> to vector<1x1x128xf32>
      %cst_123 = arith.constant 1.600000e+01 : f32
      %174 = vector.broadcast %cst_123 : f32 to vector<1x1x128xf32>
      %175 = arith.divf %173, %174 : vector<1x1x128xf32>
      %cst_124 = arith.constant 9.99999974E-6 : f32
      %176 = vector.broadcast %cst_124 : f32 to vector<1x1x128xf32>
      %177 = arith.addf %175, %176 : vector<1x1x128xf32>
      %178 = math.rsqrt %177 : vector<1x1x128xf32>
      %179 = vector.broadcast %178 : vector<1x1x128xf32> to vector<4x4x128xf32>
      %180 = arith.mulf %168, %179 : vector<4x4x128xf32>
      %cst_125 = arith.constant 0.000000e+00 : f32
      %181 = vector.broadcast %cst_125 : f32 to vector<4x4x128xf32>
      %182 = arith.cmpf oge, %180, %181 : vector<4x4x128xf32>
      %cst_126 = arith.constant 2.000000e-01 : f32
      %183 = vector.broadcast %cst_126 : f32 to vector<4x4x128xf32>
      %184 = arith.mulf %183, %180 : vector<4x4x128xf32>
      %185 = arith.select %182, %180, %184 : vector<4x4x128xi1>, vector<4x4x128xf32>
      %186 = arith.truncf %185 : vector<4x4x128xf32> to vector<4x4x128xbf16>
      %c0_127 = arith.constant 0 : index
      %c0_128 = arith.constant 0 : index
      %c0_129 = arith.constant 0 : index
      %c0_130 = arith.constant 0 : index
      %187 = vector.load %arg5[%c0_127, %c0_128, %c0_129, %c0_130] : memref<1x4x4x128xbf16, #tpu.memory_space<vmem>>, vector<1x4x4x128xbf16>
      %188 = vector.shape_cast %187 : vector<1x4x4x128xbf16> to vector<4x4x128xbf16>
      %189 = vector.shape_cast %186 : vector<4x4x128xbf16> to vector<1x4x4x128xbf16>
      tpu.vector_store %arg5[%c0_127, %c0_128, %c0_129, %c0_130], %189 {strides = array<i32>} : memref<1x4x4x128xbf16, #tpu.memory_space<vmem>>, vector<1x4x4x128xbf16>,
    } else {
    }
    return
  }
  func.func @transform_0(%arg0: i32, %arg1: i32) -> (i32, i32, i32, i32) {
    %c0_i32 = arith.constant 0 : i32
    %c0_i32_0 = arith.constant 0 : i32
    %c0_i32_1 = arith.constant 0 : i32
    %c0_i32_2 = arith.constant 0 : i32
    return %arg0, %c0_i32, %c0_i32_0, %c0_i32_1 : i32, i32, i32, i32
  }
  func.func @transform_1(%arg0: i32, %arg1: i32) -> (i32, i32, i32) {
    %c0_i32 = arith.constant 0 : i32
    %c0_i32_0 = arith.constant 0 : i32
    %c0_i32_1 = arith.constant 0 : i32
    %c0_i32_2 = arith.constant 0 : i32
    return %c0_i32, %c0_i32_0, %c0_i32_1 : i32, i32, i32
  }
  func.func @transform_2(%arg0: i32, %arg1: i32) -> (i32, i32) {
    %c0_i32 = arith.constant 0 : i32
    %c0_i32_0 = arith.constant 0 : i32
    %c0_i32_1 = arith.constant 0 : i32
    return %c0_i32, %c0_i32_0 : i32, i32
  }
  func.func @transform_3(%arg0: i32, %arg1: i32) -> (i32, i32, i32, i32) {
    %c0_i32 = arith.constant 0 : i32
    %c0_i32_0 = arith.constant 0 : i32
    %c0_i32_1 = arith.constant 0 : i32
    %c0_i32_2 = arith.constant 0 : i32
    return %arg0, %c0_i32, %c0_i32_0, %c0_i32_1 : i32, i32, i32, i32
  }
}

module attributes {stable_mosaic.version = 11 : i64} {
  func.func @kernel(%arg0: i32, %arg1: i32, %arg2: memref<1x6x6x32xbf16, #tpu.memory_space<vmem>>, %arg3: memref<16x32x128xbf16, #tpu.memory_space<vmem>>, %arg4: memref<1x128xf32, #tpu.memory_space<vmem>>, %arg5: memref<16x128x128xbf16, #tpu.memory_space<vmem>>, %arg6: memref<1x128xf32, #tpu.memory_space<vmem>>, %arg7: memref<1x2x2x128xf32, #tpu.memory_space<vmem>>, %arg8: memref<3x3x128xf32, #tpu.memory_space<vmem>>, %arg9: memref<5x5x128xf32, #tpu.memory_space<vmem>>) attributes {dimension_semantics = [#tpu.dimension_semantics<parallel>, #tpu.dimension_semantics<arbitrary>], iteration_bounds = array<i64: 2, 1>, scalar_prefetch = 0 : i64, scratch_operands = 2 : i64, tpu.core_type = #tpu.core_type<tc>, window_params = [{transform_indices = @transform_0, window_bounds = array<i64: 1, 6, 6, 32>}, {pipeline_mode = #tpu.pipeline_mode<synchronous>, transform_indices = @transform_1, window_bounds = array<i64: 16, 32, 128>}, {pipeline_mode = #tpu.pipeline_mode<synchronous>, transform_indices = @transform_2, window_bounds = array<i64: 1, 128>}, {pipeline_mode = #tpu.pipeline_mode<synchronous>, transform_indices = @transform_3, window_bounds = array<i64: 16, 128, 128>}, {pipeline_mode = #tpu.pipeline_mode<synchronous>, transform_indices = @transform_4, window_bounds = array<i64: 1, 128>}, {transform_indices = @transform_5, window_bounds = array<i64: 1, 2, 2, 128>}]} {
    %c3_i32 = arith.constant 3 : i32
    %0 = arith.muli %arg1, %c3_i32 : i32
    %cst = arith.constant 0.000000e+00 : f32
    %1 = vector.broadcast %cst : f32 to vector<3x128xf32>
    %c0_i32 = arith.constant 0 : i32
    %2 = arith.addi %0, %c0_i32 : i32
    %c0_i32_0 = arith.constant 0 : i32
    %3 = arith.addi %2, %c0_i32_0 : i32
    %c0 = arith.constant 0 : index
    %4 = arith.index_cast %3 : i32 to index
    %c0_1 = arith.constant 0 : index
    %c0_2 = arith.constant 0 : index
    %5 = vector.load %arg2[%c0, %4, %c0_1, %c0_2] : memref<1x6x6x32xbf16, #tpu.memory_space<vmem>>, vector<1x1x6x32xbf16>
    %6 = vector.shape_cast %5 : vector<1x1x6x32xbf16> to vector<1x6x32xbf16>
    %7 = vector.shape_cast %6 : vector<1x6x32xbf16> to vector<6x32xbf16>
    %8 = vector.extract_strided_slice %7 {offsets = [0, 0], sizes = [3, 32], strides = [1, 1]} : vector<6x32xbf16> to vector<3x32xbf16>
    %c0_3 = arith.constant 0 : index
    %c0_4 = arith.constant 0 : index
    %c0_5 = arith.constant 0 : index
    %9 = vector.load %arg3[%c0_3, %c0_4, %c0_5] : memref<16x32x128xbf16, #tpu.memory_space<vmem>>, vector<1x32x128xbf16>
    %10 = vector.shape_cast %9 : vector<1x32x128xbf16> to vector<32x128xbf16>
    %cst_6 = arith.constant dense<0.000000e+00> : vector<3x128xf32>
    %11 = tpu.matmul %8, %10, %cst_6 {dimension_numbers = #tpu.dot_dimension_numbers<[1], [0], [0], [1], [0, 0, 1, 1], [], []>} : vector<3x32xbf16>, vector<32x128xbf16>, vector<3x128xf32> -> vector<3x128xf32>
    %12 = arith.addf %1, %11 : vector<3x128xf32>
    %13 = vector.extract_strided_slice %7 {offsets = [1, 0], sizes = [3, 32], strides = [1, 1]} : vector<6x32xbf16> to vector<3x32xbf16>
    %c1 = arith.constant 1 : index
    %c0_7 = arith.constant 0 : index
    %c0_8 = arith.constant 0 : index
    %14 = vector.load %arg3[%c1, %c0_7, %c0_8] : memref<16x32x128xbf16, #tpu.memory_space<vmem>>, vector<1x32x128xbf16>
    %15 = vector.shape_cast %14 : vector<1x32x128xbf16> to vector<32x128xbf16>
    %cst_9 = arith.constant dense<0.000000e+00> : vector<3x128xf32>
    %16 = tpu.matmul %13, %15, %cst_9 {dimension_numbers = #tpu.dot_dimension_numbers<[1], [0], [0], [1], [0, 0, 1, 1], [], []>} : vector<3x32xbf16>, vector<32x128xbf16>, vector<3x128xf32> -> vector<3x128xf32>
    %17 = arith.addf %12, %16 : vector<3x128xf32>
    %18 = vector.extract_strided_slice %7 {offsets = [2, 0], sizes = [3, 32], strides = [1, 1]} : vector<6x32xbf16> to vector<3x32xbf16>
    %c2 = arith.constant 2 : index
    %c0_10 = arith.constant 0 : index
    %c0_11 = arith.constant 0 : index
    %19 = vector.load %arg3[%c2, %c0_10, %c0_11] : memref<16x32x128xbf16, #tpu.memory_space<vmem>>, vector<1x32x128xbf16>
    %20 = vector.shape_cast %19 : vector<1x32x128xbf16> to vector<32x128xbf16>
    %cst_12 = arith.constant dense<0.000000e+00> : vector<3x128xf32>
    %21 = tpu.matmul %18, %20, %cst_12 {dimension_numbers = #tpu.dot_dimension_numbers<[1], [0], [0], [1], [0, 0, 1, 1], [], []>} : vector<3x32xbf16>, vector<32x128xbf16>, vector<3x128xf32> -> vector<3x128xf32>
    %22 = arith.addf %17, %21 : vector<3x128xf32>
    %23 = vector.extract_strided_slice %7 {offsets = [3, 0], sizes = [3, 32], strides = [1, 1]} : vector<6x32xbf16> to vector<3x32xbf16>
    %c3 = arith.constant 3 : index
    %c0_13 = arith.constant 0 : index
    %c0_14 = arith.constant 0 : index
    %24 = vector.load %arg3[%c3, %c0_13, %c0_14] : memref<16x32x128xbf16, #tpu.memory_space<vmem>>, vector<1x32x128xbf16>
    %25 = vector.shape_cast %24 : vector<1x32x128xbf16> to vector<32x128xbf16>
    %cst_15 = arith.constant dense<0.000000e+00> : vector<3x128xf32>
    %26 = tpu.matmul %23, %25, %cst_15 {dimension_numbers = #tpu.dot_dimension_numbers<[1], [0], [0], [1], [0, 0, 1, 1], [], []>} : vector<3x32xbf16>, vector<32x128xbf16>, vector<3x128xf32> -> vector<3x128xf32>
    %27 = arith.addf %22, %26 : vector<3x128xf32>
    %c0_i32_16 = arith.constant 0 : i32
    %28 = arith.addi %0, %c0_i32_16 : i32
    %c1_i32 = arith.constant 1 : i32
    %29 = arith.addi %28, %c1_i32 : i32
    %c0_17 = arith.constant 0 : index
    %30 = arith.index_cast %29 : i32 to index
    %c0_18 = arith.constant 0 : index
    %c0_19 = arith.constant 0 : index
    %31 = vector.load %arg2[%c0_17, %30, %c0_18, %c0_19] : memref<1x6x6x32xbf16, #tpu.memory_space<vmem>>, vector<1x1x6x32xbf16>
    %32 = vector.shape_cast %31 : vector<1x1x6x32xbf16> to vector<1x6x32xbf16>
    %33 = vector.shape_cast %32 : vector<1x6x32xbf16> to vector<6x32xbf16>
    %34 = vector.extract_strided_slice %33 {offsets = [0, 0], sizes = [3, 32], strides = [1, 1]} : vector<6x32xbf16> to vector<3x32xbf16>
    %c4 = arith.constant 4 : index
    %c0_20 = arith.constant 0 : index
    %c0_21 = arith.constant 0 : index
    %35 = vector.load %arg3[%c4, %c0_20, %c0_21] : memref<16x32x128xbf16, #tpu.memory_space<vmem>>, vector<1x32x128xbf16>
    %36 = vector.shape_cast %35 : vector<1x32x128xbf16> to vector<32x128xbf16>
    %cst_22 = arith.constant dense<0.000000e+00> : vector<3x128xf32>
    %37 = tpu.matmul %34, %36, %cst_22 {dimension_numbers = #tpu.dot_dimension_numbers<[1], [0], [0], [1], [0, 0, 1, 1], [], []>} : vector<3x32xbf16>, vector<32x128xbf16>, vector<3x128xf32> -> vector<3x128xf32>
    %38 = arith.addf %27, %37 : vector<3x128xf32>
    %39 = vector.extract_strided_slice %33 {offsets = [1, 0], sizes = [3, 32], strides = [1, 1]} : vector<6x32xbf16> to vector<3x32xbf16>
    %c5 = arith.constant 5 : index
    %c0_23 = arith.constant 0 : index
    %c0_24 = arith.constant 0 : index
    %40 = vector.load %arg3[%c5, %c0_23, %c0_24] : memref<16x32x128xbf16, #tpu.memory_space<vmem>>, vector<1x32x128xbf16>
    %41 = vector.shape_cast %40 : vector<1x32x128xbf16> to vector<32x128xbf16>
    %cst_25 = arith.constant dense<0.000000e+00> : vector<3x128xf32>
    %42 = tpu.matmul %39, %41, %cst_25 {dimension_numbers = #tpu.dot_dimension_numbers<[1], [0], [0], [1], [0, 0, 1, 1], [], []>} : vector<3x32xbf16>, vector<32x128xbf16>, vector<3x128xf32> -> vector<3x128xf32>
    %43 = arith.addf %38, %42 : vector<3x128xf32>
    %44 = vector.extract_strided_slice %33 {offsets = [2, 0], sizes = [3, 32], strides = [1, 1]} : vector<6x32xbf16> to vector<3x32xbf16>
    %c6 = arith.constant 6 : index
    %c0_26 = arith.constant 0 : index
    %c0_27 = arith.constant 0 : index
    %45 = vector.load %arg3[%c6, %c0_26, %c0_27] : memref<16x32x128xbf16, #tpu.memory_space<vmem>>, vector<1x32x128xbf16>
    %46 = vector.shape_cast %45 : vector<1x32x128xbf16> to vector<32x128xbf16>
    %cst_28 = arith.constant dense<0.000000e+00> : vector<3x128xf32>
    %47 = tpu.matmul %44, %46, %cst_28 {dimension_numbers = #tpu.dot_dimension_numbers<[1], [0], [0], [1], [0, 0, 1, 1], [], []>} : vector<3x32xbf16>, vector<32x128xbf16>, vector<3x128xf32> -> vector<3x128xf32>
    %48 = arith.addf %43, %47 : vector<3x128xf32>
    %49 = vector.extract_strided_slice %33 {offsets = [3, 0], sizes = [3, 32], strides = [1, 1]} : vector<6x32xbf16> to vector<3x32xbf16>
    %c7 = arith.constant 7 : index
    %c0_29 = arith.constant 0 : index
    %c0_30 = arith.constant 0 : index
    %50 = vector.load %arg3[%c7, %c0_29, %c0_30] : memref<16x32x128xbf16, #tpu.memory_space<vmem>>, vector<1x32x128xbf16>
    %51 = vector.shape_cast %50 : vector<1x32x128xbf16> to vector<32x128xbf16>
    %cst_31 = arith.constant dense<0.000000e+00> : vector<3x128xf32>
    %52 = tpu.matmul %49, %51, %cst_31 {dimension_numbers = #tpu.dot_dimension_numbers<[1], [0], [0], [1], [0, 0, 1, 1], [], []>} : vector<3x32xbf16>, vector<32x128xbf16>, vector<3x128xf32> -> vector<3x128xf32>
    %53 = arith.addf %48, %52 : vector<3x128xf32>
    %c0_i32_32 = arith.constant 0 : i32
    %54 = arith.addi %0, %c0_i32_32 : i32
    %c2_i32 = arith.constant 2 : i32
    %55 = arith.addi %54, %c2_i32 : i32
    %c0_33 = arith.constant 0 : index
    %56 = arith.index_cast %55 : i32 to index
    %c0_34 = arith.constant 0 : index
    %c0_35 = arith.constant 0 : index
    %57 = vector.load %arg2[%c0_33, %56, %c0_34, %c0_35] : memref<1x6x6x32xbf16, #tpu.memory_space<vmem>>, vector<1x1x6x32xbf16>
    %58 = vector.shape_cast %57 : vector<1x1x6x32xbf16> to vector<1x6x32xbf16>
    %59 = vector.shape_cast %58 : vector<1x6x32xbf16> to vector<6x32xbf16>
    %60 = vector.extract_strided_slice %59 {offsets = [0, 0], sizes = [3, 32], strides = [1, 1]} : vector<6x32xbf16> to vector<3x32xbf16>
    %c8 = arith.constant 8 : index
    %c0_36 = arith.constant 0 : index
    %c0_37 = arith.constant 0 : index
    %61 = vector.load %arg3[%c8, %c0_36, %c0_37] : memref<16x32x128xbf16, #tpu.memory_space<vmem>>, vector<1x32x128xbf16>
    %62 = vector.shape_cast %61 : vector<1x32x128xbf16> to vector<32x128xbf16>
    %cst_38 = arith.constant dense<0.000000e+00> : vector<3x128xf32>
    %63 = tpu.matmul %60, %62, %cst_38 {dimension_numbers = #tpu.dot_dimension_numbers<[1], [0], [0], [1], [0, 0, 1, 1], [], []>} : vector<3x32xbf16>, vector<32x128xbf16>, vector<3x128xf32> -> vector<3x128xf32>
    %64 = arith.addf %53, %63 : vector<3x128xf32>
    %65 = vector.extract_strided_slice %59 {offsets = [1, 0], sizes = [3, 32], strides = [1, 1]} : vector<6x32xbf16> to vector<3x32xbf16>
    %c9 = arith.constant 9 : index
    %c0_39 = arith.constant 0 : index
    %c0_40 = arith.constant 0 : index
    %66 = vector.load %arg3[%c9, %c0_39, %c0_40] : memref<16x32x128xbf16, #tpu.memory_space<vmem>>, vector<1x32x128xbf16>
    %67 = vector.shape_cast %66 : vector<1x32x128xbf16> to vector<32x128xbf16>
    %cst_41 = arith.constant dense<0.000000e+00> : vector<3x128xf32>
    %68 = tpu.matmul %65, %67, %cst_41 {dimension_numbers = #tpu.dot_dimension_numbers<[1], [0], [0], [1], [0, 0, 1, 1], [], []>} : vector<3x32xbf16>, vector<32x128xbf16>, vector<3x128xf32> -> vector<3x128xf32>
    %69 = arith.addf %64, %68 : vector<3x128xf32>
    %70 = vector.extract_strided_slice %59 {offsets = [2, 0], sizes = [3, 32], strides = [1, 1]} : vector<6x32xbf16> to vector<3x32xbf16>
    %c10 = arith.constant 10 : index
    %c0_42 = arith.constant 0 : index
    %c0_43 = arith.constant 0 : index
    %71 = vector.load %arg3[%c10, %c0_42, %c0_43] : memref<16x32x128xbf16, #tpu.memory_space<vmem>>, vector<1x32x128xbf16>
    %72 = vector.shape_cast %71 : vector<1x32x128xbf16> to vector<32x128xbf16>
    %cst_44 = arith.constant dense<0.000000e+00> : vector<3x128xf32>
    %73 = tpu.matmul %70, %72, %cst_44 {dimension_numbers = #tpu.dot_dimension_numbers<[1], [0], [0], [1], [0, 0, 1, 1], [], []>} : vector<3x32xbf16>, vector<32x128xbf16>, vector<3x128xf32> -> vector<3x128xf32>
    %74 = arith.addf %69, %73 : vector<3x128xf32>
    %75 = vector.extract_strided_slice %59 {offsets = [3, 0], sizes = [3, 32], strides = [1, 1]} : vector<6x32xbf16> to vector<3x32xbf16>
    %c11 = arith.constant 11 : index
    %c0_45 = arith.constant 0 : index
    %c0_46 = arith.constant 0 : index
    %76 = vector.load %arg3[%c11, %c0_45, %c0_46] : memref<16x32x128xbf16, #tpu.memory_space<vmem>>, vector<1x32x128xbf16>
    %77 = vector.shape_cast %76 : vector<1x32x128xbf16> to vector<32x128xbf16>
    %cst_47 = arith.constant dense<0.000000e+00> : vector<3x128xf32>
    %78 = tpu.matmul %75, %77, %cst_47 {dimension_numbers = #tpu.dot_dimension_numbers<[1], [0], [0], [1], [0, 0, 1, 1], [], []>} : vector<3x32xbf16>, vector<32x128xbf16>, vector<3x128xf32> -> vector<3x128xf32>
    %79 = arith.addf %74, %78 : vector<3x128xf32>
    %c0_i32_48 = arith.constant 0 : i32
    %80 = arith.addi %0, %c0_i32_48 : i32
    %c3_i32_49 = arith.constant 3 : i32
    %81 = arith.addi %80, %c3_i32_49 : i32
    %c0_50 = arith.constant 0 : index
    %82 = arith.index_cast %81 : i32 to index
    %c0_51 = arith.constant 0 : index
    %c0_52 = arith.constant 0 : index
    %83 = vector.load %arg2[%c0_50, %82, %c0_51, %c0_52] : memref<1x6x6x32xbf16, #tpu.memory_space<vmem>>, vector<1x1x6x32xbf16>
    %84 = vector.shape_cast %83 : vector<1x1x6x32xbf16> to vector<1x6x32xbf16>
    %85 = vector.shape_cast %84 : vector<1x6x32xbf16> to vector<6x32xbf16>
    %86 = vector.extract_strided_slice %85 {offsets = [0, 0], sizes = [3, 32], strides = [1, 1]} : vector<6x32xbf16> to vector<3x32xbf16>
    %c12 = arith.constant 12 : index
    %c0_53 = arith.constant 0 : index
    %c0_54 = arith.constant 0 : index
    %87 = vector.load %arg3[%c12, %c0_53, %c0_54] : memref<16x32x128xbf16, #tpu.memory_space<vmem>>, vector<1x32x128xbf16>
    %88 = vector.shape_cast %87 : vector<1x32x128xbf16> to vector<32x128xbf16>
    %cst_55 = arith.constant dense<0.000000e+00> : vector<3x128xf32>
    %89 = tpu.matmul %86, %88, %cst_55 {dimension_numbers = #tpu.dot_dimension_numbers<[1], [0], [0], [1], [0, 0, 1, 1], [], []>} : vector<3x32xbf16>, vector<32x128xbf16>, vector<3x128xf32> -> vector<3x128xf32>
    %90 = arith.addf %79, %89 : vector<3x128xf32>
    %91 = vector.extract_strided_slice %85 {offsets = [1, 0], sizes = [3, 32], strides = [1, 1]} : vector<6x32xbf16> to vector<3x32xbf16>
    %c13 = arith.constant 13 : index
    %c0_56 = arith.constant 0 : index
    %c0_57 = arith.constant 0 : index
    %92 = vector.load %arg3[%c13, %c0_56, %c0_57] : memref<16x32x128xbf16, #tpu.memory_space<vmem>>, vector<1x32x128xbf16>
    %93 = vector.shape_cast %92 : vector<1x32x128xbf16> to vector<32x128xbf16>
    %cst_58 = arith.constant dense<0.000000e+00> : vector<3x128xf32>
    %94 = tpu.matmul %91, %93, %cst_58 {dimension_numbers = #tpu.dot_dimension_numbers<[1], [0], [0], [1], [0, 0, 1, 1], [], []>} : vector<3x32xbf16>, vector<32x128xbf16>, vector<3x128xf32> -> vector<3x128xf32>
    %95 = arith.addf %90, %94 : vector<3x128xf32>
    %96 = vector.extract_strided_slice %85 {offsets = [2, 0], sizes = [3, 32], strides = [1, 1]} : vector<6x32xbf16> to vector<3x32xbf16>
    %c14 = arith.constant 14 : index
    %c0_59 = arith.constant 0 : index
    %c0_60 = arith.constant 0 : index
    %97 = vector.load %arg3[%c14, %c0_59, %c0_60] : memref<16x32x128xbf16, #tpu.memory_space<vmem>>, vector<1x32x128xbf16>
    %98 = vector.shape_cast %97 : vector<1x32x128xbf16> to vector<32x128xbf16>
    %cst_61 = arith.constant dense<0.000000e+00> : vector<3x128xf32>
    %99 = tpu.matmul %96, %98, %cst_61 {dimension_numbers = #tpu.dot_dimension_numbers<[1], [0], [0], [1], [0, 0, 1, 1], [], []>} : vector<3x32xbf16>, vector<32x128xbf16>, vector<3x128xf32> -> vector<3x128xf32>
    %100 = arith.addf %95, %99 : vector<3x128xf32>
    %101 = vector.extract_strided_slice %85 {offsets = [3, 0], sizes = [3, 32], strides = [1, 1]} : vector<6x32xbf16> to vector<3x32xbf16>
    %c15 = arith.constant 15 : index
    %c0_62 = arith.constant 0 : index
    %c0_63 = arith.constant 0 : index
    %102 = vector.load %arg3[%c15, %c0_62, %c0_63] : memref<16x32x128xbf16, #tpu.memory_space<vmem>>, vector<1x32x128xbf16>
    %103 = vector.shape_cast %102 : vector<1x32x128xbf16> to vector<32x128xbf16>
    %cst_64 = arith.constant dense<0.000000e+00> : vector<3x128xf32>
    %104 = tpu.matmul %101, %103, %cst_64 {dimension_numbers = #tpu.dot_dimension_numbers<[1], [0], [0], [1], [0, 0, 1, 1], [], []>} : vector<3x32xbf16>, vector<32x128xbf16>, vector<3x128xf32> -> vector<3x128xf32>
    %105 = arith.addf %100, %104 : vector<3x128xf32>
    %c0_i32_65 = arith.constant 0 : i32
    %106 = arith.addi %0, %c0_i32_65 : i32
    %107 = arith.index_cast %106 : i32 to index
    %c0_66 = arith.constant 0 : index
    %c0_67 = arith.constant 0 : index
    %108 = vector.load %arg8[%107, %c0_66, %c0_67] : memref<3x3x128xf32, #tpu.memory_space<vmem>>, vector<1x3x128xf32>
    %109 = vector.shape_cast %108 : vector<1x3x128xf32> to vector<3x128xf32>
    %110 = vector.shape_cast %105 : vector<3x128xf32> to vector<1x3x128xf32>
    tpu.vector_store %arg8[%107, %c0_66, %c0_67], %110 {strides = array<i32>} : memref<3x3x128xf32, #tpu.memory_space<vmem>>, vector<1x3x128xf32>,
    %cst_68 = arith.constant 0.000000e+00 : f32
    %111 = vector.broadcast %cst_68 : f32 to vector<3x128xf32>
    %c1_i32_69 = arith.constant 1 : i32
    %112 = arith.addi %0, %c1_i32_69 : i32
    %c0_i32_70 = arith.constant 0 : i32
    %113 = arith.addi %112, %c0_i32_70 : i32
    %c0_71 = arith.constant 0 : index
    %114 = arith.index_cast %113 : i32 to index
    %c0_72 = arith.constant 0 : index
    %c0_73 = arith.constant 0 : index
    %115 = vector.load %arg2[%c0_71, %114, %c0_72, %c0_73] : memref<1x6x6x32xbf16, #tpu.memory_space<vmem>>, vector<1x1x6x32xbf16>
    %116 = vector.shape_cast %115 : vector<1x1x6x32xbf16> to vector<1x6x32xbf16>
    %117 = vector.shape_cast %116 : vector<1x6x32xbf16> to vector<6x32xbf16>
    %118 = vector.extract_strided_slice %117 {offsets = [0, 0], sizes = [3, 32], strides = [1, 1]} : vector<6x32xbf16> to vector<3x32xbf16>
    %c0_74 = arith.constant 0 : index
    %c0_75 = arith.constant 0 : index
    %c0_76 = arith.constant 0 : index
    %119 = vector.load %arg3[%c0_74, %c0_75, %c0_76] : memref<16x32x128xbf16, #tpu.memory_space<vmem>>, vector<1x32x128xbf16>
    %120 = vector.shape_cast %119 : vector<1x32x128xbf16> to vector<32x128xbf16>
    %cst_77 = arith.constant dense<0.000000e+00> : vector<3x128xf32>
    %121 = tpu.matmul %118, %120, %cst_77 {dimension_numbers = #tpu.dot_dimension_numbers<[1], [0], [0], [1], [0, 0, 1, 1], [], []>} : vector<3x32xbf16>, vector<32x128xbf16>, vector<3x128xf32> -> vector<3x128xf32>
    %122 = arith.addf %111, %121 : vector<3x128xf32>
    %123 = vector.extract_strided_slice %117 {offsets = [1, 0], sizes = [3, 32], strides = [1, 1]} : vector<6x32xbf16> to vector<3x32xbf16>
    %c1_78 = arith.constant 1 : index
    %c0_79 = arith.constant 0 : index
    %c0_80 = arith.constant 0 : index
    %124 = vector.load %arg3[%c1_78, %c0_79, %c0_80] : memref<16x32x128xbf16, #tpu.memory_space<vmem>>, vector<1x32x128xbf16>
    %125 = vector.shape_cast %124 : vector<1x32x128xbf16> to vector<32x128xbf16>
    %cst_81 = arith.constant dense<0.000000e+00> : vector<3x128xf32>
    %126 = tpu.matmul %123, %125, %cst_81 {dimension_numbers = #tpu.dot_dimension_numbers<[1], [0], [0], [1], [0, 0, 1, 1], [], []>} : vector<3x32xbf16>, vector<32x128xbf16>, vector<3x128xf32> -> vector<3x128xf32>
    %127 = arith.addf %122, %126 : vector<3x128xf32>
    %128 = vector.extract_strided_slice %117 {offsets = [2, 0], sizes = [3, 32], strides = [1, 1]} : vector<6x32xbf16> to vector<3x32xbf16>
    %c2_82 = arith.constant 2 : index
    %c0_83 = arith.constant 0 : index
    %c0_84 = arith.constant 0 : index
    %129 = vector.load %arg3[%c2_82, %c0_83, %c0_84] : memref<16x32x128xbf16, #tpu.memory_space<vmem>>, vector<1x32x128xbf16>
    %130 = vector.shape_cast %129 : vector<1x32x128xbf16> to vector<32x128xbf16>
    %cst_85 = arith.constant dense<0.000000e+00> : vector<3x128xf32>
    %131 = tpu.matmul %128, %130, %cst_85 {dimension_numbers = #tpu.dot_dimension_numbers<[1], [0], [0], [1], [0, 0, 1, 1], [], []>} : vector<3x32xbf16>, vector<32x128xbf16>, vector<3x128xf32> -> vector<3x128xf32>
    %132 = arith.addf %127, %131 : vector<3x128xf32>
    %133 = vector.extract_strided_slice %117 {offsets = [3, 0], sizes = [3, 32], strides = [1, 1]} : vector<6x32xbf16> to vector<3x32xbf16>
    %c3_86 = arith.constant 3 : index
    %c0_87 = arith.constant 0 : index
    %c0_88 = arith.constant 0 : index
    %134 = vector.load %arg3[%c3_86, %c0_87, %c0_88] : memref<16x32x128xbf16, #tpu.memory_space<vmem>>, vector<1x32x128xbf16>
    %135 = vector.shape_cast %134 : vector<1x32x128xbf16> to vector<32x128xbf16>
    %cst_89 = arith.constant dense<0.000000e+00> : vector<3x128xf32>
    %136 = tpu.matmul %133, %135, %cst_89 {dimension_numbers = #tpu.dot_dimension_numbers<[1], [0], [0], [1], [0, 0, 1, 1], [], []>} : vector<3x32xbf16>, vector<32x128xbf16>, vector<3x128xf32> -> vector<3x128xf32>
    %137 = arith.addf %132, %136 : vector<3x128xf32>
    %c1_i32_90 = arith.constant 1 : i32
    %138 = arith.addi %0, %c1_i32_90 : i32
    %c1_i32_91 = arith.constant 1 : i32
    %139 = arith.addi %138, %c1_i32_91 : i32
    %c0_92 = arith.constant 0 : index
    %140 = arith.index_cast %139 : i32 to index
    %c0_93 = arith.constant 0 : index
    %c0_94 = arith.constant 0 : index
    %141 = vector.load %arg2[%c0_92, %140, %c0_93, %c0_94] : memref<1x6x6x32xbf16, #tpu.memory_space<vmem>>, vector<1x1x6x32xbf16>
    %142 = vector.shape_cast %141 : vector<1x1x6x32xbf16> to vector<1x6x32xbf16>
    %143 = vector.shape_cast %142 : vector<1x6x32xbf16> to vector<6x32xbf16>
    %144 = vector.extract_strided_slice %143 {offsets = [0, 0], sizes = [3, 32], strides = [1, 1]} : vector<6x32xbf16> to vector<3x32xbf16>
    %c4_95 = arith.constant 4 : index
    %c0_96 = arith.constant 0 : index
    %c0_97 = arith.constant 0 : index
    %145 = vector.load %arg3[%c4_95, %c0_96, %c0_97] : memref<16x32x128xbf16, #tpu.memory_space<vmem>>, vector<1x32x128xbf16>
    %146 = vector.shape_cast %145 : vector<1x32x128xbf16> to vector<32x128xbf16>
    %cst_98 = arith.constant dense<0.000000e+00> : vector<3x128xf32>
    %147 = tpu.matmul %144, %146, %cst_98 {dimension_numbers = #tpu.dot_dimension_numbers<[1], [0], [0], [1], [0, 0, 1, 1], [], []>} : vector<3x32xbf16>, vector<32x128xbf16>, vector<3x128xf32> -> vector<3x128xf32>
    %148 = arith.addf %137, %147 : vector<3x128xf32>
    %149 = vector.extract_strided_slice %143 {offsets = [1, 0], sizes = [3, 32], strides = [1, 1]} : vector<6x32xbf16> to vector<3x32xbf16>
    %c5_99 = arith.constant 5 : index
    %c0_100 = arith.constant 0 : index
    %c0_101 = arith.constant 0 : index
    %150 = vector.load %arg3[%c5_99, %c0_100, %c0_101] : memref<16x32x128xbf16, #tpu.memory_space<vmem>>, vector<1x32x128xbf16>
    %151 = vector.shape_cast %150 : vector<1x32x128xbf16> to vector<32x128xbf16>
    %cst_102 = arith.constant dense<0.000000e+00> : vector<3x128xf32>
    %152 = tpu.matmul %149, %151, %cst_102 {dimension_numbers = #tpu.dot_dimension_numbers<[1], [0], [0], [1], [0, 0, 1, 1], [], []>} : vector<3x32xbf16>, vector<32x128xbf16>, vector<3x128xf32> -> vector<3x128xf32>
    %153 = arith.addf %148, %152 : vector<3x128xf32>
    %154 = vector.extract_strided_slice %143 {offsets = [2, 0], sizes = [3, 32], strides = [1, 1]} : vector<6x32xbf16> to vector<3x32xbf16>
    %c6_103 = arith.constant 6 : index
    %c0_104 = arith.constant 0 : index
    %c0_105 = arith.constant 0 : index
    %155 = vector.load %arg3[%c6_103, %c0_104, %c0_105] : memref<16x32x128xbf16, #tpu.memory_space<vmem>>, vector<1x32x128xbf16>
    %156 = vector.shape_cast %155 : vector<1x32x128xbf16> to vector<32x128xbf16>
    %cst_106 = arith.constant dense<0.000000e+00> : vector<3x128xf32>
    %157 = tpu.matmul %154, %156, %cst_106 {dimension_numbers = #tpu.dot_dimension_numbers<[1], [0], [0], [1], [0, 0, 1, 1], [], []>} : vector<3x32xbf16>, vector<32x128xbf16>, vector<3x128xf32> -> vector<3x128xf32>
    %158 = arith.addf %153, %157 : vector<3x128xf32>
    %159 = vector.extract_strided_slice %143 {offsets = [3, 0], sizes = [3, 32], strides = [1, 1]} : vector<6x32xbf16> to vector<3x32xbf16>
    %c7_107 = arith.constant 7 : index
    %c0_108 = arith.constant 0 : index
    %c0_109 = arith.constant 0 : index
    %160 = vector.load %arg3[%c7_107, %c0_108, %c0_109] : memref<16x32x128xbf16, #tpu.memory_space<vmem>>, vector<1x32x128xbf16>
    %161 = vector.shape_cast %160 : vector<1x32x128xbf16> to vector<32x128xbf16>
    %cst_110 = arith.constant dense<0.000000e+00> : vector<3x128xf32>
    %162 = tpu.matmul %159, %161, %cst_110 {dimension_numbers = #tpu.dot_dimension_numbers<[1], [0], [0], [1], [0, 0, 1, 1], [], []>} : vector<3x32xbf16>, vector<32x128xbf16>, vector<3x128xf32> -> vector<3x128xf32>
    %163 = arith.addf %158, %162 : vector<3x128xf32>
    %c1_i32_111 = arith.constant 1 : i32
    %164 = arith.addi %0, %c1_i32_111 : i32
    %c2_i32_112 = arith.constant 2 : i32
    %165 = arith.addi %164, %c2_i32_112 : i32
    %c0_113 = arith.constant 0 : index
    %166 = arith.index_cast %165 : i32 to index
    %c0_114 = arith.constant 0 : index
    %c0_115 = arith.constant 0 : index
    %167 = vector.load %arg2[%c0_113, %166, %c0_114, %c0_115] : memref<1x6x6x32xbf16, #tpu.memory_space<vmem>>, vector<1x1x6x32xbf16>
    %168 = vector.shape_cast %167 : vector<1x1x6x32xbf16> to vector<1x6x32xbf16>
    %169 = vector.shape_cast %168 : vector<1x6x32xbf16> to vector<6x32xbf16>
    %170 = vector.extract_strided_slice %169 {offsets = [0, 0], sizes = [3, 32], strides = [1, 1]} : vector<6x32xbf16> to vector<3x32xbf16>
    %c8_116 = arith.constant 8 : index
    %c0_117 = arith.constant 0 : index
    %c0_118 = arith.constant 0 : index
    %171 = vector.load %arg3[%c8_116, %c0_117, %c0_118] : memref<16x32x128xbf16, #tpu.memory_space<vmem>>, vector<1x32x128xbf16>
    %172 = vector.shape_cast %171 : vector<1x32x128xbf16> to vector<32x128xbf16>
    %cst_119 = arith.constant dense<0.000000e+00> : vector<3x128xf32>
    %173 = tpu.matmul %170, %172, %cst_119 {dimension_numbers = #tpu.dot_dimension_numbers<[1], [0], [0], [1], [0, 0, 1, 1], [], []>} : vector<3x32xbf16>, vector<32x128xbf16>, vector<3x128xf32> -> vector<3x128xf32>
    %174 = arith.addf %163, %173 : vector<3x128xf32>
    %175 = vector.extract_strided_slice %169 {offsets = [1, 0], sizes = [3, 32], strides = [1, 1]} : vector<6x32xbf16> to vector<3x32xbf16>
    %c9_120 = arith.constant 9 : index
    %c0_121 = arith.constant 0 : index
    %c0_122 = arith.constant 0 : index
    %176 = vector.load %arg3[%c9_120, %c0_121, %c0_122] : memref<16x32x128xbf16, #tpu.memory_space<vmem>>, vector<1x32x128xbf16>
    %177 = vector.shape_cast %176 : vector<1x32x128xbf16> to vector<32x128xbf16>
    %cst_123 = arith.constant dense<0.000000e+00> : vector<3x128xf32>
    %178 = tpu.matmul %175, %177, %cst_123 {dimension_numbers = #tpu.dot_dimension_numbers<[1], [0], [0], [1], [0, 0, 1, 1], [], []>} : vector<3x32xbf16>, vector<32x128xbf16>, vector<3x128xf32> -> vector<3x128xf32>
    %179 = arith.addf %174, %178 : vector<3x128xf32>
    %180 = vector.extract_strided_slice %169 {offsets = [2, 0], sizes = [3, 32], strides = [1, 1]} : vector<6x32xbf16> to vector<3x32xbf16>
    %c10_124 = arith.constant 10 : index
    %c0_125 = arith.constant 0 : index
    %c0_126 = arith.constant 0 : index
    %181 = vector.load %arg3[%c10_124, %c0_125, %c0_126] : memref<16x32x128xbf16, #tpu.memory_space<vmem>>, vector<1x32x128xbf16>
    %182 = vector.shape_cast %181 : vector<1x32x128xbf16> to vector<32x128xbf16>
    %cst_127 = arith.constant dense<0.000000e+00> : vector<3x128xf32>
    %183 = tpu.matmul %180, %182, %cst_127 {dimension_numbers = #tpu.dot_dimension_numbers<[1], [0], [0], [1], [0, 0, 1, 1], [], []>} : vector<3x32xbf16>, vector<32x128xbf16>, vector<3x128xf32> -> vector<3x128xf32>
    %184 = arith.addf %179, %183 : vector<3x128xf32>
    %185 = vector.extract_strided_slice %169 {offsets = [3, 0], sizes = [3, 32], strides = [1, 1]} : vector<6x32xbf16> to vector<3x32xbf16>
    %c11_128 = arith.constant 11 : index
    %c0_129 = arith.constant 0 : index
    %c0_130 = arith.constant 0 : index
    %186 = vector.load %arg3[%c11_128, %c0_129, %c0_130] : memref<16x32x128xbf16, #tpu.memory_space<vmem>>, vector<1x32x128xbf16>
    %187 = vector.shape_cast %186 : vector<1x32x128xbf16> to vector<32x128xbf16>
    %cst_131 = arith.constant dense<0.000000e+00> : vector<3x128xf32>
    %188 = tpu.matmul %185, %187, %cst_131 {dimension_numbers = #tpu.dot_dimension_numbers<[1], [0], [0], [1], [0, 0, 1, 1], [], []>} : vector<3x32xbf16>, vector<32x128xbf16>, vector<3x128xf32> -> vector<3x128xf32>
    %189 = arith.addf %184, %188 : vector<3x128xf32>
    %c1_i32_132 = arith.constant 1 : i32
    %190 = arith.addi %0, %c1_i32_132 : i32
    %c3_i32_133 = arith.constant 3 : i32
    %191 = arith.addi %190, %c3_i32_133 : i32
    %c0_134 = arith.constant 0 : index
    %192 = arith.index_cast %191 : i32 to index
    %c0_135 = arith.constant 0 : index
    %c0_136 = arith.constant 0 : index
    %193 = vector.load %arg2[%c0_134, %192, %c0_135, %c0_136] : memref<1x6x6x32xbf16, #tpu.memory_space<vmem>>, vector<1x1x6x32xbf16>
    %194 = vector.shape_cast %193 : vector<1x1x6x32xbf16> to vector<1x6x32xbf16>
    %195 = vector.shape_cast %194 : vector<1x6x32xbf16> to vector<6x32xbf16>
    %196 = vector.extract_strided_slice %195 {offsets = [0, 0], sizes = [3, 32], strides = [1, 1]} : vector<6x32xbf16> to vector<3x32xbf16>
    %c12_137 = arith.constant 12 : index
    %c0_138 = arith.constant 0 : index
    %c0_139 = arith.constant 0 : index
    %197 = vector.load %arg3[%c12_137, %c0_138, %c0_139] : memref<16x32x128xbf16, #tpu.memory_space<vmem>>, vector<1x32x128xbf16>
    %198 = vector.shape_cast %197 : vector<1x32x128xbf16> to vector<32x128xbf16>
    %cst_140 = arith.constant dense<0.000000e+00> : vector<3x128xf32>
    %199 = tpu.matmul %196, %198, %cst_140 {dimension_numbers = #tpu.dot_dimension_numbers<[1], [0], [0], [1], [0, 0, 1, 1], [], []>} : vector<3x32xbf16>, vector<32x128xbf16>, vector<3x128xf32> -> vector<3x128xf32>
    %200 = arith.addf %189, %199 : vector<3x128xf32>
    %201 = vector.extract_strided_slice %195 {offsets = [1, 0], sizes = [3, 32], strides = [1, 1]} : vector<6x32xbf16> to vector<3x32xbf16>
    %c13_141 = arith.constant 13 : index
    %c0_142 = arith.constant 0 : index
    %c0_143 = arith.constant 0 : index
    %202 = vector.load %arg3[%c13_141, %c0_142, %c0_143] : memref<16x32x128xbf16, #tpu.memory_space<vmem>>, vector<1x32x128xbf16>
    %203 = vector.shape_cast %202 : vector<1x32x128xbf16> to vector<32x128xbf16>
    %cst_144 = arith.constant dense<0.000000e+00> : vector<3x128xf32>
    %204 = tpu.matmul %201, %203, %cst_144 {dimension_numbers = #tpu.dot_dimension_numbers<[1], [0], [0], [1], [0, 0, 1, 1], [], []>} : vector<3x32xbf16>, vector<32x128xbf16>, vector<3x128xf32> -> vector<3x128xf32>
    %205 = arith.addf %200, %204 : vector<3x128xf32>
    %206 = vector.extract_strided_slice %195 {offsets = [2, 0], sizes = [3, 32], strides = [1, 1]} : vector<6x32xbf16> to vector<3x32xbf16>
    %c14_145 = arith.constant 14 : index
    %c0_146 = arith.constant 0 : index
    %c0_147 = arith.constant 0 : index
    %207 = vector.load %arg3[%c14_145, %c0_146, %c0_147] : memref<16x32x128xbf16, #tpu.memory_space<vmem>>, vector<1x32x128xbf16>
    %208 = vector.shape_cast %207 : vector<1x32x128xbf16> to vector<32x128xbf16>
    %cst_148 = arith.constant dense<0.000000e+00> : vector<3x128xf32>
    %209 = tpu.matmul %206, %208, %cst_148 {dimension_numbers = #tpu.dot_dimension_numbers<[1], [0], [0], [1], [0, 0, 1, 1], [], []>} : vector<3x32xbf16>, vector<32x128xbf16>, vector<3x128xf32> -> vector<3x128xf32>
    %210 = arith.addf %205, %209 : vector<3x128xf32>
    %211 = vector.extract_strided_slice %195 {offsets = [3, 0], sizes = [3, 32], strides = [1, 1]} : vector<6x32xbf16> to vector<3x32xbf16>
    %c15_149 = arith.constant 15 : index
    %c0_150 = arith.constant 0 : index
    %c0_151 = arith.constant 0 : index
    %212 = vector.load %arg3[%c15_149, %c0_150, %c0_151] : memref<16x32x128xbf16, #tpu.memory_space<vmem>>, vector<1x32x128xbf16>
    %213 = vector.shape_cast %212 : vector<1x32x128xbf16> to vector<32x128xbf16>
    %cst_152 = arith.constant dense<0.000000e+00> : vector<3x128xf32>
    %214 = tpu.matmul %211, %213, %cst_152 {dimension_numbers = #tpu.dot_dimension_numbers<[1], [0], [0], [1], [0, 0, 1, 1], [], []>} : vector<3x32xbf16>, vector<32x128xbf16>, vector<3x128xf32> -> vector<3x128xf32>
    %215 = arith.addf %210, %214 : vector<3x128xf32>
    %c1_i32_153 = arith.constant 1 : i32
    %216 = arith.addi %0, %c1_i32_153 : i32
    %217 = arith.index_cast %216 : i32 to index
    %c0_154 = arith.constant 0 : index
    %c0_155 = arith.constant 0 : index
    %218 = vector.load %arg8[%217, %c0_154, %c0_155] : memref<3x3x128xf32, #tpu.memory_space<vmem>>, vector<1x3x128xf32>
    %219 = vector.shape_cast %218 : vector<1x3x128xf32> to vector<3x128xf32>
    %220 = vector.shape_cast %215 : vector<3x128xf32> to vector<1x3x128xf32>
    tpu.vector_store %arg8[%217, %c0_154, %c0_155], %220 {strides = array<i32>} : memref<3x3x128xf32, #tpu.memory_space<vmem>>, vector<1x3x128xf32>,
    %cst_156 = arith.constant 0.000000e+00 : f32
    %221 = vector.broadcast %cst_156 : f32 to vector<3x128xf32>
    %c2_i32_157 = arith.constant 2 : i32
    %222 = arith.addi %0, %c2_i32_157 : i32
    %c0_i32_158 = arith.constant 0 : i32
    %223 = arith.addi %222, %c0_i32_158 : i32
    %c0_159 = arith.constant 0 : index
    %224 = arith.index_cast %223 : i32 to index
    %c0_160 = arith.constant 0 : index
    %c0_161 = arith.constant 0 : index
    %225 = vector.load %arg2[%c0_159, %224, %c0_160, %c0_161] : memref<1x6x6x32xbf16, #tpu.memory_space<vmem>>, vector<1x1x6x32xbf16>
    %226 = vector.shape_cast %225 : vector<1x1x6x32xbf16> to vector<1x6x32xbf16>
    %227 = vector.shape_cast %226 : vector<1x6x32xbf16> to vector<6x32xbf16>
    %228 = vector.extract_strided_slice %227 {offsets = [0, 0], sizes = [3, 32], strides = [1, 1]} : vector<6x32xbf16> to vector<3x32xbf16>
    %c0_162 = arith.constant 0 : index
    %c0_163 = arith.constant 0 : index
    %c0_164 = arith.constant 0 : index
    %229 = vector.load %arg3[%c0_162, %c0_163, %c0_164] : memref<16x32x128xbf16, #tpu.memory_space<vmem>>, vector<1x32x128xbf16>
    %230 = vector.shape_cast %229 : vector<1x32x128xbf16> to vector<32x128xbf16>
    %cst_165 = arith.constant dense<0.000000e+00> : vector<3x128xf32>
    %231 = tpu.matmul %228, %230, %cst_165 {dimension_numbers = #tpu.dot_dimension_numbers<[1], [0], [0], [1], [0, 0, 1, 1], [], []>} : vector<3x32xbf16>, vector<32x128xbf16>, vector<3x128xf32> -> vector<3x128xf32>
    %232 = arith.addf %221, %231 : vector<3x128xf32>
    %233 = vector.extract_strided_slice %227 {offsets = [1, 0], sizes = [3, 32], strides = [1, 1]} : vector<6x32xbf16> to vector<3x32xbf16>
    %c1_166 = arith.constant 1 : index
    %c0_167 = arith.constant 0 : index
    %c0_168 = arith.constant 0 : index
    %234 = vector.load %arg3[%c1_166, %c0_167, %c0_168] : memref<16x32x128xbf16, #tpu.memory_space<vmem>>, vector<1x32x128xbf16>
    %235 = vector.shape_cast %234 : vector<1x32x128xbf16> to vector<32x128xbf16>
    %cst_169 = arith.constant dense<0.000000e+00> : vector<3x128xf32>
    %236 = tpu.matmul %233, %235, %cst_169 {dimension_numbers = #tpu.dot_dimension_numbers<[1], [0], [0], [1], [0, 0, 1, 1], [], []>} : vector<3x32xbf16>, vector<32x128xbf16>, vector<3x128xf32> -> vector<3x128xf32>
    %237 = arith.addf %232, %236 : vector<3x128xf32>
    %238 = vector.extract_strided_slice %227 {offsets = [2, 0], sizes = [3, 32], strides = [1, 1]} : vector<6x32xbf16> to vector<3x32xbf16>
    %c2_170 = arith.constant 2 : index
    %c0_171 = arith.constant 0 : index
    %c0_172 = arith.constant 0 : index
    %239 = vector.load %arg3[%c2_170, %c0_171, %c0_172] : memref<16x32x128xbf16, #tpu.memory_space<vmem>>, vector<1x32x128xbf16>
    %240 = vector.shape_cast %239 : vector<1x32x128xbf16> to vector<32x128xbf16>
    %cst_173 = arith.constant dense<0.000000e+00> : vector<3x128xf32>
    %241 = tpu.matmul %238, %240, %cst_173 {dimension_numbers = #tpu.dot_dimension_numbers<[1], [0], [0], [1], [0, 0, 1, 1], [], []>} : vector<3x32xbf16>, vector<32x128xbf16>, vector<3x128xf32> -> vector<3x128xf32>
    %242 = arith.addf %237, %241 : vector<3x128xf32>
    %243 = vector.extract_strided_slice %227 {offsets = [3, 0], sizes = [3, 32], strides = [1, 1]} : vector<6x32xbf16> to vector<3x32xbf16>
    %c3_174 = arith.constant 3 : index
    %c0_175 = arith.constant 0 : index
    %c0_176 = arith.constant 0 : index
    %244 = vector.load %arg3[%c3_174, %c0_175, %c0_176] : memref<16x32x128xbf16, #tpu.memory_space<vmem>>, vector<1x32x128xbf16>
    %245 = vector.shape_cast %244 : vector<1x32x128xbf16> to vector<32x128xbf16>
    %cst_177 = arith.constant dense<0.000000e+00> : vector<3x128xf32>
    %246 = tpu.matmul %243, %245, %cst_177 {dimension_numbers = #tpu.dot_dimension_numbers<[1], [0], [0], [1], [0, 0, 1, 1], [], []>} : vector<3x32xbf16>, vector<32x128xbf16>, vector<3x128xf32> -> vector<3x128xf32>
    %247 = arith.addf %242, %246 : vector<3x128xf32>
    %c2_i32_178 = arith.constant 2 : i32
    %248 = arith.addi %0, %c2_i32_178 : i32
    %c1_i32_179 = arith.constant 1 : i32
    %249 = arith.addi %248, %c1_i32_179 : i32
    %c0_180 = arith.constant 0 : index
    %250 = arith.index_cast %249 : i32 to index
    %c0_181 = arith.constant 0 : index
    %c0_182 = arith.constant 0 : index
    %251 = vector.load %arg2[%c0_180, %250, %c0_181, %c0_182] : memref<1x6x6x32xbf16, #tpu.memory_space<vmem>>, vector<1x1x6x32xbf16>
    %252 = vector.shape_cast %251 : vector<1x1x6x32xbf16> to vector<1x6x32xbf16>
    %253 = vector.shape_cast %252 : vector<1x6x32xbf16> to vector<6x32xbf16>
    %254 = vector.extract_strided_slice %253 {offsets = [0, 0], sizes = [3, 32], strides = [1, 1]} : vector<6x32xbf16> to vector<3x32xbf16>
    %c4_183 = arith.constant 4 : index
    %c0_184 = arith.constant 0 : index
    %c0_185 = arith.constant 0 : index
    %255 = vector.load %arg3[%c4_183, %c0_184, %c0_185] : memref<16x32x128xbf16, #tpu.memory_space<vmem>>, vector<1x32x128xbf16>
    %256 = vector.shape_cast %255 : vector<1x32x128xbf16> to vector<32x128xbf16>
    %cst_186 = arith.constant dense<0.000000e+00> : vector<3x128xf32>
    %257 = tpu.matmul %254, %256, %cst_186 {dimension_numbers = #tpu.dot_dimension_numbers<[1], [0], [0], [1], [0, 0, 1, 1], [], []>} : vector<3x32xbf16>, vector<32x128xbf16>, vector<3x128xf32> -> vector<3x128xf32>
    %258 = arith.addf %247, %257 : vector<3x128xf32>
    %259 = vector.extract_strided_slice %253 {offsets = [1, 0], sizes = [3, 32], strides = [1, 1]} : vector<6x32xbf16> to vector<3x32xbf16>
    %c5_187 = arith.constant 5 : index
    %c0_188 = arith.constant 0 : index
    %c0_189 = arith.constant 0 : index
    %260 = vector.load %arg3[%c5_187, %c0_188, %c0_189] : memref<16x32x128xbf16, #tpu.memory_space<vmem>>, vector<1x32x128xbf16>
    %261 = vector.shape_cast %260 : vector<1x32x128xbf16> to vector<32x128xbf16>
    %cst_190 = arith.constant dense<0.000000e+00> : vector<3x128xf32>
    %262 = tpu.matmul %259, %261, %cst_190 {dimension_numbers = #tpu.dot_dimension_numbers<[1], [0], [0], [1], [0, 0, 1, 1], [], []>} : vector<3x32xbf16>, vector<32x128xbf16>, vector<3x128xf32> -> vector<3x128xf32>
    %263 = arith.addf %258, %262 : vector<3x128xf32>
    %264 = vector.extract_strided_slice %253 {offsets = [2, 0], sizes = [3, 32], strides = [1, 1]} : vector<6x32xbf16> to vector<3x32xbf16>
    %c6_191 = arith.constant 6 : index
    %c0_192 = arith.constant 0 : index
    %c0_193 = arith.constant 0 : index
    %265 = vector.load %arg3[%c6_191, %c0_192, %c0_193] : memref<16x32x128xbf16, #tpu.memory_space<vmem>>, vector<1x32x128xbf16>
    %266 = vector.shape_cast %265 : vector<1x32x128xbf16> to vector<32x128xbf16>
    %cst_194 = arith.constant dense<0.000000e+00> : vector<3x128xf32>
    %267 = tpu.matmul %264, %266, %cst_194 {dimension_numbers = #tpu.dot_dimension_numbers<[1], [0], [0], [1], [0, 0, 1, 1], [], []>} : vector<3x32xbf16>, vector<32x128xbf16>, vector<3x128xf32> -> vector<3x128xf32>
    %268 = arith.addf %263, %267 : vector<3x128xf32>
    %269 = vector.extract_strided_slice %253 {offsets = [3, 0], sizes = [3, 32], strides = [1, 1]} : vector<6x32xbf16> to vector<3x32xbf16>
    %c7_195 = arith.constant 7 : index
    %c0_196 = arith.constant 0 : index
    %c0_197 = arith.constant 0 : index
    %270 = vector.load %arg3[%c7_195, %c0_196, %c0_197] : memref<16x32x128xbf16, #tpu.memory_space<vmem>>, vector<1x32x128xbf16>
    %271 = vector.shape_cast %270 : vector<1x32x128xbf16> to vector<32x128xbf16>
    %cst_198 = arith.constant dense<0.000000e+00> : vector<3x128xf32>
    %272 = tpu.matmul %269, %271, %cst_198 {dimension_numbers = #tpu.dot_dimension_numbers<[1], [0], [0], [1], [0, 0, 1, 1], [], []>} : vector<3x32xbf16>, vector<32x128xbf16>, vector<3x128xf32> -> vector<3x128xf32>
    %273 = arith.addf %268, %272 : vector<3x128xf32>
    %c2_i32_199 = arith.constant 2 : i32
    %274 = arith.addi %0, %c2_i32_199 : i32
    %c2_i32_200 = arith.constant 2 : i32
    %275 = arith.addi %274, %c2_i32_200 : i32
    %c0_201 = arith.constant 0 : index
    %276 = arith.index_cast %275 : i32 to index
    %c0_202 = arith.constant 0 : index
    %c0_203 = arith.constant 0 : index
    %277 = vector.load %arg2[%c0_201, %276, %c0_202, %c0_203] : memref<1x6x6x32xbf16, #tpu.memory_space<vmem>>, vector<1x1x6x32xbf16>
    %278 = vector.shape_cast %277 : vector<1x1x6x32xbf16> to vector<1x6x32xbf16>
    %279 = vector.shape_cast %278 : vector<1x6x32xbf16> to vector<6x32xbf16>
    %280 = vector.extract_strided_slice %279 {offsets = [0, 0], sizes = [3, 32], strides = [1, 1]} : vector<6x32xbf16> to vector<3x32xbf16>
    %c8_204 = arith.constant 8 : index
    %c0_205 = arith.constant 0 : index
    %c0_206 = arith.constant 0 : index
    %281 = vector.load %arg3[%c8_204, %c0_205, %c0_206] : memref<16x32x128xbf16, #tpu.memory_space<vmem>>, vector<1x32x128xbf16>
    %282 = vector.shape_cast %281 : vector<1x32x128xbf16> to vector<32x128xbf16>
    %cst_207 = arith.constant dense<0.000000e+00> : vector<3x128xf32>
    %283 = tpu.matmul %280, %282, %cst_207 {dimension_numbers = #tpu.dot_dimension_numbers<[1], [0], [0], [1], [0, 0, 1, 1], [], []>} : vector<3x32xbf16>, vector<32x128xbf16>, vector<3x128xf32> -> vector<3x128xf32>
    %284 = arith.addf %273, %283 : vector<3x128xf32>
    %285 = vector.extract_strided_slice %279 {offsets = [1, 0], sizes = [3, 32], strides = [1, 1]} : vector<6x32xbf16> to vector<3x32xbf16>
    %c9_208 = arith.constant 9 : index
    %c0_209 = arith.constant 0 : index
    %c0_210 = arith.constant 0 : index
    %286 = vector.load %arg3[%c9_208, %c0_209, %c0_210] : memref<16x32x128xbf16, #tpu.memory_space<vmem>>, vector<1x32x128xbf16>
    %287 = vector.shape_cast %286 : vector<1x32x128xbf16> to vector<32x128xbf16>
    %cst_211 = arith.constant dense<0.000000e+00> : vector<3x128xf32>
    %288 = tpu.matmul %285, %287, %cst_211 {dimension_numbers = #tpu.dot_dimension_numbers<[1], [0], [0], [1], [0, 0, 1, 1], [], []>} : vector<3x32xbf16>, vector<32x128xbf16>, vector<3x128xf32> -> vector<3x128xf32>
    %289 = arith.addf %284, %288 : vector<3x128xf32>
    %290 = vector.extract_strided_slice %279 {offsets = [2, 0], sizes = [3, 32], strides = [1, 1]} : vector<6x32xbf16> to vector<3x32xbf16>
    %c10_212 = arith.constant 10 : index
    %c0_213 = arith.constant 0 : index
    %c0_214 = arith.constant 0 : index
    %291 = vector.load %arg3[%c10_212, %c0_213, %c0_214] : memref<16x32x128xbf16, #tpu.memory_space<vmem>>, vector<1x32x128xbf16>
    %292 = vector.shape_cast %291 : vector<1x32x128xbf16> to vector<32x128xbf16>
    %cst_215 = arith.constant dense<0.000000e+00> : vector<3x128xf32>
    %293 = tpu.matmul %290, %292, %cst_215 {dimension_numbers = #tpu.dot_dimension_numbers<[1], [0], [0], [1], [0, 0, 1, 1], [], []>} : vector<3x32xbf16>, vector<32x128xbf16>, vector<3x128xf32> -> vector<3x128xf32>
    %294 = arith.addf %289, %293 : vector<3x128xf32>
    %295 = vector.extract_strided_slice %279 {offsets = [3, 0], sizes = [3, 32], strides = [1, 1]} : vector<6x32xbf16> to vector<3x32xbf16>
    %c11_216 = arith.constant 11 : index
    %c0_217 = arith.constant 0 : index
    %c0_218 = arith.constant 0 : index
    %296 = vector.load %arg3[%c11_216, %c0_217, %c0_218] : memref<16x32x128xbf16, #tpu.memory_space<vmem>>, vector<1x32x128xbf16>
    %297 = vector.shape_cast %296 : vector<1x32x128xbf16> to vector<32x128xbf16>
    %cst_219 = arith.constant dense<0.000000e+00> : vector<3x128xf32>
    %298 = tpu.matmul %295, %297, %cst_219 {dimension_numbers = #tpu.dot_dimension_numbers<[1], [0], [0], [1], [0, 0, 1, 1], [], []>} : vector<3x32xbf16>, vector<32x128xbf16>, vector<3x128xf32> -> vector<3x128xf32>
    %299 = arith.addf %294, %298 : vector<3x128xf32>
    %c2_i32_220 = arith.constant 2 : i32
    %300 = arith.addi %0, %c2_i32_220 : i32
    %c3_i32_221 = arith.constant 3 : i32
    %301 = arith.addi %300, %c3_i32_221 : i32
    %c0_222 = arith.constant 0 : index
    %302 = arith.index_cast %301 : i32 to index
    %c0_223 = arith.constant 0 : index
    %c0_224 = arith.constant 0 : index
    %303 = vector.load %arg2[%c0_222, %302, %c0_223, %c0_224] : memref<1x6x6x32xbf16, #tpu.memory_space<vmem>>, vector<1x1x6x32xbf16>
    %304 = vector.shape_cast %303 : vector<1x1x6x32xbf16> to vector<1x6x32xbf16>
    %305 = vector.shape_cast %304 : vector<1x6x32xbf16> to vector<6x32xbf16>
    %306 = vector.extract_strided_slice %305 {offsets = [0, 0], sizes = [3, 32], strides = [1, 1]} : vector<6x32xbf16> to vector<3x32xbf16>
    %c12_225 = arith.constant 12 : index
    %c0_226 = arith.constant 0 : index
    %c0_227 = arith.constant 0 : index
    %307 = vector.load %arg3[%c12_225, %c0_226, %c0_227] : memref<16x32x128xbf16, #tpu.memory_space<vmem>>, vector<1x32x128xbf16>
    %308 = vector.shape_cast %307 : vector<1x32x128xbf16> to vector<32x128xbf16>
    %cst_228 = arith.constant dense<0.000000e+00> : vector<3x128xf32>
    %309 = tpu.matmul %306, %308, %cst_228 {dimension_numbers = #tpu.dot_dimension_numbers<[1], [0], [0], [1], [0, 0, 1, 1], [], []>} : vector<3x32xbf16>, vector<32x128xbf16>, vector<3x128xf32> -> vector<3x128xf32>
    %310 = arith.addf %299, %309 : vector<3x128xf32>
    %311 = vector.extract_strided_slice %305 {offsets = [1, 0], sizes = [3, 32], strides = [1, 1]} : vector<6x32xbf16> to vector<3x32xbf16>
    %c13_229 = arith.constant 13 : index
    %c0_230 = arith.constant 0 : index
    %c0_231 = arith.constant 0 : index
    %312 = vector.load %arg3[%c13_229, %c0_230, %c0_231] : memref<16x32x128xbf16, #tpu.memory_space<vmem>>, vector<1x32x128xbf16>
    %313 = vector.shape_cast %312 : vector<1x32x128xbf16> to vector<32x128xbf16>
    %cst_232 = arith.constant dense<0.000000e+00> : vector<3x128xf32>
    %314 = tpu.matmul %311, %313, %cst_232 {dimension_numbers = #tpu.dot_dimension_numbers<[1], [0], [0], [1], [0, 0, 1, 1], [], []>} : vector<3x32xbf16>, vector<32x128xbf16>, vector<3x128xf32> -> vector<3x128xf32>
    %315 = arith.addf %310, %314 : vector<3x128xf32>
    %316 = vector.extract_strided_slice %305 {offsets = [2, 0], sizes = [3, 32], strides = [1, 1]} : vector<6x32xbf16> to vector<3x32xbf16>
    %c14_233 = arith.constant 14 : index
    %c0_234 = arith.constant 0 : index
    %c0_235 = arith.constant 0 : index
    %317 = vector.load %arg3[%c14_233, %c0_234, %c0_235] : memref<16x32x128xbf16, #tpu.memory_space<vmem>>, vector<1x32x128xbf16>
    %318 = vector.shape_cast %317 : vector<1x32x128xbf16> to vector<32x128xbf16>
    %cst_236 = arith.constant dense<0.000000e+00> : vector<3x128xf32>
    %319 = tpu.matmul %316, %318, %cst_236 {dimension_numbers = #tpu.dot_dimension_numbers<[1], [0], [0], [1], [0, 0, 1, 1], [], []>} : vector<3x32xbf16>, vector<32x128xbf16>, vector<3x128xf32> -> vector<3x128xf32>
    %320 = arith.addf %315, %319 : vector<3x128xf32>
    %321 = vector.extract_strided_slice %305 {offsets = [3, 0], sizes = [3, 32], strides = [1, 1]} : vector<6x32xbf16> to vector<3x32xbf16>
    %c15_237 = arith.constant 15 : index
    %c0_238 = arith.constant 0 : index
    %c0_239 = arith.constant 0 : index
    %322 = vector.load %arg3[%c15_237, %c0_238, %c0_239] : memref<16x32x128xbf16, #tpu.memory_space<vmem>>, vector<1x32x128xbf16>
    %323 = vector.shape_cast %322 : vector<1x32x128xbf16> to vector<32x128xbf16>
    %cst_240 = arith.constant dense<0.000000e+00> : vector<3x128xf32>
    %324 = tpu.matmul %321, %323, %cst_240 {dimension_numbers = #tpu.dot_dimension_numbers<[1], [0], [0], [1], [0, 0, 1, 1], [], []>} : vector<3x32xbf16>, vector<32x128xbf16>, vector<3x128xf32> -> vector<3x128xf32>
    %325 = arith.addf %320, %324 : vector<3x128xf32>
    %c2_i32_241 = arith.constant 2 : i32
    %326 = arith.addi %0, %c2_i32_241 : i32
    %327 = arith.index_cast %326 : i32 to index
    %c0_242 = arith.constant 0 : index
    %c0_243 = arith.constant 0 : index
    %328 = vector.load %arg8[%327, %c0_242, %c0_243] : memref<3x3x128xf32, #tpu.memory_space<vmem>>, vector<1x3x128xf32>
    %329 = vector.shape_cast %328 : vector<1x3x128xf32> to vector<3x128xf32>
    %330 = vector.shape_cast %325 : vector<3x128xf32> to vector<1x3x128xf32>
    tpu.vector_store %arg8[%327, %c0_242, %c0_243], %330 {strides = array<i32>} : memref<3x3x128xf32, #tpu.memory_space<vmem>>, vector<1x3x128xf32>,
    %c0_i32_244 = arith.constant 0 : i32
    %331 = arith.cmpi eq, %arg1, %c0_i32_244 : i32
    %332 = arith.extui %331 : i1 to i32
    %c0_i32_245 = arith.constant 0 : i32
    %333 = arith.cmpi ne, %332, %c0_i32_245 : i32
    scf.if %333 {
      %c0_246 = arith.constant 0 : index
      %c0_247 = arith.constant 0 : index
      %c0_248 = arith.constant 0 : index
      %334 = vector.load %arg8[%c0_246, %c0_247, %c0_248] : memref<3x3x128xf32, #tpu.memory_space<vmem>>, vector<3x3x128xf32>
      %c0_249 = arith.constant 0 : index
      %c0_250 = arith.constant 0 : index
      %335 = vector.load %arg4[%c0_249, %c0_250] : memref<1x128xf32, #tpu.memory_space<vmem>>, vector<1x128xf32>
      %336 = vector.shape_cast %335 : vector<1x128xf32> to vector<1x1x128xf32>
      %337 = vector.broadcast %336 : vector<1x1x128xf32> to vector<3x3x128xf32>
      %338 = arith.addf %334, %337 : vector<3x3x128xf32>
      %cst_251 = arith.constant dense<0.000000e+00> : vector<3x128xf32>
      %339 = vector.multi_reduction <add>, %338, %cst_251 [1] : vector<3x3x128xf32> to vector<3x128xf32>
      %340 = vector.shape_cast %339 : vector<3x128xf32> to vector<3x1x128xf32>
      %cst_252 = arith.constant dense<0.000000e+00> : vector<1x128xf32>
      %341 = vector.multi_reduction <add>, %340, %cst_252 [0] : vector<3x1x128xf32> to vector<1x128xf32>
      %342 = vector.shape_cast %341 : vector<1x128xf32> to vector<1x1x128xf32>
      %cst_253 = arith.constant 9.000000e+00 : f32
      %343 = vector.broadcast %cst_253 : f32 to vector<1x1x128xf32>
      %344 = arith.divf %342, %343 : vector<1x1x128xf32>
      %345 = vector.broadcast %344 : vector<1x1x128xf32> to vector<3x3x128xf32>
      %346 = arith.subf %338, %345 : vector<3x3x128xf32>
      %347 = arith.mulf %346, %346 : vector<3x3x128xf32>
      %cst_254 = arith.constant dense<0.000000e+00> : vector<3x128xf32>
      %348 = vector.multi_reduction <add>, %347, %cst_254 [1] : vector<3x3x128xf32> to vector<3x128xf32>
      %349 = vector.shape_cast %348 : vector<3x128xf32> to vector<3x1x128xf32>
      %cst_255 = arith.constant dense<0.000000e+00> : vector<1x128xf32>
      %350 = vector.multi_reduction <add>, %349, %cst_255 [0] : vector<3x1x128xf32> to vector<1x128xf32>
      %351 = vector.shape_cast %350 : vector<1x128xf32> to vector<1x1x128xf32>
      %cst_256 = arith.constant 9.000000e+00 : f32
      %352 = vector.broadcast %cst_256 : f32 to vector<1x1x128xf32>
      %353 = arith.divf %351, %352 : vector<1x1x128xf32>
      %cst_257 = arith.constant 9.99999974E-6 : f32
      %354 = vector.broadcast %cst_257 : f32 to vector<1x1x128xf32>
      %355 = arith.addf %353, %354 : vector<1x1x128xf32>
      %356 = math.rsqrt %355 : vector<1x1x128xf32>
      %357 = vector.broadcast %356 : vector<1x1x128xf32> to vector<3x3x128xf32>
      %358 = arith.mulf %346, %357 : vector<3x3x128xf32>
      %cst_258 = arith.constant 0.000000e+00 : f32
      %359 = vector.broadcast %cst_258 : f32 to vector<3x3x128xf32>
      %360 = arith.cmpf oge, %358, %359 : vector<3x3x128xf32>
      %cst_259 = arith.constant 2.000000e-01 : f32
      %361 = vector.broadcast %cst_259 : f32 to vector<3x3x128xf32>
      %362 = arith.mulf %361, %358 : vector<3x3x128xf32>
      %363 = arith.select %360, %358, %362 : vector<3x3x128xi1>, vector<3x3x128xf32>
      %cst_260 = arith.constant 0.000000e+00 : f32
      %364 = vector.broadcast %cst_260 : f32 to vector<5x5x128xf32>
      %c0_261 = arith.constant 0 : index
      %c0_262 = arith.constant 0 : index
      %c0_263 = arith.constant 0 : index
      %365 = vector.load %arg9[%c0_261, %c0_262, %c0_263] : memref<5x5x128xf32, #tpu.memory_space<vmem>>, vector<5x5x128xf32>
      tpu.vector_store %arg9[%c0_261, %c0_262, %c0_263], %364 {strides = array<i32>} : memref<5x5x128xf32, #tpu.memory_space<vmem>>, vector<5x5x128xf32>,
      %c1_264 = arith.constant 1 : index
      %c1_265 = arith.constant 1 : index
      %c0_266 = arith.constant 0 : index
      %366 = vector.load %arg9[%c1_264, %c1_265, %c0_266] : memref<5x5x128xf32, #tpu.memory_space<vmem>>, vector<3x3x128xf32>
      tpu.vector_store %arg9[%c1_264, %c1_265, %c0_266], %363 {strides = array<i32>} : memref<5x5x128xf32, #tpu.memory_space<vmem>>, vector<3x3x128xf32>,
      %cst_267 = arith.constant 0.000000e+00 : f32
      %367 = vector.broadcast %cst_267 : f32 to vector<2x128xf32>
      %c0_268 = arith.constant 0 : index
      %c0_269 = arith.constant 0 : index
      %c0_270 = arith.constant 0 : index
      %368 = vector.load %arg9[%c0_268, %c0_269, %c0_270] : memref<5x5x128xf32, #tpu.memory_space<vmem>>, vector<1x2x128xf32>
      %369 = vector.shape_cast %368 : vector<1x2x128xf32> to vector<2x128xf32>
      %370 = arith.truncf %369 : vector<2x128xf32> to vector<2x128xbf16>
      %c0_271 = arith.constant 0 : index
      %c0_272 = arith.constant 0 : index
      %c0_273 = arith.constant 0 : index
      %371 = vector.load %arg5[%c0_271, %c0_272, %c0_273] : memref<16x128x128xbf16, #tpu.memory_space<vmem>>, vector<1x128x128xbf16>
      %372 = vector.shape_cast %371 : vector<1x128x128xbf16> to vector<128x128xbf16>
      %cst_274 = arith.constant dense<0.000000e+00> : vector<2x128xf32>
      %373 = tpu.matmul %370, %372, %cst_274 {dimension_numbers = #tpu.dot_dimension_numbers<[1], [0], [0], [1], [0, 0, 1, 1], [], []>} : vector<2x128xbf16>, vector<128x128xbf16>, vector<2x128xf32> -> vector<2x128xf32>
      %374 = arith.addf %367, %373 : vector<2x128xf32>
      %c0_275 = arith.constant 0 : index
      %c1_276 = arith.constant 1 : index
      %c0_277 = arith.constant 0 : index
      %375 = vector.load %arg9[%c0_275, %c1_276, %c0_277] : memref<5x5x128xf32, #tpu.memory_space<vmem>>, vector<1x2x128xf32>
      %376 = vector.shape_cast %375 : vector<1x2x128xf32> to vector<2x128xf32>
      %377 = arith.truncf %376 : vector<2x128xf32> to vector<2x128xbf16>
      %c1_278 = arith.constant 1 : index
      %c0_279 = arith.constant 0 : index
      %c0_280 = arith.constant 0 : index
      %378 = vector.load %arg5[%c1_278, %c0_279, %c0_280] : memref<16x128x128xbf16, #tpu.memory_space<vmem>>, vector<1x128x128xbf16>
      %379 = vector.shape_cast %378 : vector<1x128x128xbf16> to vector<128x128xbf16>
      %cst_281 = arith.constant dense<0.000000e+00> : vector<2x128xf32>
      %380 = tpu.matmul %377, %379, %cst_281 {dimension_numbers = #tpu.dot_dimension_numbers<[1], [0], [0], [1], [0, 0, 1, 1], [], []>} : vector<2x128xbf16>, vector<128x128xbf16>, vector<2x128xf32> -> vector<2x128xf32>
      %381 = arith.addf %374, %380 : vector<2x128xf32>
      %c0_282 = arith.constant 0 : index
      %c2_283 = arith.constant 2 : index
      %c0_284 = arith.constant 0 : index
      %382 = vector.load %arg9[%c0_282, %c2_283, %c0_284] : memref<5x5x128xf32, #tpu.memory_space<vmem>>, vector<1x2x128xf32>
      %383 = vector.shape_cast %382 : vector<1x2x128xf32> to vector<2x128xf32>
      %384 = arith.truncf %383 : vector<2x128xf32> to vector<2x128xbf16>
      %c2_285 = arith.constant 2 : index
      %c0_286 = arith.constant 0 : index
      %c0_287 = arith.constant 0 : index
      %385 = vector.load %arg5[%c2_285, %c0_286, %c0_287] : memref<16x128x128xbf16, #tpu.memory_space<vmem>>, vector<1x128x128xbf16>
      %386 = vector.shape_cast %385 : vector<1x128x128xbf16> to vector<128x128xbf16>
      %cst_288 = arith.constant dense<0.000000e+00> : vector<2x128xf32>
      %387 = tpu.matmul %384, %386, %cst_288 {dimension_numbers = #tpu.dot_dimension_numbers<[1], [0], [0], [1], [0, 0, 1, 1], [], []>} : vector<2x128xbf16>, vector<128x128xbf16>, vector<2x128xf32> -> vector<2x128xf32>
      %388 = arith.addf %381, %387 : vector<2x128xf32>
      %c0_289 = arith.constant 0 : index
      %c3_290 = arith.constant 3 : index
      %c0_291 = arith.constant 0 : index
      %389 = vector.load %arg9[%c0_289, %c3_290, %c0_291] : memref<5x5x128xf32, #tpu.memory_space<vmem>>, vector<1x2x128xf32>
      %390 = vector.shape_cast %389 : vector<1x2x128xf32> to vector<2x128xf32>
      %391 = arith.truncf %390 : vector<2x128xf32> to vector<2x128xbf16>
      %c3_292 = arith.constant 3 : index
      %c0_293 = arith.constant 0 : index
      %c0_294 = arith.constant 0 : index
      %392 = vector.load %arg5[%c3_292, %c0_293, %c0_294] : memref<16x128x128xbf16, #tpu.memory_space<vmem>>, vector<1x128x128xbf16>
      %393 = vector.shape_cast %392 : vector<1x128x128xbf16> to vector<128x128xbf16>
      %cst_295 = arith.constant dense<0.000000e+00> : vector<2x128xf32>
      %394 = tpu.matmul %391, %393, %cst_295 {dimension_numbers = #tpu.dot_dimension_numbers<[1], [0], [0], [1], [0, 0, 1, 1], [], []>} : vector<2x128xbf16>, vector<128x128xbf16>, vector<2x128xf32> -> vector<2x128xf32>
      %395 = arith.addf %388, %394 : vector<2x128xf32>
      %c1_296 = arith.constant 1 : index
      %c0_297 = arith.constant 0 : index
      %c0_298 = arith.constant 0 : index
      %396 = vector.load %arg9[%c1_296, %c0_297, %c0_298] : memref<5x5x128xf32, #tpu.memory_space<vmem>>, vector<1x2x128xf32>
      %397 = vector.shape_cast %396 : vector<1x2x128xf32> to vector<2x128xf32>
      %398 = arith.truncf %397 : vector<2x128xf32> to vector<2x128xbf16>
      %c4_299 = arith.constant 4 : index
      %c0_300 = arith.constant 0 : index
      %c0_301 = arith.constant 0 : index
      %399 = vector.load %arg5[%c4_299, %c0_300, %c0_301] : memref<16x128x128xbf16, #tpu.memory_space<vmem>>, vector<1x128x128xbf16>
      %400 = vector.shape_cast %399 : vector<1x128x128xbf16> to vector<128x128xbf16>
      %cst_302 = arith.constant dense<0.000000e+00> : vector<2x128xf32>
      %401 = tpu.matmul %398, %400, %cst_302 {dimension_numbers = #tpu.dot_dimension_numbers<[1], [0], [0], [1], [0, 0, 1, 1], [], []>} : vector<2x128xbf16>, vector<128x128xbf16>, vector<2x128xf32> -> vector<2x128xf32>
      %402 = arith.addf %395, %401 : vector<2x128xf32>
      %c1_303 = arith.constant 1 : index
      %c1_304 = arith.constant 1 : index
      %c0_305 = arith.constant 0 : index
      %403 = vector.load %arg9[%c1_303, %c1_304, %c0_305] : memref<5x5x128xf32, #tpu.memory_space<vmem>>, vector<1x2x128xf32>
      %404 = vector.shape_cast %403 : vector<1x2x128xf32> to vector<2x128xf32>
      %405 = arith.truncf %404 : vector<2x128xf32> to vector<2x128xbf16>
      %c5_306 = arith.constant 5 : index
      %c0_307 = arith.constant 0 : index
      %c0_308 = arith.constant 0 : index
      %406 = vector.load %arg5[%c5_306, %c0_307, %c0_308] : memref<16x128x128xbf16, #tpu.memory_space<vmem>>, vector<1x128x128xbf16>
      %407 = vector.shape_cast %406 : vector<1x128x128xbf16> to vector<128x128xbf16>
      %cst_309 = arith.constant dense<0.000000e+00> : vector<2x128xf32>
      %408 = tpu.matmul %405, %407, %cst_309 {dimension_numbers = #tpu.dot_dimension_numbers<[1], [0], [0], [1], [0, 0, 1, 1], [], []>} : vector<2x128xbf16>, vector<128x128xbf16>, vector<2x128xf32> -> vector<2x128xf32>
      %409 = arith.addf %402, %408 : vector<2x128xf32>
      %c1_310 = arith.constant 1 : index
      %c2_311 = arith.constant 2 : index
      %c0_312 = arith.constant 0 : index
      %410 = vector.load %arg9[%c1_310, %c2_311, %c0_312] : memref<5x5x128xf32, #tpu.memory_space<vmem>>, vector<1x2x128xf32>
      %411 = vector.shape_cast %410 : vector<1x2x128xf32> to vector<2x128xf32>
      %412 = arith.truncf %411 : vector<2x128xf32> to vector<2x128xbf16>
      %c6_313 = arith.constant 6 : index
      %c0_314 = arith.constant 0 : index
      %c0_315 = arith.constant 0 : index
      %413 = vector.load %arg5[%c6_313, %c0_314, %c0_315] : memref<16x128x128xbf16, #tpu.memory_space<vmem>>, vector<1x128x128xbf16>
      %414 = vector.shape_cast %413 : vector<1x128x128xbf16> to vector<128x128xbf16>
      %cst_316 = arith.constant dense<0.000000e+00> : vector<2x128xf32>
      %415 = tpu.matmul %412, %414, %cst_316 {dimension_numbers = #tpu.dot_dimension_numbers<[1], [0], [0], [1], [0, 0, 1, 1], [], []>} : vector<2x128xbf16>, vector<128x128xbf16>, vector<2x128xf32> -> vector<2x128xf32>
      %416 = arith.addf %409, %415 : vector<2x128xf32>
      %c1_317 = arith.constant 1 : index
      %c3_318 = arith.constant 3 : index
      %c0_319 = arith.constant 0 : index
      %417 = vector.load %arg9[%c1_317, %c3_318, %c0_319] : memref<5x5x128xf32, #tpu.memory_space<vmem>>, vector<1x2x128xf32>
      %418 = vector.shape_cast %417 : vector<1x2x128xf32> to vector<2x128xf32>
      %419 = arith.truncf %418 : vector<2x128xf32> to vector<2x128xbf16>
      %c7_320 = arith.constant 7 : index
      %c0_321 = arith.constant 0 : index
      %c0_322 = arith.constant 0 : index
      %420 = vector.load %arg5[%c7_320, %c0_321, %c0_322] : memref<16x128x128xbf16, #tpu.memory_space<vmem>>, vector<1x128x128xbf16>
      %421 = vector.shape_cast %420 : vector<1x128x128xbf16> to vector<128x128xbf16>
      %cst_323 = arith.constant dense<0.000000e+00> : vector<2x128xf32>
      %422 = tpu.matmul %419, %421, %cst_323 {dimension_numbers = #tpu.dot_dimension_numbers<[1], [0], [0], [1], [0, 0, 1, 1], [], []>} : vector<2x128xbf16>, vector<128x128xbf16>, vector<2x128xf32> -> vector<2x128xf32>
      %423 = arith.addf %416, %422 : vector<2x128xf32>
      %c2_324 = arith.constant 2 : index
      %c0_325 = arith.constant 0 : index
      %c0_326 = arith.constant 0 : index
      %424 = vector.load %arg9[%c2_324, %c0_325, %c0_326] : memref<5x5x128xf32, #tpu.memory_space<vmem>>, vector<1x2x128xf32>
      %425 = vector.shape_cast %424 : vector<1x2x128xf32> to vector<2x128xf32>
      %426 = arith.truncf %425 : vector<2x128xf32> to vector<2x128xbf16>
      %c8_327 = arith.constant 8 : index
      %c0_328 = arith.constant 0 : index
      %c0_329 = arith.constant 0 : index
      %427 = vector.load %arg5[%c8_327, %c0_328, %c0_329] : memref<16x128x128xbf16, #tpu.memory_space<vmem>>, vector<1x128x128xbf16>
      %428 = vector.shape_cast %427 : vector<1x128x128xbf16> to vector<128x128xbf16>
      %cst_330 = arith.constant dense<0.000000e+00> : vector<2x128xf32>
      %429 = tpu.matmul %426, %428, %cst_330 {dimension_numbers = #tpu.dot_dimension_numbers<[1], [0], [0], [1], [0, 0, 1, 1], [], []>} : vector<2x128xbf16>, vector<128x128xbf16>, vector<2x128xf32> -> vector<2x128xf32>
      %430 = arith.addf %423, %429 : vector<2x128xf32>
      %c2_331 = arith.constant 2 : index
      %c1_332 = arith.constant 1 : index
      %c0_333 = arith.constant 0 : index
      %431 = vector.load %arg9[%c2_331, %c1_332, %c0_333] : memref<5x5x128xf32, #tpu.memory_space<vmem>>, vector<1x2x128xf32>
      %432 = vector.shape_cast %431 : vector<1x2x128xf32> to vector<2x128xf32>
      %433 = arith.truncf %432 : vector<2x128xf32> to vector<2x128xbf16>
      %c9_334 = arith.constant 9 : index
      %c0_335 = arith.constant 0 : index
      %c0_336 = arith.constant 0 : index
      %434 = vector.load %arg5[%c9_334, %c0_335, %c0_336] : memref<16x128x128xbf16, #tpu.memory_space<vmem>>, vector<1x128x128xbf16>
      %435 = vector.shape_cast %434 : vector<1x128x128xbf16> to vector<128x128xbf16>
      %cst_337 = arith.constant dense<0.000000e+00> : vector<2x128xf32>
      %436 = tpu.matmul %433, %435, %cst_337 {dimension_numbers = #tpu.dot_dimension_numbers<[1], [0], [0], [1], [0, 0, 1, 1], [], []>} : vector<2x128xbf16>, vector<128x128xbf16>, vector<2x128xf32> -> vector<2x128xf32>
      %437 = arith.addf %430, %436 : vector<2x128xf32>
      %c2_338 = arith.constant 2 : index
      %c2_339 = arith.constant 2 : index
      %c0_340 = arith.constant 0 : index
      %438 = vector.load %arg9[%c2_338, %c2_339, %c0_340] : memref<5x5x128xf32, #tpu.memory_space<vmem>>, vector<1x2x128xf32>
      %439 = vector.shape_cast %438 : vector<1x2x128xf32> to vector<2x128xf32>
      %440 = arith.truncf %439 : vector<2x128xf32> to vector<2x128xbf16>
      %c10_341 = arith.constant 10 : index
      %c0_342 = arith.constant 0 : index
      %c0_343 = arith.constant 0 : index
      %441 = vector.load %arg5[%c10_341, %c0_342, %c0_343] : memref<16x128x128xbf16, #tpu.memory_space<vmem>>, vector<1x128x128xbf16>
      %442 = vector.shape_cast %441 : vector<1x128x128xbf16> to vector<128x128xbf16>
      %cst_344 = arith.constant dense<0.000000e+00> : vector<2x128xf32>
      %443 = tpu.matmul %440, %442, %cst_344 {dimension_numbers = #tpu.dot_dimension_numbers<[1], [0], [0], [1], [0, 0, 1, 1], [], []>} : vector<2x128xbf16>, vector<128x128xbf16>, vector<2x128xf32> -> vector<2x128xf32>
      %444 = arith.addf %437, %443 : vector<2x128xf32>
      %c2_345 = arith.constant 2 : index
      %c3_346 = arith.constant 3 : index
      %c0_347 = arith.constant 0 : index
      %445 = vector.load %arg9[%c2_345, %c3_346, %c0_347] : memref<5x5x128xf32, #tpu.memory_space<vmem>>, vector<1x2x128xf32>
      %446 = vector.shape_cast %445 : vector<1x2x128xf32> to vector<2x128xf32>
      %447 = arith.truncf %446 : vector<2x128xf32> to vector<2x128xbf16>
      %c11_348 = arith.constant 11 : index
      %c0_349 = arith.constant 0 : index
      %c0_350 = arith.constant 0 : index
      %448 = vector.load %arg5[%c11_348, %c0_349, %c0_350] : memref<16x128x128xbf16, #tpu.memory_space<vmem>>, vector<1x128x128xbf16>
      %449 = vector.shape_cast %448 : vector<1x128x128xbf16> to vector<128x128xbf16>
      %cst_351 = arith.constant dense<0.000000e+00> : vector<2x128xf32>
      %450 = tpu.matmul %447, %449, %cst_351 {dimension_numbers = #tpu.dot_dimension_numbers<[1], [0], [0], [1], [0, 0, 1, 1], [], []>} : vector<2x128xbf16>, vector<128x128xbf16>, vector<2x128xf32> -> vector<2x128xf32>
      %451 = arith.addf %444, %450 : vector<2x128xf32>
      %c3_352 = arith.constant 3 : index
      %c0_353 = arith.constant 0 : index
      %c0_354 = arith.constant 0 : index
      %452 = vector.load %arg9[%c3_352, %c0_353, %c0_354] : memref<5x5x128xf32, #tpu.memory_space<vmem>>, vector<1x2x128xf32>
      %453 = vector.shape_cast %452 : vector<1x2x128xf32> to vector<2x128xf32>
      %454 = arith.truncf %453 : vector<2x128xf32> to vector<2x128xbf16>
      %c12_355 = arith.constant 12 : index
      %c0_356 = arith.constant 0 : index
      %c0_357 = arith.constant 0 : index
      %455 = vector.load %arg5[%c12_355, %c0_356, %c0_357] : memref<16x128x128xbf16, #tpu.memory_space<vmem>>, vector<1x128x128xbf16>
      %456 = vector.shape_cast %455 : vector<1x128x128xbf16> to vector<128x128xbf16>
      %cst_358 = arith.constant dense<0.000000e+00> : vector<2x128xf32>
      %457 = tpu.matmul %454, %456, %cst_358 {dimension_numbers = #tpu.dot_dimension_numbers<[1], [0], [0], [1], [0, 0, 1, 1], [], []>} : vector<2x128xbf16>, vector<128x128xbf16>, vector<2x128xf32> -> vector<2x128xf32>
      %458 = arith.addf %451, %457 : vector<2x128xf32>
      %c3_359 = arith.constant 3 : index
      %c1_360 = arith.constant 1 : index
      %c0_361 = arith.constant 0 : index
      %459 = vector.load %arg9[%c3_359, %c1_360, %c0_361] : memref<5x5x128xf32, #tpu.memory_space<vmem>>, vector<1x2x128xf32>
      %460 = vector.shape_cast %459 : vector<1x2x128xf32> to vector<2x128xf32>
      %461 = arith.truncf %460 : vector<2x128xf32> to vector<2x128xbf16>
      %c13_362 = arith.constant 13 : index
      %c0_363 = arith.constant 0 : index
      %c0_364 = arith.constant 0 : index
      %462 = vector.load %arg5[%c13_362, %c0_363, %c0_364] : memref<16x128x128xbf16, #tpu.memory_space<vmem>>, vector<1x128x128xbf16>
      %463 = vector.shape_cast %462 : vector<1x128x128xbf16> to vector<128x128xbf16>
      %cst_365 = arith.constant dense<0.000000e+00> : vector<2x128xf32>
      %464 = tpu.matmul %461, %463, %cst_365 {dimension_numbers = #tpu.dot_dimension_numbers<[1], [0], [0], [1], [0, 0, 1, 1], [], []>} : vector<2x128xbf16>, vector<128x128xbf16>, vector<2x128xf32> -> vector<2x128xf32>
      %465 = arith.addf %458, %464 : vector<2x128xf32>
      %c3_366 = arith.constant 3 : index
      %c2_367 = arith.constant 2 : index
      %c0_368 = arith.constant 0 : index
      %466 = vector.load %arg9[%c3_366, %c2_367, %c0_368] : memref<5x5x128xf32, #tpu.memory_space<vmem>>, vector<1x2x128xf32>
      %467 = vector.shape_cast %466 : vector<1x2x128xf32> to vector<2x128xf32>
      %468 = arith.truncf %467 : vector<2x128xf32> to vector<2x128xbf16>
      %c14_369 = arith.constant 14 : index
      %c0_370 = arith.constant 0 : index
      %c0_371 = arith.constant 0 : index
      %469 = vector.load %arg5[%c14_369, %c0_370, %c0_371] : memref<16x128x128xbf16, #tpu.memory_space<vmem>>, vector<1x128x128xbf16>
      %470 = vector.shape_cast %469 : vector<1x128x128xbf16> to vector<128x128xbf16>
      %cst_372 = arith.constant dense<0.000000e+00> : vector<2x128xf32>
      %471 = tpu.matmul %468, %470, %cst_372 {dimension_numbers = #tpu.dot_dimension_numbers<[1], [0], [0], [1], [0, 0, 1, 1], [], []>} : vector<2x128xbf16>, vector<128x128xbf16>, vector<2x128xf32> -> vector<2x128xf32>
      %472 = arith.addf %465, %471 : vector<2x128xf32>
      %c3_373 = arith.constant 3 : index
      %c3_374 = arith.constant 3 : index
      %c0_375 = arith.constant 0 : index
      %473 = vector.load %arg9[%c3_373, %c3_374, %c0_375] : memref<5x5x128xf32, #tpu.memory_space<vmem>>, vector<1x2x128xf32>
      %474 = vector.shape_cast %473 : vector<1x2x128xf32> to vector<2x128xf32>
      %475 = arith.truncf %474 : vector<2x128xf32> to vector<2x128xbf16>
      %c15_376 = arith.constant 15 : index
      %c0_377 = arith.constant 0 : index
      %c0_378 = arith.constant 0 : index
      %476 = vector.load %arg5[%c15_376, %c0_377, %c0_378] : memref<16x128x128xbf16, #tpu.memory_space<vmem>>, vector<1x128x128xbf16>
      %477 = vector.shape_cast %476 : vector<1x128x128xbf16> to vector<128x128xbf16>
      %cst_379 = arith.constant dense<0.000000e+00> : vector<2x128xf32>
      %478 = tpu.matmul %475, %477, %cst_379 {dimension_numbers = #tpu.dot_dimension_numbers<[1], [0], [0], [1], [0, 0, 1, 1], [], []>} : vector<2x128xbf16>, vector<128x128xbf16>, vector<2x128xf32> -> vector<2x128xf32>
      %479 = arith.addf %472, %478 : vector<2x128xf32>
      %c0_380 = arith.constant 0 : index
      %c0_381 = arith.constant 0 : index
      %480 = vector.load %arg6[%c0_380, %c0_381] : memref<1x128xf32, #tpu.memory_space<vmem>>, vector<1x128xf32>
      %481 = vector.broadcast %480 : vector<1x128xf32> to vector<2x128xf32>
      %482 = arith.addf %479, %481 : vector<2x128xf32>
      %c0_382 = arith.constant 0 : index
      %c0_383 = arith.constant 0 : index
      %c0_384 = arith.constant 0 : index
      %c0_385 = arith.constant 0 : index
      %483 = vector.load %arg7[%c0_382, %c0_383, %c0_384, %c0_385] : memref<1x2x2x128xf32, #tpu.memory_space<vmem>>, vector<1x1x2x128xf32>
      %484 = vector.shape_cast %483 : vector<1x1x2x128xf32> to vector<2x128xf32>
      %485 = vector.shape_cast %482 : vector<2x128xf32> to vector<1x1x2x128xf32>
      tpu.vector_store %arg7[%c0_382, %c0_383, %c0_384, %c0_385], %485 {strides = array<i32>} : memref<1x2x2x128xf32, #tpu.memory_space<vmem>>, vector<1x1x2x128xf32>,
      %cst_386 = arith.constant 0.000000e+00 : f32
      %486 = vector.broadcast %cst_386 : f32 to vector<2x128xf32>
      %c1_387 = arith.constant 1 : index
      %c0_388 = arith.constant 0 : index
      %c0_389 = arith.constant 0 : index
      %487 = vector.load %arg9[%c1_387, %c0_388, %c0_389] : memref<5x5x128xf32, #tpu.memory_space<vmem>>, vector<1x2x128xf32>
      %488 = vector.shape_cast %487 : vector<1x2x128xf32> to vector<2x128xf32>
      %489 = arith.truncf %488 : vector<2x128xf32> to vector<2x128xbf16>
      %c0_390 = arith.constant 0 : index
      %c0_391 = arith.constant 0 : index
      %c0_392 = arith.constant 0 : index
      %490 = vector.load %arg5[%c0_390, %c0_391, %c0_392] : memref<16x128x128xbf16, #tpu.memory_space<vmem>>, vector<1x128x128xbf16>
      %491 = vector.shape_cast %490 : vector<1x128x128xbf16> to vector<128x128xbf16>
      %cst_393 = arith.constant dense<0.000000e+00> : vector<2x128xf32>
      %492 = tpu.matmul %489, %491, %cst_393 {dimension_numbers = #tpu.dot_dimension_numbers<[1], [0], [0], [1], [0, 0, 1, 1], [], []>} : vector<2x128xbf16>, vector<128x128xbf16>, vector<2x128xf32> -> vector<2x128xf32>
      %493 = arith.addf %486, %492 : vector<2x128xf32>
      %c1_394 = arith.constant 1 : index
      %c1_395 = arith.constant 1 : index
      %c0_396 = arith.constant 0 : index
      %494 = vector.load %arg9[%c1_394, %c1_395, %c0_396] : memref<5x5x128xf32, #tpu.memory_space<vmem>>, vector<1x2x128xf32>
      %495 = vector.shape_cast %494 : vector<1x2x128xf32> to vector<2x128xf32>
      %496 = arith.truncf %495 : vector<2x128xf32> to vector<2x128xbf16>
      %c1_397 = arith.constant 1 : index
      %c0_398 = arith.constant 0 : index
      %c0_399 = arith.constant 0 : index
      %497 = vector.load %arg5[%c1_397, %c0_398, %c0_399] : memref<16x128x128xbf16, #tpu.memory_space<vmem>>, vector<1x128x128xbf16>
      %498 = vector.shape_cast %497 : vector<1x128x128xbf16> to vector<128x128xbf16>
      %cst_400 = arith.constant dense<0.000000e+00> : vector<2x128xf32>
      %499 = tpu.matmul %496, %498, %cst_400 {dimension_numbers = #tpu.dot_dimension_numbers<[1], [0], [0], [1], [0, 0, 1, 1], [], []>} : vector<2x128xbf16>, vector<128x128xbf16>, vector<2x128xf32> -> vector<2x128xf32>
      %500 = arith.addf %493, %499 : vector<2x128xf32>
      %c1_401 = arith.constant 1 : index
      %c2_402 = arith.constant 2 : index
      %c0_403 = arith.constant 0 : index
      %501 = vector.load %arg9[%c1_401, %c2_402, %c0_403] : memref<5x5x128xf32, #tpu.memory_space<vmem>>, vector<1x2x128xf32>
      %502 = vector.shape_cast %501 : vector<1x2x128xf32> to vector<2x128xf32>
      %503 = arith.truncf %502 : vector<2x128xf32> to vector<2x128xbf16>
      %c2_404 = arith.constant 2 : index
      %c0_405 = arith.constant 0 : index
      %c0_406 = arith.constant 0 : index
      %504 = vector.load %arg5[%c2_404, %c0_405, %c0_406] : memref<16x128x128xbf16, #tpu.memory_space<vmem>>, vector<1x128x128xbf16>
      %505 = vector.shape_cast %504 : vector<1x128x128xbf16> to vector<128x128xbf16>
      %cst_407 = arith.constant dense<0.000000e+00> : vector<2x128xf32>
      %506 = tpu.matmul %503, %505, %cst_407 {dimension_numbers = #tpu.dot_dimension_numbers<[1], [0], [0], [1], [0, 0, 1, 1], [], []>} : vector<2x128xbf16>, vector<128x128xbf16>, vector<2x128xf32> -> vector<2x128xf32>
      %507 = arith.addf %500, %506 : vector<2x128xf32>
      %c1_408 = arith.constant 1 : index
      %c3_409 = arith.constant 3 : index
      %c0_410 = arith.constant 0 : index
      %508 = vector.load %arg9[%c1_408, %c3_409, %c0_410] : memref<5x5x128xf32, #tpu.memory_space<vmem>>, vector<1x2x128xf32>
      %509 = vector.shape_cast %508 : vector<1x2x128xf32> to vector<2x128xf32>
      %510 = arith.truncf %509 : vector<2x128xf32> to vector<2x128xbf16>
      %c3_411 = arith.constant 3 : index
      %c0_412 = arith.constant 0 : index
      %c0_413 = arith.constant 0 : index
      %511 = vector.load %arg5[%c3_411, %c0_412, %c0_413] : memref<16x128x128xbf16, #tpu.memory_space<vmem>>, vector<1x128x128xbf16>
      %512 = vector.shape_cast %511 : vector<1x128x128xbf16> to vector<128x128xbf16>
      %cst_414 = arith.constant dense<0.000000e+00> : vector<2x128xf32>
      %513 = tpu.matmul %510, %512, %cst_414 {dimension_numbers = #tpu.dot_dimension_numbers<[1], [0], [0], [1], [0, 0, 1, 1], [], []>} : vector<2x128xbf16>, vector<128x128xbf16>, vector<2x128xf32> -> vector<2x128xf32>
      %514 = arith.addf %507, %513 : vector<2x128xf32>
      %c2_415 = arith.constant 2 : index
      %c0_416 = arith.constant 0 : index
      %c0_417 = arith.constant 0 : index
      %515 = vector.load %arg9[%c2_415, %c0_416, %c0_417] : memref<5x5x128xf32, #tpu.memory_space<vmem>>, vector<1x2x128xf32>
      %516 = vector.shape_cast %515 : vector<1x2x128xf32> to vector<2x128xf32>
      %517 = arith.truncf %516 : vector<2x128xf32> to vector<2x128xbf16>
      %c4_418 = arith.constant 4 : index
      %c0_419 = arith.constant 0 : index
      %c0_420 = arith.constant 0 : index
      %518 = vector.load %arg5[%c4_418, %c0_419, %c0_420] : memref<16x128x128xbf16, #tpu.memory_space<vmem>>, vector<1x128x128xbf16>
      %519 = vector.shape_cast %518 : vector<1x128x128xbf16> to vector<128x128xbf16>
      %cst_421 = arith.constant dense<0.000000e+00> : vector<2x128xf32>
      %520 = tpu.matmul %517, %519, %cst_421 {dimension_numbers = #tpu.dot_dimension_numbers<[1], [0], [0], [1], [0, 0, 1, 1], [], []>} : vector<2x128xbf16>, vector<128x128xbf16>, vector<2x128xf32> -> vector<2x128xf32>
      %521 = arith.addf %514, %520 : vector<2x128xf32>
      %c2_422 = arith.constant 2 : index
      %c1_423 = arith.constant 1 : index
      %c0_424 = arith.constant 0 : index
      %522 = vector.load %arg9[%c2_422, %c1_423, %c0_424] : memref<5x5x128xf32, #tpu.memory_space<vmem>>, vector<1x2x128xf32>
      %523 = vector.shape_cast %522 : vector<1x2x128xf32> to vector<2x128xf32>
      %524 = arith.truncf %523 : vector<2x128xf32> to vector<2x128xbf16>
      %c5_425 = arith.constant 5 : index
      %c0_426 = arith.constant 0 : index
      %c0_427 = arith.constant 0 : index
      %525 = vector.load %arg5[%c5_425, %c0_426, %c0_427] : memref<16x128x128xbf16, #tpu.memory_space<vmem>>, vector<1x128x128xbf16>
      %526 = vector.shape_cast %525 : vector<1x128x128xbf16> to vector<128x128xbf16>
      %cst_428 = arith.constant dense<0.000000e+00> : vector<2x128xf32>
      %527 = tpu.matmul %524, %526, %cst_428 {dimension_numbers = #tpu.dot_dimension_numbers<[1], [0], [0], [1], [0, 0, 1, 1], [], []>} : vector<2x128xbf16>, vector<128x128xbf16>, vector<2x128xf32> -> vector<2x128xf32>
      %528 = arith.addf %521, %527 : vector<2x128xf32>
      %c2_429 = arith.constant 2 : index
      %c2_430 = arith.constant 2 : index
      %c0_431 = arith.constant 0 : index
      %529 = vector.load %arg9[%c2_429, %c2_430, %c0_431] : memref<5x5x128xf32, #tpu.memory_space<vmem>>, vector<1x2x128xf32>
      %530 = vector.shape_cast %529 : vector<1x2x128xf32> to vector<2x128xf32>
      %531 = arith.truncf %530 : vector<2x128xf32> to vector<2x128xbf16>
      %c6_432 = arith.constant 6 : index
      %c0_433 = arith.constant 0 : index
      %c0_434 = arith.constant 0 : index
      %532 = vector.load %arg5[%c6_432, %c0_433, %c0_434] : memref<16x128x128xbf16, #tpu.memory_space<vmem>>, vector<1x128x128xbf16>
      %533 = vector.shape_cast %532 : vector<1x128x128xbf16> to vector<128x128xbf16>
      %cst_435 = arith.constant dense<0.000000e+00> : vector<2x128xf32>
      %534 = tpu.matmul %531, %533, %cst_435 {dimension_numbers = #tpu.dot_dimension_numbers<[1], [0], [0], [1], [0, 0, 1, 1], [], []>} : vector<2x128xbf16>, vector<128x128xbf16>, vector<2x128xf32> -> vector<2x128xf32>
      %535 = arith.addf %528, %534 : vector<2x128xf32>
      %c2_436 = arith.constant 2 : index
      %c3_437 = arith.constant 3 : index
      %c0_438 = arith.constant 0 : index
      %536 = vector.load %arg9[%c2_436, %c3_437, %c0_438] : memref<5x5x128xf32, #tpu.memory_space<vmem>>, vector<1x2x128xf32>
      %537 = vector.shape_cast %536 : vector<1x2x128xf32> to vector<2x128xf32>
      %538 = arith.truncf %537 : vector<2x128xf32> to vector<2x128xbf16>
      %c7_439 = arith.constant 7 : index
      %c0_440 = arith.constant 0 : index
      %c0_441 = arith.constant 0 : index
      %539 = vector.load %arg5[%c7_439, %c0_440, %c0_441] : memref<16x128x128xbf16, #tpu.memory_space<vmem>>, vector<1x128x128xbf16>
      %540 = vector.shape_cast %539 : vector<1x128x128xbf16> to vector<128x128xbf16>
      %cst_442 = arith.constant dense<0.000000e+00> : vector<2x128xf32>
      %541 = tpu.matmul %538, %540, %cst_442 {dimension_numbers = #tpu.dot_dimension_numbers<[1], [0], [0], [1], [0, 0, 1, 1], [], []>} : vector<2x128xbf16>, vector<128x128xbf16>, vector<2x128xf32> -> vector<2x128xf32>
      %542 = arith.addf %535, %541 : vector<2x128xf32>
      %c3_443 = arith.constant 3 : index
      %c0_444 = arith.constant 0 : index
      %c0_445 = arith.constant 0 : index
      %543 = vector.load %arg9[%c3_443, %c0_444, %c0_445] : memref<5x5x128xf32, #tpu.memory_space<vmem>>, vector<1x2x128xf32>
      %544 = vector.shape_cast %543 : vector<1x2x128xf32> to vector<2x128xf32>
      %545 = arith.truncf %544 : vector<2x128xf32> to vector<2x128xbf16>
      %c8_446 = arith.constant 8 : index
      %c0_447 = arith.constant 0 : index
      %c0_448 = arith.constant 0 : index
      %546 = vector.load %arg5[%c8_446, %c0_447, %c0_448] : memref<16x128x128xbf16, #tpu.memory_space<vmem>>, vector<1x128x128xbf16>
      %547 = vector.shape_cast %546 : vector<1x128x128xbf16> to vector<128x128xbf16>
      %cst_449 = arith.constant dense<0.000000e+00> : vector<2x128xf32>
      %548 = tpu.matmul %545, %547, %cst_449 {dimension_numbers = #tpu.dot_dimension_numbers<[1], [0], [0], [1], [0, 0, 1, 1], [], []>} : vector<2x128xbf16>, vector<128x128xbf16>, vector<2x128xf32> -> vector<2x128xf32>
      %549 = arith.addf %542, %548 : vector<2x128xf32>
      %c3_450 = arith.constant 3 : index
      %c1_451 = arith.constant 1 : index
      %c0_452 = arith.constant 0 : index
      %550 = vector.load %arg9[%c3_450, %c1_451, %c0_452] : memref<5x5x128xf32, #tpu.memory_space<vmem>>, vector<1x2x128xf32>
      %551 = vector.shape_cast %550 : vector<1x2x128xf32> to vector<2x128xf32>
      %552 = arith.truncf %551 : vector<2x128xf32> to vector<2x128xbf16>
      %c9_453 = arith.constant 9 : index
      %c0_454 = arith.constant 0 : index
      %c0_455 = arith.constant 0 : index
      %553 = vector.load %arg5[%c9_453, %c0_454, %c0_455] : memref<16x128x128xbf16, #tpu.memory_space<vmem>>, vector<1x128x128xbf16>
      %554 = vector.shape_cast %553 : vector<1x128x128xbf16> to vector<128x128xbf16>
      %cst_456 = arith.constant dense<0.000000e+00> : vector<2x128xf32>
      %555 = tpu.matmul %552, %554, %cst_456 {dimension_numbers = #tpu.dot_dimension_numbers<[1], [0], [0], [1], [0, 0, 1, 1], [], []>} : vector<2x128xbf16>, vector<128x128xbf16>, vector<2x128xf32> -> vector<2x128xf32>
      %556 = arith.addf %549, %555 : vector<2x128xf32>
      %c3_457 = arith.constant 3 : index
      %c2_458 = arith.constant 2 : index
      %c0_459 = arith.constant 0 : index
      %557 = vector.load %arg9[%c3_457, %c2_458, %c0_459] : memref<5x5x128xf32, #tpu.memory_space<vmem>>, vector<1x2x128xf32>
      %558 = vector.shape_cast %557 : vector<1x2x128xf32> to vector<2x128xf32>
      %559 = arith.truncf %558 : vector<2x128xf32> to vector<2x128xbf16>
      %c10_460 = arith.constant 10 : index
      %c0_461 = arith.constant 0 : index
      %c0_462 = arith.constant 0 : index
      %560 = vector.load %arg5[%c10_460, %c0_461, %c0_462] : memref<16x128x128xbf16, #tpu.memory_space<vmem>>, vector<1x128x128xbf16>
      %561 = vector.shape_cast %560 : vector<1x128x128xbf16> to vector<128x128xbf16>
      %cst_463 = arith.constant dense<0.000000e+00> : vector<2x128xf32>
      %562 = tpu.matmul %559, %561, %cst_463 {dimension_numbers = #tpu.dot_dimension_numbers<[1], [0], [0], [1], [0, 0, 1, 1], [], []>} : vector<2x128xbf16>, vector<128x128xbf16>, vector<2x128xf32> -> vector<2x128xf32>
      %563 = arith.addf %556, %562 : vector<2x128xf32>
      %c3_464 = arith.constant 3 : index
      %c3_465 = arith.constant 3 : index
      %c0_466 = arith.constant 0 : index
      %564 = vector.load %arg9[%c3_464, %c3_465, %c0_466] : memref<5x5x128xf32, #tpu.memory_space<vmem>>, vector<1x2x128xf32>
      %565 = vector.shape_cast %564 : vector<1x2x128xf32> to vector<2x128xf32>
      %566 = arith.truncf %565 : vector<2x128xf32> to vector<2x128xbf16>
      %c11_467 = arith.constant 11 : index
      %c0_468 = arith.constant 0 : index
      %c0_469 = arith.constant 0 : index
      %567 = vector.load %arg5[%c11_467, %c0_468, %c0_469] : memref<16x128x128xbf16, #tpu.memory_space<vmem>>, vector<1x128x128xbf16>
      %568 = vector.shape_cast %567 : vector<1x128x128xbf16> to vector<128x128xbf16>
      %cst_470 = arith.constant dense<0.000000e+00> : vector<2x128xf32>
      %569 = tpu.matmul %566, %568, %cst_470 {dimension_numbers = #tpu.dot_dimension_numbers<[1], [0], [0], [1], [0, 0, 1, 1], [], []>} : vector<2x128xbf16>, vector<128x128xbf16>, vector<2x128xf32> -> vector<2x128xf32>
      %570 = arith.addf %563, %569 : vector<2x128xf32>
      %c4_471 = arith.constant 4 : index
      %c0_472 = arith.constant 0 : index
      %c0_473 = arith.constant 0 : index
      %571 = vector.load %arg9[%c4_471, %c0_472, %c0_473] : memref<5x5x128xf32, #tpu.memory_space<vmem>>, vector<1x2x128xf32>
      %572 = vector.shape_cast %571 : vector<1x2x128xf32> to vector<2x128xf32>
      %573 = arith.truncf %572 : vector<2x128xf32> to vector<2x128xbf16>
      %c12_474 = arith.constant 12 : index
      %c0_475 = arith.constant 0 : index
      %c0_476 = arith.constant 0 : index
      %574 = vector.load %arg5[%c12_474, %c0_475, %c0_476] : memref<16x128x128xbf16, #tpu.memory_space<vmem>>, vector<1x128x128xbf16>
      %575 = vector.shape_cast %574 : vector<1x128x128xbf16> to vector<128x128xbf16>
      %cst_477 = arith.constant dense<0.000000e+00> : vector<2x128xf32>
      %576 = tpu.matmul %573, %575, %cst_477 {dimension_numbers = #tpu.dot_dimension_numbers<[1], [0], [0], [1], [0, 0, 1, 1], [], []>} : vector<2x128xbf16>, vector<128x128xbf16>, vector<2x128xf32> -> vector<2x128xf32>
      %577 = arith.addf %570, %576 : vector<2x128xf32>
      %c4_478 = arith.constant 4 : index
      %c1_479 = arith.constant 1 : index
      %c0_480 = arith.constant 0 : index
      %578 = vector.load %arg9[%c4_478, %c1_479, %c0_480] : memref<5x5x128xf32, #tpu.memory_space<vmem>>, vector<1x2x128xf32>
      %579 = vector.shape_cast %578 : vector<1x2x128xf32> to vector<2x128xf32>
      %580 = arith.truncf %579 : vector<2x128xf32> to vector<2x128xbf16>
      %c13_481 = arith.constant 13 : index
      %c0_482 = arith.constant 0 : index
      %c0_483 = arith.constant 0 : index
      %581 = vector.load %arg5[%c13_481, %c0_482, %c0_483] : memref<16x128x128xbf16, #tpu.memory_space<vmem>>, vector<1x128x128xbf16>
      %582 = vector.shape_cast %581 : vector<1x128x128xbf16> to vector<128x128xbf16>
      %cst_484 = arith.constant dense<0.000000e+00> : vector<2x128xf32>
      %583 = tpu.matmul %580, %582, %cst_484 {dimension_numbers = #tpu.dot_dimension_numbers<[1], [0], [0], [1], [0, 0, 1, 1], [], []>} : vector<2x128xbf16>, vector<128x128xbf16>, vector<2x128xf32> -> vector<2x128xf32>
      %584 = arith.addf %577, %583 : vector<2x128xf32>
      %c4_485 = arith.constant 4 : index
      %c2_486 = arith.constant 2 : index
      %c0_487 = arith.constant 0 : index
      %585 = vector.load %arg9[%c4_485, %c2_486, %c0_487] : memref<5x5x128xf32, #tpu.memory_space<vmem>>, vector<1x2x128xf32>
      %586 = vector.shape_cast %585 : vector<1x2x128xf32> to vector<2x128xf32>
      %587 = arith.truncf %586 : vector<2x128xf32> to vector<2x128xbf16>
      %c14_488 = arith.constant 14 : index
      %c0_489 = arith.constant 0 : index
      %c0_490 = arith.constant 0 : index
      %588 = vector.load %arg5[%c14_488, %c0_489, %c0_490] : memref<16x128x128xbf16, #tpu.memory_space<vmem>>, vector<1x128x128xbf16>
      %589 = vector.shape_cast %588 : vector<1x128x128xbf16> to vector<128x128xbf16>
      %cst_491 = arith.constant dense<0.000000e+00> : vector<2x128xf32>
      %590 = tpu.matmul %587, %589, %cst_491 {dimension_numbers = #tpu.dot_dimension_numbers<[1], [0], [0], [1], [0, 0, 1, 1], [], []>} : vector<2x128xbf16>, vector<128x128xbf16>, vector<2x128xf32> -> vector<2x128xf32>
      %591 = arith.addf %584, %590 : vector<2x128xf32>
      %c4_492 = arith.constant 4 : index
      %c3_493 = arith.constant 3 : index
      %c0_494 = arith.constant 0 : index
      %592 = vector.load %arg9[%c4_492, %c3_493, %c0_494] : memref<5x5x128xf32, #tpu.memory_space<vmem>>, vector<1x2x128xf32>
      %593 = vector.shape_cast %592 : vector<1x2x128xf32> to vector<2x128xf32>
      %594 = arith.truncf %593 : vector<2x128xf32> to vector<2x128xbf16>
      %c15_495 = arith.constant 15 : index
      %c0_496 = arith.constant 0 : index
      %c0_497 = arith.constant 0 : index
      %595 = vector.load %arg5[%c15_495, %c0_496, %c0_497] : memref<16x128x128xbf16, #tpu.memory_space<vmem>>, vector<1x128x128xbf16>
      %596 = vector.shape_cast %595 : vector<1x128x128xbf16> to vector<128x128xbf16>
      %cst_498 = arith.constant dense<0.000000e+00> : vector<2x128xf32>
      %597 = tpu.matmul %594, %596, %cst_498 {dimension_numbers = #tpu.dot_dimension_numbers<[1], [0], [0], [1], [0, 0, 1, 1], [], []>} : vector<2x128xbf16>, vector<128x128xbf16>, vector<2x128xf32> -> vector<2x128xf32>
      %598 = arith.addf %591, %597 : vector<2x128xf32>
      %c0_499 = arith.constant 0 : index
      %c0_500 = arith.constant 0 : index
      %599 = vector.load %arg6[%c0_499, %c0_500] : memref<1x128xf32, #tpu.memory_space<vmem>>, vector<1x128xf32>
      %600 = vector.broadcast %599 : vector<1x128xf32> to vector<2x128xf32>
      %601 = arith.addf %598, %600 : vector<2x128xf32>
      %c0_501 = arith.constant 0 : index
      %c1_502 = arith.constant 1 : index
      %c0_503 = arith.constant 0 : index
      %c0_504 = arith.constant 0 : index
      %602 = vector.load %arg7[%c0_501, %c1_502, %c0_503, %c0_504] : memref<1x2x2x128xf32, #tpu.memory_space<vmem>>, vector<1x1x2x128xf32>
      %603 = vector.shape_cast %602 : vector<1x1x2x128xf32> to vector<2x128xf32>
      %604 = vector.shape_cast %601 : vector<2x128xf32> to vector<1x1x2x128xf32>
      tpu.vector_store %arg7[%c0_501, %c1_502, %c0_503, %c0_504], %604 {strides = array<i32>} : memref<1x2x2x128xf32, #tpu.memory_space<vmem>>, vector<1x1x2x128xf32>,
    } else {
    }
    return
  }
  func.func @transform_0(%arg0: i32, %arg1: i32) -> (i32, i32, i32, i32) {
    %c0_i32 = arith.constant 0 : i32
    %c0_i32_0 = arith.constant 0 : i32
    %c0_i32_1 = arith.constant 0 : i32
    %c0_i32_2 = arith.constant 0 : i32
    return %arg0, %c0_i32, %c0_i32_0, %c0_i32_1 : i32, i32, i32, i32
  }
  func.func @transform_1(%arg0: i32, %arg1: i32) -> (i32, i32, i32) {
    %c0_i32 = arith.constant 0 : i32
    %c0_i32_0 = arith.constant 0 : i32
    %c0_i32_1 = arith.constant 0 : i32
    %c0_i32_2 = arith.constant 0 : i32
    return %c0_i32, %c0_i32_0, %c0_i32_1 : i32, i32, i32
  }
  func.func @transform_2(%arg0: i32, %arg1: i32) -> (i32, i32) {
    %c0_i32 = arith.constant 0 : i32
    %c0_i32_0 = arith.constant 0 : i32
    %c0_i32_1 = arith.constant 0 : i32
    return %c0_i32, %c0_i32_0 : i32, i32
  }
  func.func @transform_3(%arg0: i32, %arg1: i32) -> (i32, i32, i32) {
    %c0_i32 = arith.constant 0 : i32
    %c0_i32_0 = arith.constant 0 : i32
    %c0_i32_1 = arith.constant 0 : i32
    %c0_i32_2 = arith.constant 0 : i32
    return %c0_i32, %c0_i32_0, %c0_i32_1 : i32, i32, i32
  }
  func.func @transform_4(%arg0: i32, %arg1: i32) -> (i32, i32) {
    %c0_i32 = arith.constant 0 : i32
    %c0_i32_0 = arith.constant 0 : i32
    %c0_i32_1 = arith.constant 0 : i32
    return %c0_i32, %c0_i32_0 : i32, i32
  }
  func.func @transform_5(%arg0: i32, %arg1: i32) -> (i32, i32, i32, i32) {
    %c0_i32 = arith.constant 0 : i32
    %c0_i32_0 = arith.constant 0 : i32
    %c0_i32_1 = arith.constant 0 : i32
    %c0_i32_2 = arith.constant 0 : i32
    return %arg0, %c0_i32, %c0_i32_0, %c0_i32_1 : i32, i32, i32, i32
  }
}

</mosaic_0001>

<llo_original>
// kernel: discriminator_forward.4
$region0: #{discriminator_forward.4}
  #allocation0 [shape = 'u32[]', space=smem, size = 0x4, offset = 0x4, fixed_abs, tag = 'smem constant byte address 0x4 - core index']
  #allocation1 [shape = 'u32[72,128]{1,0:T(1,128)}', space=vmem, size = 0x9000, scoped, tag = 'internal scratch']
  #allocation2 [shape = 'f32[16,16,128]{2,1,0:T(8,128)}', space=vmem, size = 0x20000, scoped, tag = 'scratch operand']
  %s0 = inlined_call_operand.vmem [shape: bf16[2,17,17,12], index: 0, kind: input, shape index: {}]
  %s1 = inlined_call_operand.vmem [shape: bf16[4,12,128], index: 1, kind: input, shape index: {}]
  %s2 = inlined_call_operand.vmem [shape: f32[1,128], index: 2, kind: input, shape index: {}]
  %s3 = inlined_call_operand.vmem [shape: bf16[2,16,16,128], index: 3, kind: output, shape index: {}]
  %s4 = sld [smem:[#allocation0]]
  $region49: #{discriminator_forward.4} parent=0
    _
  %s6 = ssub.s32 1, %s4
  %s7 = scalar_select 0, %s6, %s4
  loop: start=0, step=1, limit=6
  $region2: #{discriminator_forward.4} parent=0 // loop_pre_header
    _
  $region3: #{discriminator_forward.4} parent=0 // loop_header
    %s9 = sphi 0, %s13
    %p10 = scmp.ge.s32.totalorder %s9, 6
    %s16 = sphi 0, %s28
    %s17 = sphi 0, %s24
    %s18 = sphi 0, %s16
    %s19 = sphi 0, %s17
    %s20 = sphi 0, %s18
    %s21 = sphi 0, %s19
    %s31 = sphi 0, %s33
    %s34 = sphi 0, %s31
    %s35 = sphi 0, %s34
    %s51 = sphi 0, %s35
    %s55 = sphi 0, %s55
    %s57 = sphi 0, %s55
    %s58 = sphi 0, %s57
    %s72 = sphi 0, %s58
    %s76 = sphi 0, %s76
    %s78 = sphi 0, %s76
    %s79 = sphi 0, %s78
    %s93 = sphi 0, %s79
    %s99 = sphi 0, %s101
    %s102 = sphi 0, %s99
    %s103 = sphi 0, %s102
    %s119 = sphi 0, %s103
  $region4: #{discriminator_forward.4} parent=0 // loop_header_branch
    %12 = sbr.rel (%p10) target = $region8
  $region5: #{discriminator_forward.4} parent=0 // loop_body
    %s14 = ssub.s32 %s9, 1
    %s15 = ssub.s32 %s9, 2
    %s22 = sadd.s32 1, %s17
    %p23 = scmp.ge.s32.totalorder %s22, 2
    %s24 = scalar_select %p23, 0, %s22
    %s25 = sadd.s32 1, %s16
    %s26 = scalar_select %p23, %s25, %s16
    %p27 = scmp.ge.s32.totalorder %s26, 2
    %s28 = scalar_select %p27, 0, %s26
    %s29 = ssub.s32 %s16, %s28
    %p30 = scmp.eq.s32.totalorder %s29, 0
    %s32 = sadd.s32 %s31, 1
    %s33 = scalar_select %p30, %s31, %s32
    %p36 = pneg %p30
    %p37 = scmp.eq.s32.totalorder %s9, 3
    %p38 = por %p36, %p37
    %p39 = scmp.ne.s32.totalorder %s31, %s34
    %p40 = scmp.eq.s32.totalorder %s9, 0
    %p41 = por %p39, %p40
    %p42 = scmp.ne.s32.totalorder %s31, %s34
    %p43 = scmp.eq.s32.totalorder %s14, 3
    %p44 = por %p42, %p43
    %p45 = scmp.ne.s32.totalorder %s34, %s35
    %p46 = scmp.eq.s32.totalorder %s14, 0
    %p47 = por %p45, %p46
    %p48 = scmp.ne.s32.totalorder %s34, %s35
    %p49 = scmp.eq.s32.totalorder %s15, 3
    %p50 = por %p48, %p49
    %p52 = scmp.ne.s32.totalorder %s35, %s51
    %p53 = scmp.eq.s32.totalorder %s15, 0
    %p54 = por %p52, %p53
    %s56 = sadd.s32 %s55, 1
    %p59 = scmp.eq.s32.totalorder %s9, 3
    %p60 = scmp.ne.s32.totalorder %s55, %s57
    %p61 = scmp.eq.s32.totalorder %s9, 0
    %p62 = por %p60, %p61
    %p63 = scmp.ne.s32.totalorder %s55, %s57
    %p64 = scmp.eq.s32.totalorder %s14, 3
    %p65 = por %p63, %p64
    %p66 = scmp.ne.s32.totalorder %s57, %s58
    %p67 = scmp.eq.s32.totalorder %s14, 0
    %p68 = por %p66, %p67
    %p69 = scmp.ne.s32.totalorder %s57, %s58
    %p70 = scmp.eq.s32.totalorder %s15, 3
    %p71 = por %p69, %p70
    %p73 = scmp.ne.s32.totalorder %s58, %s72
    %p74 = scmp.eq.s32.totalorder %s15, 0
    %p75 = por %p73, %p74
    %s77 = sadd.s32 %s76, 1
    %p80 = scmp.eq.s32.totalorder %s9, 3
    %p81 = scmp.ne.s32.totalorder %s76, %s78
    %p82 = scmp.eq.s32.totalorder %s9, 0
    %p83 = por %p81, %p82
    %p84 = scmp.ne.s32.totalorder %s76, %s78
    %p85 = scmp.eq.s32.totalorder %s14, 3
    %p86 = por %p84, %p85
    %p87 = scmp.ne.s32.totalorder %s78, %s79
    %p88 = scmp.eq.s32.totalorder %s14, 0
    %p89 = por %p87, %p88
    %p90 = scmp.ne.s32.totalorder %s78, %s79
    %p91 = scmp.eq.s32.totalorder %s15, 3
    %p92 = por %p90, %p91
    %p94 = scmp.ne.s32.totalorder %s79, %s93
    %p95 = scmp.eq.s32.totalorder %s15, 0
    %p96 = por %p94, %p95
    %s97 = ssub.s32 %s16, %s28
    %p98 = scmp.eq.s32.totalorder %s97, 0
    %s100 = sadd.s32 %s99, 1
    %s101 = scalar_select %p98, %s99, %s100
    %p104 = pneg %p98
    %p105 = scmp.eq.s32.totalorder %s9, 3
    %p106 = por %p104, %p105
    %p107 = scmp.ne.s32.totalorder %s99, %s102
    %p108 = scmp.eq.s32.totalorder %s9, 0
    %p109 = por %p107, %p108
    %p110 = scmp.ne.s32.totalorder %s99, %s102
    %p111 = scmp.eq.s32.totalorder %s14, 3
    %p112 = por %p110, %p111
    %p113 = scmp.ne.s32.totalorder %s102, %s103
    %p114 = scmp.eq.s32.totalorder %s14, 0
    %p115 = por %p113, %p114
    %p116 = scmp.ne.s32.totalorder %s102, %s103
    %p117 = scmp.eq.s32.totalorder %s15, 3
    %p118 = por %p116, %p117
    %p120 = scmp.ne.s32.totalorder %s103, %s119
    %p121 = scmp.eq.s32.totalorder %s15, 0
    %p122 = por %p120, %p121
    %p123 = scmp.le.s32.totalorder 1, %s9
    %p124 = scmp.lt.s32.totalorder %s9, 5
    %p125 = pnand %p123, %p124
    %p126 = pneg %p125
    // Predicated region
    $region9: #{discriminator_forward.4} parent=5 // pred_check
      _
    $region10: #{discriminator_forward.4} parent=5 // pred_check_branch
      %128 = sbr.rel (%p125) target = $region12
    $region11: #{discriminator_forward.4} parent=5 // pred_region
      %s129 = ssub.s32 %s9, 1
      // Predicated region
      $region13: #{discriminator_forward.4} parent=11 // pred_check
        %p130 = pneg %p68
      $region14: #{discriminator_forward.4} parent=11 // pred_check_branch
        %132 = sbr.rel (%p130) target = $region16
      $region15: #{discriminator_forward.4} parent=11 // pred_region
        _
      $region16: #{discriminator_forward.4} parent=11 // pred_fallthru
        _
      // Predicated region
      $region17: #{discriminator_forward.4} parent=11 // pred_check
        %p133 = pneg %p89
      $region18: #{discriminator_forward.4} parent=11 // pred_check_branch
        %135 = sbr.rel (%p133) target = $region20
      $region19: #{discriminator_forward.4} parent=11 // pred_region
        _
      $region20: #{discriminator_forward.4} parent=11 // pred_fallthru
        _
    $region12: #{discriminator_forward.4} parent=5 // pred_fallthru
      _
    %p136 = scmp.lt.s32.totalorder %s9, 4
    // Predicated region
    $region21: #{discriminator_forward.4} parent=5 // pred_check
      %p137 = pneg %p136
    $region22: #{discriminator_forward.4} parent=5 // pred_check_branch
      %139 = sbr.rel (%p137) target = $region24
    $region23: #{discriminator_forward.4} parent=5 // pred_region
      // Predicated region
      $region25: #{discriminator_forward.4} parent=23 // pred_check
        %p140 = pneg %p41
      $region26: #{discriminator_forward.4} parent=23 // pred_check_branch
        %142 = sbr.rel (%p140) target = $region28
      $region27: #{discriminator_forward.4} parent=23 // pred_region
        %p143 = scmp.lt.s32.totalorder %s16, 1
        %s144 = scalar_select %p143, %s16, 1
        %s145 = smul.addr %s144, 51
        %s146 = smul.addr %s145, 4
        %s147 = scalar_lea.vmem %s0, %s146
      $region28: #{discriminator_forward.4} parent=23 // pred_fallthru
        _
    $region24: #{discriminator_forward.4} parent=5 // pred_fallthru
      _
    %p148 = scmp.le.s32.totalorder 1, %s9
    %p149 = scmp.lt.s32.totalorder %s9, 5
    %p150 = pnand %p148, %p149
    %p151 = pneg %p150
    // Predicated region
    $region29: #{discriminator_forward.4} parent=5 // pred_check
      _
    $region30: #{discriminator_forward.4} parent=5 // pred_check_branch
      %153 = sbr.rel (%p150) target = $region32
    $region31: #{discriminator_forward.4} parent=5 // pred_region
      %s154 = ssub.s32 %s9, 1
      %p155 = scmp.lt.s32.totalorder %s18, 1
      %s156 = scalar_select %p155, %s18, 1
      %s157 = smul.addr %s156, 51
      %s158 = smul.addr %s157, 4
      %s159 = scalar_lea.vmem %s0, %s158
      %p160 = pneg %p47
      %p161 = pneg %p44
      %p162 = pneg %p68
      %p163 = pneg %p65
      %p164 = pneg %p89
      %p165 = pneg %p86
      %p166 = pneg %p115
      %p167 = pneg %p112
      %p168 = scmp.lt.s32.totalorder %s18, 1
      %s169 = scalar_select %p168, %s18, 1
      %s170 = smul.addr %s169, 32
      %s171 = smul.addr %s170, 4
      %s172 = scalar_lea.vmem %s3, %s171
      %p173 = scmp.lt.s32.totalorder %s18, 1
      %s174 = scalar_select %p173, %s18, 1
      %s175 = smul.addr %s174, 51
      %s176 = smul.addr %s175, 4
      %s177 = scalar_lea.vmem %s0, %s176
      %p178 = scmp.lt.s32.totalorder %s18, 1
      %s179 = scalar_select %p178, %s18, 1
      %s180 = smul.addr %s179, 32
      %s181 = smul.addr %s180, 4
      %s182 = scalar_lea.vmem %s3, %s181
      %s184 = smul.u32 %s19, 8
      %s185 = smul.u32 %s184, 3
      %s186 = smul.addr %s185, 4
      %s187 = scalar_lea.vmem %s177, %s186
      %v188 = vld [vmem:[%s187] sm:$0xf]
      %v189 = vld [vmem:[%s187 + $0x4] sm:$0xf]
      %v190 = vld [vmem:[%s187 + $0xc] sm:$0xf]
      %v191 = vld [vmem:[%s187 + $0x10] sm:$0xf]
      %v192 = vld [vmem:[%s187 + $0x18] sm:$0xf]
      %v193 = vld [vmem:[%s187 + $0x1c] sm:$0xf]
      %v194 = vld [vmem:[%s187 + $0x24] sm:$0xf]
      %v195 = vld [vmem:[%s187 + $0x28] sm:$0xf]
      %v196 = vld [vmem:[%s187 + $0x30] sm:$0xf]
      %v197 = vld [vmem:[%s187 + $0x34] sm:$0xf]
      %v198 = vld [vmem:[%s187 + $0x3c] sm:$0xf]
      %v199 = vld [vmem:[%s187 + $0x40] sm:$0xf]
      %v200 = vld [vmem:[%s187 + $0x48] sm:$0xf]
      %v201 = vld [vmem:[%s187 + $0x4c] sm:$0xf]
      %v202 = vld [vmem:[%s187 + $0x54] sm:$0xf]
      %v203 = vld [vmem:[%s187 + $0x58] sm:$0xf]
      %v204 = vld [vmem:[%s1] sm:$0xf]
      %v205 = vld [vmem:[%s1 + $0x4] sm:$0x3]
      %v206 = vld [vmem:[%s187 + $0x8] sm:$0x1]
      %v207 = vld [vmem:[%s187 + $0x14] sm:$0x1]
      %v208 = vld [vmem:[%s187 + $0x20] sm:$0x1]
      %v209 = vld [vmem:[%s187 + $0x2c] sm:$0x1]
      %v210 = vld [vmem:[%s187 + $0x38] sm:$0x1]
      %v211 = vld [vmem:[%s187 + $0x44] sm:$0x1]
      %v212 = vld [vmem:[%s187 + $0x50] sm:$0x1]
      %v213 = vld [vmem:[%s187 + $0x5c] sm:$0x1]
      %vm214 = vsmask.f32 3328
      %vm215 = vsmask.f32 7440
      %vm216 = vmor %vm214, %vm215
      %v218 = vshrl.u32 %v188, 16
      %v220 = vrot.slane %v218, 4
      %v221 = vshll.u32 %v188, 16
      %v223 = vrot.slane %v221, 5
      %v224 = vor.u32 %v220, %v223
      %v225 = vrot.slane %v224, 4
      %v227 = vshll.u32 %v189, 16
      %v229 = vrot.slane %v227, 5
      %v230 = vsel %vm216, %v225, %v229
      %v231 = vshrl.u32 %v189, 16
      %v233 = vrot.slane %v231, 4
      %v234 = vor.u32 %v233, %v229
      %v235 = vrot.slane %v234, 4
      %v237 = vshll.u32 %v206, 16
      %v239 = vrot.slane %v237, 5
      %v240 = vsel %vm216, %v235, %v239
      %v242 = vshrl.u32 %v190, 16
      %v244 = vrot.slane %v242, 4
      %v245 = vshll.u32 %v190, 16
      %v247 = vrot.slane %v245, 5
      %v248 = vor.u32 %v244, %v247
      %v249 = vrot.slane %v248, 4
      %v251 = vshll.u32 %v191, 16
      %v253 = vrot.slane %v251, 5
      %v254 = vsel %vm216, %v249, %v253
      %v255 = vshrl.u32 %v191, 16
      %v257 = vrot.slane %v255, 4
      %v258 = vor.u32 %v257, %v253
      %v259 = vrot.slane %v258, 4
      %v261 = vshll.u32 %v207, 16
      %v263 = vrot.slane %v261, 5
      %v264 = vsel %vm216, %v259, %v263
      %v266 = vshrl.u32 %v192, 16
      %v268 = vrot.slane %v266, 4
      %v269 = vshll.u32 %v192, 16
      %v271 = vrot.slane %v269, 5
      %v272 = vor.u32 %v268, %v271
      %v273 = vrot.slane %v272, 4
      %v275 = vshll.u32 %v193, 16
      %v277 = vrot.slane %v275, 5
      %v278 = vsel %vm216, %v273, %v277
      %v279 = vshrl.u32 %v193, 16
      %v281 = vrot.slane %v279, 4
      %v282 = vor.u32 %v281, %v277
      %v283 = vrot.slane %v282, 4
      %v285 = vshll.u32 %v208, 16
      %v287 = vrot.slane %v285, 5
      %v288 = vsel %vm216, %v283, %v287
      %v290 = vshrl.u32 %v194, 16
      %v292 = vrot.slane %v290, 4
      %v293 = vshll.u32 %v194, 16
      %v295 = vrot.slane %v293, 5
      %v296 = vor.u32 %v292, %v295
      %v297 = vrot.slane %v296, 4
      %v299 = vshll.u32 %v195, 16
      %v301 = vrot.slane %v299, 5
      %v302 = vsel %vm216, %v297, %v301
      %v303 = vshrl.u32 %v195, 16
      %v305 = vrot.slane %v303, 4
      %v306 = vor.u32 %v305, %v301
      %v307 = vrot.slane %v306, 4
      %v309 = vshll.u32 %v209, 16
      %v311 = vrot.slane %v309, 5
      %v312 = vsel %vm216, %v307, %v311
      %v314 = vshrl.u32 %v196, 16
      %v316 = vrot.slane %v314, 4
      %v317 = vshll.u32 %v196, 16
      %v319 = vrot.slane %v317, 5
      %v320 = vor.u32 %v316, %v319
      %v321 = vrot.slane %v320, 4
      %v323 = vshll.u32 %v197, 16
      %v325 = vrot.slane %v323, 5
      %v326 = vsel %vm216, %v321, %v325
      %v327 = vshrl.u32 %v197, 16
      %v329 = vrot.slane %v327, 4
      %v330 = vor.u32 %v329, %v325
      %v331 = vrot.slane %v330, 4
      %v333 = vshll.u32 %v210, 16
      %v335 = vrot.slane %v333, 5
      %v336 = vsel %vm216, %v331, %v335
      %v338 = vshrl.u32 %v198, 16
      %v340 = vrot.slane %v338, 4
      %v341 = vshll.u32 %v198, 16
      %v343 = vrot.slane %v341, 5
      %v344 = vor.u32 %v340, %v343
      %v345 = vrot.slane %v344, 4
      %v347 = vshll.u32 %v199, 16
      %v349 = vrot.slane %v347, 5
      %v350 = vsel %vm216, %v345, %v349
      %v351 = vshrl.u32 %v199, 16
      %v353 = vrot.slane %v351, 4
      %v354 = vor.u32 %v353, %v349
      %v355 = vrot.slane %v354, 4
      %v357 = vshll.u32 %v211, 16
      %v359 = vrot.slane %v357, 5
      %v360 = vsel %vm216, %v355, %v359
      %v362 = vshrl.u32 %v200, 16
      %v364 = vrot.slane %v362, 4
      %v365 = vshll.u32 %v200, 16
      %v367 = vrot.slane %v365, 5
      %v368 = vor.u32 %v364, %v367
      %v369 = vrot.slane %v368, 4
      %v371 = vshll.u32 %v201, 16
      %v373 = vrot.slane %v371, 5
      %v374 = vsel %vm216, %v369, %v373
      %v375 = vshrl.u32 %v201, 16
      %v377 = vrot.slane %v375, 4
      %v378 = vor.u32 %v377, %v373
      %v379 = vrot.slane %v378, 4
      %v381 = vshll.u32 %v212, 16
      %v383 = vrot.slane %v381, 5
      %v384 = vsel %vm216, %v379, %v383
      %v386 = vshrl.u32 %v202, 16
      %v388 = vrot.slane %v386, 4
      %v389 = vshll.u32 %v202, 16
      %v391 = vrot.slane %v389, 5
      %v392 = vor.u32 %v388, %v391
      %v393 = vrot.slane %v392, 4
      %v395 = vshll.u32 %v203, 16
      %v397 = vrot.slane %v395, 5
      %v398 = vsel %vm216, %v393, %v397
      %v399 = vshrl.u32 %v203, 16
      %v401 = vrot.slane %v399, 4
      %v402 = vor.u32 %v401, %v397
      %v403 = vrot.slane %v402, 4
      %v405 = vshll.u32 %v213, 16
      %v407 = vrot.slane %v405, 5
      %v408 = vsel %vm216, %v403, %v407
      %s409 = scalar_lea.vmem %s1, 8
      %v410 = vld [vmem:[%s409] sm:$0xf]
      %v411 = vld [vmem:[%s409 + $0x4] sm:$0x3]
      %v412 = vunpack.c.l.b16 %v230
      %v413 = vunpack.c.l.b16 %v240
      %v414 = vunpack.c.l.b16 %v254
      %v415 = vunpack.c.l.b16 %v264
      %v416 = vunpack.c.l.b16 %v278
      %v417 = vunpack.c.l.b16 %v288
      %v418 = vunpack.c.l.b16 %v302
      %v419 = vunpack.c.l.b16 %v312
      %v420 = vunpack.c.l.b16 %v326
      %v421 = vunpack.c.l.b16 %v336
      %v422 = vunpack.c.l.b16 %v350
      %v423 = vunpack.c.l.b16 %v360
      %v424 = vunpack.c.l.b16 %v374
      %v425 = vunpack.c.l.b16 %v384
      %v426 = vunpack.c.l.b16 %v398
      %v427 = vunpack.c.l.b16 %v408
      %v428 = vpack.c.b16 %v413, %v412
      %v429 = vpack.c.b16 %v415, %v414
      %v430 = vpack.c.b16 %v417, %v416
      %v431 = vpack.c.b16 %v419, %v418
      %v432 = vpack.c.b16 %v421, %v420
      %v433 = vpack.c.b16 %v423, %v422
      %v434 = vpack.c.b16 %v425, %v424
      %v435 = vpack.c.b16 %v427, %v426
      %v438 = vunpack.c.l.b16 %v410
      %v439 = vunpack.c.l.b16 %v411
      %v440 = vpack.c.b16 %v439, %v438
      %vm441 = vcmask 97280
      %v443 = vsel %vm441, %v428, 0
      %v446 = vsel %vm441, %v429, 0
      %v449 = vsel %vm441, %v430, 0
      %v452 = vsel %vm441, %v431, 0
      %v455 = vsel %vm441, %v432, 0
      %v458 = vsel %vm441, %v433, 0
      %v461 = vsel %vm441, %v434, 0
      %v464 = vsel %vm441, %v435, 0
      %vm466 = vcmask 1045504
      %v468 = vsel %vm466, %v440, 0
      %470 = vmatpush.bf16.msra.mxu0 0
      %471 = vmatpush.bf16.msra.mxu0 0
      %472 = vmatpush.bf16.msra.mxu0 0
      %473 = vmatpush.bf16.msra.mxu0 0
      %474 = vmatpush.bf16.msra.mxu0 0
      %475 = vmatpush.bf16.msra.mxu0 0
      %476 = vmatpush.bf16.msra.mxu0 0
      %477 = vmatpush.bf16.msra.mxu0 %v468
      %478 = vmatmul.bf16.gmra.mxu0 %v443
      %v479 = vpop.f32.mrf.mxu0
      %v480 = vadd.f32 0.0, %v479
      %v481 = vpop.f32.mrf.mxu0
      %v482 = vadd.f32 0.0, %v481
      %483 = vmatmul.bf16.gmra.mxu0 %v446
      %v484 = vpop.f32.mrf.mxu0
      %v485 = vadd.f32 0.0, %v484
      %v486 = vpop.f32.mrf.mxu0
      %v487 = vadd.f32 0.0, %v486
      %488 = vmatmul.bf16.gmra.mxu0 %v449
      %v489 = vpop.f32.mrf.mxu0
      %v490 = vadd.f32 0.0, %v489
      %v491 = vpop.f32.mrf.mxu0
      %v492 = vadd.f32 0.0, %v491
      %493 = vmatmul.bf16.gmra.mxu0 %v452
      %v494 = vpop.f32.mrf.mxu0
      %v495 = vadd.f32 0.0, %v494
      %v496 = vpop.f32.mrf.mxu0
      %v497 = vadd.f32 0.0, %v496
      %498 = vmatmul.bf16.gmra.mxu0 %v455
      %v499 = vpop.f32.mrf.mxu0
      %v500 = vadd.f32 0.0, %v499
      %v501 = vpop.f32.mrf.mxu0
      %v502 = vadd.f32 0.0, %v501
      %503 = vmatmul.bf16.gmra.mxu0 %v458
      %v504 = vpop.f32.mrf.mxu0
      %v505 = vadd.f32 0.0, %v504
      %v506 = vpop.f32.mrf.mxu0
      %v507 = vadd.f32 0.0, %v506
      %508 = vmatmul.bf16.gmra.mxu0 %v461
      %v509 = vpop.f32.mrf.mxu0
      %v510 = vadd.f32 0.0, %v509
      %v511 = vpop.f32.mrf.mxu0
      %v512 = vadd.f32 0.0, %v511
      %513 = vmatmul.bf16.gmra.mxu0 %v464
      %v514 = vpop.f32.mrf.mxu0
      %v515 = vadd.f32 0.0, %v514
      %v516 = vpop.f32.mrf.mxu0
      %v517 = vadd.f32 0.0, %v516
      %518 = vdwg.mxu0
      %v535 = vunpack.c.l.b16 %v188
      %v536 = vunpack.c.l.b16 %v189
      %v537 = vunpack.c.l.b16 %v190
      %v538 = vunpack.c.l.b16 %v191
      %v539 = vunpack.c.l.b16 %v192
      %v540 = vunpack.c.l.b16 %v193
      %v541 = vunpack.c.l.b16 %v194
      %v542 = vunpack.c.l.b16 %v195
      %v543 = vunpack.c.l.b16 %v196
      %v544 = vunpack.c.l.b16 %v197
      %v545 = vunpack.c.l.b16 %v198
      %v546 = vunpack.c.l.b16 %v199
      %v547 = vunpack.c.l.b16 %v200
      %v548 = vunpack.c.l.b16 %v201
      %v549 = vunpack.c.l.b16 %v202
      %v550 = vunpack.c.l.b16 %v203
      %v551 = vpack.c.b16 %v536, %v535
      %v552 = vpack.c.b16 %v538, %v537
      %v553 = vpack.c.b16 %v540, %v539
      %v554 = vpack.c.b16 %v542, %v541
      %v555 = vpack.c.b16 %v544, %v543
      %v556 = vpack.c.b16 %v546, %v545
      %v557 = vpack.c.b16 %v548, %v547
      %v558 = vpack.c.b16 %v550, %v549
      %v561 = vunpack.c.l.b16 %v204
      %v562 = vunpack.c.l.b16 %v205
      %v563 = vpack.c.b16 %v562, %v561
      %v565 = vsel %vm441, %v551, 0
      %v568 = vsel %vm441, %v552, 0
      %v571 = vsel %vm441, %v553, 0
      %v574 = vsel %vm441, %v554, 0
      %v577 = vsel %vm441, %v555, 0
      %v580 = vsel %vm441, %v556, 0
      %v583 = vsel %vm441, %v557, 0
      %v586 = vsel %vm441, %v558, 0
      %v589 = vsel %vm466, %v563, 0
      %591 = vmatpush.bf16.msra.mxu0 0
      %592 = vmatpush.bf16.msra.mxu0 0
      %593 = vmatpush.bf16.msra.mxu0 0
      %594 = vmatpush.bf16.msra.mxu0 0
      %595 = vmatpush.bf16.msra.mxu0 0
      %596 = vmatpush.bf16.msra.mxu0 0
      %597 = vmatpush.bf16.msra.mxu0 0
      %598 = vmatpush.bf16.msra.mxu0 %v589
      %599 = vmatmul.bf16.gmra.mxu0 %v565
      %v600 = vpop.f32.mrf.mxu0
      %v601 = vadd.f32 %v480, %v600
      %v602 = vpop.f32.mrf.mxu0
      %v603 = vadd.f32 %v482, %v602
      %604 = vmatmul.bf16.gmra.mxu0 %v568
      %v605 = vpop.f32.mrf.mxu0
      %v606 = vadd.f32 %v485, %v605
      %v607 = vpop.f32.mrf.mxu0
      %v608 = vadd.f32 %v487, %v607
      %609 = vmatmul.bf16.gmra.mxu0 %v571
      %v610 = vpop.f32.mrf.mxu0
      %v611 = vadd.f32 %v490, %v610
      %v612 = vpop.f32.mrf.mxu0
      %v613 = vadd.f32 %v492, %v612
      %614 = vmatmul.bf16.gmra.mxu0 %v574
      %v615 = vpop.f32.mrf.mxu0
      %v616 = vadd.f32 %v495, %v615
      %v617 = vpop.f32.mrf.mxu0
      %v618 = vadd.f32 %v497, %v617
      %619 = vmatmul.bf16.gmra.mxu0 %v577
      %v620 = vpop.f32.mrf.mxu0
      %v621 = vadd.f32 %v500, %v620
      %v622 = vpop.f32.mrf.mxu0
      %v623 = vadd.f32 %v502, %v622
      %624 = vmatmul.bf16.gmra.mxu0 %v580
      %v625 = vpop.f32.mrf.mxu0
      %v626 = vadd.f32 %v505, %v625
      %v627 = vpop.f32.mrf.mxu0
      %v628 = vadd.f32 %v507, %v627
      %629 = vmatmul.bf16.gmra.mxu0 %v583
      %v630 = vpop.f32.mrf.mxu0
      %v631 = vadd.f32 %v510, %v630
      %v632 = vpop.f32.mrf.mxu0
      %v633 = vadd.f32 %v512, %v632
      %634 = vmatmul.bf16.gmra.mxu0 %v586
      %v635 = vpop.f32.mrf.mxu0
      %v636 = vadd.f32 %v515, %v635
      %v637 = vpop.f32.mrf.mxu0
      %v638 = vadd.f32 %v517, %v637
      %639 = vdwg.mxu0
      %s640 = sadd.s32 %s184, 1
      %s641 = smul.u32 %s640, 3
      %s642 = smul.addr %s641, 4
      %s643 = scalar_lea.vmem %s177, %s642
      %v644 = vld [vmem:[%s643] sm:$0xf]
      %v645 = vld [vmem:[%s643 + $0x4] sm:$0xf]
      %v646 = vld [vmem:[%s643 + $0xc] sm:$0xf]
      %v647 = vld [vmem:[%s643 + $0x10] sm:$0xf]
      %v648 = vld [vmem:[%s643 + $0x18] sm:$0xf]
      %v649 = vld [vmem:[%s643 + $0x1c] sm:$0xf]
      %v650 = vld [vmem:[%s643 + $0x24] sm:$0xf]
      %v651 = vld [vmem:[%s643 + $0x28] sm:$0xf]
      %v652 = vld [vmem:[%s643 + $0x30] sm:$0xf]
      %v653 = vld [vmem:[%s643 + $0x34] sm:$0xf]
      %v654 = vld [vmem:[%s643 + $0x3c] sm:$0xf]
      %v655 = vld [vmem:[%s643 + $0x40] sm:$0xf]
      %v656 = vld [vmem:[%s643 + $0x48] sm:$0xf]
      %v657 = vld [vmem:[%s643 + $0x4c] sm:$0xf]
      %v658 = vld [vmem:[%s643 + $0x54] sm:$0xf]
      %v659 = vld [vmem:[%s643 + $0x58] sm:$0xf]
      %s660 = scalar_lea.vmem %s1, 16
      %v661 = vld [vmem:[%s660] sm:$0xf]
      %v662 = vld [vmem:[%s660 + $0x4] sm:$0x3]
      %v679 = vunpack.c.l.b16 %v644
      %v680 = vunpack.c.l.b16 %v645
      %v681 = vunpack.c.l.b16 %v646
      %v682 = vunpack.c.l.b16 %v647
      %v683 = vunpack.c.l.b16 %v648
      %v684 = vunpack.c.l.b16 %v649
      %v685 = vunpack.c.l.b16 %v650
      %v686 = vunpack.c.l.b16 %v651
      %v687 = vunpack.c.l.b16 %v652
      %v688 = vunpack.c.l.b16 %v653
      %v689 = vunpack.c.l.b16 %v654
      %v690 = vunpack.c.l.b16 %v655
      %v691 = vunpack.c.l.b16 %v656
      %v692 = vunpack.c.l.b16 %v657
      %v693 = vunpack.c.l.b16 %v658
      %v694 = vunpack.c.l.b16 %v659
      %v695 = vpack.c.b16 %v680, %v679
      %v696 = vpack.c.b16 %v682, %v681
      %v697 = vpack.c.b16 %v684, %v683
      %v698 = vpack.c.b16 %v686, %v685
      %v699 = vpack.c.b16 %v688, %v687
      %v700 = vpack.c.b16 %v690, %v689
      %v701 = vpack.c.b16 %v692, %v691
      %v702 = vpack.c.b16 %v694, %v693
      %v705 = vunpack.c.l.b16 %v661
      %v706 = vunpack.c.l.b16 %v662
      %v707 = vpack.c.b16 %v706, %v705
      %v709 = vsel %vm441, %v695, 0
      %v712 = vsel %vm441, %v696, 0
      %v715 = vsel %vm441, %v697, 0
      %v718 = vsel %vm441, %v698, 0
      %v721 = vsel %vm441, %v699, 0
      %v724 = vsel %vm441, %v700, 0
      %v727 = vsel %vm441, %v701, 0
      %v730 = vsel %vm441, %v702, 0
      %v733 = vsel %vm466, %v707, 0
      %735 = vmatpush.bf16.msra.mxu0 0
      %736 = vmatpush.bf16.msra.mxu0 0
      %737 = vmatpush.bf16.msra.mxu0 0
      %738 = vmatpush.bf16.msra.mxu0 0
      %739 = vmatpush.bf16.msra.mxu0 0
      %740 = vmatpush.bf16.msra.mxu0 0
      %741 = vmatpush.bf16.msra.mxu0 0
      %742 = vmatpush.bf16.msra.mxu0 %v733
      %743 = vmatmul.bf16.gmra.mxu0 %v709
      %v744 = vpop.f32.mrf.mxu0
      %v745 = vadd.f32 0.0, %v744
      %v746 = vpop.f32.mrf.mxu0
      %v747 = vadd.f32 0.0, %v746
      %748 = vmatmul.bf16.gmra.mxu0 %v712
      %v749 = vpop.f32.mrf.mxu0
      %v750 = vadd.f32 0.0, %v749
      %v751 = vpop.f32.mrf.mxu0
      %v752 = vadd.f32 0.0, %v751
      %753 = vmatmul.bf16.gmra.mxu0 %v715
      %v754 = vpop.f32.mrf.mxu0
      %v755 = vadd.f32 0.0, %v754
      %v756 = vpop.f32.mrf.mxu0
      %v757 = vadd.f32 0.0, %v756
      %758 = vmatmul.bf16.gmra.mxu0 %v718
      %v759 = vpop.f32.mrf.mxu0
      %v760 = vadd.f32 0.0, %v759
      %v761 = vpop.f32.mrf.mxu0
      %v762 = vadd.f32 0.0, %v761
      %763 = vmatmul.bf16.gmra.mxu0 %v721
      %v764 = vpop.f32.mrf.mxu0
      %v765 = vadd.f32 0.0, %v764
      %v766 = vpop.f32.mrf.mxu0
      %v767 = vadd.f32 0.0, %v766
      %768 = vmatmul.bf16.gmra.mxu0 %v724
      %v769 = vpop.f32.mrf.mxu0
      %v770 = vadd.f32 0.0, %v769
      %v771 = vpop.f32.mrf.mxu0
      %v772 = vadd.f32 0.0, %v771
      %773 = vmatmul.bf16.gmra.mxu0 %v727
      %v774 = vpop.f32.mrf.mxu0
      %v775 = vadd.f32 0.0, %v774
      %v776 = vpop.f32.mrf.mxu0
      %v777 = vadd.f32 0.0, %v776
      %778 = vmatmul.bf16.gmra.mxu0 %v730
      %v779 = vpop.f32.mrf.mxu0
      %v780 = vadd.f32 0.0, %v779
      %v781 = vpop.f32.mrf.mxu0
      %v782 = vadd.f32 0.0, %v781
      %783 = vdwg.mxu0
      %v784 = vadd.f32 %v601, %v745
      %v785 = vadd.f32 %v603, %v747
      %v786 = vadd.f32 %v606, %v750
      %v787 = vadd.f32 %v608, %v752
      %v788 = vadd.f32 %v611, %v755
      %v789 = vadd.f32 %v613, %v757
      %v790 = vadd.f32 %v616, %v760
      %v791 = vadd.f32 %v618, %v762
      %v792 = vadd.f32 %v621, %v765
      %v793 = vadd.f32 %v623, %v767
      %v794 = vadd.f32 %v626, %v770
      %v795 = vadd.f32 %v628, %v772
      %v796 = vadd.f32 %v631, %v775
      %v797 = vadd.f32 %v633, %v777
      %v798 = vadd.f32 %v636, %v780
      %v799 = vadd.f32 %v638, %v782
      %v800 = vld [vmem:[%s643] sm:$0xf]
      %v801 = vld [vmem:[%s643 + $0x4] sm:$0xf]
      %v802 = vld [vmem:[%s643 + $0x8] sm:$0x1]
      %v803 = vld [vmem:[%s643 + $0xc] sm:$0xf]
      %v804 = vld [vmem:[%s643 + $0x10] sm:$0xf]
      %v805 = vld [vmem:[%s643 + $0x14] sm:$0x1]
      %v806 = vld [vmem:[%s643 + $0x18] sm:$0xf]
      %v807 = vld [vmem:[%s643 + $0x1c] sm:$0xf]
      %v808 = vld [vmem:[%s643 + $0x20] sm:$0x1]
      %v809 = vld [vmem:[%s643 + $0x24] sm:$0xf]
      %v810 = vld [vmem:[%s643 + $0x28] sm:$0xf]
      %v811 = vld [vmem:[%s643 + $0x2c] sm:$0x1]
      %v812 = vld [vmem:[%s643 + $0x30] sm:$0xf]
      %v813 = vld [vmem:[%s643 + $0x34] sm:$0xf]
      %v814 = vld [vmem:[%s643 + $0x38] sm:$0x1]
      %v815 = vld [vmem:[%s643 + $0x3c] sm:$0xf]
      %v816 = vld [vmem:[%s643 + $0x40] sm:$0xf]
      %v817 = vld [vmem:[%s643 + $0x44] sm:$0x1]
      %v818 = vld [vmem:[%s643 + $0x48] sm:$0xf]
      %v819 = vld [vmem:[%s643 + $0x4c] sm:$0xf]
      %v820 = vld [vmem:[%s643 + $0x50] sm:$0x1]
      %v821 = vld [vmem:[%s643 + $0x54] sm:$0xf]
      %v822 = vld [vmem:[%s643 + $0x58] sm:$0xf]
      %v823 = vld [vmem:[%s643 + $0x5c] sm:$0x1]
      %v825 = vshrl.u32 %v800, 16
      %v827 = vrot.slane %v825, 4
      %v828 = vshll.u32 %v800, 16
      %v830 = vrot.slane %v828, 5
      %v831 = vor.u32 %v827, %v830
      %v832 = vrot.slane %v831, 4
      %v834 = vshll.u32 %v801, 16
      %v836 = vrot.slane %v834, 5
      %v837 = vsel %vm216, %v832, %v836
      %v838 = vshrl.u32 %v801, 16
      %v840 = vrot.slane %v838, 4
      %v841 = vor.u32 %v840, %v836
      %v842 = vrot.slane %v841, 4
      %v844 = vshll.u32 %v802, 16
      %v846 = vrot.slane %v844, 5
      %v847 = vsel %vm216, %v842, %v846
      %v849 = vshrl.u32 %v803, 16
      %v851 = vrot.slane %v849, 4
      %v852 = vshll.u32 %v803, 16
      %v854 = vrot.slane %v852, 5
      %v855 = vor.u32 %v851, %v854
      %v856 = vrot.slane %v855, 4
      %v858 = vshll.u32 %v804, 16
      %v860 = vrot.slane %v858, 5
      %v861 = vsel %vm216, %v856, %v860
      %v862 = vshrl.u32 %v804, 16
      %v864 = vrot.slane %v862, 4
      %v865 = vor.u32 %v864, %v860
      %v866 = vrot.slane %v865, 4
      %v868 = vshll.u32 %v805, 16
      %v870 = vrot.slane %v868, 5
      %v871 = vsel %vm216, %v866, %v870
      %v873 = vshrl.u32 %v806, 16
      %v875 = vrot.slane %v873, 4
      %v876 = vshll.u32 %v806, 16
      %v878 = vrot.slane %v876, 5
      %v879 = vor.u32 %v875, %v878
      %v880 = vrot.slane %v879, 4
      %v882 = vshll.u32 %v807, 16
      %v884 = vrot.slane %v882, 5
      %v885 = vsel %vm216, %v880, %v884
      %v886 = vshrl.u32 %v807, 16
      %v888 = vrot.slane %v886, 4
      %v889 = vor.u32 %v888, %v884
      %v890 = vrot.slane %v889, 4
      %v892 = vshll.u32 %v808, 16
      %v894 = vrot.slane %v892, 5
      %v895 = vsel %vm216, %v890, %v894
      %v897 = vshrl.u32 %v809, 16
      %v899 = vrot.slane %v897, 4
      %v900 = vshll.u32 %v809, 16
      %v902 = vrot.slane %v900, 5
      %v903 = vor.u32 %v899, %v902
      %v904 = vrot.slane %v903, 4
      %v906 = vshll.u32 %v810, 16
      %v908 = vrot.slane %v906, 5
      %v909 = vsel %vm216, %v904, %v908
      %v910 = vshrl.u32 %v810, 16
      %v912 = vrot.slane %v910, 4
      %v913 = vor.u32 %v912, %v908
      %v914 = vrot.slane %v913, 4
      %v916 = vshll.u32 %v811, 16
      %v918 = vrot.slane %v916, 5
      %v919 = vsel %vm216, %v914, %v918
      %v921 = vshrl.u32 %v812, 16
      %v923 = vrot.slane %v921, 4
      %v924 = vshll.u32 %v812, 16
      %v926 = vrot.slane %v924, 5
      %v927 = vor.u32 %v923, %v926
      %v928 = vrot.slane %v927, 4
      %v930 = vshll.u32 %v813, 16
      %v932 = vrot.slane %v930, 5
      %v933 = vsel %vm216, %v928, %v932
      %v934 = vshrl.u32 %v813, 16
      %v936 = vrot.slane %v934, 4
      %v937 = vor.u32 %v936, %v932
      %v938 = vrot.slane %v937, 4
      %v940 = vshll.u32 %v814, 16
      %v942 = vrot.slane %v940, 5
      %v943 = vsel %vm216, %v938, %v942
      %v945 = vshrl.u32 %v815, 16
      %v947 = vrot.slane %v945, 4
      %v948 = vshll.u32 %v815, 16
      %v950 = vrot.slane %v948, 5
      %v951 = vor.u32 %v947, %v950
      %v952 = vrot.slane %v951, 4
      %v954 = vshll.u32 %v816, 16
      %v956 = vrot.slane %v954, 5
      %v957 = vsel %vm216, %v952, %v956
      %v958 = vshrl.u32 %v816, 16
      %v960 = vrot.slane %v958, 4
      %v961 = vor.u32 %v960, %v956
      %v962 = vrot.slane %v961, 4
      %v964 = vshll.u32 %v817, 16
      %v966 = vrot.slane %v964, 5
      %v967 = vsel %vm216, %v962, %v966
      %v969 = vshrl.u32 %v818, 16
      %v971 = vrot.slane %v969, 4
      %v972 = vshll.u32 %v818, 16
      %v974 = vrot.slane %v972, 5
      %v975 = vor.u32 %v971, %v974
      %v976 = vrot.slane %v975, 4
      %v978 = vshll.u32 %v819, 16
      %v980 = vrot.slane %v978, 5
      %v981 = vsel %vm216, %v976, %v980
      %v982 = vshrl.u32 %v819, 16
      %v984 = vrot.slane %v982, 4
      %v985 = vor.u32 %v984, %v980
      %v986 = vrot.slane %v985, 4
      %v988 = vshll.u32 %v820, 16
      %v990 = vrot.slane %v988, 5
      %v991 = vsel %vm216, %v986, %v990
      %v993 = vshrl.u32 %v821, 16
      %v995 = vrot.slane %v993, 4
      %v996 = vshll.u32 %v821, 16
      %v998 = vrot.slane %v996, 5
      %v999 = vor.u32 %v995, %v998
      %v1000 = vrot.slane %v999, 4
      %v1002 = vshll.u32 %v822, 16
      %v1004 = vrot.slane %v1002, 5
      %v1005 = vsel %vm216, %v1000, %v1004
      %v1006 = vshrl.u32 %v822, 16
      %v1008 = vrot.slane %v1006, 4
      %v1009 = vor.u32 %v1008, %v1004
      %v1010 = vrot.slane %v1009, 4
      %v1012 = vshll.u32 %v823, 16
      %v1014 = vrot.slane %v1012, 5
      %v1015 = vsel %vm216, %v1010, %v1014
      %s1016 = scalar_lea.vmem %s1, 24
      %v1017 = vld [vmem:[%s1016] sm:$0xf]
      %v1018 = vld [vmem:[%s1016 + $0x4] sm:$0x3]
      %v1019 = vunpack.c.l.b16 %v837
      %v1020 = vunpack.c.l.b16 %v847
      %v1021 = vunpack.c.l.b16 %v861
      %v1022 = vunpack.c.l.b16 %v871
      %v1023 = vunpack.c.l.b16 %v885
      %v1024 = vunpack.c.l.b16 %v895
      %v1025 = vunpack.c.l.b16 %v909
      %v1026 = vunpack.c.l.b16 %v919
      %v1027 = vunpack.c.l.b16 %v933
      %v1028 = vunpack.c.l.b16 %v943
      %v1029 = vunpack.c.l.b16 %v957
      %v1030 = vunpack.c.l.b16 %v967
      %v1031 = vunpack.c.l.b16 %v981
      %v1032 = vunpack.c.l.b16 %v991
      %v1033 = vunpack.c.l.b16 %v1005
      %v1034 = vunpack.c.l.b16 %v1015
      %v1035 = vpack.c.b16 %v1020, %v1019
      %v1036 = vpack.c.b16 %v1022, %v1021
      %v1037 = vpack.c.b16 %v1024, %v1023
      %v1038 = vpack.c.b16 %v1026, %v1025
      %v1039 = vpack.c.b16 %v1028, %v1027
      %v1040 = vpack.c.b16 %v1030, %v1029
      %v1041 = vpack.c.b16 %v1032, %v1031
      %v1042 = vpack.c.b16 %v1034, %v1033
      %v1045 = vunpack.c.l.b16 %v1017
      %v1046 = vunpack.c.l.b16 %v1018
      %v1047 = vpack.c.b16 %v1046, %v1045
      %v1049 = vsel %vm441, %v1035, 0
      %v1052 = vsel %vm441, %v1036, 0
      %v1055 = vsel %vm441, %v1037, 0
      %v1058 = vsel %vm441, %v1038, 0
      %v1061 = vsel %vm441, %v1039, 0
      %v1064 = vsel %vm441, %v1040, 0
      %v1067 = vsel %vm441, %v1041, 0
      %v1070 = vsel %vm441, %v1042, 0
      %v1073 = vsel %vm466, %v1047, 0
      %1075 = vmatpush.bf16.msra.mxu0 0
      %1076 = vmatpush.bf16.msra.mxu0 0
      %1077 = vmatpush.bf16.msra.mxu0 0
      %1078 = vmatpush.bf16.msra.mxu0 0
      %1079 = vmatpush.bf16.msra.mxu0 0
      %1080 = vmatpush.bf16.msra.mxu0 0
      %1081 = vmatpush.bf16.msra.mxu0 0
      %1082 = vmatpush.bf16.msra.mxu0 %v1073
      %1083 = vmatmul.bf16.gmra.mxu0 %v1049
      %v1084 = vpop.f32.mrf.mxu0
      %v1085 = vadd.f32 0.0, %v1084
      %v1086 = vpop.f32.mrf.mxu0
      %v1087 = vadd.f32 0.0, %v1086
      %1088 = vmatmul.bf16.gmra.mxu0 %v1052
      %v1089 = vpop.f32.mrf.mxu0
      %v1090 = vadd.f32 0.0, %v1089
      %v1091 = vpop.f32.mrf.mxu0
      %v1092 = vadd.f32 0.0, %v1091
      %1093 = vmatmul.bf16.gmra.mxu0 %v1055
      %v1094 = vpop.f32.mrf.mxu0
      %v1095 = vadd.f32 0.0, %v1094
      %v1096 = vpop.f32.mrf.mxu0
      %v1097 = vadd.f32 0.0, %v1096
      %1098 = vmatmul.bf16.gmra.mxu0 %v1058
      %v1099 = vpop.f32.mrf.mxu0
      %v1100 = vadd.f32 0.0, %v1099
      %v1101 = vpop.f32.mrf.mxu0
      %v1102 = vadd.f32 0.0, %v1101
      %1103 = vmatmul.bf16.gmra.mxu0 %v1061
      %v1104 = vpop.f32.mrf.mxu0
      %v1105 = vadd.f32 0.0, %v1104
      %v1106 = vpop.f32.mrf.mxu0
      %v1107 = vadd.f32 0.0, %v1106
      %1108 = vmatmul.bf16.gmra.mxu0 %v1064
      %v1109 = vpop.f32.mrf.mxu0
      %v1110 = vadd.f32 0.0, %v1109
      %v1111 = vpop.f32.mrf.mxu0
      %v1112 = vadd.f32 0.0, %v1111
      %1113 = vmatmul.bf16.gmra.mxu0 %v1067
      %v1114 = vpop.f32.mrf.mxu0
      %v1115 = vadd.f32 0.0, %v1114
      %v1116 = vpop.f32.mrf.mxu0
      %v1117 = vadd.f32 0.0, %v1116
      %1118 = vmatmul.bf16.gmra.mxu0 %v1070
      %v1119 = vpop.f32.mrf.mxu0
      %v1120 = vadd.f32 0.0, %v1119
      %v1121 = vpop.f32.mrf.mxu0
      %v1122 = vadd.f32 0.0, %v1121
      %1123 = vdwg.mxu0
      %v1124 = vadd.f32 %v784, %v1085
      %v1125 = vadd.f32 %v785, %v1087
      %v1126 = vadd.f32 %v786, %v1090
      %v1127 = vadd.f32 %v787, %v1092
      %v1128 = vadd.f32 %v788, %v1095
      %v1129 = vadd.f32 %v789, %v1097
      %v1130 = vadd.f32 %v790, %v1100
      %v1131 = vadd.f32 %v791, %v1102
      %v1132 = vadd.f32 %v792, %v1105
      %v1133 = vadd.f32 %v793, %v1107
      %v1134 = vadd.f32 %v794, %v1110
      %v1135 = vadd.f32 %v795, %v1112
      %v1136 = vadd.f32 %v796, %v1115
      %v1137 = vadd.f32 %v797, %v1117
      %v1138 = vadd.f32 %v798, %v1120
      %v1139 = vadd.f32 %v799, %v1122
      %s1140 = smul.u32 %s184, 16
      %s1141 = scalar_lea.vmem [#allocation2], %s1140
      %1142 = vst [vmem:[%s1141] sm:$0xff] %v1124
      %1143 = vst [vmem:[%s1141 + $0x8] sm:$0xff] %v1125
      %1144 = vst [vmem:[%s1141 + $0x10] sm:$0xff] %v1126
      %1145 = vst [vmem:[%s1141 + $0x18] sm:$0xff] %v1127
      %1146 = vst [vmem:[%s1141 + $0x20] sm:$0xff] %v1128
      %1147 = vst [vmem:[%s1141 + $0x28] sm:$0xff] %v1129
      %1148 = vst [vmem:[%s1141 + $0x30] sm:$0xff] %v1130
      %1149 = vst [vmem:[%s1141 + $0x38] sm:$0xff] %v1131
      %1150 = vst [vmem:[%s1141 + $0x40] sm:$0xff] %v1132
      %1151 = vst [vmem:[%s1141 + $0x48] sm:$0xff] %v1133
      %1152 = vst [vmem:[%s1141 + $0x50] sm:$0xff] %v1134
      %1153 = vst [vmem:[%s1141 + $0x58] sm:$0xff] %v1135
      %1154 = vst [vmem:[%s1141 + $0x60] sm:$0xff] %v1136
      %1155 = vst [vmem:[%s1141 + $0x68] sm:$0xff] %v1137
      %1156 = vst [vmem:[%s1141 + $0x70] sm:$0xff] %v1138
      %1157 = vst [vmem:[%s1141 + $0x78] sm:$0xff] %v1139
      %p1158 = scmp.eq.s32.totalorder %s19, 1
      // Predicated region
      $region33: #{discriminator_forward.4} parent=31 // pred_check
        %p1159 = pneg %p1158
      $region34: #{discriminator_forward.4} parent=31 // pred_check_branch
        %1161 = sbr.rel (%p1159) target = $region36
      $region35: #{discriminator_forward.4} parent=31 // pred_region
        %v1162 = vld [vmem:[#allocation2] sm:$0xff]
        %v1163 = vld [vmem:[#allocation2 + $0x8] sm:$0xff]
        %v1164 = vld [vmem:[#allocation2 + $0x10] sm:$0xff]
        %v1165 = vld [vmem:[#allocation2 + $0x18] sm:$0xff]
        %v1166 = vld [vmem:[#allocation2 + $0x20] sm:$0xff]
        %v1167 = vld [vmem:[#allocation2 + $0x28] sm:$0xff]
        %v1168 = vld [vmem:[#allocation2 + $0x30] sm:$0xff]
        %v1169 = vld [vmem:[#allocation2 + $0x38] sm:$0xff]
        %v1170 = vld [vmem:[#allocation2 + $0x40] sm:$0xff]
        %v1171 = vld [vmem:[#allocation2 + $0x48] sm:$0xff]
        %v1172 = vld [vmem:[#allocation2 + $0x50] sm:$0xff]
        %v1173 = vld [vmem:[#allocation2 + $0x58] sm:$0xff]
        %v1174 = vld [vmem:[#allocation2 + $0x60] sm:$0xff]
        %v1175 = vld [vmem:[#allocation2 + $0x68] sm:$0xff]
        %v1176 = vld [vmem:[#allocation2 + $0x70] sm:$0xff]
        %v1177 = vld [vmem:[#allocation2 + $0x78] sm:$0xff]
        %v1178 = vld [vmem:[#allocation2 + $0x80] sm:$0xff]
        %v1179 = vld [vmem:[#allocation2 + $0x88] sm:$0xff]
        %v1180 = vld [vmem:[#allocation2 + $0x90] sm:$0xff]
        %v1181 = vld [vmem:[#allocation2 + $0x98] sm:$0xff]
        %v1182 = vld [vmem:[#allocation2 + $0xa0] sm:$0xff]
        %v1183 = vld [vmem:[#allocation2 + $0xa8] sm:$0xff]
        %v1184 = vld [vmem:[#allocation2 + $0xb0] sm:$0xff]
        %v1185 = vld [vmem:[#allocation2 + $0xb8] sm:$0xff]
        %v1186 = vld [vmem:[#allocation2 + $0xc0] sm:$0xff]
        %v1187 = vld [vmem:[#allocation2 + $0xc8] sm:$0xff]
        %v1188 = vld [vmem:[#allocation2 + $0xd0] sm:$0xff]
        %v1189 = vld [vmem:[#allocation2 + $0xd8] sm:$0xff]
        %v1190 = vld [vmem:[#allocation2 + $0xe0] sm:$0xff]
        %v1191 = vld [vmem:[#allocation2 + $0xe8] sm:$0xff]
        %v1192 = vld [vmem:[#allocation2 + $0xf0] sm:$0xff]
        %v1193 = vld [vmem:[#allocation2 + $0xf8] sm:$0xff]
        %v1194 = vld [vmem:[%s2] sm:$0x1]
        %v1196 = vperm.slane %v1194, 0
        %v1198 = vadd.f32 %v1162, %v1196
        %v1199 = vadd.f32 %v1163, %v1196
        %v1200 = vadd.f32 %v1164, %v1196
        %v1201 = vadd.f32 %v1165, %v1196
        %v1202 = vadd.f32 %v1166, %v1196
        %v1203 = vadd.f32 %v1167, %v1196
        %v1204 = vadd.f32 %v1168, %v1196
        %v1205 = vadd.f32 %v1169, %v1196
        %v1206 = vadd.f32 %v1170, %v1196
        %v1207 = vadd.f32 %v1171, %v1196
        %v1208 = vadd.f32 %v1172, %v1196
        %v1209 = vadd.f32 %v1173, %v1196
        %v1210 = vadd.f32 %v1174, %v1196
        %v1211 = vadd.f32 %v1175, %v1196
        %v1212 = vadd.f32 %v1176, %v1196
        %v1213 = vadd.f32 %v1177, %v1196
        %v1214 = vadd.f32 %v1178, %v1196
        %v1215 = vadd.f32 %v1179, %v1196
        %v1216 = vadd.f32 %v1180, %v1196
        %v1217 = vadd.f32 %v1181, %v1196
        %v1218 = vadd.f32 %v1182, %v1196
        %v1219 = vadd.f32 %v1183, %v1196
        %v1220 = vadd.f32 %v1184, %v1196
        %v1221 = vadd.f32 %v1185, %v1196
        %v1222 = vadd.f32 %v1186, %v1196
        %v1223 = vadd.f32 %v1187, %v1196
        %v1224 = vadd.f32 %v1188, %v1196
        %v1225 = vadd.f32 %v1189, %v1196
        %v1226 = vadd.f32 %v1190, %v1196
        %v1227 = vadd.f32 %v1191, %v1196
        %v1228 = vadd.f32 %v1192, %v1196
        %v1229 = vadd.f32 %v1193, %v1196
        %vm1230 = vcmp.ge.f32.partialorder %v1198, 0.0
        %vm1231 = vcmp.ge.f32.partialorder %v1199, 0.0
        %vm1232 = vcmp.ge.f32.partialorder %v1200, 0.0
        %vm1233 = vcmp.ge.f32.partialorder %v1201, 0.0
        %vm1234 = vcmp.ge.f32.partialorder %v1202, 0.0
        %vm1235 = vcmp.ge.f32.partialorder %v1203, 0.0
        %vm1236 = vcmp.ge.f32.partialorder %v1204, 0.0
        %vm1237 = vcmp.ge.f32.partialorder %v1205, 0.0
        %vm1238 = vcmp.ge.f32.partialorder %v1206, 0.0
        %vm1239 = vcmp.ge.f32.partialorder %v1207, 0.0
        %vm1240 = vcmp.ge.f32.partialorder %v1208, 0.0
        %vm1241 = vcmp.ge.f32.partialorder %v1209, 0.0
        %vm1242 = vcmp.ge.f32.partialorder %v1210, 0.0
        %vm1243 = vcmp.ge.f32.partialorder %v1211, 0.0
        %vm1244 = vcmp.ge.f32.partialorder %v1212, 0.0
        %vm1245 = vcmp.ge.f32.partialorder %v1213, 0.0
        %vm1246 = vcmp.ge.f32.partialorder %v1214, 0.0
        %vm1247 = vcmp.ge.f32.partialorder %v1215, 0.0
        %vm1248 = vcmp.ge.f32.partialorder %v1216, 0.0
        %vm1249 = vcmp.ge.f32.partialorder %v1217, 0.0
        %vm1250 = vcmp.ge.f32.partialorder %v1218, 0.0
        %vm1251 = vcmp.ge.f32.partialorder %v1219, 0.0
        %vm1252 = vcmp.ge.f32.partialorder %v1220, 0.0
        %vm1253 = vcmp.ge.f32.partialorder %v1221, 0.0
        %vm1254 = vcmp.ge.f32.partialorder %v1222, 0.0
        %vm1255 = vcmp.ge.f32.partialorder %v1223, 0.0
        %vm1256 = vcmp.ge.f32.partialorder %v1224, 0.0
        %vm1257 = vcmp.ge.f32.partialorder %v1225, 0.0
        %vm1258 = vcmp.ge.f32.partialorder %v1226, 0.0
        %vm1259 = vcmp.ge.f32.partialorder %v1227, 0.0
        %vm1260 = vcmp.ge.f32.partialorder %v1228, 0.0
        %vm1261 = vcmp.ge.f32.partialorder %v1229, 0.0
        %v1262 = vmul.f32 %v1198, 0.2
        %v1263 = vmul.f32 %v1199, 0.2
        %v1264 = vmul.f32 %v1200, 0.2
        %v1265 = vmul.f32 %v1201, 0.2
        %v1266 = vmul.f32 %v1202, 0.2
        %v1267 = vmul.f32 %v1203, 0.2
        %v1268 = vmul.f32 %v1204, 0.2
        %v1269 = vmul.f32 %v1205, 0.2
        %v1270 = vmul.f32 %v1206, 0.2
        %v1271 = vmul.f32 %v1207, 0.2
        %v1272 = vmul.f32 %v1208, 0.2
        %v1273 = vmul.f32 %v1209, 0.2
        %v1274 = vmul.f32 %v1210, 0.2
        %v1275 = vmul.f32 %v1211, 0.2
        %v1276 = vmul.f32 %v1212, 0.2
        %v1277 = vmul.f32 %v1213, 0.2
        %v1278 = vmul.f32 %v1214, 0.2
        %v1279 = vmul.f32 %v1215, 0.2
        %v1280 = vmul.f32 %v1216, 0.2
        %v1281 = vmul.f32 %v1217, 0.2
        %v1282 = vmul.f32 %v1218, 0.2
        %v1283 = vmul.f32 %v1219, 0.2
        %v1284 = vmul.f32 %v1220, 0.2
        %v1285 = vmul.f32 %v1221, 0.2
        %v1286 = vmul.f32 %v1222, 0.2
        %v1287 = vmul.f32 %v1223, 0.2
        %v1288 = vmul.f32 %v1224, 0.2
        %v1289 = vmul.f32 %v1225, 0.2
        %v1290 = vmul.f32 %v1226, 0.2
        %v1291 = vmul.f32 %v1227, 0.2
        %v1292 = vmul.f32 %v1228, 0.2
        %v1293 = vmul.f32 %v1229, 0.2
        %v1294 = vsel %vm1230, %v1198, %v1262
        %v1295 = vsel %vm1231, %v1199, %v1263
        %v1296 = vsel %vm1232, %v1200, %v1264
        %v1297 = vsel %vm1233, %v1201, %v1265
        %v1298 = vsel %vm1234, %v1202, %v1266
        %v1299 = vsel %vm1235, %v1203, %v1267
        %v1300 = vsel %vm1236, %v1204, %v1268
        %v1301 = vsel %vm1237, %v1205, %v1269
        %v1302 = vsel %vm1238, %v1206, %v1270
        %v1303 = vsel %vm1239, %v1207, %v1271
        %v1304 = vsel %vm1240, %v1208, %v1272
        %v1305 = vsel %vm1241, %v1209, %v1273
        %v1306 = vsel %vm1242, %v1210, %v1274
        %v1307 = vsel %vm1243, %v1211, %v1275
        %v1308 = vsel %vm1244, %v1212, %v1276
        %v1309 = vsel %vm1245, %v1213, %v1277
        %v1310 = vsel %vm1246, %v1214, %v1278
        %v1311 = vsel %vm1247, %v1215, %v1279
        %v1312 = vsel %vm1248, %v1216, %v1280
        %v1313 = vsel %vm1249, %v1217, %v1281
        %v1314 = vsel %vm1250, %v1218, %v1282
        %v1315 = vsel %vm1251, %v1219, %v1283
        %v1316 = vsel %vm1252, %v1220, %v1284
        %v1317 = vsel %vm1253, %v1221, %v1285
        %v1318 = vsel %vm1254, %v1222, %v1286
        %v1319 = vsel %vm1255, %v1223, %v1287
        %v1320 = vsel %vm1256, %v1224, %v1288
        %v1321 = vsel %vm1257, %v1225, %v1289
        %v1322 = vsel %vm1258, %v1226, %v1290
        %v1323 = vsel %vm1259, %v1227, %v1291
        %v1324 = vsel %vm1260, %v1228, %v1292
        %v1325 = vsel %vm1261, %v1229, %v1293
        %v1326 = vpack.c.bf16 %v1294, %v1294
        %v1327 = vpack.c.bf16 %v1295, %v1295
        %v1328 = vpack.c.bf16 %v1296, %v1296
        %v1329 = vpack.c.bf16 %v1297, %v1297
        %v1330 = vpack.c.bf16 %v1298, %v1298
        %v1331 = vpack.c.bf16 %v1299, %v1299
        %v1332 = vpack.c.bf16 %v1300, %v1300
        %v1333 = vpack.c.bf16 %v1301, %v1301
        %v1334 = vpack.c.bf16 %v1302, %v1302
        %v1335 = vpack.c.bf16 %v1303, %v1303
        %v1336 = vpack.c.bf16 %v1304, %v1304
        %v1337 = vpack.c.bf16 %v1305, %v1305
        %v1338 = vpack.c.bf16 %v1306, %v1306
        %v1339 = vpack.c.bf16 %v1307, %v1307
        %v1340 = vpack.c.bf16 %v1308, %v1308
        %v1341 = vpack.c.bf16 %v1309, %v1309
        %v1342 = vpack.c.bf16 %v1310, %v1310
        %v1343 = vpack.c.bf16 %v1311, %v1311
        %v1344 = vpack.c.bf16 %v1312, %v1312
        %v1345 = vpack.c.bf16 %v1313, %v1313
        %v1346 = vpack.c.bf16 %v1314, %v1314
        %v1347 = vpack.c.bf16 %v1315, %v1315
        %v1348 = vpack.c.bf16 %v1316, %v1316
        %v1349 = vpack.c.bf16 %v1317, %v1317
        %v1350 = vpack.c.bf16 %v1318, %v1318
        %v1351 = vpack.c.bf16 %v1319, %v1319
        %v1352 = vpack.c.bf16 %v1320, %v1320
        %v1353 = vpack.c.bf16 %v1321, %v1321
        %v1354 = vpack.c.bf16 %v1322, %v1322
        %v1355 = vpack.c.bf16 %v1323, %v1323
        %v1356 = vpack.c.bf16 %v1324, %v1324
        %v1357 = vpack.c.bf16 %v1325, %v1325
        %1358 = vst [vmem:[%s182] sm:$0xf] %v1326
        %1359 = vst [vmem:[%s182 + $0x4] sm:$0xf] %v1327
        %1360 = vst [vmem:[%s182 + $0x8] sm:$0xf] %v1328
        %1361 = vst [vmem:[%s182 + $0xc] sm:$0xf] %v1329
        %1362 = vst [vmem:[%s182 + $0x10] sm:$0xf] %v1330
        %1363 = vst [vmem:[%s182 + $0x14] sm:$0xf] %v1331
        %1364 = vst [vmem:[%s182 + $0x18] sm:$0xf] %v1332
        %1365 = vst [vmem:[%s182 + $0x1c] sm:$0xf] %v1333
        %1366 = vst [vmem:[%s182 + $0x20] sm:$0xf] %v1334
        %1367 = vst [vmem:[%s182 + $0x24] sm:$0xf] %v1335
        %1368 = vst [vmem:[%s182 + $0x28] sm:$0xf] %v1336
        %1369 = vst [vmem:[%s182 + $0x2c] sm:$0xf] %v1337
        %1370 = vst [vmem:[%s182 + $0x30] sm:$0xf] %v1338
        %1371 = vst [vmem:[%s182 + $0x34] sm:$0xf] %v1339
        %1372 = vst [vmem:[%s182 + $0x38] sm:$0xf] %v1340
        %1373 = vst [vmem:[%s182 + $0x3c] sm:$0xf] %v1341
        %1374 = vst [vmem:[%s182 + $0x40] sm:$0xf] %v1342
        %1375 = vst [vmem:[%s182 + $0x44] sm:$0xf] %v1343
        %1376 = vst [vmem:[%s182 + $0x48] sm:$0xf] %v1344
        %1377 = vst [vmem:[%s182 + $0x4c] sm:$0xf] %v1345
        %1378 = vst [vmem:[%s182 + $0x50] sm:$0xf] %v1346
        %1379 = vst [vmem:[%s182 + $0x54] sm:$0xf] %v1347
        %1380 = vst [vmem:[%s182 + $0x58] sm:$0xf] %v1348
        %1381 = vst [vmem:[%s182 + $0x5c] sm:$0xf] %v1349
        %1382 = vst [vmem:[%s182 + $0x60] sm:$0xf] %v1350
        %1383 = vst [vmem:[%s182 + $0x64] sm:$0xf] %v1351
        %1384 = vst [vmem:[%s182 + $0x68] sm:$0xf] %v1352
        %1385 = vst [vmem:[%s182 + $0x6c] sm:$0xf] %v1353
        %1386 = vst [vmem:[%s182 + $0x70] sm:$0xf] %v1354
        %1387 = vst [vmem:[%s182 + $0x74] sm:$0xf] %v1355
        %1388 = vst [vmem:[%s182 + $0x78] sm:$0xf] %v1356
        %1389 = vst [vmem:[%s182 + $0x7c] sm:$0xf] %v1357
      $region36: #{discriminator_forward.4} parent=31 // pred_fallthru
        _
      %p1390 = scmp.lt.s32.totalorder %s18, 1
      %s1391 = scalar_select %p1390, %s18, 1
      %s1392 = smul.addr %s1391, 32
      %s1393 = smul.addr %s1392, 4
      %s1394 = scalar_lea.vmem %s3, %s1393
      // Predicated region
      $region37: #{discriminator_forward.4} parent=31 // pred_check
        %p1395 = pneg %p112
      $region38: #{discriminator_forward.4} parent=31 // pred_check_branch
        %1397 = sbr.rel (%p1395) target = $region40
      $region39: #{discriminator_forward.4} parent=31 // pred_region
        _
      $region40: #{discriminator_forward.4} parent=31 // pred_fallthru
        _
    $region32: #{discriminator_forward.4} parent=5 // pred_fallthru
      _
    %p1398 = scmp.le.s32.totalorder 2, %s9
    // Predicated region
    $region41: #{discriminator_forward.4} parent=5 // pred_check
      %p1399 = pneg %p1398
    $region42: #{discriminator_forward.4} parent=5 // pred_check_branch
      %1401 = sbr.rel (%p1399) target = $region44
    $region43: #{discriminator_forward.4} parent=5 // pred_region
      %s1402 = ssub.s32 %s9, 2
      // Predicated region
      $region45: #{discriminator_forward.4} parent=43 // pred_check
        %p1403 = pneg %p118
      $region46: #{discriminator_forward.4} parent=43 // pred_check_branch
        %1405 = sbr.rel (%p1403) target = $region48
      $region47: #{discriminator_forward.4} parent=43 // pred_region
        %p1406 = scmp.lt.s32.totalorder %s20, 1
        %s1407 = scalar_select %p1406, %s20, 1
        %s1408 = smul.addr %s1407, 32
        %s1409 = smul.addr %s1408, 4
        %s1410 = scalar_lea.vmem %s3, %s1409
      $region48: #{discriminator_forward.4} parent=43 // pred_fallthru
        _
    $region44: #{discriminator_forward.4} parent=5 // pred_fallthru
      _
  $region6: #{discriminator_forward.4} parent=0 // loop_footer
    %s13 = sadd.s32 1, %s9
  $region7: #{discriminator_forward.4} parent=0 // loop_footer_branch
    %8 = sbr.rel target = $region3
  $region8: #{discriminator_forward.4} parent=0 // loop_exit
    _

// kernel: discriminator_forward.5
$region0: #{discriminator_forward.5}
  #allocation0 [shape = 'u32[]', space=smem, size = 0x4, offset = 0x4, fixed_abs, tag = 'smem constant byte address 0x4 - core index']
  #allocation1 [shape = 'u32[72,128]{1,0:T(1,128)}', space=vmem, size = 0x9000, scoped, tag = 'internal scratch']
  #allocation2 [shape = 'f32[8,8,128]{2,1,0:T(8,128)}', space=vmem, size = 0x8000, scoped, tag = 'scratch operand']
  %s0 = inlined_call_operand.vmem [shape: bf16[2,9,9,32], index: 0, kind: input, shape index: {}]
  %s1 = inlined_call_operand.vmem [shape: bf16[4,32,128], index: 1, kind: input, shape index: {}]
  %s2 = inlined_call_operand.vmem [shape: f32[1,128], index: 2, kind: input, shape index: {}]
  %s3 = inlined_call_operand.vmem [shape: bf16[2,8,8,128], index: 3, kind: output, shape index: {}]
  %s4 = sld [smem:[#allocation0]]
  $region49: #{discriminator_forward.5} parent=0
    _
  %s6 = ssub.s32 1, %s4
  %s7 = scalar_select 0, %s6, %s4
  loop: start=0, step=1, limit=4
  $region2: #{discriminator_forward.5} parent=0 // loop_pre_header
    _
  $region3: #{discriminator_forward.5} parent=0 // loop_header
    %s9 = sphi 0, %s13
    %p10 = scmp.ge.s32.totalorder %s9, 4
    %s16 = sphi 0, %s28
    %s17 = sphi 0, %s24
    %s18 = sphi 0, %s16
    %s19 = sphi 0, %s17
    %s20 = sphi 0, %s18
    %s21 = sphi 0, %s19
    %s31 = sphi 0, %s33
    %s34 = sphi 0, %s31
    %s35 = sphi 0, %s34
    %s51 = sphi 0, %s35
    %s55 = sphi 0, %s55
    %s57 = sphi 0, %s55
    %s58 = sphi 0, %s57
    %s72 = sphi 0, %s58
    %s76 = sphi 0, %s76
    %s78 = sphi 0, %s76
    %s79 = sphi 0, %s78
    %s93 = sphi 0, %s79
    %s99 = sphi 0, %s101
    %s102 = sphi 0, %s99
    %s103 = sphi 0, %s102
    %s119 = sphi 0, %s103
  $region4: #{discriminator_forward.5} parent=0 // loop_header_branch
    %12 = sbr.rel (%p10) target = $region8
  $region5: #{discriminator_forward.5} parent=0 // loop_body
    %s14 = ssub.s32 %s9, 1
    %s15 = ssub.s32 %s9, 2
    %s22 = sadd.s32 1, %s17
    %p23 = scmp.ge.s32.totalorder %s22, 1
    %s24 = scalar_select %p23, 0, %s22
    %s25 = sadd.s32 1, %s16
    %s26 = scalar_select %p23, %s25, %s16
    %p27 = scmp.ge.s32.totalorder %s26, 2
    %s28 = scalar_select %p27, 0, %s26
    %s29 = ssub.s32 %s16, %s28
    %p30 = scmp.eq.s32.totalorder %s29, 0
    %s32 = sadd.s32 %s31, 1
    %s33 = scalar_select %p30, %s31, %s32
    %p36 = pneg %p30
    %p37 = scmp.eq.s32.totalorder %s9, 1
    %p38 = por %p36, %p37
    %p39 = scmp.ne.s32.totalorder %s31, %s34
    %p40 = scmp.eq.s32.totalorder %s9, 0
    %p41 = por %p39, %p40
    %p42 = scmp.ne.s32.totalorder %s31, %s34
    %p43 = scmp.eq.s32.totalorder %s14, 1
    %p44 = por %p42, %p43
    %p45 = scmp.ne.s32.totalorder %s34, %s35
    %p46 = scmp.eq.s32.totalorder %s14, 0
    %p47 = por %p45, %p46
    %p48 = scmp.ne.s32.totalorder %s34, %s35
    %p49 = scmp.eq.s32.totalorder %s15, 1
    %p50 = por %p48, %p49
    %p52 = scmp.ne.s32.totalorder %s35, %s51
    %p53 = scmp.eq.s32.totalorder %s15, 0
    %p54 = por %p52, %p53
    %s56 = sadd.s32 %s55, 1
    %p59 = scmp.eq.s32.totalorder %s9, 1
    %p60 = scmp.ne.s32.totalorder %s55, %s57
    %p61 = scmp.eq.s32.totalorder %s9, 0
    %p62 = por %p60, %p61
    %p63 = scmp.ne.s32.totalorder %s55, %s57
    %p64 = scmp.eq.s32.totalorder %s14, 1
    %p65 = por %p63, %p64
    %p66 = scmp.ne.s32.totalorder %s57, %s58
    %p67 = scmp.eq.s32.totalorder %s14, 0
    %p68 = por %p66, %p67
    %p69 = scmp.ne.s32.totalorder %s57, %s58
    %p70 = scmp.eq.s32.totalorder %s15, 1
    %p71 = por %p69, %p70
    %p73 = scmp.ne.s32.totalorder %s58, %s72
    %p74 = scmp.eq.s32.totalorder %s15, 0
    %p75 = por %p73, %p74
    %s77 = sadd.s32 %s76, 1
    %p80 = scmp.eq.s32.totalorder %s9, 1
    %p81 = scmp.ne.s32.totalorder %s76, %s78
    %p82 = scmp.eq.s32.totalorder %s9, 0
    %p83 = por %p81, %p82
    %p84 = scmp.ne.s32.totalorder %s76, %s78
    %p85 = scmp.eq.s32.totalorder %s14, 1
    %p86 = por %p84, %p85
    %p87 = scmp.ne.s32.totalorder %s78, %s79
    %p88 = scmp.eq.s32.totalorder %s14, 0
    %p89 = por %p87, %p88
    %p90 = scmp.ne.s32.totalorder %s78, %s79
    %p91 = scmp.eq.s32.totalorder %s15, 1
    %p92 = por %p90, %p91
    %p94 = scmp.ne.s32.totalorder %s79, %s93
    %p95 = scmp.eq.s32.totalorder %s15, 0
    %p96 = por %p94, %p95
    %s97 = ssub.s32 %s16, %s28
    %p98 = scmp.eq.s32.totalorder %s97, 0
    %s100 = sadd.s32 %s99, 1
    %s101 = scalar_select %p98, %s99, %s100
    %p104 = pneg %p98
    %p105 = scmp.eq.s32.totalorder %s9, 1
    %p106 = por %p104, %p105
    %p107 = scmp.ne.s32.totalorder %s99, %s102
    %p108 = scmp.eq.s32.totalorder %s9, 0
    %p109 = por %p107, %p108
    %p110 = scmp.ne.s32.totalorder %s99, %s102
    %p111 = scmp.eq.s32.totalorder %s14, 1
    %p112 = por %p110, %p111
    %p113 = scmp.ne.s32.totalorder %s102, %s103
    %p114 = scmp.eq.s32.totalorder %s14, 0
    %p115 = por %p113, %p114
    %p116 = scmp.ne.s32.totalorder %s102, %s103
    %p117 = scmp.eq.s32.totalorder %s15, 1
    %p118 = por %p116, %p117
    %p120 = scmp.ne.s32.totalorder %s103, %s119
    %p121 = scmp.eq.s32.totalorder %s15, 0
    %p122 = por %p120, %p121
    %p123 = scmp.le.s32.totalorder 1, %s9
    %p124 = scmp.lt.s32.totalorder %s9, 3
    %p125 = pnand %p123, %p124
    %p126 = pneg %p125
    // Predicated region
    $region9: #{discriminator_forward.5} parent=5 // pred_check
      _
    $region10: #{discriminator_forward.5} parent=5 // pred_check_branch
      %128 = sbr.rel (%p125) target = $region12
    $region11: #{discriminator_forward.5} parent=5 // pred_region
      %s129 = ssub.s32 %s9, 1
      // Predicated region
      $region13: #{discriminator_forward.5} parent=11 // pred_check
        %p130 = pneg %p68
      $region14: #{discriminator_forward.5} parent=11 // pred_check_branch
        %132 = sbr.rel (%p130) target = $region16
      $region15: #{discriminator_forward.5} parent=11 // pred_region
        _
      $region16: #{discriminator_forward.5} parent=11 // pred_fallthru
        _
      // Predicated region
      $region17: #{discriminator_forward.5} parent=11 // pred_check
        %p133 = pneg %p89
      $region18: #{discriminator_forward.5} parent=11 // pred_check_branch
        %135 = sbr.rel (%p133) target = $region20
      $region19: #{discriminator_forward.5} parent=11 // pred_region
        _
      $region20: #{discriminator_forward.5} parent=11 // pred_fallthru
        _
    $region12: #{discriminator_forward.5} parent=5 // pred_fallthru
      _
    %p136 = scmp.lt.s32.totalorder %s9, 2
    // Predicated region
    $region21: #{discriminator_forward.5} parent=5 // pred_check
      %p137 = pneg %p136
    $region22: #{discriminator_forward.5} parent=5 // pred_check_branch
      %139 = sbr.rel (%p137) target = $region24
    $region23: #{discriminator_forward.5} parent=5 // pred_region
      // Predicated region
      $region25: #{discriminator_forward.5} parent=23 // pred_check
        %p140 = pneg %p41
      $region26: #{discriminator_forward.5} parent=23 // pred_check_branch
        %142 = sbr.rel (%p140) target = $region28
      $region27: #{discriminator_forward.5} parent=23 // pred_region
        %p143 = scmp.lt.s32.totalorder %s16, 1
        %s144 = scalar_select %p143, %s16, 1
        %s145 = smul.addr %s144, 18
        %s146 = smul.addr %s145, 4
        %s147 = scalar_lea.vmem %s0, %s146
      $region28: #{discriminator_forward.5} parent=23 // pred_fallthru
        _
    $region24: #{discriminator_forward.5} parent=5 // pred_fallthru
      _
    %p148 = scmp.le.s32.totalorder 1, %s9
    %p149 = scmp.lt.s32.totalorder %s9, 3
    %p150 = pnand %p148, %p149
    %p151 = pneg %p150
    // Predicated region
    $region29: #{discriminator_forward.5} parent=5 // pred_check
      _
    $region30: #{discriminator_forward.5} parent=5 // pred_check_branch
      %153 = sbr.rel (%p150) target = $region32
    $region31: #{discriminator_forward.5} parent=5 // pred_region
      %s154 = ssub.s32 %s9, 1
      %p155 = scmp.lt.s32.totalorder %s18, 1
      %s156 = scalar_select %p155, %s18, 1
      %s157 = smul.addr %s156, 18
      %s158 = smul.addr %s157, 4
      %s159 = scalar_lea.vmem %s0, %s158
      %p160 = pneg %p47
      %p161 = pneg %p44
      %p162 = pneg %p68
      %p163 = pneg %p65
      %p164 = pneg %p89
      %p165 = pneg %p86
      %p166 = pneg %p115
      %p167 = pneg %p112
      %p168 = scmp.lt.s32.totalorder %s18, 1
      %s169 = scalar_select %p168, %s18, 1
      %s170 = smul.addr %s169, 8
      %s171 = smul.addr %s170, 4
      %s172 = scalar_lea.vmem %s3, %s171
      %p173 = scmp.lt.s32.totalorder %s18, 1
      %s174 = scalar_select %p173, %s18, 1
      %s175 = smul.addr %s174, 18
      %s176 = smul.addr %s175, 4
      %s177 = scalar_lea.vmem %s0, %s176
      %p178 = scmp.lt.s32.totalorder %s18, 1
      %s179 = scalar_select %p178, %s18, 1
      %s180 = smul.addr %s179, 8
      %s181 = smul.addr %s180, 4
      %s182 = scalar_lea.vmem %s3, %s181
      %s184 = smul.u32 %s19, 8
      %s185 = smul.u32 %s184, 2
      %s186 = smul.addr %s185, 4
      %s187 = scalar_lea.vmem %s177, %s186
      %v188 = vld [vmem:[%s187] sm:$0xf]
      %v189 = vld [vmem:[%s187 + $0x8] sm:$0xf]
      %v190 = vld [vmem:[%s187 + $0x10] sm:$0xf]
      %v191 = vld [vmem:[%s187 + $0x18] sm:$0xf]
      %v192 = vld [vmem:[%s187 + $0x20] sm:$0xf]
      %v193 = vld [vmem:[%s187 + $0x28] sm:$0xf]
      %v194 = vld [vmem:[%s187 + $0x30] sm:$0xf]
      %v195 = vld [vmem:[%s187 + $0x38] sm:$0xf]
      %v196 = vld [vmem:[%s1] sm:$0xf]
      %v197 = vld [vmem:[%s1 + $0x4] sm:$0xf]
      %v198 = vld [vmem:[%s1 + $0x8] sm:$0xf]
      %v199 = vld [vmem:[%s1 + $0xc] sm:$0xf]
      %v200 = vld [vmem:[%s187 + $0x4] sm:$0x1]
      %v201 = vld [vmem:[%s187 + $0xc] sm:$0x1]
      %v202 = vld [vmem:[%s187 + $0x14] sm:$0x1]
      %v203 = vld [vmem:[%s187 + $0x1c] sm:$0x1]
      %v204 = vld [vmem:[%s187 + $0x24] sm:$0x1]
      %v205 = vld [vmem:[%s187 + $0x2c] sm:$0x1]
      %v206 = vld [vmem:[%s187 + $0x34] sm:$0x1]
      %v207 = vld [vmem:[%s187 + $0x3c] sm:$0x1]
      %vm208 = vsmask.f32 3328
      %vm209 = vsmask.f32 7440
      %vm210 = vmor %vm208, %vm209
      %v212 = vshrl.u32 %v188, 16
      %v214 = vrot.slane %v212, 4
      %v215 = vshll.u32 %v188, 16
      %v217 = vrot.slane %v215, 5
      %v218 = vor.u32 %v214, %v217
      %v219 = vrot.slane %v218, 4
      %v221 = vshll.u32 %v200, 16
      %v223 = vrot.slane %v221, 5
      %v224 = vsel %vm210, %v219, %v223
      %v226 = vshrl.u32 %v189, 16
      %v228 = vrot.slane %v226, 4
      %v229 = vshll.u32 %v189, 16
      %v231 = vrot.slane %v229, 5
      %v232 = vor.u32 %v228, %v231
      %v233 = vrot.slane %v232, 4
      %v235 = vshll.u32 %v201, 16
      %v237 = vrot.slane %v235, 5
      %v238 = vsel %vm210, %v233, %v237
      %v240 = vshrl.u32 %v190, 16
      %v242 = vrot.slane %v240, 4
      %v243 = vshll.u32 %v190, 16
      %v245 = vrot.slane %v243, 5
      %v246 = vor.u32 %v242, %v245
      %v247 = vrot.slane %v246, 4
      %v249 = vshll.u32 %v202, 16
      %v251 = vrot.slane %v249, 5
      %v252 = vsel %vm210, %v247, %v251
      %v254 = vshrl.u32 %v191, 16
      %v256 = vrot.slane %v254, 4
      %v257 = vshll.u32 %v191, 16
      %v259 = vrot.slane %v257, 5
      %v260 = vor.u32 %v256, %v259
      %v261 = vrot.slane %v260, 4
      %v263 = vshll.u32 %v203, 16
      %v265 = vrot.slane %v263, 5
      %v266 = vsel %vm210, %v261, %v265
      %v268 = vshrl.u32 %v192, 16
      %v270 = vrot.slane %v268, 4
      %v271 = vshll.u32 %v192, 16
      %v273 = vrot.slane %v271, 5
      %v274 = vor.u32 %v270, %v273
      %v275 = vrot.slane %v274, 4
      %v277 = vshll.u32 %v204, 16
      %v279 = vrot.slane %v277, 5
      %v280 = vsel %vm210, %v275, %v279
      %v282 = vshrl.u32 %v193, 16
      %v284 = vrot.slane %v282, 4
      %v285 = vshll.u32 %v193, 16
      %v287 = vrot.slane %v285, 5
      %v288 = vor.u32 %v284, %v287
      %v289 = vrot.slane %v288, 4
      %v291 = vshll.u32 %v205, 16
      %v293 = vrot.slane %v291, 5
      %v294 = vsel %vm210, %v289, %v293
      %v296 = vshrl.u32 %v194, 16
      %v298 = vrot.slane %v296, 4
      %v299 = vshll.u32 %v194, 16
      %v301 = vrot.slane %v299, 5
      %v302 = vor.u32 %v298, %v301
      %v303 = vrot.slane %v302, 4
      %v305 = vshll.u32 %v206, 16
      %v307 = vrot.slane %v305, 5
      %v308 = vsel %vm210, %v303, %v307
      %v310 = vshrl.u32 %v195, 16
      %v312 = vrot.slane %v310, 4
      %v313 = vshll.u32 %v195, 16
      %v315 = vrot.slane %v313, 5
      %v316 = vor.u32 %v312, %v315
      %v317 = vrot.slane %v316, 4
      %v319 = vshll.u32 %v207, 16
      %v321 = vrot.slane %v319, 5
      %v322 = vsel %vm210, %v317, %v321
      %s323 = scalar_lea.vmem %s1, 16
      %v324 = vld [vmem:[%s323] sm:$0xf]
      %v325 = vld [vmem:[%s323 + $0x4] sm:$0xf]
      %v326 = vld [vmem:[%s323 + $0x8] sm:$0xf]
      %v327 = vld [vmem:[%s323 + $0xc] sm:$0xf]
      %v328 = vunpack.c.l.b16 %v224
      %v329 = vunpack.c.l.b16 %v238
      %v330 = vunpack.c.l.b16 %v252
      %v331 = vunpack.c.l.b16 %v266
      %v332 = vunpack.c.l.b16 %v280
      %v333 = vunpack.c.l.b16 %v294
      %v334 = vunpack.c.l.b16 %v308
      %v335 = vunpack.c.l.b16 %v322
      %v336 = vpack.c.b16 %v329, %v328
      %v337 = vpack.c.b16 %v331, %v330
      %v338 = vpack.c.b16 %v333, %v332
      %v339 = vpack.c.b16 %v335, %v334
      %v344 = vunpack.c.l.b16 %v324
      %v345 = vunpack.c.l.b16 %v325
      %v346 = vunpack.c.l.b16 %v326
      %v347 = vunpack.c.l.b16 %v327
      %v348 = vpack.c.b16 %v345, %v344
      %v349 = vpack.c.b16 %v347, %v346
      %vm352 = vcmask 261120
      %v354 = vsel %vm352, %v336, 0
      %v357 = vsel %vm352, %v337, 0
      %v360 = vsel %vm352, %v338, 0
      %v363 = vsel %vm352, %v339, 0
      %365 = vmatpush.bf16.msra.mxu0 0
      %366 = vmatpush.bf16.msra.mxu0 0
      %367 = vmatpush.bf16.msra.mxu0 0
      %368 = vmatpush.bf16.msra.mxu0 0
      %369 = vmatpush.bf16.msra.mxu0 0
      %370 = vmatpush.bf16.msra.mxu0 0
      %371 = vmatpush.bf16.msra.mxu0 %v349
      %372 = vmatpush.bf16.msra.mxu0 %v348
      %373 = vmatmul.bf16.gmra.mxu0 %v354
      %v374 = vpop.f32.mrf.mxu0
      %v375 = vadd.f32 0.0, %v374
      %v376 = vpop.f32.mrf.mxu0
      %v377 = vadd.f32 0.0, %v376
      %378 = vmatmul.bf16.gmra.mxu0 %v357
      %v379 = vpop.f32.mrf.mxu0
      %v380 = vadd.f32 0.0, %v379
      %v381 = vpop.f32.mrf.mxu0
      %v382 = vadd.f32 0.0, %v381
      %383 = vmatmul.bf16.gmra.mxu0 %v360
      %v384 = vpop.f32.mrf.mxu0
      %v385 = vadd.f32 0.0, %v384
      %v386 = vpop.f32.mrf.mxu0
      %v387 = vadd.f32 0.0, %v386
      %388 = vmatmul.bf16.gmra.mxu0 %v363
      %v389 = vpop.f32.mrf.mxu0
      %v390 = vadd.f32 0.0, %v389
      %v391 = vpop.f32.mrf.mxu0
      %v392 = vadd.f32 0.0, %v391
      %393 = vdwg.mxu0
      %v402 = vunpack.c.l.b16 %v188
      %v403 = vunpack.c.l.b16 %v189
      %v404 = vunpack.c.l.b16 %v190
      %v405 = vunpack.c.l.b16 %v191
      %v406 = vunpack.c.l.b16 %v192
      %v407 = vunpack.c.l.b16 %v193
      %v408 = vunpack.c.l.b16 %v194
      %v409 = vunpack.c.l.b16 %v195
      %v410 = vpack.c.b16 %v403, %v402
      %v411 = vpack.c.b16 %v405, %v404
      %v412 = vpack.c.b16 %v407, %v406
      %v413 = vpack.c.b16 %v409, %v408
      %v418 = vunpack.c.l.b16 %v196
      %v419 = vunpack.c.l.b16 %v197
      %v420 = vunpack.c.l.b16 %v198
      %v421 = vunpack.c.l.b16 %v199
      %v422 = vpack.c.b16 %v419, %v418
      %v423 = vpack.c.b16 %v421, %v420
      %v427 = vsel %vm352, %v410, 0
      %v430 = vsel %vm352, %v411, 0
      %v433 = vsel %vm352, %v412, 0
      %v436 = vsel %vm352, %v413, 0
      %438 = vmatpush.bf16.msra.mxu0 0
      %439 = vmatpush.bf16.msra.mxu0 0
      %440 = vmatpush.bf16.msra.mxu0 0
      %441 = vmatpush.bf16.msra.mxu0 0
      %442 = vmatpush.bf16.msra.mxu0 0
      %443 = vmatpush.bf16.msra.mxu0 0
      %444 = vmatpush.bf16.msra.mxu0 %v423
      %445 = vmatpush.bf16.msra.mxu0 %v422
      %446 = vmatmul.bf16.gmra.mxu0 %v427
      %v447 = vpop.f32.mrf.mxu0
      %v448 = vadd.f32 %v375, %v447
      %v449 = vpop.f32.mrf.mxu0
      %v450 = vadd.f32 %v377, %v449
      %451 = vmatmul.bf16.gmra.mxu0 %v430
      %v452 = vpop.f32.mrf.mxu0
      %v453 = vadd.f32 %v380, %v452
      %v454 = vpop.f32.mrf.mxu0
      %v455 = vadd.f32 %v382, %v454
      %456 = vmatmul.bf16.gmra.mxu0 %v433
      %v457 = vpop.f32.mrf.mxu0
      %v458 = vadd.f32 %v385, %v457
      %v459 = vpop.f32.mrf.mxu0
      %v460 = vadd.f32 %v387, %v459
      %461 = vmatmul.bf16.gmra.mxu0 %v436
      %v462 = vpop.f32.mrf.mxu0
      %v463 = vadd.f32 %v390, %v462
      %v464 = vpop.f32.mrf.mxu0
      %v465 = vadd.f32 %v392, %v464
      %466 = vdwg.mxu0
      %s467 = sadd.s32 %s184, 1
      %s468 = smul.u32 %s467, 2
      %s469 = smul.addr %s468, 4
      %s470 = scalar_lea.vmem %s177, %s469
      %v471 = vld [vmem:[%s470] sm:$0xf]
      %v472 = vld [vmem:[%s470 + $0x8] sm:$0xf]
      %v473 = vld [vmem:[%s470 + $0x10] sm:$0xf]
      %v474 = vld [vmem:[%s470 + $0x18] sm:$0xf]
      %v475 = vld [vmem:[%s470 + $0x20] sm:$0xf]
      %v476 = vld [vmem:[%s470 + $0x28] sm:$0xf]
      %v477 = vld [vmem:[%s470 + $0x30] sm:$0xf]
      %v478 = vld [vmem:[%s470 + $0x38] sm:$0xf]
      %s479 = scalar_lea.vmem %s1, 32
      %v480 = vld [vmem:[%s479] sm:$0xf]
      %v481 = vld [vmem:[%s479 + $0x4] sm:$0xf]
      %v482 = vld [vmem:[%s479 + $0x8] sm:$0xf]
      %v483 = vld [vmem:[%s479 + $0xc] sm:$0xf]
      %v492 = vunpack.c.l.b16 %v471
      %v493 = vunpack.c.l.b16 %v472
      %v494 = vunpack.c.l.b16 %v473
      %v495 = vunpack.c.l.b16 %v474
      %v496 = vunpack.c.l.b16 %v475
      %v497 = vunpack.c.l.b16 %v476
      %v498 = vunpack.c.l.b16 %v477
      %v499 = vunpack.c.l.b16 %v478
      %v500 = vpack.c.b16 %v493, %v492
      %v501 = vpack.c.b16 %v495, %v494
      %v502 = vpack.c.b16 %v497, %v496
      %v503 = vpack.c.b16 %v499, %v498
      %v508 = vunpack.c.l.b16 %v480
      %v509 = vunpack.c.l.b16 %v481
      %v510 = vunpack.c.l.b16 %v482
      %v511 = vunpack.c.l.b16 %v483
      %v512 = vpack.c.b16 %v509, %v508
      %v513 = vpack.c.b16 %v511, %v510
      %v517 = vsel %vm352, %v500, 0
      %v520 = vsel %vm352, %v501, 0
      %v523 = vsel %vm352, %v502, 0
      %v526 = vsel %vm352, %v503, 0
      %528 = vmatpush.bf16.msra.mxu0 0
      %529 = vmatpush.bf16.msra.mxu0 0
      %530 = vmatpush.bf16.msra.mxu0 0
      %531 = vmatpush.bf16.msra.mxu0 0
      %532 = vmatpush.bf16.msra.mxu0 0
      %533 = vmatpush.bf16.msra.mxu0 0
      %534 = vmatpush.bf16.msra.mxu0 %v513
      %535 = vmatpush.bf16.msra.mxu0 %v512
      %536 = vmatmul.bf16.gmra.mxu0 %v517
      %v537 = vpop.f32.mrf.mxu0
      %v538 = vadd.f32 0.0, %v537
      %v539 = vpop.f32.mrf.mxu0
      %v540 = vadd.f32 0.0, %v539
      %541 = vmatmul.bf16.gmra.mxu0 %v520
      %v542 = vpop.f32.mrf.mxu0
      %v543 = vadd.f32 0.0, %v542
      %v544 = vpop.f32.mrf.mxu0
      %v545 = vadd.f32 0.0, %v544
      %546 = vmatmul.bf16.gmra.mxu0 %v523
      %v547 = vpop.f32.mrf.mxu0
      %v548 = vadd.f32 0.0, %v547
      %v549 = vpop.f32.mrf.mxu0
      %v550 = vadd.f32 0.0, %v549
      %551 = vmatmul.bf16.gmra.mxu0 %v526
      %v552 = vpop.f32.mrf.mxu0
      %v553 = vadd.f32 0.0, %v552
      %v554 = vpop.f32.mrf.mxu0
      %v555 = vadd.f32 0.0, %v554
      %556 = vdwg.mxu0
      %v557 = vadd.f32 %v448, %v538
      %v558 = vadd.f32 %v450, %v540
      %v559 = vadd.f32 %v453, %v543
      %v560 = vadd.f32 %v455, %v545
      %v561 = vadd.f32 %v458, %v548
      %v562 = vadd.f32 %v460, %v550
      %v563 = vadd.f32 %v463, %v553
      %v564 = vadd.f32 %v465, %v555
      %v565 = vld [vmem:[%s470] sm:$0xf]
      %v566 = vld [vmem:[%s470 + $0x4] sm:$0x1]
      %v567 = vld [vmem:[%s470 + $0x8] sm:$0xf]
      %v568 = vld [vmem:[%s470 + $0xc] sm:$0x1]
      %v569 = vld [vmem:[%s470 + $0x10] sm:$0xf]
      %v570 = vld [vmem:[%s470 + $0x14] sm:$0x1]
      %v571 = vld [vmem:[%s470 + $0x18] sm:$0xf]
      %v572 = vld [vmem:[%s470 + $0x1c] sm:$0x1]
      %v573 = vld [vmem:[%s470 + $0x20] sm:$0xf]
      %v574 = vld [vmem:[%s470 + $0x24] sm:$0x1]
      %v575 = vld [vmem:[%s470 + $0x28] sm:$0xf]
      %v576 = vld [vmem:[%s470 + $0x2c] sm:$0x1]
      %v577 = vld [vmem:[%s470 + $0x30] sm:$0xf]
      %v578 = vld [vmem:[%s470 + $0x34] sm:$0x1]
      %v579 = vld [vmem:[%s470 + $0x38] sm:$0xf]
      %v580 = vld [vmem:[%s470 + $0x3c] sm:$0x1]
      %v582 = vshrl.u32 %v565, 16
      %v584 = vrot.slane %v582, 4
      %v585 = vshll.u32 %v565, 16
      %v587 = vrot.slane %v585, 5
      %v588 = vor.u32 %v584, %v587
      %v589 = vrot.slane %v588, 4
      %v591 = vshll.u32 %v566, 16
      %v593 = vrot.slane %v591, 5
      %v594 = vsel %vm210, %v589, %v593
      %v596 = vshrl.u32 %v567, 16
      %v598 = vrot.slane %v596, 4
      %v599 = vshll.u32 %v567, 16
      %v601 = vrot.slane %v599, 5
      %v602 = vor.u32 %v598, %v601
      %v603 = vrot.slane %v602, 4
      %v605 = vshll.u32 %v568, 16
      %v607 = vrot.slane %v605, 5
      %v608 = vsel %vm210, %v603, %v607
      %v610 = vshrl.u32 %v569, 16
      %v612 = vrot.slane %v610, 4
      %v613 = vshll.u32 %v569, 16
      %v615 = vrot.slane %v613, 5
      %v616 = vor.u32 %v612, %v615
      %v617 = vrot.slane %v616, 4
      %v619 = vshll.u32 %v570, 16
      %v621 = vrot.slane %v619, 5
      %v622 = vsel %vm210, %v617, %v621
      %v624 = vshrl.u32 %v571, 16
      %v626 = vrot.slane %v624, 4
      %v627 = vshll.u32 %v571, 16
      %v629 = vrot.slane %v627, 5
      %v630 = vor.u32 %v626, %v629
      %v631 = vrot.slane %v630, 4
      %v633 = vshll.u32 %v572, 16
      %v635 = vrot.slane %v633, 5
      %v636 = vsel %vm210, %v631, %v635
      %v638 = vshrl.u32 %v573, 16
      %v640 = vrot.slane %v638, 4
      %v641 = vshll.u32 %v573, 16
      %v643 = vrot.slane %v641, 5
      %v644 = vor.u32 %v640, %v643
      %v645 = vrot.slane %v644, 4
      %v647 = vshll.u32 %v574, 16
      %v649 = vrot.slane %v647, 5
      %v650 = vsel %vm210, %v645, %v649
      %v652 = vshrl.u32 %v575, 16
      %v654 = vrot.slane %v652, 4
      %v655 = vshll.u32 %v575, 16
      %v657 = vrot.slane %v655, 5
      %v658 = vor.u32 %v654, %v657
      %v659 = vrot.slane %v658, 4
      %v661 = vshll.u32 %v576, 16
      %v663 = vrot.slane %v661, 5
      %v664 = vsel %vm210, %v659, %v663
      %v666 = vshrl.u32 %v577, 16
      %v668 = vrot.slane %v666, 4
      %v669 = vshll.u32 %v577, 16
      %v671 = vrot.slane %v669, 5
      %v672 = vor.u32 %v668, %v671
      %v673 = vrot.slane %v672, 4
      %v675 = vshll.u32 %v578, 16
      %v677 = vrot.slane %v675, 5
      %v678 = vsel %vm210, %v673, %v677
      %v680 = vshrl.u32 %v579, 16
      %v682 = vrot.slane %v680, 4
      %v683 = vshll.u32 %v579, 16
      %v685 = vrot.slane %v683, 5
      %v686 = vor.u32 %v682, %v685
      %v687 = vrot.slane %v686, 4
      %v689 = vshll.u32 %v580, 16
      %v691 = vrot.slane %v689, 5
      %v692 = vsel %vm210, %v687, %v691
      %s693 = scalar_lea.vmem %s1, 48
      %v694 = vld [vmem:[%s693] sm:$0xf]
      %v695 = vld [vmem:[%s693 + $0x4] sm:$0xf]
      %v696 = vld [vmem:[%s693 + $0x8] sm:$0xf]
      %v697 = vld [vmem:[%s693 + $0xc] sm:$0xf]
      %v698 = vunpack.c.l.b16 %v594
      %v699 = vunpack.c.l.b16 %v608
      %v700 = vunpack.c.l.b16 %v622
      %v701 = vunpack.c.l.b16 %v636
      %v702 = vunpack.c.l.b16 %v650
      %v703 = vunpack.c.l.b16 %v664
      %v704 = vunpack.c.l.b16 %v678
      %v705 = vunpack.c.l.b16 %v692
      %v706 = vpack.c.b16 %v699, %v698
      %v707 = vpack.c.b16 %v701, %v700
      %v708 = vpack.c.b16 %v703, %v702
      %v709 = vpack.c.b16 %v705, %v704
      %v714 = vunpack.c.l.b16 %v694
      %v715 = vunpack.c.l.b16 %v695
      %v716 = vunpack.c.l.b16 %v696
      %v717 = vunpack.c.l.b16 %v697
      %v718 = vpack.c.b16 %v715, %v714
      %v719 = vpack.c.b16 %v717, %v716
      %v723 = vsel %vm352, %v706, 0
      %v726 = vsel %vm352, %v707, 0
      %v729 = vsel %vm352, %v708, 0
      %v732 = vsel %vm352, %v709, 0
      %734 = vmatpush.bf16.msra.mxu0 0
      %735 = vmatpush.bf16.msra.mxu0 0
      %736 = vmatpush.bf16.msra.mxu0 0
      %737 = vmatpush.bf16.msra.mxu0 0
      %738 = vmatpush.bf16.msra.mxu0 0
      %739 = vmatpush.bf16.msra.mxu0 0
      %740 = vmatpush.bf16.msra.mxu0 %v719
      %741 = vmatpush.bf16.msra.mxu0 %v718
      %742 = vmatmul.bf16.gmra.mxu0 %v723
      %v743 = vpop.f32.mrf.mxu0
      %v744 = vadd.f32 0.0, %v743
      %v745 = vpop.f32.mrf.mxu0
      %v746 = vadd.f32 0.0, %v745
      %747 = vmatmul.bf16.gmra.mxu0 %v726
      %v748 = vpop.f32.mrf.mxu0
      %v749 = vadd.f32 0.0, %v748
      %v750 = vpop.f32.mrf.mxu0
      %v751 = vadd.f32 0.0, %v750
      %752 = vmatmul.bf16.gmra.mxu0 %v729
      %v753 = vpop.f32.mrf.mxu0
      %v754 = vadd.f32 0.0, %v753
      %v755 = vpop.f32.mrf.mxu0
      %v756 = vadd.f32 0.0, %v755
      %757 = vmatmul.bf16.gmra.mxu0 %v732
      %v758 = vpop.f32.mrf.mxu0
      %v759 = vadd.f32 0.0, %v758
      %v760 = vpop.f32.mrf.mxu0
      %v761 = vadd.f32 0.0, %v760
      %762 = vdwg.mxu0
      %v763 = vadd.f32 %v557, %v744
      %v764 = vadd.f32 %v558, %v746
      %v765 = vadd.f32 %v559, %v749
      %v766 = vadd.f32 %v560, %v751
      %v767 = vadd.f32 %v561, %v754
      %v768 = vadd.f32 %v562, %v756
      %v769 = vadd.f32 %v563, %v759
      %v770 = vadd.f32 %v564, %v761
      %s771 = smul.u32 %s184, 8
      %s772 = scalar_lea.vmem [#allocation2], %s771
      %773 = vst [vmem:[%s772] sm:$0xff] %v763
      %774 = vst [vmem:[%s772 + $0x8] sm:$0xff] %v764
      %775 = vst [vmem:[%s772 + $0x10] sm:$0xff] %v765
      %776 = vst [vmem:[%s772 + $0x18] sm:$0xff] %v766
      %777 = vst [vmem:[%s772 + $0x20] sm:$0xff] %v767
      %778 = vst [vmem:[%s772 + $0x28] sm:$0xff] %v768
      %779 = vst [vmem:[%s772 + $0x30] sm:$0xff] %v769
      %780 = vst [vmem:[%s772 + $0x38] sm:$0xff] %v770
      %p781 = scmp.eq.s32.totalorder %s19, 0
      // Predicated region
      $region33: #{discriminator_forward.5} parent=31 // pred_check
        %p782 = pneg %p781
      $region34: #{discriminator_forward.5} parent=31 // pred_check_branch
        %784 = sbr.rel (%p782) target = $region36
      $region35: #{discriminator_forward.5} parent=31 // pred_region
        %v785 = vld [vmem:[#allocation2] sm:$0xff]
        %v786 = vld [vmem:[#allocation2 + $0x8] sm:$0xff]
        %v787 = vld [vmem:[#allocation2 + $0x10] sm:$0xff]
        %v788 = vld [vmem:[#allocation2 + $0x18] sm:$0xff]
        %v789 = vld [vmem:[#allocation2 + $0x20] sm:$0xff]
        %v790 = vld [vmem:[#allocation2 + $0x28] sm:$0xff]
        %v791 = vld [vmem:[#allocation2 + $0x30] sm:$0xff]
        %v792 = vld [vmem:[#allocation2 + $0x38] sm:$0xff]
        %v793 = vld [vmem:[%s2] sm:$0x1]
        %v795 = vperm.slane %v793, 0
        %v797 = vadd.f32 %v785, %v795
        %v798 = vadd.f32 %v786, %v795
        %v799 = vadd.f32 %v787, %v795
        %v800 = vadd.f32 %v788, %v795
        %v801 = vadd.f32 %v789, %v795
        %v802 = vadd.f32 %v790, %v795
        %v803 = vadd.f32 %v791, %v795
        %v804 = vadd.f32 %v792, %v795
        %v805 = vrot.slane %v797, 4
        %v806 = vadd.f32 %v797, %v805
        %v807 = vrot.slane %v806, 2
        %v808 = vadd.f32 %v806, %v807
        %v809 = vrot.slane %v808, 1
        %v810 = vadd.f32 %v808, %v809
        %v811 = vrot.slane %v798, 4
        %v812 = vadd.f32 %v798, %v811
        %v813 = vrot.slane %v812, 2
        %v814 = vadd.f32 %v812, %v813
        %v815 = vrot.slane %v814, 1
        %v816 = vadd.f32 %v814, %v815
        %v817 = vrot.slane %v799, 4
        %v818 = vadd.f32 %v799, %v817
        %v819 = vrot.slane %v818, 2
        %v820 = vadd.f32 %v818, %v819
        %v821 = vrot.slane %v820, 1
        %v822 = vadd.f32 %v820, %v821
        %v823 = vrot.slane %v800, 4
        %v824 = vadd.f32 %v800, %v823
        %v825 = vrot.slane %v824, 2
        %v826 = vadd.f32 %v824, %v825
        %v827 = vrot.slane %v826, 1
        %v828 = vadd.f32 %v826, %v827
        %v829 = vrot.slane %v801, 4
        %v830 = vadd.f32 %v801, %v829
        %v831 = vrot.slane %v830, 2
        %v832 = vadd.f32 %v830, %v831
        %v833 = vrot.slane %v832, 1
        %v834 = vadd.f32 %v832, %v833
        %v835 = vrot.slane %v802, 4
        %v836 = vadd.f32 %v802, %v835
        %v837 = vrot.slane %v836, 2
        %v838 = vadd.f32 %v836, %v837
        %v839 = vrot.slane %v838, 1
        %v840 = vadd.f32 %v838, %v839
        %v841 = vrot.slane %v803, 4
        %v842 = vadd.f32 %v803, %v841
        %v843 = vrot.slane %v842, 2
        %v844 = vadd.f32 %v842, %v843
        %v845 = vrot.slane %v844, 1
        %v846 = vadd.f32 %v844, %v845
        %v847 = vrot.slane %v804, 4
        %v848 = vadd.f32 %v804, %v847
        %v849 = vrot.slane %v848, 2
        %v850 = vadd.f32 %v848, %v849
        %v851 = vrot.slane %v850, 1
        %v852 = vadd.f32 %v850, %v851
        %v853 = vadd.f32 %v810, %v816
        %v854 = vadd.f32 %v853, %v822
        %v855 = vadd.f32 %v854, %v828
        %v856 = vadd.f32 %v855, %v834
        %v857 = vadd.f32 %v856, %v840
        %v858 = vadd.f32 %v857, %v846
        %v859 = vadd.f32 %v858, %v852
        %v860 = vrcp.pop 64.0
        %v861 = vmul.f32 64.0, %v860
        %v862 = vsub.f32 1.0, %v861
        %v863 = vmul.f32 %v860, %v862
        %v864 = vadd.f32 %v860, %v863
        %vm865 = vweird.f32 %v860
        %v866 = vsel %vm865, %v860, %v864
        %v867 = vmul.f32 %v859, %v866
        %v868 = vsub.f32 %v797, %v867
        %v869 = vsub.f32 %v798, %v867
        %v870 = vsub.f32 %v799, %v867
        %v871 = vsub.f32 %v800, %v867
        %v872 = vsub.f32 %v801, %v867
        %v873 = vsub.f32 %v802, %v867
        %v874 = vsub.f32 %v803, %v867
        %v875 = vsub.f32 %v804, %v867
        %v876 = vmul.f32 %v868, %v868
        %v877 = vmul.f32 %v869, %v869
        %v878 = vmul.f32 %v870, %v870
        %v879 = vmul.f32 %v871, %v871
        %v880 = vmul.f32 %v872, %v872
        %v881 = vmul.f32 %v873, %v873
        %v882 = vmul.f32 %v874, %v874
        %v883 = vmul.f32 %v875, %v875
        %v884 = vrot.slane %v876, 4
        %v885 = vadd.f32 %v876, %v884
        %v886 = vrot.slane %v885, 2
        %v887 = vadd.f32 %v885, %v886
        %v888 = vrot.slane %v887, 1
        %v889 = vadd.f32 %v887, %v888
        %v890 = vrot.slane %v877, 4
        %v891 = vadd.f32 %v877, %v890
        %v892 = vrot.slane %v891, 2
        %v893 = vadd.f32 %v891, %v892
        %v894 = vrot.slane %v893, 1
        %v895 = vadd.f32 %v893, %v894
        %v896 = vrot.slane %v878, 4
        %v897 = vadd.f32 %v878, %v896
        %v898 = vrot.slane %v897, 2
        %v899 = vadd.f32 %v897, %v898
        %v900 = vrot.slane %v899, 1
        %v901 = vadd.f32 %v899, %v900
        %v902 = vrot.slane %v879, 4
        %v903 = vadd.f32 %v879, %v902
        %v904 = vrot.slane %v903, 2
        %v905 = vadd.f32 %v903, %v904
        %v906 = vrot.slane %v905, 1
        %v907 = vadd.f32 %v905, %v906
        %v908 = vrot.slane %v880, 4
        %v909 = vadd.f32 %v880, %v908
        %v910 = vrot.slane %v909, 2
        %v911 = vadd.f32 %v909, %v910
        %v912 = vrot.slane %v911, 1
        %v913 = vadd.f32 %v911, %v912
        %v914 = vrot.slane %v881, 4
        %v915 = vadd.f32 %v881, %v914
        %v916 = vrot.slane %v915, 2
        %v917 = vadd.f32 %v915, %v916
        %v918 = vrot.slane %v917, 1
        %v919 = vadd.f32 %v917, %v918
        %v920 = vrot.slane %v882, 4
        %v921 = vadd.f32 %v882, %v920
        %v922 = vrot.slane %v921, 2
        %v923 = vadd.f32 %v921, %v922
        %v924 = vrot.slane %v923, 1
        %v925 = vadd.f32 %v923, %v924
        %v926 = vrot.slane %v883, 4
        %v927 = vadd.f32 %v883, %v926
        %v928 = vrot.slane %v927, 2
        %v929 = vadd.f32 %v927, %v928
        %v930 = vrot.slane %v929, 1
        %v931 = vadd.f32 %v929, %v930
        %v932 = vadd.f32 %v889, %v895
        %v933 = vadd.f32 %v932, %v901
        %v934 = vadd.f32 %v933, %v907
        %v935 = vadd.f32 %v934, %v913
        %v936 = vadd.f32 %v935, %v919
        %v937 = vadd.f32 %v936, %v925
        %v938 = vadd.f32 %v937, %v931
        %v939 = vmul.f32 %v938, %v866
        %v940 = vadd.f32 %v939, 1e-05
        %v941 = vrsqrt.pop %v940
        %v942 = vmul.f32 %v941, %v940
        %v943 = vmul.f32 %v942, %v941
        %v944 = vmul.f32 0.5, %v943
        %v945 = vsub.f32 1.5, %v944
        %v946 = vmul.f32 %v941, %v945
        %vm947 = vweird.f32 %v940
        %vm948 = vweird.f32 %v941
        %vm949 = vmor %vm947, %vm948
        %v950 = vsel %vm949, %v941, %v946
        %v951 = vmul.f32 %v868, %v950
        %v952 = vmul.f32 %v869, %v950
        %v953 = vmul.f32 %v870, %v950
        %v954 = vmul.f32 %v871, %v950
        %v955 = vmul.f32 %v872, %v950
        %v956 = vmul.f32 %v873, %v950
        %v957 = vmul.f32 %v874, %v950
        %v958 = vmul.f32 %v875, %v950
        %vm959 = vcmp.ge.f32.partialorder %v951, 0.0
        %vm960 = vcmp.ge.f32.partialorder %v952, 0.0
        %vm961 = vcmp.ge.f32.partialorder %v953, 0.0
        %vm962 = vcmp.ge.f32.partialorder %v954, 0.0
        %vm963 = vcmp.ge.f32.partialorder %v955, 0.0
        %vm964 = vcmp.ge.f32.partialorder %v956, 0.0
        %vm965 = vcmp.ge.f32.partialorder %v957, 0.0
        %vm966 = vcmp.ge.f32.partialorder %v958, 0.0
        %v967 = vmul.f32 %v951, 0.2
        %v968 = vmul.f32 %v952, 0.2
        %v969 = vmul.f32 %v953, 0.2
        %v970 = vmul.f32 %v954, 0.2
        %v971 = vmul.f32 %v955, 0.2
        %v972 = vmul.f32 %v956, 0.2
        %v973 = vmul.f32 %v957, 0.2
        %v974 = vmul.f32 %v958, 0.2
        %v975 = vsel %vm959, %v951, %v967
        %v976 = vsel %vm960, %v952, %v968
        %v977 = vsel %vm961, %v953, %v969
        %v978 = vsel %vm962, %v954, %v970
        %v979 = vsel %vm963, %v955, %v971
        %v980 = vsel %vm964, %v956, %v972
        %v981 = vsel %vm965, %v957, %v973
        %v982 = vsel %vm966, %v958, %v974
        %v983 = vpack.c.bf16 %v975, %v975
        %v984 = vpack.c.bf16 %v976, %v976
        %v985 = vpack.c.bf16 %v977, %v977
        %v986 = vpack.c.bf16 %v978, %v978
        %v987 = vpack.c.bf16 %v979, %v979
        %v988 = vpack.c.bf16 %v980, %v980
        %v989 = vpack.c.bf16 %v981, %v981
        %v990 = vpack.c.bf16 %v982, %v982
        %991 = vst [vmem:[%s182] sm:$0xf] %v983
        %992 = vst [vmem:[%s182 + $0x4] sm:$0xf] %v984
        %993 = vst [vmem:[%s182 + $0x8] sm:$0xf] %v985
        %994 = vst [vmem:[%s182 + $0xc] sm:$0xf] %v986
        %995 = vst [vmem:[%s182 + $0x10] sm:$0xf] %v987
        %996 = vst [vmem:[%s182 + $0x14] sm:$0xf] %v988
        %997 = vst [vmem:[%s182 + $0x18] sm:$0xf] %v989
        %998 = vst [vmem:[%s182 + $0x1c] sm:$0xf] %v990
      $region36: #{discriminator_forward.5} parent=31 // pred_fallthru
        _
      %p999 = scmp.lt.s32.totalorder %s18, 1
      %s1000 = scalar_select %p999, %s18, 1
      %s1001 = smul.addr %s1000, 8
      %s1002 = smul.addr %s1001, 4
      %s1003 = scalar_lea.vmem %s3, %s1002
      // Predicated region
      $region37: #{discriminator_forward.5} parent=31 // pred_check
        %p1004 = pneg %p112
      $region38: #{discriminator_forward.5} parent=31 // pred_check_branch
        %1006 = sbr.rel (%p1004) target = $region40
      $region39: #{discriminator_forward.5} parent=31 // pred_region
        _
      $region40: #{discriminator_forward.5} parent=31 // pred_fallthru
        _
    $region32: #{discriminator_forward.5} parent=5 // pred_fallthru
      _
    %p1007 = scmp.le.s32.totalorder 2, %s9
    // Predicated region
    $region41: #{discriminator_forward.5} parent=5 // pred_check
      %p1008 = pneg %p1007
    $region42: #{discriminator_forward.5} parent=5 // pred_check_branch
      %1010 = sbr.rel (%p1008) target = $region44
    $region43: #{discriminator_forward.5} parent=5 // pred_region
      %s1011 = ssub.s32 %s9, 2
      // Predicated region
      $region45: #{discriminator_forward.5} parent=43 // pred_check
        %p1012 = pneg %p118
      $region46: #{discriminator_forward.5} parent=43 // pred_check_branch
        %1014 = sbr.rel (%p1012) target = $region48
      $region47: #{discriminator_forward.5} parent=43 // pred_region
        %p1015 = scmp.lt.s32.totalorder %s20, 1
        %s1016 = scalar_select %p1015, %s20, 1
        %s1017 = smul.addr %s1016, 8
        %s1018 = smul.addr %s1017, 4
        %s1019 = scalar_lea.vmem %s3, %s1018
      $region48: #{discriminator_forward.5} parent=43 // pred_fallthru
        _
    $region44: #{discriminator_forward.5} parent=5 // pred_fallthru
      _
  $region6: #{discriminator_forward.5} parent=0 // loop_footer
    %s13 = sadd.s32 1, %s9
  $region7: #{discriminator_forward.5} parent=0 // loop_footer_branch
    %8 = sbr.rel target = $region3
  $region8: #{discriminator_forward.5} parent=0 // loop_exit
    _

// kernel: discriminator_forward.6
$region0: #{discriminator_forward.6}
  #allocation0 [shape = 'u32[]', space=smem, size = 0x4, offset = 0x4, fixed_abs, tag = 'smem constant byte address 0x4 - core index']
  #allocation1 [shape = 'u32[72,128]{1,0:T(1,128)}', space=vmem, size = 0x9000, scoped, tag = 'internal scratch']
  #allocation2 [shape = 'f32[4,4,128]{2,1,0:T(4,128)}', space=vmem, size = 0x2000, scoped, tag = 'scratch operand']
  %s0 = inlined_call_operand.vmem [shape: bf16[2,5,5,64], index: 0, kind: input, shape index: {}]
  %s1 = inlined_call_operand.vmem [shape: bf16[4,64,128], index: 1, kind: input, shape index: {}]
  %s2 = inlined_call_operand.vmem [shape: f32[1,128], index: 2, kind: input, shape index: {}]
  %s3 = inlined_call_operand.vmem [shape: bf16[2,4,4,128], index: 3, kind: output, shape index: {}]
  %s4 = sld [smem:[#allocation0]]
  $region49: #{discriminator_forward.6} parent=0
    _
  %s6 = ssub.s32 1, %s4
  %s7 = scalar_select 0, %s6, %s4
  loop: start=0, step=1, limit=4
  $region2: #{discriminator_forward.6} parent=0 // loop_pre_header
    _
  $region3: #{discriminator_forward.6} parent=0 // loop_header
    %s9 = sphi 0, %s13
    %p10 = scmp.ge.s32.totalorder %s9, 4
    %s16 = sphi 0, %s28
    %s17 = sphi 0, %s24
    %s18 = sphi 0, %s16
    %s19 = sphi 0, %s17
    %s20 = sphi 0, %s18
    %s21 = sphi 0, %s19
    %s31 = sphi 0, %s33
    %s34 = sphi 0, %s31
    %s35 = sphi 0, %s34
    %s51 = sphi 0, %s35
    %s55 = sphi 0, %s55
    %s57 = sphi 0, %s55
    %s58 = sphi 0, %s57
    %s72 = sphi 0, %s58
    %s76 = sphi 0, %s76
    %s78 = sphi 0, %s76
    %s79 = sphi 0, %s78
    %s93 = sphi 0, %s79
    %s99 = sphi 0, %s101
    %s102 = sphi 0, %s99
    %s103 = sphi 0, %s102
    %s119 = sphi 0, %s103
  $region4: #{discriminator_forward.6} parent=0 // loop_header_branch
    %12 = sbr.rel (%p10) target = $region8
  $region5: #{discriminator_forward.6} parent=0 // loop_body
    %s14 = ssub.s32 %s9, 1
    %s15 = ssub.s32 %s9, 2
    %s22 = sadd.s32 1, %s17
    %p23 = scmp.ge.s32.totalorder %s22, 1
    %s24 = scalar_select %p23, 0, %s22
    %s25 = sadd.s32 1, %s16
    %s26 = scalar_select %p23, %s25, %s16
    %p27 = scmp.ge.s32.totalorder %s26, 2
    %s28 = scalar_select %p27, 0, %s26
    %s29 = ssub.s32 %s16, %s28
    %p30 = scmp.eq.s32.totalorder %s29, 0
    %s32 = sadd.s32 %s31, 1
    %s33 = scalar_select %p30, %s31, %s32
    %p36 = pneg %p30
    %p37 = scmp.eq.s32.totalorder %s9, 1
    %p38 = por %p36, %p37
    %p39 = scmp.ne.s32.totalorder %s31, %s34
    %p40 = scmp.eq.s32.totalorder %s9, 0
    %p41 = por %p39, %p40
    %p42 = scmp.ne.s32.totalorder %s31, %s34
    %p43 = scmp.eq.s32.totalorder %s14, 1
    %p44 = por %p42, %p43
    %p45 = scmp.ne.s32.totalorder %s34, %s35
    %p46 = scmp.eq.s32.totalorder %s14, 0
    %p47 = por %p45, %p46
    %p48 = scmp.ne.s32.totalorder %s34, %s35
    %p49 = scmp.eq.s32.totalorder %s15, 1
    %p50 = por %p48, %p49
    %p52 = scmp.ne.s32.totalorder %s35, %s51
    %p53 = scmp.eq.s32.totalorder %s15, 0
    %p54 = por %p52, %p53
    %s56 = sadd.s32 %s55, 1
    %p59 = scmp.eq.s32.totalorder %s9, 1
    %p60 = scmp.ne.s32.totalorder %s55, %s57
    %p61 = scmp.eq.s32.totalorder %s9, 0
    %p62 = por %p60, %p61
    %p63 = scmp.ne.s32.totalorder %s55, %s57
    %p64 = scmp.eq.s32.totalorder %s14, 1
    %p65 = por %p63, %p64
    %p66 = scmp.ne.s32.totalorder %s57, %s58
    %p67 = scmp.eq.s32.totalorder %s14, 0
    %p68 = por %p66, %p67
    %p69 = scmp.ne.s32.totalorder %s57, %s58
    %p70 = scmp.eq.s32.totalorder %s15, 1
    %p71 = por %p69, %p70
    %p73 = scmp.ne.s32.totalorder %s58, %s72
    %p74 = scmp.eq.s32.totalorder %s15, 0
    %p75 = por %p73, %p74
    %s77 = sadd.s32 %s76, 1
    %p80 = scmp.eq.s32.totalorder %s9, 1
    %p81 = scmp.ne.s32.totalorder %s76, %s78
    %p82 = scmp.eq.s32.totalorder %s9, 0
    %p83 = por %p81, %p82
    %p84 = scmp.ne.s32.totalorder %s76, %s78
    %p85 = scmp.eq.s32.totalorder %s14, 1
    %p86 = por %p84, %p85
    %p87 = scmp.ne.s32.totalorder %s78, %s79
    %p88 = scmp.eq.s32.totalorder %s14, 0
    %p89 = por %p87, %p88
    %p90 = scmp.ne.s32.totalorder %s78, %s79
    %p91 = scmp.eq.s32.totalorder %s15, 1
    %p92 = por %p90, %p91
    %p94 = scmp.ne.s32.totalorder %s79, %s93
    %p95 = scmp.eq.s32.totalorder %s15, 0
    %p96 = por %p94, %p95
    %s97 = ssub.s32 %s16, %s28
    %p98 = scmp.eq.s32.totalorder %s97, 0
    %s100 = sadd.s32 %s99, 1
    %s101 = scalar_select %p98, %s99, %s100
    %p104 = pneg %p98
    %p105 = scmp.eq.s32.totalorder %s9, 1
    %p106 = por %p104, %p105
    %p107 = scmp.ne.s32.totalorder %s99, %s102
    %p108 = scmp.eq.s32.totalorder %s9, 0
    %p109 = por %p107, %p108
    %p110 = scmp.ne.s32.totalorder %s99, %s102
    %p111 = scmp.eq.s32.totalorder %s14, 1
    %p112 = por %p110, %p111
    %p113 = scmp.ne.s32.totalorder %s102, %s103
    %p114 = scmp.eq.s32.totalorder %s14, 0
    %p115 = por %p113, %p114
    %p116 = scmp.ne.s32.totalorder %s102, %s103
    %p117 = scmp.eq.s32.totalorder %s15, 1
    %p118 = por %p116, %p117
    %p120 = scmp.ne.s32.totalorder %s103, %s119
    %p121 = scmp.eq.s32.totalorder %s15, 0
    %p122 = por %p120, %p121
    %p123 = scmp.le.s32.totalorder 1, %s9
    %p124 = scmp.lt.s32.totalorder %s9, 3
    %p125 = pnand %p123, %p124
    %p126 = pneg %p125
    // Predicated region
    $region9: #{discriminator_forward.6} parent=5 // pred_check
      _
    $region10: #{discriminator_forward.6} parent=5 // pred_check_branch
      %128 = sbr.rel (%p125) target = $region12
    $region11: #{discriminator_forward.6} parent=5 // pred_region
      %s129 = ssub.s32 %s9, 1
      // Predicated region
      $region13: #{discriminator_forward.6} parent=11 // pred_check
        %p130 = pneg %p68
      $region14: #{discriminator_forward.6} parent=11 // pred_check_branch
        %132 = sbr.rel (%p130) target = $region16
      $region15: #{discriminator_forward.6} parent=11 // pred_region
        _
      $region16: #{discriminator_forward.6} parent=11 // pred_fallthru
        _
      // Predicated region
      $region17: #{discriminator_forward.6} parent=11 // pred_check
        %p133 = pneg %p89
      $region18: #{discriminator_forward.6} parent=11 // pred_check_branch
        %135 = sbr.rel (%p133) target = $region20
      $region19: #{discriminator_forward.6} parent=11 // pred_region
        _
      $region20: #{discriminator_forward.6} parent=11 // pred_fallthru
        _
    $region12: #{discriminator_forward.6} parent=5 // pred_fallthru
      _
    %p136 = scmp.lt.s32.totalorder %s9, 2
    // Predicated region
    $region21: #{discriminator_forward.6} parent=5 // pred_check
      %p137 = pneg %p136
    $region22: #{discriminator_forward.6} parent=5 // pred_check_branch
      %139 = sbr.rel (%p137) target = $region24
    $region23: #{discriminator_forward.6} parent=5 // pred_region
      // Predicated region
      $region25: #{discriminator_forward.6} parent=23 // pred_check
        %p140 = pneg %p41
      $region26: #{discriminator_forward.6} parent=23 // pred_check_branch
        %142 = sbr.rel (%p140) target = $region28
      $region27: #{discriminator_forward.6} parent=23 // pred_region
        %p143 = scmp.lt.s32.totalorder %s16, 1
        %s144 = scalar_select %p143, %s16, 1
        %s145 = smul.addr %s144, 5
        %s146 = smul.addr %s145, 4
        %s147 = scalar_lea.vmem %s0, %s146
      $region28: #{discriminator_forward.6} parent=23 // pred_fallthru
        _
    $region24: #{discriminator_forward.6} parent=5 // pred_fallthru
      _
    %p148 = scmp.le.s32.totalorder 1, %s9
    %p149 = scmp.lt.s32.totalorder %s9, 3
    %p150 = pnand %p148, %p149
    %p151 = pneg %p150
    // Predicated region
    $region29: #{discriminator_forward.6} parent=5 // pred_check
      _
    $region30: #{discriminator_forward.6} parent=5 // pred_check_branch
      %153 = sbr.rel (%p150) target = $region32
    $region31: #{discriminator_forward.6} parent=5 // pred_region
      %s154 = ssub.s32 %s9, 1
      %p155 = scmp.lt.s32.totalorder %s18, 1
      %s156 = scalar_select %p155, %s18, 1
      %s157 = smul.addr %s156, 5
      %s158 = smul.addr %s157, 4
      %s159 = scalar_lea.vmem %s0, %s158
      %p160 = pneg %p47
      %p161 = pneg %p44
      %p162 = pneg %p68
      %p163 = pneg %p65
      %p164 = pneg %p89
      %p165 = pneg %p86
      %p166 = pneg %p115
      %p167 = pneg %p112
      %p168 = scmp.lt.s32.totalorder %s18, 1
      %s169 = scalar_select %p168, %s18, 1
      %s170 = smul.addr %s169, 4
      %s171 = smul.addr %s170, 2
      %s172 = scalar_lea.vmem %s3, %s171
      %p173 = scmp.lt.s32.totalorder %s18, 1
      %s174 = scalar_select %p173, %s18, 1
      %s175 = smul.addr %s174, 5
      %s176 = smul.addr %s175, 4
      %s177 = scalar_lea.vmem %s0, %s176
      %p178 = scmp.lt.s32.totalorder %s18, 1
      %s179 = scalar_select %p178, %s18, 1
      %s180 = smul.addr %s179, 4
      %s181 = smul.addr %s180, 2
      %s182 = scalar_lea.vmem %s3, %s181
      %s184 = smul.u32 %s19, 4
      %s185 = smul.addr %s184, 4
      %s186 = scalar_lea.vmem %s177, %s185
      %v187 = vld [vmem:[%s186] sm:$0x7]
      %v188 = vld [vmem:[%s1] sm:$0xf]
      %v189 = vld [vmem:[%s1 + $0x4] sm:$0xf]
      %v190 = vld [vmem:[%s1 + $0x8] sm:$0xf]
      %v191 = vld [vmem:[%s1 + $0xc] sm:$0xf]
      %v192 = vld [vmem:[%s1 + $0x10] sm:$0xf]
      %v193 = vld [vmem:[%s1 + $0x14] sm:$0xf]
      %v194 = vld [vmem:[%s1 + $0x18] sm:$0xf]
      %v195 = vld [vmem:[%s1 + $0x1c] sm:$0xf]
      %s196 = scalar_lea.vmem %s1, 32
      %v197 = vld [vmem:[%s196] sm:$0xf]
      %v198 = vld [vmem:[%s196 + $0x4] sm:$0xf]
      %v199 = vld [vmem:[%s196 + $0x8] sm:$0xf]
      %v200 = vld [vmem:[%s196 + $0xc] sm:$0xf]
      %v201 = vld [vmem:[%s196 + $0x10] sm:$0xf]
      %v202 = vld [vmem:[%s196 + $0x14] sm:$0xf]
      %v203 = vld [vmem:[%s196 + $0x18] sm:$0xf]
      %v204 = vld [vmem:[%s196 + $0x1c] sm:$0xf]
      %v206 = vunpack.c.l.b16 %v187
      %v207 = vpack.c.b16 %v206, %v206
      %v209 = vshrl.u32 %v207, 16
      %v211 = vshll.u32 %v207, 16
      %v213 = vrot.slane %v211, 1
      %v214 = vor.u32 %v209, %v213
      %v223 = vunpack.c.l.b16 %v197
      %v224 = vunpack.c.l.b16 %v198
      %v225 = vunpack.c.l.b16 %v199
      %v226 = vunpack.c.l.b16 %v200
      %v227 = vunpack.c.l.b16 %v201
      %v228 = vunpack.c.l.b16 %v202
      %v229 = vunpack.c.l.b16 %v203
      %v230 = vunpack.c.l.b16 %v204
      %v231 = vpack.c.b16 %v224, %v223
      %v232 = vpack.c.b16 %v226, %v225
      %v233 = vpack.c.b16 %v228, %v227
      %v234 = vpack.c.b16 %v230, %v229
      %vm239 = vcmask 523264
      %v241 = vsel %vm239, %v214, 0
      %243 = vmatpush.bf16.msra.mxu0 0
      %244 = vmatpush.bf16.msra.mxu0 0
      %245 = vmatpush.bf16.msra.mxu0 0
      %246 = vmatpush.bf16.msra.mxu0 0
      %247 = vmatpush.bf16.msra.mxu0 %v234
      %248 = vmatpush.bf16.msra.mxu0 %v233
      %249 = vmatpush.bf16.msra.mxu0 %v232
      %250 = vmatpush.bf16.msra.mxu0 %v231
      %251 = vmatmul.bf16.gmra.mxu0 %v241
      %v252 = vpop.f32.mrf.mxu0
      %v253 = vadd.f32 0.0, %v252
      %v254 = vpop.f32.mrf.mxu0
      %255 = vdwg.mxu0
      %v264 = vunpack.c.l.b16 %v188
      %v265 = vunpack.c.l.b16 %v189
      %v266 = vunpack.c.l.b16 %v190
      %v267 = vunpack.c.l.b16 %v191
      %v268 = vunpack.c.l.b16 %v192
      %v269 = vunpack.c.l.b16 %v193
      %v270 = vunpack.c.l.b16 %v194
      %v271 = vunpack.c.l.b16 %v195
      %v272 = vpack.c.b16 %v265, %v264
      %v273 = vpack.c.b16 %v267, %v266
      %v274 = vpack.c.b16 %v269, %v268
      %v275 = vpack.c.b16 %v271, %v270
      %v281 = vsel %vm239, %v187, 0
      %283 = vmatpush.bf16.msra.mxu0 0
      %284 = vmatpush.bf16.msra.mxu0 0
      %285 = vmatpush.bf16.msra.mxu0 0
      %286 = vmatpush.bf16.msra.mxu0 0
      %287 = vmatpush.bf16.msra.mxu0 %v275
      %288 = vmatpush.bf16.msra.mxu0 %v274
      %289 = vmatpush.bf16.msra.mxu0 %v273
      %290 = vmatpush.bf16.msra.mxu0 %v272
      %291 = vmatmul.bf16.gmra.mxu0 %v281
      %v292 = vpop.f32.mrf.mxu0
      %v293 = vadd.f32 %v253, %v292
      %v294 = vpop.f32.mrf.mxu0
      %295 = vdwg.mxu0
      %s296 = sadd.s32 %s184, 1
      %s297 = smul.addr %s296, 4
      %s298 = scalar_lea.vmem %s177, %s297
      %v299 = vld [vmem:[%s298] sm:$0x7]
      %s300 = scalar_lea.vmem %s1, 64
      %v301 = vld [vmem:[%s300] sm:$0xf]
      %v302 = vld [vmem:[%s300 + $0x4] sm:$0xf]
      %v303 = vld [vmem:[%s300 + $0x8] sm:$0xf]
      %v304 = vld [vmem:[%s300 + $0xc] sm:$0xf]
      %v305 = vld [vmem:[%s300 + $0x10] sm:$0xf]
      %v306 = vld [vmem:[%s300 + $0x14] sm:$0xf]
      %v307 = vld [vmem:[%s300 + $0x18] sm:$0xf]
      %v308 = vld [vmem:[%s300 + $0x1c] sm:$0xf]
      %v317 = vunpack.c.l.b16 %v301
      %v318 = vunpack.c.l.b16 %v302
      %v319 = vunpack.c.l.b16 %v303
      %v320 = vunpack.c.l.b16 %v304
      %v321 = vunpack.c.l.b16 %v305
      %v322 = vunpack.c.l.b16 %v306
      %v323 = vunpack.c.l.b16 %v307
      %v324 = vunpack.c.l.b16 %v308
      %v325 = vpack.c.b16 %v318, %v317
      %v326 = vpack.c.b16 %v320, %v319
      %v327 = vpack.c.b16 %v322, %v321
      %v328 = vpack.c.b16 %v324, %v323
      %v334 = vsel %vm239, %v299, 0
      %336 = vmatpush.bf16.msra.mxu0 0
      %337 = vmatpush.bf16.msra.mxu0 0
      %338 = vmatpush.bf16.msra.mxu0 0
      %339 = vmatpush.bf16.msra.mxu0 0
      %340 = vmatpush.bf16.msra.mxu0 %v328
      %341 = vmatpush.bf16.msra.mxu0 %v327
      %342 = vmatpush.bf16.msra.mxu0 %v326
      %343 = vmatpush.bf16.msra.mxu0 %v325
      %344 = vmatmul.bf16.gmra.mxu0 %v334
      %v345 = vpop.f32.mrf.mxu0
      %v346 = vadd.f32 0.0, %v345
      %v347 = vpop.f32.mrf.mxu0
      %348 = vdwg.mxu0
      %v349 = vadd.f32 %v293, %v346
      %s350 = scalar_lea.vmem %s1, 96
      %v351 = vld [vmem:[%s350] sm:$0xf]
      %v352 = vld [vmem:[%s350 + $0x4] sm:$0xf]
      %v353 = vld [vmem:[%s350 + $0x8] sm:$0xf]
      %v354 = vld [vmem:[%s350 + $0xc] sm:$0xf]
      %v355 = vld [vmem:[%s350 + $0x10] sm:$0xf]
      %v356 = vld [vmem:[%s350 + $0x14] sm:$0xf]
      %v357 = vld [vmem:[%s350 + $0x18] sm:$0xf]
      %v358 = vld [vmem:[%s350 + $0x1c] sm:$0xf]
      %v360 = vunpack.c.l.b16 %v299
      %v361 = vpack.c.b16 %v360, %v360
      %v363 = vshrl.u32 %v361, 16
      %v365 = vshll.u32 %v361, 16
      %v367 = vrot.slane %v365, 1
      %v368 = vor.u32 %v363, %v367
      %v377 = vunpack.c.l.b16 %v351
      %v378 = vunpack.c.l.b16 %v352
      %v379 = vunpack.c.l.b16 %v353
      %v380 = vunpack.c.l.b16 %v354
      %v381 = vunpack.c.l.b16 %v355
      %v382 = vunpack.c.l.b16 %v356
      %v383 = vunpack.c.l.b16 %v357
      %v384 = vunpack.c.l.b16 %v358
      %v385 = vpack.c.b16 %v378, %v377
      %v386 = vpack.c.b16 %v380, %v379
      %v387 = vpack.c.b16 %v382, %v381
      %v388 = vpack.c.b16 %v384, %v383
      %v394 = vsel %vm239, %v368, 0
      %396 = vmatpush.bf16.msra.mxu0 0
      %397 = vmatpush.bf16.msra.mxu0 0
      %398 = vmatpush.bf16.msra.mxu0 0
      %399 = vmatpush.bf16.msra.mxu0 0
      %400 = vmatpush.bf16.msra.mxu0 %v388
      %401 = vmatpush.bf16.msra.mxu0 %v387
      %402 = vmatpush.bf16.msra.mxu0 %v386
      %403 = vmatpush.bf16.msra.mxu0 %v385
      %404 = vmatmul.bf16.gmra.mxu0 %v394
      %v405 = vpop.f32.mrf.mxu0
      %v406 = vadd.f32 0.0, %v405
      %v407 = vpop.f32.mrf.mxu0
      %408 = vdwg.mxu0
      %v409 = vadd.f32 %v349, %v406
      %s410 = smul.u32 %s184, 4
      %s411 = scalar_lea.vmem [#allocation2], %s410
      %412 = vst [vmem:[%s411] sm:$0xf] %v409
      %v413 = vld [vmem:[%s298] sm:$0x7]
      %v414 = vld [vmem:[%s1] sm:$0xf]
      %v415 = vld [vmem:[%s1 + $0x4] sm:$0xf]
      %v416 = vld [vmem:[%s1 + $0x8] sm:$0xf]
      %v417 = vld [vmem:[%s1 + $0xc] sm:$0xf]
      %v418 = vld [vmem:[%s1 + $0x10] sm:$0xf]
      %v419 = vld [vmem:[%s1 + $0x14] sm:$0xf]
      %v420 = vld [vmem:[%s1 + $0x18] sm:$0xf]
      %v421 = vld [vmem:[%s1 + $0x1c] sm:$0xf]
      %v422 = vld [vmem:[%s196] sm:$0xf]
      %v423 = vld [vmem:[%s196 + $0x4] sm:$0xf]
      %v424 = vld [vmem:[%s196 + $0x8] sm:$0xf]
      %v425 = vld [vmem:[%s196 + $0xc] sm:$0xf]
      %v426 = vld [vmem:[%s196 + $0x10] sm:$0xf]
      %v427 = vld [vmem:[%s196 + $0x14] sm:$0xf]
      %v428 = vld [vmem:[%s196 + $0x18] sm:$0xf]
      %v429 = vld [vmem:[%s196 + $0x1c] sm:$0xf]
      %v431 = vunpack.c.l.b16 %v413
      %v432 = vpack.c.b16 %v431, %v431
      %v434 = vshrl.u32 %v432, 16
      %v436 = vshll.u32 %v432, 16
      %v438 = vrot.slane %v436, 1
      %v439 = vor.u32 %v434, %v438
      %v448 = vunpack.c.l.b16 %v422
      %v449 = vunpack.c.l.b16 %v423
      %v450 = vunpack.c.l.b16 %v424
      %v451 = vunpack.c.l.b16 %v425
      %v452 = vunpack.c.l.b16 %v426
      %v453 = vunpack.c.l.b16 %v427
      %v454 = vunpack.c.l.b16 %v428
      %v455 = vunpack.c.l.b16 %v429
      %v456 = vpack.c.b16 %v449, %v448
      %v457 = vpack.c.b16 %v451, %v450
      %v458 = vpack.c.b16 %v453, %v452
      %v459 = vpack.c.b16 %v455, %v454
      %v465 = vsel %vm239, %v439, 0
      %467 = vmatpush.bf16.msra.mxu0 0
      %468 = vmatpush.bf16.msra.mxu0 0
      %469 = vmatpush.bf16.msra.mxu0 0
      %470 = vmatpush.bf16.msra.mxu0 0
      %471 = vmatpush.bf16.msra.mxu0 %v459
      %472 = vmatpush.bf16.msra.mxu0 %v458
      %473 = vmatpush.bf16.msra.mxu0 %v457
      %474 = vmatpush.bf16.msra.mxu0 %v456
      %475 = vmatmul.bf16.gmra.mxu0 %v465
      %v476 = vpop.f32.mrf.mxu0
      %v477 = vadd.f32 0.0, %v476
      %v478 = vpop.f32.mrf.mxu0
      %479 = vdwg.mxu0
      %v488 = vunpack.c.l.b16 %v414
      %v489 = vunpack.c.l.b16 %v415
      %v490 = vunpack.c.l.b16 %v416
      %v491 = vunpack.c.l.b16 %v417
      %v492 = vunpack.c.l.b16 %v418
      %v493 = vunpack.c.l.b16 %v419
      %v494 = vunpack.c.l.b16 %v420
      %v495 = vunpack.c.l.b16 %v421
      %v496 = vpack.c.b16 %v489, %v488
      %v497 = vpack.c.b16 %v491, %v490
      %v498 = vpack.c.b16 %v493, %v492
      %v499 = vpack.c.b16 %v495, %v494
      %v505 = vsel %vm239, %v413, 0
      %507 = vmatpush.bf16.msra.mxu0 0
      %508 = vmatpush.bf16.msra.mxu0 0
      %509 = vmatpush.bf16.msra.mxu0 0
      %510 = vmatpush.bf16.msra.mxu0 0
      %511 = vmatpush.bf16.msra.mxu0 %v499
      %512 = vmatpush.bf16.msra.mxu0 %v498
      %513 = vmatpush.bf16.msra.mxu0 %v497
      %514 = vmatpush.bf16.msra.mxu0 %v496
      %515 = vmatmul.bf16.gmra.mxu0 %v505
      %v516 = vpop.f32.mrf.mxu0
      %v517 = vadd.f32 %v477, %v516
      %v518 = vpop.f32.mrf.mxu0
      %519 = vdwg.mxu0
      %s520 = sadd.s32 %s184, 2
      %s521 = smul.addr %s520, 4
      %s522 = scalar_lea.vmem %s177, %s521
      %v523 = vld [vmem:[%s522] sm:$0x7]
      %v524 = vld [vmem:[%s300] sm:$0xf]
      %v525 = vld [vmem:[%s300 + $0x4] sm:$0xf]
      %v526 = vld [vmem:[%s300 + $0x8] sm:$0xf]
      %v527 = vld [vmem:[%s300 + $0xc] sm:$0xf]
      %v528 = vld [vmem:[%s300 + $0x10] sm:$0xf]
      %v529 = vld [vmem:[%s300 + $0x14] sm:$0xf]
      %v530 = vld [vmem:[%s300 + $0x18] sm:$0xf]
      %v531 = vld [vmem:[%s300 + $0x1c] sm:$0xf]
      %v540 = vunpack.c.l.b16 %v524
      %v541 = vunpack.c.l.b16 %v525
      %v542 = vunpack.c.l.b16 %v526
      %v543 = vunpack.c.l.b16 %v527
      %v544 = vunpack.c.l.b16 %v528
      %v545 = vunpack.c.l.b16 %v529
      %v546 = vunpack.c.l.b16 %v530
      %v547 = vunpack.c.l.b16 %v531
      %v548 = vpack.c.b16 %v541, %v540
      %v549 = vpack.c.b16 %v543, %v542
      %v550 = vpack.c.b16 %v545, %v544
      %v551 = vpack.c.b16 %v547, %v546
      %v557 = vsel %vm239, %v523, 0
      %559 = vmatpush.bf16.msra.mxu0 0
      %560 = vmatpush.bf16.msra.mxu0 0
      %561 = vmatpush.bf16.msra.mxu0 0
      %562 = vmatpush.bf16.msra.mxu0 0
      %563 = vmatpush.bf16.msra.mxu0 %v551
      %564 = vmatpush.bf16.msra.mxu0 %v550
      %565 = vmatpush.bf16.msra.mxu0 %v549
      %566 = vmatpush.bf16.msra.mxu0 %v548
      %567 = vmatmul.bf16.gmra.mxu0 %v557
      %v568 = vpop.f32.mrf.mxu0
      %v569 = vadd.f32 0.0, %v568
      %v570 = vpop.f32.mrf.mxu0
      %571 = vdwg.mxu0
      %v572 = vadd.f32 %v517, %v569
      %v573 = vld [vmem:[%s350] sm:$0xf]
      %v574 = vld [vmem:[%s350 + $0x4] sm:$0xf]
      %v575 = vld [vmem:[%s350 + $0x8] sm:$0xf]
      %v576 = vld [vmem:[%s350 + $0xc] sm:$0xf]
      %v577 = vld [vmem:[%s350 + $0x10] sm:$0xf]
      %v578 = vld [vmem:[%s350 + $0x14] sm:$0xf]
      %v579 = vld [vmem:[%s350 + $0x18] sm:$0xf]
      %v580 = vld [vmem:[%s350 + $0x1c] sm:$0xf]
      %v582 = vunpack.c.l.b16 %v523
      %v583 = vpack.c.b16 %v582, %v582
      %v585 = vshrl.u32 %v583, 16
      %v587 = vshll.u32 %v583, 16
      %v589 = vrot.slane %v587, 1
      %v590 = vor.u32 %v585, %v589
      %v599 = vunpack.c.l.b16 %v573
      %v600 = vunpack.c.l.b16 %v574
      %v601 = vunpack.c.l.b16 %v575
      %v602 = vunpack.c.l.b16 %v576
      %v603 = vunpack.c.l.b16 %v577
      %v604 = vunpack.c.l.b16 %v578
      %v605 = vunpack.c.l.b16 %v579
      %v606 = vunpack.c.l.b16 %v580
      %v607 = vpack.c.b16 %v600, %v599
      %v608 = vpack.c.b16 %v602, %v601
      %v609 = vpack.c.b16 %v604, %v603
      %v610 = vpack.c.b16 %v606, %v605
      %v616 = vsel %vm239, %v590, 0
      %618 = vmatpush.bf16.msra.mxu0 0
      %619 = vmatpush.bf16.msra.mxu0 0
      %620 = vmatpush.bf16.msra.mxu0 0
      %621 = vmatpush.bf16.msra.mxu0 0
      %622 = vmatpush.bf16.msra.mxu0 %v610
      %623 = vmatpush.bf16.msra.mxu0 %v609
      %624 = vmatpush.bf16.msra.mxu0 %v608
      %625 = vmatpush.bf16.msra.mxu0 %v607
      %626 = vmatmul.bf16.gmra.mxu0 %v616
      %v627 = vpop.f32.mrf.mxu0
      %v628 = vadd.f32 0.0, %v627
      %v629 = vpop.f32.mrf.mxu0
      %630 = vdwg.mxu0
      %v631 = vadd.f32 %v572, %v628
      %s632 = smul.u32 %s296, 4
      %s633 = scalar_lea.vmem [#allocation2], %s632
      %634 = vst [vmem:[%s633] sm:$0xf] %v631
      %v635 = vld [vmem:[%s522] sm:$0x7]
      %v636 = vld [vmem:[%s1] sm:$0xf]
      %v637 = vld [vmem:[%s1 + $0x4] sm:$0xf]
      %v638 = vld [vmem:[%s1 + $0x8] sm:$0xf]
      %v639 = vld [vmem:[%s1 + $0xc] sm:$0xf]
      %v640 = vld [vmem:[%s1 + $0x10] sm:$0xf]
      %v641 = vld [vmem:[%s1 + $0x14] sm:$0xf]
      %v642 = vld [vmem:[%s1 + $0x18] sm:$0xf]
      %v643 = vld [vmem:[%s1 + $0x1c] sm:$0xf]
      %v644 = vld [vmem:[%s196] sm:$0xf]
      %v645 = vld [vmem:[%s196 + $0x4] sm:$0xf]
      %v646 = vld [vmem:[%s196 + $0x8] sm:$0xf]
      %v647 = vld [vmem:[%s196 + $0xc] sm:$0xf]
      %v648 = vld [vmem:[%s196 + $0x10] sm:$0xf]
      %v649 = vld [vmem:[%s196 + $0x14] sm:$0xf]
      %v650 = vld [vmem:[%s196 + $0x18] sm:$0xf]
      %v651 = vld [vmem:[%s196 + $0x1c] sm:$0xf]
      %v653 = vunpack.c.l.b16 %v635
      %v654 = vpack.c.b16 %v653, %v653
      %v656 = vshrl.u32 %v654, 16
      %v658 = vshll.u32 %v654, 16
      %v660 = vrot.slane %v658, 1
      %v661 = vor.u32 %v656, %v660
      %v670 = vunpack.c.l.b16 %v644
      %v671 = vunpack.c.l.b16 %v645
      %v672 = vunpack.c.l.b16 %v646
      %v673 = vunpack.c.l.b16 %v647
      %v674 = vunpack.c.l.b16 %v648
      %v675 = vunpack.c.l.b16 %v649
      %v676 = vunpack.c.l.b16 %v650
      %v677 = vunpack.c.l.b16 %v651
      %v678 = vpack.c.b16 %v671, %v670
      %v679 = vpack.c.b16 %v673, %v672
      %v680 = vpack.c.b16 %v675, %v674
      %v681 = vpack.c.b16 %v677, %v676
      %v687 = vsel %vm239, %v661, 0
      %689 = vmatpush.bf16.msra.mxu0 0
      %690 = vmatpush.bf16.msra.mxu0 0
      %691 = vmatpush.bf16.msra.mxu0 0
      %692 = vmatpush.bf16.msra.mxu0 0
      %693 = vmatpush.bf16.msra.mxu0 %v681
      %694 = vmatpush.bf16.msra.mxu0 %v680
      %695 = vmatpush.bf16.msra.mxu0 %v679
      %696 = vmatpush.bf16.msra.mxu0 %v678
      %697 = vmatmul.bf16.gmra.mxu0 %v687
      %v698 = vpop.f32.mrf.mxu0
      %v699 = vadd.f32 0.0, %v698
      %v700 = vpop.f32.mrf.mxu0
      %701 = vdwg.mxu0
      %v710 = vunpack.c.l.b16 %v636
      %v711 = vunpack.c.l.b16 %v637
      %v712 = vunpack.c.l.b16 %v638
      %v713 = vunpack.c.l.b16 %v639
      %v714 = vunpack.c.l.b16 %v640
      %v715 = vunpack.c.l.b16 %v641
      %v716 = vunpack.c.l.b16 %v642
      %v717 = vunpack.c.l.b16 %v643
      %v718 = vpack.c.b16 %v711, %v710
      %v719 = vpack.c.b16 %v713, %v712
      %v720 = vpack.c.b16 %v715, %v714
      %v721 = vpack.c.b16 %v717, %v716
      %v727 = vsel %vm239, %v635, 0
      %729 = vmatpush.bf16.msra.mxu0 0
      %730 = vmatpush.bf16.msra.mxu0 0
      %731 = vmatpush.bf16.msra.mxu0 0
      %732 = vmatpush.bf16.msra.mxu0 0
      %733 = vmatpush.bf16.msra.mxu0 %v721
      %734 = vmatpush.bf16.msra.mxu0 %v720
      %735 = vmatpush.bf16.msra.mxu0 %v719
      %736 = vmatpush.bf16.msra.mxu0 %v718
      %737 = vmatmul.bf16.gmra.mxu0 %v727
      %v738 = vpop.f32.mrf.mxu0
      %v739 = vadd.f32 %v699, %v738
      %v740 = vpop.f32.mrf.mxu0
      %741 = vdwg.mxu0
      %s742 = sadd.s32 %s184, 3
      %s743 = smul.addr %s742, 4
      %s744 = scalar_lea.vmem %s177, %s743
      %v745 = vld [vmem:[%s744] sm:$0x7]
      %v746 = vld [vmem:[%s300] sm:$0xf]
      %v747 = vld [vmem:[%s300 + $0x4] sm:$0xf]
      %v748 = vld [vmem:[%s300 + $0x8] sm:$0xf]
      %v749 = vld [vmem:[%s300 + $0xc] sm:$0xf]
      %v750 = vld [vmem:[%s300 + $0x10] sm:$0xf]
      %v751 = vld [vmem:[%s300 + $0x14] sm:$0xf]
      %v752 = vld [vmem:[%s300 + $0x18] sm:$0xf]
      %v753 = vld [vmem:[%s300 + $0x1c] sm:$0xf]
      %v762 = vunpack.c.l.b16 %v746
      %v763 = vunpack.c.l.b16 %v747
      %v764 = vunpack.c.l.b16 %v748
      %v765 = vunpack.c.l.b16 %v749
      %v766 = vunpack.c.l.b16 %v750
      %v767 = vunpack.c.l.b16 %v751
      %v768 = vunpack.c.l.b16 %v752
      %v769 = vunpack.c.l.b16 %v753
      %v770 = vpack.c.b16 %v763, %v762
      %v771 = vpack.c.b16 %v765, %v764
      %v772 = vpack.c.b16 %v767, %v766
      %v773 = vpack.c.b16 %v769, %v768
      %v779 = vsel %vm239, %v745, 0
      %781 = vmatpush.bf16.msra.mxu0 0
      %782 = vmatpush.bf16.msra.mxu0 0
      %783 = vmatpush.bf16.msra.mxu0 0
      %784 = vmatpush.bf16.msra.mxu0 0
      %785 = vmatpush.bf16.msra.mxu0 %v773
      %786 = vmatpush.bf16.msra.mxu0 %v772
      %787 = vmatpush.bf16.msra.mxu0 %v771
      %788 = vmatpush.bf16.msra.mxu0 %v770
      %789 = vmatmul.bf16.gmra.mxu0 %v779
      %v790 = vpop.f32.mrf.mxu0
      %v791 = vadd.f32 0.0, %v790
      %v792 = vpop.f32.mrf.mxu0
      %793 = vdwg.mxu0
      %v794 = vadd.f32 %v739, %v791
      %v795 = vld [vmem:[%s350] sm:$0xf]
      %v796 = vld [vmem:[%s350 + $0x4] sm:$0xf]
      %v797 = vld [vmem:[%s350 + $0x8] sm:$0xf]
      %v798 = vld [vmem:[%s350 + $0xc] sm:$0xf]
      %v799 = vld [vmem:[%s350 + $0x10] sm:$0xf]
      %v800 = vld [vmem:[%s350 + $0x14] sm:$0xf]
      %v801 = vld [vmem:[%s350 + $0x18] sm:$0xf]
      %v802 = vld [vmem:[%s350 + $0x1c] sm:$0xf]
      %v804 = vunpack.c.l.b16 %v745
      %v805 = vpack.c.b16 %v804, %v804
      %v807 = vshrl.u32 %v805, 16
      %v809 = vshll.u32 %v805, 16
      %v811 = vrot.slane %v809, 1
      %v812 = vor.u32 %v807, %v811
      %v821 = vunpack.c.l.b16 %v795
      %v822 = vunpack.c.l.b16 %v796
      %v823 = vunpack.c.l.b16 %v797
      %v824 = vunpack.c.l.b16 %v798
      %v825 = vunpack.c.l.b16 %v799
      %v826 = vunpack.c.l.b16 %v800
      %v827 = vunpack.c.l.b16 %v801
      %v828 = vunpack.c.l.b16 %v802
      %v829 = vpack.c.b16 %v822, %v821
      %v830 = vpack.c.b16 %v824, %v823
      %v831 = vpack.c.b16 %v826, %v825
      %v832 = vpack.c.b16 %v828, %v827
      %v838 = vsel %vm239, %v812, 0
      %840 = vmatpush.bf16.msra.mxu0 0
      %841 = vmatpush.bf16.msra.mxu0 0
      %842 = vmatpush.bf16.msra.mxu0 0
      %843 = vmatpush.bf16.msra.mxu0 0
      %844 = vmatpush.bf16.msra.mxu0 %v832
      %845 = vmatpush.bf16.msra.mxu0 %v831
      %846 = vmatpush.bf16.msra.mxu0 %v830
      %847 = vmatpush.bf16.msra.mxu0 %v829
      %848 = vmatmul.bf16.gmra.mxu0 %v838
      %v849 = vpop.f32.mrf.mxu0
      %v850 = vadd.f32 0.0, %v849
      %v851 = vpop.f32.mrf.mxu0
      %852 = vdwg.mxu0
      %v853 = vadd.f32 %v794, %v850
      %s854 = smul.u32 %s520, 4
      %s855 = scalar_lea.vmem [#allocation2], %s854
      %856 = vst [vmem:[%s855] sm:$0xf] %v853
      %v857 = vld [vmem:[%s744] sm:$0x7]
      %v858 = vld [vmem:[%s1] sm:$0xf]
      %v859 = vld [vmem:[%s1 + $0x4] sm:$0xf]
      %v860 = vld [vmem:[%s1 + $0x8] sm:$0xf]
      %v861 = vld [vmem:[%s1 + $0xc] sm:$0xf]
      %v862 = vld [vmem:[%s1 + $0x10] sm:$0xf]
      %v863 = vld [vmem:[%s1 + $0x14] sm:$0xf]
      %v864 = vld [vmem:[%s1 + $0x18] sm:$0xf]
      %v865 = vld [vmem:[%s1 + $0x1c] sm:$0xf]
      %v866 = vld [vmem:[%s196] sm:$0xf]
      %v867 = vld [vmem:[%s196 + $0x4] sm:$0xf]
      %v868 = vld [vmem:[%s196 + $0x8] sm:$0xf]
      %v869 = vld [vmem:[%s196 + $0xc] sm:$0xf]
      %v870 = vld [vmem:[%s196 + $0x10] sm:$0xf]
      %v871 = vld [vmem:[%s196 + $0x14] sm:$0xf]
      %v872 = vld [vmem:[%s196 + $0x18] sm:$0xf]
      %v873 = vld [vmem:[%s196 + $0x1c] sm:$0xf]
      %v875 = vunpack.c.l.b16 %v857
      %v876 = vpack.c.b16 %v875, %v875
      %v878 = vshrl.u32 %v876, 16
      %v880 = vshll.u32 %v876, 16
      %v882 = vrot.slane %v880, 1
      %v883 = vor.u32 %v878, %v882
      %v892 = vunpack.c.l.b16 %v866
      %v893 = vunpack.c.l.b16 %v867
      %v894 = vunpack.c.l.b16 %v868
      %v895 = vunpack.c.l.b16 %v869
      %v896 = vunpack.c.l.b16 %v870
      %v897 = vunpack.c.l.b16 %v871
      %v898 = vunpack.c.l.b16 %v872
      %v899 = vunpack.c.l.b16 %v873
      %v900 = vpack.c.b16 %v893, %v892
      %v901 = vpack.c.b16 %v895, %v894
      %v902 = vpack.c.b16 %v897, %v896
      %v903 = vpack.c.b16 %v899, %v898
      %v909 = vsel %vm239, %v883, 0
      %911 = vmatpush.bf16.msra.mxu0 0
      %912 = vmatpush.bf16.msra.mxu0 0
      %913 = vmatpush.bf16.msra.mxu0 0
      %914 = vmatpush.bf16.msra.mxu0 0
      %915 = vmatpush.bf16.msra.mxu0 %v903
      %916 = vmatpush.bf16.msra.mxu0 %v902
      %917 = vmatpush.bf16.msra.mxu0 %v901
      %918 = vmatpush.bf16.msra.mxu0 %v900
      %919 = vmatmul.bf16.gmra.mxu0 %v909
      %v920 = vpop.f32.mrf.mxu0
      %v921 = vadd.f32 0.0, %v920
      %v922 = vpop.f32.mrf.mxu0
      %923 = vdwg.mxu0
      %v932 = vunpack.c.l.b16 %v858
      %v933 = vunpack.c.l.b16 %v859
      %v934 = vunpack.c.l.b16 %v860
      %v935 = vunpack.c.l.b16 %v861
      %v936 = vunpack.c.l.b16 %v862
      %v937 = vunpack.c.l.b16 %v863
      %v938 = vunpack.c.l.b16 %v864
      %v939 = vunpack.c.l.b16 %v865
      %v940 = vpack.c.b16 %v933, %v932
      %v941 = vpack.c.b16 %v935, %v934
      %v942 = vpack.c.b16 %v937, %v936
      %v943 = vpack.c.b16 %v939, %v938
      %v949 = vsel %vm239, %v857, 0
      %951 = vmatpush.bf16.msra.mxu0 0
      %952 = vmatpush.bf16.msra.mxu0 0
      %953 = vmatpush.bf16.msra.mxu0 0
      %954 = vmatpush.bf16.msra.mxu0 0
      %955 = vmatpush.bf16.msra.mxu0 %v943
      %956 = vmatpush.bf16.msra.mxu0 %v942
      %957 = vmatpush.bf16.msra.mxu0 %v941
      %958 = vmatpush.bf16.msra.mxu0 %v940
      %959 = vmatmul.bf16.gmra.mxu0 %v949
      %v960 = vpop.f32.mrf.mxu0
      %v961 = vadd.f32 %v921, %v960
      %v962 = vpop.f32.mrf.mxu0
      %963 = vdwg.mxu0
      %s964 = sadd.s32 %s184, 4
      %s965 = smul.addr %s964, 4
      %s966 = scalar_lea.vmem %s177, %s965
      %v967 = vld [vmem:[%s966] sm:$0x7]
      %v968 = vld [vmem:[%s300] sm:$0xf]
      %v969 = vld [vmem:[%s300 + $0x4] sm:$0xf]
      %v970 = vld [vmem:[%s300 + $0x8] sm:$0xf]
      %v971 = vld [vmem:[%s300 + $0xc] sm:$0xf]
      %v972 = vld [vmem:[%s300 + $0x10] sm:$0xf]
      %v973 = vld [vmem:[%s300 + $0x14] sm:$0xf]
      %v974 = vld [vmem:[%s300 + $0x18] sm:$0xf]
      %v975 = vld [vmem:[%s300 + $0x1c] sm:$0xf]
      %v984 = vunpack.c.l.b16 %v968
      %v985 = vunpack.c.l.b16 %v969
      %v986 = vunpack.c.l.b16 %v970
      %v987 = vunpack.c.l.b16 %v971
      %v988 = vunpack.c.l.b16 %v972
      %v989 = vunpack.c.l.b16 %v973
      %v990 = vunpack.c.l.b16 %v974
      %v991 = vunpack.c.l.b16 %v975
      %v992 = vpack.c.b16 %v985, %v984
      %v993 = vpack.c.b16 %v987, %v986
      %v994 = vpack.c.b16 %v989, %v988
      %v995 = vpack.c.b16 %v991, %v990
      %v1001 = vsel %vm239, %v967, 0
      %1003 = vmatpush.bf16.msra.mxu0 0
      %1004 = vmatpush.bf16.msra.mxu0 0
      %1005 = vmatpush.bf16.msra.mxu0 0
      %1006 = vmatpush.bf16.msra.mxu0 0
      %1007 = vmatpush.bf16.msra.mxu0 %v995
      %1008 = vmatpush.bf16.msra.mxu0 %v994
      %1009 = vmatpush.bf16.msra.mxu0 %v993
      %1010 = vmatpush.bf16.msra.mxu0 %v992
      %1011 = vmatmul.bf16.gmra.mxu0 %v1001
      %v1012 = vpop.f32.mrf.mxu0
      %v1013 = vadd.f32 0.0, %v1012
      %v1014 = vpop.f32.mrf.mxu0
      %1015 = vdwg.mxu0
      %v1016 = vadd.f32 %v961, %v1013
      %v1017 = vld [vmem:[%s350] sm:$0xf]
      %v1018 = vld [vmem:[%s350 + $0x4] sm:$0xf]
      %v1019 = vld [vmem:[%s350 + $0x8] sm:$0xf]
      %v1020 = vld [vmem:[%s350 + $0xc] sm:$0xf]
      %v1021 = vld [vmem:[%s350 + $0x10] sm:$0xf]
      %v1022 = vld [vmem:[%s350 + $0x14] sm:$0xf]
      %v1023 = vld [vmem:[%s350 + $0x18] sm:$0xf]
      %v1024 = vld [vmem:[%s350 + $0x1c] sm:$0xf]
      %v1026 = vunpack.c.l.b16 %v967
      %v1027 = vpack.c.b16 %v1026, %v1026
      %v1029 = vshrl.u32 %v1027, 16
      %v1031 = vshll.u32 %v1027, 16
      %v1033 = vrot.slane %v1031, 1
      %v1034 = vor.u32 %v1029, %v1033
      %v1043 = vunpack.c.l.b16 %v1017
      %v1044 = vunpack.c.l.b16 %v1018
      %v1045 = vunpack.c.l.b16 %v1019
      %v1046 = vunpack.c.l.b16 %v1020
      %v1047 = vunpack.c.l.b16 %v1021
      %v1048 = vunpack.c.l.b16 %v1022
      %v1049 = vunpack.c.l.b16 %v1023
      %v1050 = vunpack.c.l.b16 %v1024
      %v1051 = vpack.c.b16 %v1044, %v1043
      %v1052 = vpack.c.b16 %v1046, %v1045
      %v1053 = vpack.c.b16 %v1048, %v1047
      %v1054 = vpack.c.b16 %v1050, %v1049
      %v1060 = vsel %vm239, %v1034, 0
      %1062 = vmatpush.bf16.msra.mxu0 0
      %1063 = vmatpush.bf16.msra.mxu0 0
      %1064 = vmatpush.bf16.msra.mxu0 0
      %1065 = vmatpush.bf16.msra.mxu0 0
      %1066 = vmatpush.bf16.msra.mxu0 %v1054
      %1067 = vmatpush.bf16.msra.mxu0 %v1053
      %1068 = vmatpush.bf16.msra.mxu0 %v1052
      %1069 = vmatpush.bf16.msra.mxu0 %v1051
      %1070 = vmatmul.bf16.gmra.mxu0 %v1060
      %v1071 = vpop.f32.mrf.mxu0
      %v1072 = vadd.f32 0.0, %v1071
      %v1073 = vpop.f32.mrf.mxu0
      %1074 = vdwg.mxu0
      %v1075 = vadd.f32 %v1016, %v1072
      %s1076 = smul.u32 %s742, 4
      %s1077 = scalar_lea.vmem [#allocation2], %s1076
      %1078 = vst [vmem:[%s1077] sm:$0xf] %v1075
      %p1079 = scmp.eq.s32.totalorder %s19, 0
      // Predicated region
      $region33: #{discriminator_forward.6} parent=31 // pred_check
        %p1080 = pneg %p1079
      $region34: #{discriminator_forward.6} parent=31 // pred_check_branch
        %1082 = sbr.rel (%p1080) target = $region36
      $region35: #{discriminator_forward.6} parent=31 // pred_region
        %v1083 = vld [vmem:[#allocation2] sm:$0xf]
        %v1084 = vld [vmem:[#allocation2 + $0x4] sm:$0xf]
        %v1085 = vld [vmem:[#allocation2 + $0x8] sm:$0xf]
        %v1086 = vld [vmem:[#allocation2 + $0xc] sm:$0xf]
        %v1087 = vld [vmem:[%s2] sm:$0x1]
        %v1089 = vperm.slane %v1087, 0
        %v1091 = vadd.f32 %v1083, %v1089
        %v1092 = vadd.f32 %v1084, %v1089
        %v1093 = vadd.f32 %v1085, %v1089
        %v1094 = vadd.f32 %v1086, %v1089
        %vm1095 = vcmask 1043456
        %v1096 = vsel %vm1095, %v1091, 0.0
        %v1097 = vrot.slane %v1096, 4
        %v1098 = vadd.f32 %v1096, %v1097
        %v1099 = vrot.slane %v1098, 2
        %v1100 = vadd.f32 %v1098, %v1099
        %v1101 = vrot.slane %v1100, 1
        %v1102 = vadd.f32 %v1100, %v1101
        %v1103 = vsel %vm1095, %v1092, 0.0
        %v1104 = vrot.slane %v1103, 4
        %v1105 = vadd.f32 %v1103, %v1104
        %v1106 = vrot.slane %v1105, 2
        %v1107 = vadd.f32 %v1105, %v1106
        %v1108 = vrot.slane %v1107, 1
        %v1109 = vadd.f32 %v1107, %v1108
        %v1110 = vsel %vm1095, %v1093, 0.0
        %v1111 = vrot.slane %v1110, 4
        %v1112 = vadd.f32 %v1110, %v1111
        %v1113 = vrot.slane %v1112, 2
        %v1114 = vadd.f32 %v1112, %v1113
        %v1115 = vrot.slane %v1114, 1
        %v1116 = vadd.f32 %v1114, %v1115
        %v1117 = vsel %vm1095, %v1094, 0.0
        %v1118 = vrot.slane %v1117, 4
        %v1119 = vadd.f32 %v1117, %v1118
        %v1120 = vrot.slane %v1119, 2
        %v1121 = vadd.f32 %v1119, %v1120
        %v1122 = vrot.slane %v1121, 1
        %v1123 = vadd.f32 %v1121, %v1122
        %v1124 = vadd.f32 %v1102, %v1109
        %v1125 = vadd.f32 %v1124, %v1116
        %v1126 = vadd.f32 %v1125, %v1123
        %v1127 = vrcp.pop 16.0
        %v1128 = vmul.f32 16.0, %v1127
        %v1129 = vsub.f32 1.0, %v1128
        %v1130 = vmul.f32 %v1127, %v1129
        %v1131 = vadd.f32 %v1127, %v1130
        %vm1132 = vweird.f32 %v1127
        %v1133 = vsel %vm1132, %v1127, %v1131
        %v1134 = vmul.f32 %v1126, %v1133
        %v1135 = vsub.f32 %v1091, %v1134
        %v1136 = vsub.f32 %v1092, %v1134
        %v1137 = vsub.f32 %v1093, %v1134
        %v1138 = vsub.f32 %v1094, %v1134
        %v1139 = vmul.f32 %v1135, %v1135
        %v1140 = vmul.f32 %v1136, %v1136
        %v1141 = vmul.f32 %v1137, %v1137
        %v1142 = vmul.f32 %v1138, %v1138
        %v1143 = vsel %vm1095, %v1139, 0.0
        %v1144 = vrot.slane %v1143, 4
        %v1145 = vadd.f32 %v1143, %v1144
        %v1146 = vrot.slane %v1145, 2
        %v1147 = vadd.f32 %v1145, %v1146
        %v1148 = vrot.slane %v1147, 1
        %v1149 = vadd.f32 %v1147, %v1148
        %v1150 = vsel %vm1095, %v1140, 0.0
        %v1151 = vrot.slane %v1150, 4
        %v1152 = vadd.f32 %v1150, %v1151
        %v1153 = vrot.slane %v1152, 2
        %v1154 = vadd.f32 %v1152, %v1153
        %v1155 = vrot.slane %v1154, 1
        %v1156 = vadd.f32 %v1154, %v1155
        %v1157 = vsel %vm1095, %v1141, 0.0
        %v1158 = vrot.slane %v1157, 4
        %v1159 = vadd.f32 %v1157, %v1158
        %v1160 = vrot.slane %v1159, 2
        %v1161 = vadd.f32 %v1159, %v1160
        %v1162 = vrot.slane %v1161, 1
        %v1163 = vadd.f32 %v1161, %v1162
        %v1164 = vsel %vm1095, %v1142, 0.0
        %v1165 = vrot.slane %v1164, 4
        %v1166 = vadd.f32 %v1164, %v1165
        %v1167 = vrot.slane %v1166, 2
        %v1168 = vadd.f32 %v1166, %v1167
        %v1169 = vrot.slane %v1168, 1
        %v1170 = vadd.f32 %v1168, %v1169
        %v1171 = vadd.f32 %v1149, %v1156
        %v1172 = vadd.f32 %v1171, %v1163
        %v1173 = vadd.f32 %v1172, %v1170
        %v1174 = vmul.f32 %v1173, %v1133
        %v1175 = vadd.f32 %v1174, 1e-05
        %v1176 = vrsqrt.pop %v1175
        %v1177 = vmul.f32 %v1176, %v1175
        %v1178 = vmul.f32 %v1177, %v1176
        %v1179 = vmul.f32 0.5, %v1178
        %v1180 = vsub.f32 1.5, %v1179
        %v1181 = vmul.f32 %v1176, %v1180
        %vm1182 = vweird.f32 %v1175
        %vm1183 = vweird.f32 %v1176
        %vm1184 = vmor %vm1182, %vm1183
        %v1185 = vsel %vm1184, %v1176, %v1181
        %v1186 = vmul.f32 %v1135, %v1185
        %v1187 = vmul.f32 %v1136, %v1185
        %v1188 = vmul.f32 %v1137, %v1185
        %v1189 = vmul.f32 %v1138, %v1185
        %vm1190 = vcmp.ge.f32.partialorder %v1186, 0.0
        %vm1191 = vcmp.ge.f32.partialorder %v1187, 0.0
        %vm1192 = vcmp.ge.f32.partialorder %v1188, 0.0
        %vm1193 = vcmp.ge.f32.partialorder %v1189, 0.0
        %v1194 = vmul.f32 %v1186, 0.2
        %v1195 = vmul.f32 %v1187, 0.2
        %v1196 = vmul.f32 %v1188, 0.2
        %v1197 = vmul.f32 %v1189, 0.2
        %v1198 = vsel %vm1190, %v1186, %v1194
        %v1199 = vsel %vm1191, %v1187, %v1195
        %v1200 = vsel %vm1192, %v1188, %v1196
        %v1201 = vsel %vm1193, %v1189, %v1197
        %v1202 = vpack.c.bf16 %v1198, %v1198
        %v1203 = vpack.c.bf16 %v1199, %v1199
        %v1204 = vpack.c.bf16 %v1200, %v1200
        %v1205 = vpack.c.bf16 %v1201, %v1201
        %1206 = vst [vmem:[%s182] sm:$0x3] %v1202
        %1207 = vst [vmem:[%s182 + $0x2] sm:$0x3] %v1203
        %1208 = vst [vmem:[%s182 + $0x4] sm:$0x3] %v1204
        %1209 = vst [vmem:[%s182 + $0x6] sm:$0x3] %v1205
      $region36: #{discriminator_forward.6} parent=31 // pred_fallthru
        _
      %p1210 = scmp.lt.s32.totalorder %s18, 1
      %s1211 = scalar_select %p1210, %s18, 1
      %s1212 = smul.addr %s1211, 4
      %s1213 = smul.addr %s1212, 2
      %s1214 = scalar_lea.vmem %s3, %s1213
      // Predicated region
      $region37: #{discriminator_forward.6} parent=31 // pred_check
        %p1215 = pneg %p112
      $region38: #{discriminator_forward.6} parent=31 // pred_check_branch
        %1217 = sbr.rel (%p1215) target = $region40
      $region39: #{discriminator_forward.6} parent=31 // pred_region
        _
      $region40: #{discriminator_forward.6} parent=31 // pred_fallthru
        _
    $region32: #{discriminator_forward.6} parent=5 // pred_fallthru
      _
    %p1218 = scmp.le.s32.totalorder 2, %s9
    // Predicated region
    $region41: #{discriminator_forward.6} parent=5 // pred_check
      %p1219 = pneg %p1218
    $region42: #{discriminator_forward.6} parent=5 // pred_check_branch
      %1221 = sbr.rel (%p1219) target = $region44
    $region43: #{discriminator_forward.6} parent=5 // pred_region
      %s1222 = ssub.s32 %s9, 2
      // Predicated region
      $region45: #{discriminator_forward.6} parent=43 // pred_check
        %p1223 = pneg %p118
      $region46: #{discriminator_forward.6} parent=43 // pred_check_branch
        %1225 = sbr.rel (%p1223) target = $region48
      $region47: #{discriminator_forward.6} parent=43 // pred_region
        %p1226 = scmp.lt.s32.totalorder %s20, 1
        %s1227 = scalar_select %p1226, %s20, 1
        %s1228 = smul.addr %s1227, 4
        %s1229 = smul.addr %s1228, 2
        %s1230 = scalar_lea.vmem %s3, %s1229
      $region48: #{discriminator_forward.6} parent=43 // pred_fallthru
        _
    $region44: #{discriminator_forward.6} parent=5 // pred_fallthru
      _
  $region6: #{discriminator_forward.6} parent=0 // loop_footer
    %s13 = sadd.s32 1, %s9
  $region7: #{discriminator_forward.6} parent=0 // loop_footer_branch
    %8 = sbr.rel target = $region3
  $region8: #{discriminator_forward.6} parent=0 // loop_exit
    _

// kernel: discriminator_forward.7
$region0: #{discriminator_forward.7}
  #allocation0 [shape = 'u32[]', space=smem, size = 0x4, offset = 0x4, fixed_abs, tag = 'smem constant byte address 0x4 - core index']
  #allocation1 [shape = 'u32[72,128]{1,0:T(1,128)}', space=vmem, size = 0x9000, scoped, tag = 'internal scratch']
  #allocation2 [shape = 'f32[3,3,128]{2,1,0:T(4,128)}', space=vmem, size = 0x1800, scoped, tag = 'scratch operand']
  #allocation3 [shape = 'f32[5,5,128]{2,1,0:T(8,128)}', space=vmem, size = 0x5000, scoped, tag = 'scratch operand']
  %s0 = inlined_call_operand.vmem [shape: bf16[2,6,6,32], index: 0, kind: input, shape index: {}]
  %s1 = inlined_call_operand.vmem [shape: bf16[16,32,128], index: 1, kind: input, shape index: {}]
  %s2 = inlined_call_operand.vmem [shape: f32[1,128], index: 2, kind: input, shape index: {}]
  %s3 = inlined_call_operand.vmem [shape: bf16[16,128,128], index: 3, kind: input, shape index: {}]
  %s4 = inlined_call_operand.vmem [shape: f32[1,128], index: 4, kind: input, shape index: {}]
  %s5 = inlined_call_operand.vmem [shape: f32[2,2,2,128], index: 5, kind: output, shape index: {}]
  %s6 = sld [smem:[#allocation0]]
  $region57: #{discriminator_forward.7} parent=0
    _
  %s8 = ssub.s32 1, %s6
  %s9 = scalar_select 0, %s8, %s6
  loop: start=0, step=1, limit=4
  $region2: #{discriminator_forward.7} parent=0 // loop_pre_header
    _
  $region3: #{discriminator_forward.7} parent=0 // loop_header
    %s11 = sphi 0, %s15
    %p12 = scmp.ge.s32.totalorder %s11, 4
    %s18 = sphi 0, %s30
    %s19 = sphi 0, %s26
    %s20 = sphi 0, %s18
    %s21 = sphi 0, %s19
    %s22 = sphi 0, %s20
    %s23 = sphi 0, %s21
    %s33 = sphi 0, %s35
    %s36 = sphi 0, %s33
    %s37 = sphi 0, %s36
    %s53 = sphi 0, %s37
    %s57 = sphi 0, %s57
    %s59 = sphi 0, %s57
    %s60 = sphi 0, %s59
    %s74 = sphi 0, %s60
    %s78 = sphi 0, %s78
    %s80 = sphi 0, %s78
    %s81 = sphi 0, %s80
    %s95 = sphi 0, %s81
    %s99 = sphi 0, %s99
    %s101 = sphi 0, %s99
    %s102 = sphi 0, %s101
    %s116 = sphi 0, %s102
    %s120 = sphi 0, %s120
    %s122 = sphi 0, %s120
    %s123 = sphi 0, %s122
    %s137 = sphi 0, %s123
    %s143 = sphi 0, %s145
    %s146 = sphi 0, %s143
    %s147 = sphi 0, %s146
    %s163 = sphi 0, %s147
  $region4: #{discriminator_forward.7} parent=0 // loop_header_branch
    %14 = sbr.rel (%p12) target = $region8
  $region5: #{discriminator_forward.7} parent=0 // loop_body
    %s16 = ssub.s32 %s11, 1
    %s17 = ssub.s32 %s11, 2
    %s24 = sadd.s32 1, %s19
    %p25 = scmp.ge.s32.totalorder %s24, 1
    %s26 = scalar_select %p25, 0, %s24
    %s27 = sadd.s32 1, %s18
    %s28 = scalar_select %p25, %s27, %s18
    %p29 = scmp.ge.s32.totalorder %s28, 2
    %s30 = scalar_select %p29, 0, %s28
    %s31 = ssub.s32 %s18, %s30
    %p32 = scmp.eq.s32.totalorder %s31, 0
    %s34 = sadd.s32 %s33, 1
    %s35 = scalar_select %p32, %s33, %s34
    %p38 = pneg %p32
    %p39 = scmp.eq.s32.totalorder %s11, 1
    %p40 = por %p38, %p39
    %p41 = scmp.ne.s32.totalorder %s33, %s36
    %p42 = scmp.eq.s32.totalorder %s11, 0
    %p43 = por %p41, %p42
    %p44 = scmp.ne.s32.totalorder %s33, %s36
    %p45 = scmp.eq.s32.totalorder %s16, 1
    %p46 = por %p44, %p45
    %p47 = scmp.ne.s32.totalorder %s36, %s37
    %p48 = scmp.eq.s32.totalorder %s16, 0
    %p49 = por %p47, %p48
    %p50 = scmp.ne.s32.totalorder %s36, %s37
    %p51 = scmp.eq.s32.totalorder %s17, 1
    %p52 = por %p50, %p51
    %p54 = scmp.ne.s32.totalorder %s37, %s53
    %p55 = scmp.eq.s32.totalorder %s17, 0
    %p56 = por %p54, %p55
    %s58 = sadd.s32 %s57, 1
    %p61 = scmp.eq.s32.totalorder %s11, 1
    %p62 = scmp.ne.s32.totalorder %s57, %s59
    %p63 = scmp.eq.s32.totalorder %s11, 0
    %p64 = por %p62, %p63
    %p65 = scmp.ne.s32.totalorder %s57, %s59
    %p66 = scmp.eq.s32.totalorder %s16, 1
    %p67 = por %p65, %p66
    %p68 = scmp.ne.s32.totalorder %s59, %s60
    %p69 = scmp.eq.s32.totalorder %s16, 0
    %p70 = por %p68, %p69
    %p71 = scmp.ne.s32.totalorder %s59, %s60
    %p72 = scmp.eq.s32.totalorder %s17, 1
    %p73 = por %p71, %p72
    %p75 = scmp.ne.s32.totalorder %s60, %s74
    %p76 = scmp.eq.s32.totalorder %s17, 0
    %p77 = por %p75, %p76
    %s79 = sadd.s32 %s78, 1
    %p82 = scmp.eq.s32.totalorder %s11, 1
    %p83 = scmp.ne.s32.totalorder %s78, %s80
    %p84 = scmp.eq.s32.totalorder %s11, 0
    %p85 = por %p83, %p84
    %p86 = scmp.ne.s32.totalorder %s78, %s80
    %p87 = scmp.eq.s32.totalorder %s16, 1
    %p88 = por %p86, %p87
    %p89 = scmp.ne.s32.totalorder %s80, %s81
    %p90 = scmp.eq.s32.totalorder %s16, 0
    %p91 = por %p89, %p90
    %p92 = scmp.ne.s32.totalorder %s80, %s81
    %p93 = scmp.eq.s32.totalorder %s17, 1
    %p94 = por %p92, %p93
    %p96 = scmp.ne.s32.totalorder %s81, %s95
    %p97 = scmp.eq.s32.totalorder %s17, 0
    %p98 = por %p96, %p97
    %s100 = sadd.s32 %s99, 1
    %p103 = scmp.eq.s32.totalorder %s11, 1
    %p104 = scmp.ne.s32.totalorder %s99, %s101
    %p105 = scmp.eq.s32.totalorder %s11, 0
    %p106 = por %p104, %p105
    %p107 = scmp.ne.s32.totalorder %s99, %s101
    %p108 = scmp.eq.s32.totalorder %s16, 1
    %p109 = por %p107, %p108
    %p110 = scmp.ne.s32.totalorder %s101, %s102
    %p111 = scmp.eq.s32.totalorder %s16, 0
    %p112 = por %p110, %p111
    %p113 = scmp.ne.s32.totalorder %s101, %s102
    %p114 = scmp.eq.s32.totalorder %s17, 1
    %p115 = por %p113, %p114
    %p117 = scmp.ne.s32.totalorder %s102, %s116
    %p118 = scmp.eq.s32.totalorder %s17, 0
    %p119 = por %p117, %p118
    %s121 = sadd.s32 %s120, 1
    %p124 = scmp.eq.s32.totalorder %s11, 1
    %p125 = scmp.ne.s32.totalorder %s120, %s122
    %p126 = scmp.eq.s32.totalorder %s11, 0
    %p127 = por %p125, %p126
    %p128 = scmp.ne.s32.totalorder %s120, %s122
    %p129 = scmp.eq.s32.totalorder %s16, 1
    %p130 = por %p128, %p129
    %p131 = scmp.ne.s32.totalorder %s122, %s123
    %p132 = scmp.eq.s32.totalorder %s16, 0
    %p133 = por %p131, %p132
    %p134 = scmp.ne.s32.totalorder %s122, %s123
    %p135 = scmp.eq.s32.totalorder %s17, 1
    %p136 = por %p134, %p135
    %p138 = scmp.ne.s32.totalorder %s123, %s137
    %p139 = scmp.eq.s32.totalorder %s17, 0
    %p140 = por %p138, %p139
    %s141 = ssub.s32 %s18, %s30
    %p142 = scmp.eq.s32.totalorder %s141, 0
    %s144 = sadd.s32 %s143, 1
    %s145 = scalar_select %p142, %s143, %s144
    %p148 = pneg %p142
    %p149 = scmp.eq.s32.totalorder %s11, 1
    %p150 = por %p148, %p149
    %p151 = scmp.ne.s32.totalorder %s143, %s146
    %p152 = scmp.eq.s32.totalorder %s11, 0
    %p153 = por %p151, %p152
    %p154 = scmp.ne.s32.totalorder %s143, %s146
    %p155 = scmp.eq.s32.totalorder %s16, 1
    %p156 = por %p154, %p155
    %p157 = scmp.ne.s32.totalorder %s146, %s147
    %p158 = scmp.eq.s32.totalorder %s16, 0
    %p159 = por %p157, %p158
    %p160 = scmp.ne.s32.totalorder %s146, %s147
    %p161 = scmp.eq.s32.totalorder %s17, 1
    %p162 = por %p160, %p161
    %p164 = scmp.ne.s32.totalorder %s147, %s163
    %p165 = scmp.eq.s32.totalorder %s17, 0
    %p166 = por %p164, %p165
    %p167 = scmp.le.s32.totalorder 1, %s11
    %p168 = scmp.lt.s32.totalorder %s11, 3
    %p169 = pnand %p167, %p168
    %p170 = pneg %p169
    // Predicated region
    $region9: #{discriminator_forward.7} parent=5 // pred_check
      _
    $region10: #{discriminator_forward.7} parent=5 // pred_check_branch
      %172 = sbr.rel (%p169) target = $region12
    $region11: #{discriminator_forward.7} parent=5 // pred_region
      %s173 = ssub.s32 %s11, 1
      // Predicated region
      $region13: #{discriminator_forward.7} parent=11 // pred_check
        %p174 = pneg %p70
      $region14: #{discriminator_forward.7} parent=11 // pred_check_branch
        %176 = sbr.rel (%p174) target = $region16
      $region15: #{discriminator_forward.7} parent=11 // pred_region
        _
      $region16: #{discriminator_forward.7} parent=11 // pred_fallthru
        _
      // Predicated region
      $region17: #{discriminator_forward.7} parent=11 // pred_check
        %p177 = pneg %p91
      $region18: #{discriminator_forward.7} parent=11 // pred_check_branch
        %179 = sbr.rel (%p177) target = $region20
      $region19: #{discriminator_forward.7} parent=11 // pred_region
        _
      $region20: #{discriminator_forward.7} parent=11 // pred_fallthru
        _
      // Predicated region
      $region21: #{discriminator_forward.7} parent=11 // pred_check
        %p180 = pneg %p112
      $region22: #{discriminator_forward.7} parent=11 // pred_check_branch
        %182 = sbr.rel (%p180) target = $region24
      $region23: #{discriminator_forward.7} parent=11 // pred_region
        _
      $region24: #{discriminator_forward.7} parent=11 // pred_fallthru
        _
      // Predicated region
      $region25: #{discriminator_forward.7} parent=11 // pred_check
        %p183 = pneg %p133
      $region26: #{discriminator_forward.7} parent=11 // pred_check_branch
        %185 = sbr.rel (%p183) target = $region28
      $region27: #{discriminator_forward.7} parent=11 // pred_region
        _
      $region28: #{discriminator_forward.7} parent=11 // pred_fallthru
        _
    $region12: #{discriminator_forward.7} parent=5 // pred_fallthru
      _
    %p186 = scmp.lt.s32.totalorder %s11, 2
    // Predicated region
    $region29: #{discriminator_forward.7} parent=5 // pred_check
      %p187 = pneg %p186
    $region30: #{discriminator_forward.7} parent=5 // pred_check_branch
      %189 = sbr.rel (%p187) target = $region32
    $region31: #{discriminator_forward.7} parent=5 // pred_region
      // Predicated region
      $region33: #{discriminator_forward.7} parent=31 // pred_check
        %p190 = pneg %p43
      $region34: #{discriminator_forward.7} parent=31 // pred_check_branch
        %192 = sbr.rel (%p190) target = $region36
      $region35: #{discriminator_forward.7} parent=31 // pred_region
        %p193 = scmp.lt.s32.totalorder %s18, 1
        %s194 = scalar_select %p193, %s18, 1
        %s195 = smul.addr %s194, 6
        %s196 = smul.addr %s195, 4
        %s197 = scalar_lea.vmem %s0, %s196
      $region36: #{discriminator_forward.7} parent=31 // pred_fallthru
        _
    $region32: #{discriminator_forward.7} parent=5 // pred_fallthru
      _
    %p198 = scmp.le.s32.totalorder 1, %s11
    %p199 = scmp.lt.s32.totalorder %s11, 3
    %p200 = pnand %p198, %p199
    %p201 = pneg %p200
    // Predicated region
    $region37: #{discriminator_forward.7} parent=5 // pred_check
      _
    $region38: #{discriminator_forward.7} parent=5 // pred_check_branch
      %203 = sbr.rel (%p200) target = $region40
    $region39: #{discriminator_forward.7} parent=5 // pred_region
      %s204 = ssub.s32 %s11, 1
      %p205 = scmp.lt.s32.totalorder %s20, 1
      %s206 = scalar_select %p205, %s20, 1
      %s207 = smul.addr %s206, 6
      %s208 = smul.addr %s207, 4
      %s209 = scalar_lea.vmem %s0, %s208
      %p210 = pneg %p49
      %p211 = pneg %p46
      %p212 = pneg %p70
      %p213 = pneg %p67
      %p214 = pneg %p91
      %p215 = pneg %p88
      %p216 = pneg %p112
      %p217 = pneg %p109
      %p218 = pneg %p133
      %p219 = pneg %p130
      %p220 = pneg %p159
      %p221 = pneg %p156
      %p222 = scmp.lt.s32.totalorder %s20, 1
      %s223 = scalar_select %p222, %s20, 1
      %s224 = smul.addr %s223, 2
      %s225 = smul.addr %s224, 2
      %s226 = scalar_lea.vmem %s5, %s225
      %p227 = scmp.lt.s32.totalorder %s20, 1
      %s228 = scalar_select %p227, %s20, 1
      %s229 = smul.addr %s228, 6
      %s230 = smul.addr %s229, 4
      %s231 = scalar_lea.vmem %s0, %s230
      %p232 = scmp.lt.s32.totalorder %s20, 1
      %s233 = scalar_select %p232, %s20, 1
      %s234 = smul.addr %s233, 2
      %s235 = smul.addr %s234, 2
      %s236 = scalar_lea.vmem %s5, %s235
      %s238 = smul.u32 %s21, 3
      %s239 = smul.addr %s238, 4
      %s240 = scalar_lea.vmem %s231, %s239
      %v241 = vld [vmem:[%s240] sm:$0x7]
      %v242 = vld [vmem:[%s1] sm:$0xf]
      %v243 = vld [vmem:[%s1 + $0x4] sm:$0xf]
      %v244 = vld [vmem:[%s1 + $0x8] sm:$0xf]
      %v245 = vld [vmem:[%s1 + $0xc] sm:$0xf]
      %s246 = scalar_lea.vmem %s1, 16
      %v247 = vld [vmem:[%s246] sm:$0xf]
      %v248 = vld [vmem:[%s246 + $0x4] sm:$0xf]
      %v249 = vld [vmem:[%s246 + $0x8] sm:$0xf]
      %v250 = vld [vmem:[%s246 + $0xc] sm:$0xf]
      %v252 = vunpack.c.l.b16 %v241
      %v253 = vpack.c.b16 %v252, %v252
      %v255 = vshrl.u32 %v253, 16
      %v257 = vshll.u32 %v253, 16
      %v259 = vrot.slane %v257, 1
      %v260 = vor.u32 %v255, %v259
      %v265 = vunpack.c.l.b16 %v247
      %v266 = vunpack.c.l.b16 %v248
      %v267 = vunpack.c.l.b16 %v249
      %v268 = vunpack.c.l.b16 %v250
      %v269 = vpack.c.b16 %v266, %v265
      %v270 = vpack.c.b16 %v268, %v267
      %vm273 = vcmask 261120
      %v275 = vsel %vm273, %v260, 0
      %277 = vmatpush.bf16.msra.mxu0 0
      %278 = vmatpush.bf16.msra.mxu0 0
      %279 = vmatpush.bf16.msra.mxu0 0
      %280 = vmatpush.bf16.msra.mxu0 0
      %281 = vmatpush.bf16.msra.mxu0 0
      %282 = vmatpush.bf16.msra.mxu0 0
      %283 = vmatpush.bf16.msra.mxu0 %v270
      %284 = vmatpush.bf16.msra.mxu0 %v269
      %285 = vmatmul.bf16.gmra.mxu0 %v275
      %v286 = vpop.f32.mrf.mxu0
      %v287 = vadd.f32 0.0, %v286
      %v288 = vpop.f32.mrf.mxu0
      %289 = vdwg.mxu0
      %v294 = vunpack.c.l.b16 %v242
      %v295 = vunpack.c.l.b16 %v243
      %v296 = vunpack.c.l.b16 %v244
      %v297 = vunpack.c.l.b16 %v245
      %v298 = vpack.c.b16 %v295, %v294
      %v299 = vpack.c.b16 %v297, %v296
      %v303 = vsel %vm273, %v241, 0
      %305 = vmatpush.bf16.msra.mxu0 0
      %306 = vmatpush.bf16.msra.mxu0 0
      %307 = vmatpush.bf16.msra.mxu0 0
      %308 = vmatpush.bf16.msra.mxu0 0
      %309 = vmatpush.bf16.msra.mxu0 0
      %310 = vmatpush.bf16.msra.mxu0 0
      %311 = vmatpush.bf16.msra.mxu0 %v299
      %312 = vmatpush.bf16.msra.mxu0 %v298
      %313 = vmatmul.bf16.gmra.mxu0 %v303
      %v314 = vpop.f32.mrf.mxu0
      %v315 = vadd.f32 %v287, %v314
      %v316 = vpop.f32.mrf.mxu0
      %317 = vdwg.mxu0
      %s318 = scalar_lea.vmem %s1, 32
      %v319 = vld [vmem:[%s318] sm:$0xf]
      %v320 = vld [vmem:[%s318 + $0x4] sm:$0xf]
      %v321 = vld [vmem:[%s318 + $0x8] sm:$0xf]
      %v322 = vld [vmem:[%s318 + $0xc] sm:$0xf]
      %v323 = vrot.slane %v253, 1
      %v328 = vunpack.c.l.b16 %v319
      %v329 = vunpack.c.l.b16 %v320
      %v330 = vunpack.c.l.b16 %v321
      %v331 = vunpack.c.l.b16 %v322
      %v332 = vpack.c.b16 %v329, %v328
      %v333 = vpack.c.b16 %v331, %v330
      %v337 = vsel %vm273, %v323, 0
      %339 = vmatpush.bf16.msra.mxu0 0
      %340 = vmatpush.bf16.msra.mxu0 0
      %341 = vmatpush.bf16.msra.mxu0 0
      %342 = vmatpush.bf16.msra.mxu0 0
      %343 = vmatpush.bf16.msra.mxu0 0
      %344 = vmatpush.bf16.msra.mxu0 0
      %345 = vmatpush.bf16.msra.mxu0 %v333
      %346 = vmatpush.bf16.msra.mxu0 %v332
      %347 = vmatmul.bf16.gmra.mxu0 %v337
      %v348 = vpop.f32.mrf.mxu0
      %v349 = vadd.f32 0.0, %v348
      %v350 = vpop.f32.mrf.mxu0
      %351 = vdwg.mxu0
      %v352 = vadd.f32 %v315, %v349
      %s353 = scalar_lea.vmem %s1, 48
      %v354 = vld [vmem:[%s353] sm:$0xf]
      %v355 = vld [vmem:[%s353 + $0x4] sm:$0xf]
      %v356 = vld [vmem:[%s353 + $0x8] sm:$0xf]
      %v357 = vld [vmem:[%s353 + $0xc] sm:$0xf]
      %v358 = vrot.slane %v255, 1
      %v359 = vrot.slane %v257, 2
      %v360 = vor.u32 %v358, %v359
      %v365 = vunpack.c.l.b16 %v354
      %v366 = vunpack.c.l.b16 %v355
      %v367 = vunpack.c.l.b16 %v356
      %v368 = vunpack.c.l.b16 %v357
      %v369 = vpack.c.b16 %v366, %v365
      %v370 = vpack.c.b16 %v368, %v367
      %v374 = vsel %vm273, %v360, 0
      %376 = vmatpush.bf16.msra.mxu0 0
      %377 = vmatpush.bf16.msra.mxu0 0
      %378 = vmatpush.bf16.msra.mxu0 0
      %379 = vmatpush.bf16.msra.mxu0 0
      %380 = vmatpush.bf16.msra.mxu0 0
      %381 = vmatpush.bf16.msra.mxu0 0
      %382 = vmatpush.bf16.msra.mxu0 %v370
      %383 = vmatpush.bf16.msra.mxu0 %v369
      %384 = vmatmul.bf16.gmra.mxu0 %v374
      %v385 = vpop.f32.mrf.mxu0
      %v386 = vadd.f32 0.0, %v385
      %v387 = vpop.f32.mrf.mxu0
      %388 = vdwg.mxu0
      %v389 = vadd.f32 %v352, %v386
      %s390 = sadd.s32 %s238, 1
      %s391 = smul.addr %s390, 4
      %s392 = scalar_lea.vmem %s231, %s391
      %v393 = vld [vmem:[%s392] sm:$0x7]
      %s394 = scalar_lea.vmem %s1, 64
      %v395 = vld [vmem:[%s394] sm:$0xf]
      %v396 = vld [vmem:[%s394 + $0x4] sm:$0xf]
      %v397 = vld [vmem:[%s394 + $0x8] sm:$0xf]
      %v398 = vld [vmem:[%s394 + $0xc] sm:$0xf]
      %v403 = vunpack.c.l.b16 %v395
      %v404 = vunpack.c.l.b16 %v396
      %v405 = vunpack.c.l.b16 %v397
      %v406 = vunpack.c.l.b16 %v398
      %v407 = vpack.c.b16 %v404, %v403
      %v408 = vpack.c.b16 %v406, %v405
      %v412 = vsel %vm273, %v393, 0
      %414 = vmatpush.bf16.msra.mxu0 0
      %415 = vmatpush.bf16.msra.mxu0 0
      %416 = vmatpush.bf16.msra.mxu0 0
      %417 = vmatpush.bf16.msra.mxu0 0
      %418 = vmatpush.bf16.msra.mxu0 0
      %419 = vmatpush.bf16.msra.mxu0 0
      %420 = vmatpush.bf16.msra.mxu0 %v408
      %421 = vmatpush.bf16.msra.mxu0 %v407
      %422 = vmatmul.bf16.gmra.mxu0 %v412
      %v423 = vpop.f32.mrf.mxu0
      %v424 = vadd.f32 0.0, %v423
      %v425 = vpop.f32.mrf.mxu0
      %426 = vdwg.mxu0
      %v427 = vadd.f32 %v389, %v424
      %s428 = scalar_lea.vmem %s1, 80
      %v429 = vld [vmem:[%s428] sm:$0xf]
      %v430 = vld [vmem:[%s428 + $0x4] sm:$0xf]
      %v431 = vld [vmem:[%s428 + $0x8] sm:$0xf]
      %v432 = vld [vmem:[%s428 + $0xc] sm:$0xf]
      %v434 = vunpack.c.l.b16 %v393
      %v435 = vpack.c.b16 %v434, %v434
      %v437 = vshrl.u32 %v435, 16
      %v439 = vshll.u32 %v435, 16
      %v441 = vrot.slane %v439, 1
      %v442 = vor.u32 %v437, %v441
      %v447 = vunpack.c.l.b16 %v429
      %v448 = vunpack.c.l.b16 %v430
      %v449 = vunpack.c.l.b16 %v431
      %v450 = vunpack.c.l.b16 %v432
      %v451 = vpack.c.b16 %v448, %v447
      %v452 = vpack.c.b16 %v450, %v449
      %v456 = vsel %vm273, %v442, 0
      %458 = vmatpush.bf16.msra.mxu0 0
      %459 = vmatpush.bf16.msra.mxu0 0
      %460 = vmatpush.bf16.msra.mxu0 0
      %461 = vmatpush.bf16.msra.mxu0 0
      %462 = vmatpush.bf16.msra.mxu0 0
      %463 = vmatpush.bf16.msra.mxu0 0
      %464 = vmatpush.bf16.msra.mxu0 %v452
      %465 = vmatpush.bf16.msra.mxu0 %v451
      %466 = vmatmul.bf16.gmra.mxu0 %v456
      %v467 = vpop.f32.mrf.mxu0
      %v468 = vadd.f32 0.0, %v467
      %v469 = vpop.f32.mrf.mxu0
      %470 = vdwg.mxu0
      %v471 = vadd.f32 %v427, %v468
      %s472 = scalar_lea.vmem %s1, 96
      %v473 = vld [vmem:[%s472] sm:$0xf]
      %v474 = vld [vmem:[%s472 + $0x4] sm:$0xf]
      %v475 = vld [vmem:[%s472 + $0x8] sm:$0xf]
      %v476 = vld [vmem:[%s472 + $0xc] sm:$0xf]
      %v477 = vrot.slane %v435, 1
      %v482 = vunpack.c.l.b16 %v473
      %v483 = vunpack.c.l.b16 %v474
      %v484 = vunpack.c.l.b16 %v475
      %v485 = vunpack.c.l.b16 %v476
      %v486 = vpack.c.b16 %v483, %v482
      %v487 = vpack.c.b16 %v485, %v484
      %v491 = vsel %vm273, %v477, 0
      %493 = vmatpush.bf16.msra.mxu0 0
      %494 = vmatpush.bf16.msra.mxu0 0
      %495 = vmatpush.bf16.msra.mxu0 0
      %496 = vmatpush.bf16.msra.mxu0 0
      %497 = vmatpush.bf16.msra.mxu0 0
      %498 = vmatpush.bf16.msra.mxu0 0
      %499 = vmatpush.bf16.msra.mxu0 %v487
      %500 = vmatpush.bf16.msra.mxu0 %v486
      %501 = vmatmul.bf16.gmra.mxu0 %v491
      %v502 = vpop.f32.mrf.mxu0
      %v503 = vadd.f32 0.0, %v502
      %v504 = vpop.f32.mrf.mxu0
      %505 = vdwg.mxu0
      %v506 = vadd.f32 %v471, %v503
      %s507 = scalar_lea.vmem %s1, 112
      %v508 = vld [vmem:[%s507] sm:$0xf]
      %v509 = vld [vmem:[%s507 + $0x4] sm:$0xf]
      %v510 = vld [vmem:[%s507 + $0x8] sm:$0xf]
      %v511 = vld [vmem:[%s507 + $0xc] sm:$0xf]
      %v512 = vrot.slane %v437, 1
      %v513 = vrot.slane %v439, 2
      %v514 = vor.u32 %v512, %v513
      %v519 = vunpack.c.l.b16 %v508
      %v520 = vunpack.c.l.b16 %v509
      %v521 = vunpack.c.l.b16 %v510
      %v522 = vunpack.c.l.b16 %v511
      %v523 = vpack.c.b16 %v520, %v519
      %v524 = vpack.c.b16 %v522, %v521
      %v528 = vsel %vm273, %v514, 0
      %530 = vmatpush.bf16.msra.mxu0 0
      %531 = vmatpush.bf16.msra.mxu0 0
      %532 = vmatpush.bf16.msra.mxu0 0
      %533 = vmatpush.bf16.msra.mxu0 0
      %534 = vmatpush.bf16.msra.mxu0 0
      %535 = vmatpush.bf16.msra.mxu0 0
      %536 = vmatpush.bf16.msra.mxu0 %v524
      %537 = vmatpush.bf16.msra.mxu0 %v523
      %538 = vmatmul.bf16.gmra.mxu0 %v528
      %v539 = vpop.f32.mrf.mxu0
      %v540 = vadd.f32 0.0, %v539
      %v541 = vpop.f32.mrf.mxu0
      %542 = vdwg.mxu0
      %v543 = vadd.f32 %v506, %v540
      %s544 = sadd.s32 %s238, 2
      %s545 = smul.addr %s544, 4
      %s546 = scalar_lea.vmem %s231, %s545
      %v547 = vld [vmem:[%s546] sm:$0x7]
      %s548 = scalar_lea.vmem %s1, 128
      %v549 = vld [vmem:[%s548] sm:$0xf]
      %v550 = vld [vmem:[%s548 + $0x4] sm:$0xf]
      %v551 = vld [vmem:[%s548 + $0x8] sm:$0xf]
      %v552 = vld [vmem:[%s548 + $0xc] sm:$0xf]
      %v557 = vunpack.c.l.b16 %v549
      %v558 = vunpack.c.l.b16 %v550
      %v559 = vunpack.c.l.b16 %v551
      %v560 = vunpack.c.l.b16 %v552
      %v561 = vpack.c.b16 %v558, %v557
      %v562 = vpack.c.b16 %v560, %v559
      %v566 = vsel %vm273, %v547, 0
      %568 = vmatpush.bf16.msra.mxu0 0
      %569 = vmatpush.bf16.msra.mxu0 0
      %570 = vmatpush.bf16.msra.mxu0 0
      %571 = vmatpush.bf16.msra.mxu0 0
      %572 = vmatpush.bf16.msra.mxu0 0
      %573 = vmatpush.bf16.msra.mxu0 0
      %574 = vmatpush.bf16.msra.mxu0 %v562
      %575 = vmatpush.bf16.msra.mxu0 %v561
      %576 = vmatmul.bf16.gmra.mxu0 %v566
      %v577 = vpop.f32.mrf.mxu0
      %v578 = vadd.f32 0.0, %v577
      %v579 = vpop.f32.mrf.mxu0
      %580 = vdwg.mxu0
      %v581 = vadd.f32 %v543, %v578
      %s582 = scalar_lea.vmem %s1, 144
      %v583 = vld [vmem:[%s582] sm:$0xf]
      %v584 = vld [vmem:[%s582 + $0x4] sm:$0xf]
      %v585 = vld [vmem:[%s582 + $0x8] sm:$0xf]
      %v586 = vld [vmem:[%s582 + $0xc] sm:$0xf]
      %v588 = vunpack.c.l.b16 %v547
      %v589 = vpack.c.b16 %v588, %v588
      %v591 = vshrl.u32 %v589, 16
      %v593 = vshll.u32 %v589, 16
      %v595 = vrot.slane %v593, 1
      %v596 = vor.u32 %v591, %v595
      %v601 = vunpack.c.l.b16 %v583
      %v602 = vunpack.c.l.b16 %v584
      %v603 = vunpack.c.l.b16 %v585
      %v604 = vunpack.c.l.b16 %v586
      %v605 = vpack.c.b16 %v602, %v601
      %v606 = vpack.c.b16 %v604, %v603
      %v610 = vsel %vm273, %v596, 0
      %612 = vmatpush.bf16.msra.mxu0 0
      %613 = vmatpush.bf16.msra.mxu0 0
      %614 = vmatpush.bf16.msra.mxu0 0
      %615 = vmatpush.bf16.msra.mxu0 0
      %616 = vmatpush.bf16.msra.mxu0 0
      %617 = vmatpush.bf16.msra.mxu0 0
      %618 = vmatpush.bf16.msra.mxu0 %v606
      %619 = vmatpush.bf16.msra.mxu0 %v605
      %620 = vmatmul.bf16.gmra.mxu0 %v610
      %v621 = vpop.f32.mrf.mxu0
      %v622 = vadd.f32 0.0, %v621
      %v623 = vpop.f32.mrf.mxu0
      %624 = vdwg.mxu0
      %v625 = vadd.f32 %v581, %v622
      %s626 = scalar_lea.vmem %s1, 160
      %v627 = vld [vmem:[%s626] sm:$0xf]
      %v628 = vld [vmem:[%s626 + $0x4] sm:$0xf]
      %v629 = vld [vmem:[%s626 + $0x8] sm:$0xf]
      %v630 = vld [vmem:[%s626 + $0xc] sm:$0xf]
      %v631 = vrot.slane %v589, 1
      %v636 = vunpack.c.l.b16 %v627
      %v637 = vunpack.c.l.b16 %v628
      %v638 = vunpack.c.l.b16 %v629
      %v639 = vunpack.c.l.b16 %v630
      %v640 = vpack.c.b16 %v637, %v636
      %v641 = vpack.c.b16 %v639, %v638
      %v645 = vsel %vm273, %v631, 0
      %647 = vmatpush.bf16.msra.mxu0 0
      %648 = vmatpush.bf16.msra.mxu0 0
      %649 = vmatpush.bf16.msra.mxu0 0
      %650 = vmatpush.bf16.msra.mxu0 0
      %651 = vmatpush.bf16.msra.mxu0 0
      %652 = vmatpush.bf16.msra.mxu0 0
      %653 = vmatpush.bf16.msra.mxu0 %v641
      %654 = vmatpush.bf16.msra.mxu0 %v640
      %655 = vmatmul.bf16.gmra.mxu0 %v645
      %v656 = vpop.f32.mrf.mxu0
      %v657 = vadd.f32 0.0, %v656
      %v658 = vpop.f32.mrf.mxu0
      %659 = vdwg.mxu0
      %v660 = vadd.f32 %v625, %v657
      %s661 = scalar_lea.vmem %s1, 176
      %v662 = vld [vmem:[%s661] sm:$0xf]
      %v663 = vld [vmem:[%s661 + $0x4] sm:$0xf]
      %v664 = vld [vmem:[%s661 + $0x8] sm:$0xf]
      %v665 = vld [vmem:[%s661 + $0xc] sm:$0xf]
      %v666 = vrot.slane %v591, 1
      %v667 = vrot.slane %v593, 2
      %v668 = vor.u32 %v666, %v667
      %v673 = vunpack.c.l.b16 %v662
      %v674 = vunpack.c.l.b16 %v663
      %v675 = vunpack.c.l.b16 %v664
      %v676 = vunpack.c.l.b16 %v665
      %v677 = vpack.c.b16 %v674, %v673
      %v678 = vpack.c.b16 %v676, %v675
      %v682 = vsel %vm273, %v668, 0
      %684 = vmatpush.bf16.msra.mxu0 0
      %685 = vmatpush.bf16.msra.mxu0 0
      %686 = vmatpush.bf16.msra.mxu0 0
      %687 = vmatpush.bf16.msra.mxu0 0
      %688 = vmatpush.bf16.msra.mxu0 0
      %689 = vmatpush.bf16.msra.mxu0 0
      %690 = vmatpush.bf16.msra.mxu0 %v678
      %691 = vmatpush.bf16.msra.mxu0 %v677
      %692 = vmatmul.bf16.gmra.mxu0 %v682
      %v693 = vpop.f32.mrf.mxu0
      %v694 = vadd.f32 0.0, %v693
      %v695 = vpop.f32.mrf.mxu0
      %696 = vdwg.mxu0
      %v697 = vadd.f32 %v660, %v694
      %s698 = sadd.s32 %s238, 3
      %s699 = smul.addr %s698, 4
      %s700 = scalar_lea.vmem %s231, %s699
      %v701 = vld [vmem:[%s700] sm:$0x7]
      %s702 = scalar_lea.vmem %s1, 192
      %v703 = vld [vmem:[%s702] sm:$0xf]
      %v704 = vld [vmem:[%s702 + $0x4] sm:$0xf]
      %v705 = vld [vmem:[%s702 + $0x8] sm:$0xf]
      %v706 = vld [vmem:[%s702 + $0xc] sm:$0xf]
      %v711 = vunpack.c.l.b16 %v703
      %v712 = vunpack.c.l.b16 %v704
      %v713 = vunpack.c.l.b16 %v705
      %v714 = vunpack.c.l.b16 %v706
      %v715 = vpack.c.b16 %v712, %v711
      %v716 = vpack.c.b16 %v714, %v713
      %v720 = vsel %vm273, %v701, 0
      %722 = vmatpush.bf16.msra.mxu0 0
      %723 = vmatpush.bf16.msra.mxu0 0
      %724 = vmatpush.bf16.msra.mxu0 0
      %725 = vmatpush.bf16.msra.mxu0 0
      %726 = vmatpush.bf16.msra.mxu0 0
      %727 = vmatpush.bf16.msra.mxu0 0
      %728 = vmatpush.bf16.msra.mxu0 %v716
      %729 = vmatpush.bf16.msra.mxu0 %v715
      %730 = vmatmul.bf16.gmra.mxu0 %v720
      %v731 = vpop.f32.mrf.mxu0
      %v732 = vadd.f32 0.0, %v731
      %v733 = vpop.f32.mrf.mxu0
      %734 = vdwg.mxu0
      %v735 = vadd.f32 %v697, %v732
      %s736 = scalar_lea.vmem %s1, 208
      %v737 = vld [vmem:[%s736] sm:$0xf]
      %v738 = vld [vmem:[%s736 + $0x4] sm:$0xf]
      %v739 = vld [vmem:[%s736 + $0x8] sm:$0xf]
      %v740 = vld [vmem:[%s736 + $0xc] sm:$0xf]
      %v742 = vunpack.c.l.b16 %v701
      %v743 = vpack.c.b16 %v742, %v742
      %v745 = vshrl.u32 %v743, 16
      %v747 = vshll.u32 %v743, 16
      %v749 = vrot.slane %v747, 1
      %v750 = vor.u32 %v745, %v749
      %v755 = vunpack.c.l.b16 %v737
      %v756 = vunpack.c.l.b16 %v738
      %v757 = vunpack.c.l.b16 %v739
      %v758 = vunpack.c.l.b16 %v740
      %v759 = vpack.c.b16 %v756, %v755
      %v760 = vpack.c.b16 %v758, %v757
      %v764 = vsel %vm273, %v750, 0
      %766 = vmatpush.bf16.msra.mxu0 0
      %767 = vmatpush.bf16.msra.mxu0 0
      %768 = vmatpush.bf16.msra.mxu0 0
      %769 = vmatpush.bf16.msra.mxu0 0
      %770 = vmatpush.bf16.msra.mxu0 0
      %771 = vmatpush.bf16.msra.mxu0 0
      %772 = vmatpush.bf16.msra.mxu0 %v760
      %773 = vmatpush.bf16.msra.mxu0 %v759
      %774 = vmatmul.bf16.gmra.mxu0 %v764
      %v775 = vpop.f32.mrf.mxu0
      %v776 = vadd.f32 0.0, %v775
      %v777 = vpop.f32.mrf.mxu0
      %778 = vdwg.mxu0
      %v779 = vadd.f32 %v735, %v776
      %s780 = scalar_lea.vmem %s1, 224
      %v781 = vld [vmem:[%s780] sm:$0xf]
      %v782 = vld [vmem:[%s780 + $0x4] sm:$0xf]
      %v783 = vld [vmem:[%s780 + $0x8] sm:$0xf]
      %v784 = vld [vmem:[%s780 + $0xc] sm:$0xf]
      %v785 = vrot.slane %v743, 1
      %v790 = vunpack.c.l.b16 %v781
      %v791 = vunpack.c.l.b16 %v782
      %v792 = vunpack.c.l.b16 %v783
      %v793 = vunpack.c.l.b16 %v784
      %v794 = vpack.c.b16 %v791, %v790
      %v795 = vpack.c.b16 %v793, %v792
      %v799 = vsel %vm273, %v785, 0
      %801 = vmatpush.bf16.msra.mxu0 0
      %802 = vmatpush.bf16.msra.mxu0 0
      %803 = vmatpush.bf16.msra.mxu0 0
      %804 = vmatpush.bf16.msra.mxu0 0
      %805 = vmatpush.bf16.msra.mxu0 0
      %806 = vmatpush.bf16.msra.mxu0 0
      %807 = vmatpush.bf16.msra.mxu0 %v795
      %808 = vmatpush.bf16.msra.mxu0 %v794
      %809 = vmatmul.bf16.gmra.mxu0 %v799
      %v810 = vpop.f32.mrf.mxu0
      %v811 = vadd.f32 0.0, %v810
      %v812 = vpop.f32.mrf.mxu0
      %813 = vdwg.mxu0
      %v814 = vadd.f32 %v779, %v811
      %s815 = scalar_lea.vmem %s1, 240
      %v816 = vld [vmem:[%s815] sm:$0xf]
      %v817 = vld [vmem:[%s815 + $0x4] sm:$0xf]
      %v818 = vld [vmem:[%s815 + $0x8] sm:$0xf]
      %v819 = vld [vmem:[%s815 + $0xc] sm:$0xf]
      %v820 = vrot.slane %v745, 1
      %v821 = vrot.slane %v747, 2
      %v822 = vor.u32 %v820, %v821
      %v827 = vunpack.c.l.b16 %v816
      %v828 = vunpack.c.l.b16 %v817
      %v829 = vunpack.c.l.b16 %v818
      %v830 = vunpack.c.l.b16 %v819
      %v831 = vpack.c.b16 %v828, %v827
      %v832 = vpack.c.b16 %v830, %v829
      %v836 = vsel %vm273, %v822, 0
      %838 = vmatpush.bf16.msra.mxu0 0
      %839 = vmatpush.bf16.msra.mxu0 0
      %840 = vmatpush.bf16.msra.mxu0 0
      %841 = vmatpush.bf16.msra.mxu0 0
      %842 = vmatpush.bf16.msra.mxu0 0
      %843 = vmatpush.bf16.msra.mxu0 0
      %844 = vmatpush.bf16.msra.mxu0 %v832
      %845 = vmatpush.bf16.msra.mxu0 %v831
      %846 = vmatmul.bf16.gmra.mxu0 %v836
      %v847 = vpop.f32.mrf.mxu0
      %v848 = vadd.f32 0.0, %v847
      %v849 = vpop.f32.mrf.mxu0
      %850 = vdwg.mxu0
      %v851 = vadd.f32 %v814, %v848
      %s852 = smul.u32 %s238, 4
      %s853 = scalar_lea.vmem [#allocation2], %s852
      %854 = vst [vmem:[%s853] sm:$0x7] %v851
      %v855 = vld [vmem:[%s392] sm:$0x7]
      %v856 = vld [vmem:[%s1] sm:$0xf]
      %v857 = vld [vmem:[%s1 + $0x4] sm:$0xf]
      %v858 = vld [vmem:[%s1 + $0x8] sm:$0xf]
      %v859 = vld [vmem:[%s1 + $0xc] sm:$0xf]
      %v860 = vld [vmem:[%s246] sm:$0xf]
      %v861 = vld [vmem:[%s246 + $0x4] sm:$0xf]
      %v862 = vld [vmem:[%s246 + $0x8] sm:$0xf]
      %v863 = vld [vmem:[%s246 + $0xc] sm:$0xf]
      %v865 = vunpack.c.l.b16 %v855
      %v866 = vpack.c.b16 %v865, %v865
      %v868 = vshrl.u32 %v866, 16
      %v870 = vshll.u32 %v866, 16
      %v872 = vrot.slane %v870, 1
      %v873 = vor.u32 %v868, %v872
      %v878 = vunpack.c.l.b16 %v860
      %v879 = vunpack.c.l.b16 %v861
      %v880 = vunpack.c.l.b16 %v862
      %v881 = vunpack.c.l.b16 %v863
      %v882 = vpack.c.b16 %v879, %v878
      %v883 = vpack.c.b16 %v881, %v880
      %v887 = vsel %vm273, %v873, 0
      %889 = vmatpush.bf16.msra.mxu0 0
      %890 = vmatpush.bf16.msra.mxu0 0
      %891 = vmatpush.bf16.msra.mxu0 0
      %892 = vmatpush.bf16.msra.mxu0 0
      %893 = vmatpush.bf16.msra.mxu0 0
      %894 = vmatpush.bf16.msra.mxu0 0
      %895 = vmatpush.bf16.msra.mxu0 %v883
      %896 = vmatpush.bf16.msra.mxu0 %v882
      %897 = vmatmul.bf16.gmra.mxu0 %v887
      %v898 = vpop.f32.mrf.mxu0
      %v899 = vadd.f32 0.0, %v898
      %v900 = vpop.f32.mrf.mxu0
      %901 = vdwg.mxu0
      %v906 = vunpack.c.l.b16 %v856
      %v907 = vunpack.c.l.b16 %v857
      %v908 = vunpack.c.l.b16 %v858
      %v909 = vunpack.c.l.b16 %v859
      %v910 = vpack.c.b16 %v907, %v906
      %v911 = vpack.c.b16 %v909, %v908
      %v915 = vsel %vm273, %v855, 0
      %917 = vmatpush.bf16.msra.mxu0 0
      %918 = vmatpush.bf16.msra.mxu0 0
      %919 = vmatpush.bf16.msra.mxu0 0
      %920 = vmatpush.bf16.msra.mxu0 0
      %921 = vmatpush.bf16.msra.mxu0 0
      %922 = vmatpush.bf16.msra.mxu0 0
      %923 = vmatpush.bf16.msra.mxu0 %v911
      %924 = vmatpush.bf16.msra.mxu0 %v910
      %925 = vmatmul.bf16.gmra.mxu0 %v915
      %v926 = vpop.f32.mrf.mxu0
      %v927 = vadd.f32 %v899, %v926
      %v928 = vpop.f32.mrf.mxu0
      %929 = vdwg.mxu0
      %v930 = vld [vmem:[%s318] sm:$0xf]
      %v931 = vld [vmem:[%s318 + $0x4] sm:$0xf]
      %v932 = vld [vmem:[%s318 + $0x8] sm:$0xf]
      %v933 = vld [vmem:[%s318 + $0xc] sm:$0xf]
      %v934 = vrot.slane %v866, 1
      %v939 = vunpack.c.l.b16 %v930
      %v940 = vunpack.c.l.b16 %v931
      %v941 = vunpack.c.l.b16 %v932
      %v942 = vunpack.c.l.b16 %v933
      %v943 = vpack.c.b16 %v940, %v939
      %v944 = vpack.c.b16 %v942, %v941
      %v948 = vsel %vm273, %v934, 0
      %950 = vmatpush.bf16.msra.mxu0 0
      %951 = vmatpush.bf16.msra.mxu0 0
      %952 = vmatpush.bf16.msra.mxu0 0
      %953 = vmatpush.bf16.msra.mxu0 0
      %954 = vmatpush.bf16.msra.mxu0 0
      %955 = vmatpush.bf16.msra.mxu0 0
      %956 = vmatpush.bf16.msra.mxu0 %v944
      %957 = vmatpush.bf16.msra.mxu0 %v943
      %958 = vmatmul.bf16.gmra.mxu0 %v948
      %v959 = vpop.f32.mrf.mxu0
      %v960 = vadd.f32 0.0, %v959
      %v961 = vpop.f32.mrf.mxu0
      %962 = vdwg.mxu0
      %v963 = vadd.f32 %v927, %v960
      %v964 = vld [vmem:[%s353] sm:$0xf]
      %v965 = vld [vmem:[%s353 + $0x4] sm:$0xf]
      %v966 = vld [vmem:[%s353 + $0x8] sm:$0xf]
      %v967 = vld [vmem:[%s353 + $0xc] sm:$0xf]
      %v968 = vrot.slane %v868, 1
      %v969 = vrot.slane %v870, 2
      %v970 = vor.u32 %v968, %v969
      %v975 = vunpack.c.l.b16 %v964
      %v976 = vunpack.c.l.b16 %v965
      %v977 = vunpack.c.l.b16 %v966
      %v978 = vunpack.c.l.b16 %v967
      %v979 = vpack.c.b16 %v976, %v975
      %v980 = vpack.c.b16 %v978, %v977
      %v984 = vsel %vm273, %v970, 0
      %986 = vmatpush.bf16.msra.mxu0 0
      %987 = vmatpush.bf16.msra.mxu0 0
      %988 = vmatpush.bf16.msra.mxu0 0
      %989 = vmatpush.bf16.msra.mxu0 0
      %990 = vmatpush.bf16.msra.mxu0 0
      %991 = vmatpush.bf16.msra.mxu0 0
      %992 = vmatpush.bf16.msra.mxu0 %v980
      %993 = vmatpush.bf16.msra.mxu0 %v979
      %994 = vmatmul.bf16.gmra.mxu0 %v984
      %v995 = vpop.f32.mrf.mxu0
      %v996 = vadd.f32 0.0, %v995
      %v997 = vpop.f32.mrf.mxu0
      %998 = vdwg.mxu0
      %v999 = vadd.f32 %v963, %v996
      %v1000 = vld [vmem:[%s546] sm:$0x7]
      %v1001 = vld [vmem:[%s394] sm:$0xf]
      %v1002 = vld [vmem:[%s394 + $0x4] sm:$0xf]
      %v1003 = vld [vmem:[%s394 + $0x8] sm:$0xf]
      %v1004 = vld [vmem:[%s394 + $0xc] sm:$0xf]
      %v1009 = vunpack.c.l.b16 %v1001
      %v1010 = vunpack.c.l.b16 %v1002
      %v1011 = vunpack.c.l.b16 %v1003
      %v1012 = vunpack.c.l.b16 %v1004
      %v1013 = vpack.c.b16 %v1010, %v1009
      %v1014 = vpack.c.b16 %v1012, %v1011
      %v1018 = vsel %vm273, %v1000, 0
      %1020 = vmatpush.bf16.msra.mxu0 0
      %1021 = vmatpush.bf16.msra.mxu0 0
      %1022 = vmatpush.bf16.msra.mxu0 0
      %1023 = vmatpush.bf16.msra.mxu0 0
      %1024 = vmatpush.bf16.msra.mxu0 0
      %1025 = vmatpush.bf16.msra.mxu0 0
      %1026 = vmatpush.bf16.msra.mxu0 %v1014
      %1027 = vmatpush.bf16.msra.mxu0 %v1013
      %1028 = vmatmul.bf16.gmra.mxu0 %v1018
      %v1029 = vpop.f32.mrf.mxu0
      %v1030 = vadd.f32 0.0, %v1029
      %v1031 = vpop.f32.mrf.mxu0
      %1032 = vdwg.mxu0
      %v1033 = vadd.f32 %v999, %v1030
      %v1034 = vld [vmem:[%s428] sm:$0xf]
      %v1035 = vld [vmem:[%s428 + $0x4] sm:$0xf]
      %v1036 = vld [vmem:[%s428 + $0x8] sm:$0xf]
      %v1037 = vld [vmem:[%s428 + $0xc] sm:$0xf]
      %v1039 = vunpack.c.l.b16 %v1000
      %v1040 = vpack.c.b16 %v1039, %v1039
      %v1042 = vshrl.u32 %v1040, 16
      %v1044 = vshll.u32 %v1040, 16
      %v1046 = vrot.slane %v1044, 1
      %v1047 = vor.u32 %v1042, %v1046
      %v1052 = vunpack.c.l.b16 %v1034
      %v1053 = vunpack.c.l.b16 %v1035
      %v1054 = vunpack.c.l.b16 %v1036
      %v1055 = vunpack.c.l.b16 %v1037
      %v1056 = vpack.c.b16 %v1053, %v1052
      %v1057 = vpack.c.b16 %v1055, %v1054
      %v1061 = vsel %vm273, %v1047, 0
      %1063 = vmatpush.bf16.msra.mxu0 0
      %1064 = vmatpush.bf16.msra.mxu0 0
      %1065 = vmatpush.bf16.msra.mxu0 0
      %1066 = vmatpush.bf16.msra.mxu0 0
      %1067 = vmatpush.bf16.msra.mxu0 0
      %1068 = vmatpush.bf16.msra.mxu0 0
      %1069 = vmatpush.bf16.msra.mxu0 %v1057
      %1070 = vmatpush.bf16.msra.mxu0 %v1056
      %1071 = vmatmul.bf16.gmra.mxu0 %v1061
      %v1072 = vpop.f32.mrf.mxu0
      %v1073 = vadd.f32 0.0, %v1072
      %v1074 = vpop.f32.mrf.mxu0
      %1075 = vdwg.mxu0
      %v1076 = vadd.f32 %v1033, %v1073
      %v1077 = vld [vmem:[%s472] sm:$0xf]
      %v1078 = vld [vmem:[%s472 + $0x4] sm:$0xf]
      %v1079 = vld [vmem:[%s472 + $0x8] sm:$0xf]
      %v1080 = vld [vmem:[%s472 + $0xc] sm:$0xf]
      %v1081 = vrot.slane %v1040, 1
      %v1086 = vunpack.c.l.b16 %v1077
      %v1087 = vunpack.c.l.b16 %v1078
      %v1088 = vunpack.c.l.b16 %v1079
      %v1089 = vunpack.c.l.b16 %v1080
      %v1090 = vpack.c.b16 %v1087, %v1086
      %v1091 = vpack.c.b16 %v1089, %v1088
      %v1095 = vsel %vm273, %v1081, 0
      %1097 = vmatpush.bf16.msra.mxu0 0
      %1098 = vmatpush.bf16.msra.mxu0 0
      %1099 = vmatpush.bf16.msra.mxu0 0
      %1100 = vmatpush.bf16.msra.mxu0 0
      %1101 = vmatpush.bf16.msra.mxu0 0
      %1102 = vmatpush.bf16.msra.mxu0 0
      %1103 = vmatpush.bf16.msra.mxu0 %v1091
      %1104 = vmatpush.bf16.msra.mxu0 %v1090
      %1105 = vmatmul.bf16.gmra.mxu0 %v1095
      %v1106 = vpop.f32.mrf.mxu0
      %v1107 = vadd.f32 0.0, %v1106
      %v1108 = vpop.f32.mrf.mxu0
      %1109 = vdwg.mxu0
      %v1110 = vadd.f32 %v1076, %v1107
      %v1111 = vld [vmem:[%s507] sm:$0xf]
      %v1112 = vld [vmem:[%s507 + $0x4] sm:$0xf]
      %v1113 = vld [vmem:[%s507 + $0x8] sm:$0xf]
      %v1114 = vld [vmem:[%s507 + $0xc] sm:$0xf]
      %v1115 = vrot.slane %v1042, 1
      %v1116 = vrot.slane %v1044, 2
      %v1117 = vor.u32 %v1115, %v1116
      %v1122 = vunpack.c.l.b16 %v1111
      %v1123 = vunpack.c.l.b16 %v1112
      %v1124 = vunpack.c.l.b16 %v1113
      %v1125 = vunpack.c.l.b16 %v1114
      %v1126 = vpack.c.b16 %v1123, %v1122
      %v1127 = vpack.c.b16 %v1125, %v1124
      %v1131 = vsel %vm273, %v1117, 0
      %1133 = vmatpush.bf16.msra.mxu0 0
      %1134 = vmatpush.bf16.msra.mxu0 0
      %1135 = vmatpush.bf16.msra.mxu0 0
      %1136 = vmatpush.bf16.msra.mxu0 0
      %1137 = vmatpush.bf16.msra.mxu0 0
      %1138 = vmatpush.bf16.msra.mxu0 0
      %1139 = vmatpush.bf16.msra.mxu0 %v1127
      %1140 = vmatpush.bf16.msra.mxu0 %v1126
      %1141 = vmatmul.bf16.gmra.mxu0 %v1131
      %v1142 = vpop.f32.mrf.mxu0
      %v1143 = vadd.f32 0.0, %v1142
      %v1144 = vpop.f32.mrf.mxu0
      %1145 = vdwg.mxu0
      %v1146 = vadd.f32 %v1110, %v1143
      %v1147 = vld [vmem:[%s700] sm:$0x7]
      %v1148 = vld [vmem:[%s548] sm:$0xf]
      %v1149 = vld [vmem:[%s548 + $0x4] sm:$0xf]
      %v1150 = vld [vmem:[%s548 + $0x8] sm:$0xf]
      %v1151 = vld [vmem:[%s548 + $0xc] sm:$0xf]
      %v1156 = vunpack.c.l.b16 %v1148
      %v1157 = vunpack.c.l.b16 %v1149
      %v1158 = vunpack.c.l.b16 %v1150
      %v1159 = vunpack.c.l.b16 %v1151
      %v1160 = vpack.c.b16 %v1157, %v1156
      %v1161 = vpack.c.b16 %v1159, %v1158
      %v1165 = vsel %vm273, %v1147, 0
      %1167 = vmatpush.bf16.msra.mxu0 0
      %1168 = vmatpush.bf16.msra.mxu0 0
      %1169 = vmatpush.bf16.msra.mxu0 0
      %1170 = vmatpush.bf16.msra.mxu0 0
      %1171 = vmatpush.bf16.msra.mxu0 0
      %1172 = vmatpush.bf16.msra.mxu0 0
      %1173 = vmatpush.bf16.msra.mxu0 %v1161
      %1174 = vmatpush.bf16.msra.mxu0 %v1160
      %1175 = vmatmul.bf16.gmra.mxu0 %v1165
      %v1176 = vpop.f32.mrf.mxu0
      %v1177 = vadd.f32 0.0, %v1176
      %v1178 = vpop.f32.mrf.mxu0
      %1179 = vdwg.mxu0
      %v1180 = vadd.f32 %v1146, %v1177
      %v1181 = vld [vmem:[%s582] sm:$0xf]
      %v1182 = vld [vmem:[%s582 + $0x4] sm:$0xf]
      %v1183 = vld [vmem:[%s582 + $0x8] sm:$0xf]
      %v1184 = vld [vmem:[%s582 + $0xc] sm:$0xf]
      %v1186 = vunpack.c.l.b16 %v1147
      %v1187 = vpack.c.b16 %v1186, %v1186
      %v1189 = vshrl.u32 %v1187, 16
      %v1191 = vshll.u32 %v1187, 16
      %v1193 = vrot.slane %v1191, 1
      %v1194 = vor.u32 %v1189, %v1193
      %v1199 = vunpack.c.l.b16 %v1181
      %v1200 = vunpack.c.l.b16 %v1182
      %v1201 = vunpack.c.l.b16 %v1183
      %v1202 = vunpack.c.l.b16 %v1184
      %v1203 = vpack.c.b16 %v1200, %v1199
      %v1204 = vpack.c.b16 %v1202, %v1201
      %v1208 = vsel %vm273, %v1194, 0
      %1210 = vmatpush.bf16.msra.mxu0 0
      %1211 = vmatpush.bf16.msra.mxu0 0
      %1212 = vmatpush.bf16.msra.mxu0 0
      %1213 = vmatpush.bf16.msra.mxu0 0
      %1214 = vmatpush.bf16.msra.mxu0 0
      %1215 = vmatpush.bf16.msra.mxu0 0
      %1216 = vmatpush.bf16.msra.mxu0 %v1204
      %1217 = vmatpush.bf16.msra.mxu0 %v1203
      %1218 = vmatmul.bf16.gmra.mxu0 %v1208
      %v1219 = vpop.f32.mrf.mxu0
      %v1220 = vadd.f32 0.0, %v1219
      %v1221 = vpop.f32.mrf.mxu0
      %1222 = vdwg.mxu0
      %v1223 = vadd.f32 %v1180, %v1220
      %v1224 = vld [vmem:[%s626] sm:$0xf]
      %v1225 = vld [vmem:[%s626 + $0x4] sm:$0xf]
      %v1226 = vld [vmem:[%s626 + $0x8] sm:$0xf]
      %v1227 = vld [vmem:[%s626 + $0xc] sm:$0xf]
      %v1228 = vrot.slane %v1187, 1
      %v1233 = vunpack.c.l.b16 %v1224
      %v1234 = vunpack.c.l.b16 %v1225
      %v1235 = vunpack.c.l.b16 %v1226
      %v1236 = vunpack.c.l.b16 %v1227
      %v1237 = vpack.c.b16 %v1234, %v1233
      %v1238 = vpack.c.b16 %v1236, %v1235
      %v1242 = vsel %vm273, %v1228, 0
      %1244 = vmatpush.bf16.msra.mxu0 0
      %1245 = vmatpush.bf16.msra.mxu0 0
      %1246 = vmatpush.bf16.msra.mxu0 0
      %1247 = vmatpush.bf16.msra.mxu0 0
      %1248 = vmatpush.bf16.msra.mxu0 0
      %1249 = vmatpush.bf16.msra.mxu0 0
      %1250 = vmatpush.bf16.msra.mxu0 %v1238
      %1251 = vmatpush.bf16.msra.mxu0 %v1237
      %1252 = vmatmul.bf16.gmra.mxu0 %v1242
      %v1253 = vpop.f32.mrf.mxu0
      %v1254 = vadd.f32 0.0, %v1253
      %v1255 = vpop.f32.mrf.mxu0
      %1256 = vdwg.mxu0
      %v1257 = vadd.f32 %v1223, %v1254
      %v1258 = vld [vmem:[%s661] sm:$0xf]
      %v1259 = vld [vmem:[%s661 + $0x4] sm:$0xf]
      %v1260 = vld [vmem:[%s661 + $0x8] sm:$0xf]
      %v1261 = vld [vmem:[%s661 + $0xc] sm:$0xf]
      %v1262 = vrot.slane %v1189, 1
      %v1263 = vrot.slane %v1191, 2
      %v1264 = vor.u32 %v1262, %v1263
      %v1269 = vunpack.c.l.b16 %v1258
      %v1270 = vunpack.c.l.b16 %v1259
      %v1271 = vunpack.c.l.b16 %v1260
      %v1272 = vunpack.c.l.b16 %v1261
      %v1273 = vpack.c.b16 %v1270, %v1269
      %v1274 = vpack.c.b16 %v1272, %v1271
      %v1278 = vsel %vm273, %v1264, 0
      %1280 = vmatpush.bf16.msra.mxu0 0
      %1281 = vmatpush.bf16.msra.mxu0 0
      %1282 = vmatpush.bf16.msra.mxu0 0
      %1283 = vmatpush.bf16.msra.mxu0 0
      %1284 = vmatpush.bf16.msra.mxu0 0
      %1285 = vmatpush.bf16.msra.mxu0 0
      %1286 = vmatpush.bf16.msra.mxu0 %v1274
      %1287 = vmatpush.bf16.msra.mxu0 %v1273
      %1288 = vmatmul.bf16.gmra.mxu0 %v1278
      %v1289 = vpop.f32.mrf.mxu0
      %v1290 = vadd.f32 0.0, %v1289
      %v1291 = vpop.f32.mrf.mxu0
      %1292 = vdwg.mxu0
      %v1293 = vadd.f32 %v1257, %v1290
      %s1294 = sadd.s32 %s238, 4
      %s1295 = smul.addr %s1294, 4
      %s1296 = scalar_lea.vmem %s231, %s1295
      %v1297 = vld [vmem:[%s1296] sm:$0x7]
      %v1298 = vld [vmem:[%s702] sm:$0xf]
      %v1299 = vld [vmem:[%s702 + $0x4] sm:$0xf]
      %v1300 = vld [vmem:[%s702 + $0x8] sm:$0xf]
      %v1301 = vld [vmem:[%s702 + $0xc] sm:$0xf]
      %v1306 = vunpack.c.l.b16 %v1298
      %v1307 = vunpack.c.l.b16 %v1299
      %v1308 = vunpack.c.l.b16 %v1300
      %v1309 = vunpack.c.l.b16 %v1301
      %v1310 = vpack.c.b16 %v1307, %v1306
      %v1311 = vpack.c.b16 %v1309, %v1308
      %v1315 = vsel %vm273, %v1297, 0
      %1317 = vmatpush.bf16.msra.mxu0 0
      %1318 = vmatpush.bf16.msra.mxu0 0
      %1319 = vmatpush.bf16.msra.mxu0 0
      %1320 = vmatpush.bf16.msra.mxu0 0
      %1321 = vmatpush.bf16.msra.mxu0 0
      %1322 = vmatpush.bf16.msra.mxu0 0
      %1323 = vmatpush.bf16.msra.mxu0 %v1311
      %1324 = vmatpush.bf16.msra.mxu0 %v1310
      %1325 = vmatmul.bf16.gmra.mxu0 %v1315
      %v1326 = vpop.f32.mrf.mxu0
      %v1327 = vadd.f32 0.0, %v1326
      %v1328 = vpop.f32.mrf.mxu0
      %1329 = vdwg.mxu0
      %v1330 = vadd.f32 %v1293, %v1327
      %v1331 = vld [vmem:[%s736] sm:$0xf]
      %v1332 = vld [vmem:[%s736 + $0x4] sm:$0xf]
      %v1333 = vld [vmem:[%s736 + $0x8] sm:$0xf]
      %v1334 = vld [vmem:[%s736 + $0xc] sm:$0xf]
      %v1336 = vunpack.c.l.b16 %v1297
      %v1337 = vpack.c.b16 %v1336, %v1336
      %v1339 = vshrl.u32 %v1337, 16
      %v1341 = vshll.u32 %v1337, 16
      %v1343 = vrot.slane %v1341, 1
      %v1344 = vor.u32 %v1339, %v1343
      %v1349 = vunpack.c.l.b16 %v1331
      %v1350 = vunpack.c.l.b16 %v1332
      %v1351 = vunpack.c.l.b16 %v1333
      %v1352 = vunpack.c.l.b16 %v1334
      %v1353 = vpack.c.b16 %v1350, %v1349
      %v1354 = vpack.c.b16 %v1352, %v1351
      %v1358 = vsel %vm273, %v1344, 0
      %1360 = vmatpush.bf16.msra.mxu0 0
      %1361 = vmatpush.bf16.msra.mxu0 0
      %1362 = vmatpush.bf16.msra.mxu0 0
      %1363 = vmatpush.bf16.msra.mxu0 0
      %1364 = vmatpush.bf16.msra.mxu0 0
      %1365 = vmatpush.bf16.msra.mxu0 0
      %1366 = vmatpush.bf16.msra.mxu0 %v1354
      %1367 = vmatpush.bf16.msra.mxu0 %v1353
      %1368 = vmatmul.bf16.gmra.mxu0 %v1358
      %v1369 = vpop.f32.mrf.mxu0
      %v1370 = vadd.f32 0.0, %v1369
      %v1371 = vpop.f32.mrf.mxu0
      %1372 = vdwg.mxu0
      %v1373 = vadd.f32 %v1330, %v1370
      %v1374 = vld [vmem:[%s780] sm:$0xf]
      %v1375 = vld [vmem:[%s780 + $0x4] sm:$0xf]
      %v1376 = vld [vmem:[%s780 + $0x8] sm:$0xf]
      %v1377 = vld [vmem:[%s780 + $0xc] sm:$0xf]
      %v1378 = vrot.slane %v1337, 1
      %v1383 = vunpack.c.l.b16 %v1374
      %v1384 = vunpack.c.l.b16 %v1375
      %v1385 = vunpack.c.l.b16 %v1376
      %v1386 = vunpack.c.l.b16 %v1377
      %v1387 = vpack.c.b16 %v1384, %v1383
      %v1388 = vpack.c.b16 %v1386, %v1385
      %v1392 = vsel %vm273, %v1378, 0
      %1394 = vmatpush.bf16.msra.mxu0 0
      %1395 = vmatpush.bf16.msra.mxu0 0
      %1396 = vmatpush.bf16.msra.mxu0 0
      %1397 = vmatpush.bf16.msra.mxu0 0
      %1398 = vmatpush.bf16.msra.mxu0 0
      %1399 = vmatpush.bf16.msra.mxu0 0
      %1400 = vmatpush.bf16.msra.mxu0 %v1388
      %1401 = vmatpush.bf16.msra.mxu0 %v1387
      %1402 = vmatmul.bf16.gmra.mxu0 %v1392
      %v1403 = vpop.f32.mrf.mxu0
      %v1404 = vadd.f32 0.0, %v1403
      %v1405 = vpop.f32.mrf.mxu0
      %1406 = vdwg.mxu0
      %v1407 = vadd.f32 %v1373, %v1404
      %v1408 = vld [vmem:[%s815] sm:$0xf]
      %v1409 = vld [vmem:[%s815 + $0x4] sm:$0xf]
      %v1410 = vld [vmem:[%s815 + $0x8] sm:$0xf]
      %v1411 = vld [vmem:[%s815 + $0xc] sm:$0xf]
      %v1412 = vrot.slane %v1339, 1
      %v1413 = vrot.slane %v1341, 2
      %v1414 = vor.u32 %v1412, %v1413
      %v1419 = vunpack.c.l.b16 %v1408
      %v1420 = vunpack.c.l.b16 %v1409
      %v1421 = vunpack.c.l.b16 %v1410
      %v1422 = vunpack.c.l.b16 %v1411
      %v1423 = vpack.c.b16 %v1420, %v1419
      %v1424 = vpack.c.b16 %v1422, %v1421
      %v1428 = vsel %vm273, %v1414, 0
      %1430 = vmatpush.bf16.msra.mxu0 0
      %1431 = vmatpush.bf16.msra.mxu0 0
      %1432 = vmatpush.bf16.msra.mxu0 0
      %1433 = vmatpush.bf16.msra.mxu0 0
      %1434 = vmatpush.bf16.msra.mxu0 0
      %1435 = vmatpush.bf16.msra.mxu0 0
      %1436 = vmatpush.bf16.msra.mxu0 %v1424
      %1437 = vmatpush.bf16.msra.mxu0 %v1423
      %1438 = vmatmul.bf16.gmra.mxu0 %v1428
      %v1439 = vpop.f32.mrf.mxu0
      %v1440 = vadd.f32 0.0, %v1439
      %v1441 = vpop.f32.mrf.mxu0
      %1442 = vdwg.mxu0
      %v1443 = vadd.f32 %v1407, %v1440
      %s1444 = smul.u32 %s390, 4
      %s1445 = scalar_lea.vmem [#allocation2], %s1444
      %1446 = vst [vmem:[%s1445] sm:$0x7] %v1443
      %v1447 = vld [vmem:[%s546] sm:$0x7]
      %v1448 = vld [vmem:[%s1] sm:$0xf]
      %v1449 = vld [vmem:[%s1 + $0x4] sm:$0xf]
      %v1450 = vld [vmem:[%s1 + $0x8] sm:$0xf]
      %v1451 = vld [vmem:[%s1 + $0xc] sm:$0xf]
      %v1452 = vld [vmem:[%s246] sm:$0xf]
      %v1453 = vld [vmem:[%s246 + $0x4] sm:$0xf]
      %v1454 = vld [vmem:[%s246 + $0x8] sm:$0xf]
      %v1455 = vld [vmem:[%s246 + $0xc] sm:$0xf]
      %v1457 = vunpack.c.l.b16 %v1447
      %v1458 = vpack.c.b16 %v1457, %v1457
      %v1460 = vshrl.u32 %v1458, 16
      %v1462 = vshll.u32 %v1458, 16
      %v1464 = vrot.slane %v1462, 1
      %v1465 = vor.u32 %v1460, %v1464
      %v1470 = vunpack.c.l.b16 %v1452
      %v1471 = vunpack.c.l.b16 %v1453
      %v1472 = vunpack.c.l.b16 %v1454
      %v1473 = vunpack.c.l.b16 %v1455
      %v1474 = vpack.c.b16 %v1471, %v1470
      %v1475 = vpack.c.b16 %v1473, %v1472
      %v1479 = vsel %vm273, %v1465, 0
      %1481 = vmatpush.bf16.msra.mxu0 0
      %1482 = vmatpush.bf16.msra.mxu0 0
      %1483 = vmatpush.bf16.msra.mxu0 0
      %1484 = vmatpush.bf16.msra.mxu0 0
      %1485 = vmatpush.bf16.msra.mxu0 0
      %1486 = vmatpush.bf16.msra.mxu0 0
      %1487 = vmatpush.bf16.msra.mxu0 %v1475
      %1488 = vmatpush.bf16.msra.mxu0 %v1474
      %1489 = vmatmul.bf16.gmra.mxu0 %v1479
      %v1490 = vpop.f32.mrf.mxu0
      %v1491 = vadd.f32 0.0, %v1490
      %v1492 = vpop.f32.mrf.mxu0
      %1493 = vdwg.mxu0
      %v1498 = vunpack.c.l.b16 %v1448
      %v1499 = vunpack.c.l.b16 %v1449
      %v1500 = vunpack.c.l.b16 %v1450
      %v1501 = vunpack.c.l.b16 %v1451
      %v1502 = vpack.c.b16 %v1499, %v1498
      %v1503 = vpack.c.b16 %v1501, %v1500
      %v1507 = vsel %vm273, %v1447, 0
      %1509 = vmatpush.bf16.msra.mxu0 0
      %1510 = vmatpush.bf16.msra.mxu0 0
      %1511 = vmatpush.bf16.msra.mxu0 0
      %1512 = vmatpush.bf16.msra.mxu0 0
      %1513 = vmatpush.bf16.msra.mxu0 0
      %1514 = vmatpush.bf16.msra.mxu0 0
      %1515 = vmatpush.bf16.msra.mxu0 %v1503
      %1516 = vmatpush.bf16.msra.mxu0 %v1502
      %1517 = vmatmul.bf16.gmra.mxu0 %v1507
      %v1518 = vpop.f32.mrf.mxu0
      %v1519 = vadd.f32 %v1491, %v1518
      %v1520 = vpop.f32.mrf.mxu0
      %1521 = vdwg.mxu0
      %v1522 = vld [vmem:[%s318] sm:$0xf]
      %v1523 = vld [vmem:[%s318 + $0x4] sm:$0xf]
      %v1524 = vld [vmem:[%s318 + $0x8] sm:$0xf]
      %v1525 = vld [vmem:[%s318 + $0xc] sm:$0xf]
      %v1526 = vrot.slane %v1458, 1
      %v1531 = vunpack.c.l.b16 %v1522
      %v1532 = vunpack.c.l.b16 %v1523
      %v1533 = vunpack.c.l.b16 %v1524
      %v1534 = vunpack.c.l.b16 %v1525
      %v1535 = vpack.c.b16 %v1532, %v1531
      %v1536 = vpack.c.b16 %v1534, %v1533
      %v1540 = vsel %vm273, %v1526, 0
      %1542 = vmatpush.bf16.msra.mxu0 0
      %1543 = vmatpush.bf16.msra.mxu0 0
      %1544 = vmatpush.bf16.msra.mxu0 0
      %1545 = vmatpush.bf16.msra.mxu0 0
      %1546 = vmatpush.bf16.msra.mxu0 0
      %1547 = vmatpush.bf16.msra.mxu0 0
      %1548 = vmatpush.bf16.msra.mxu0 %v1536
      %1549 = vmatpush.bf16.msra.mxu0 %v1535
      %1550 = vmatmul.bf16.gmra.mxu0 %v1540
      %v1551 = vpop.f32.mrf.mxu0
      %v1552 = vadd.f32 0.0, %v1551
      %v1553 = vpop.f32.mrf.mxu0
      %1554 = vdwg.mxu0
      %v1555 = vadd.f32 %v1519, %v1552
      %v1556 = vld [vmem:[%s353] sm:$0xf]
      %v1557 = vld [vmem:[%s353 + $0x4] sm:$0xf]
      %v1558 = vld [vmem:[%s353 + $0x8] sm:$0xf]
      %v1559 = vld [vmem:[%s353 + $0xc] sm:$0xf]
      %v1560 = vrot.slane %v1460, 1
      %v1561 = vrot.slane %v1462, 2
      %v1562 = vor.u32 %v1560, %v1561
      %v1567 = vunpack.c.l.b16 %v1556
      %v1568 = vunpack.c.l.b16 %v1557
      %v1569 = vunpack.c.l.b16 %v1558
      %v1570 = vunpack.c.l.b16 %v1559
      %v1571 = vpack.c.b16 %v1568, %v1567
      %v1572 = vpack.c.b16 %v1570, %v1569
      %v1576 = vsel %vm273, %v1562, 0
      %1578 = vmatpush.bf16.msra.mxu0 0
      %1579 = vmatpush.bf16.msra.mxu0 0
      %1580 = vmatpush.bf16.msra.mxu0 0
      %1581 = vmatpush.bf16.msra.mxu0 0
      %1582 = vmatpush.bf16.msra.mxu0 0
      %1583 = vmatpush.bf16.msra.mxu0 0
      %1584 = vmatpush.bf16.msra.mxu0 %v1572
      %1585 = vmatpush.bf16.msra.mxu0 %v1571
      %1586 = vmatmul.bf16.gmra.mxu0 %v1576
      %v1587 = vpop.f32.mrf.mxu0
      %v1588 = vadd.f32 0.0, %v1587
      %v1589 = vpop.f32.mrf.mxu0
      %1590 = vdwg.mxu0
      %v1591 = vadd.f32 %v1555, %v1588
      %v1592 = vld [vmem:[%s700] sm:$0x7]
      %v1593 = vld [vmem:[%s394] sm:$0xf]
      %v1594 = vld [vmem:[%s394 + $0x4] sm:$0xf]
      %v1595 = vld [vmem:[%s394 + $0x8] sm:$0xf]
      %v1596 = vld [vmem:[%s394 + $0xc] sm:$0xf]
      %v1601 = vunpack.c.l.b16 %v1593
      %v1602 = vunpack.c.l.b16 %v1594
      %v1603 = vunpack.c.l.b16 %v1595
      %v1604 = vunpack.c.l.b16 %v1596
      %v1605 = vpack.c.b16 %v1602, %v1601
      %v1606 = vpack.c.b16 %v1604, %v1603
      %v1610 = vsel %vm273, %v1592, 0
      %1612 = vmatpush.bf16.msra.mxu0 0
      %1613 = vmatpush.bf16.msra.mxu0 0
      %1614 = vmatpush.bf16.msra.mxu0 0
      %1615 = vmatpush.bf16.msra.mxu0 0
      %1616 = vmatpush.bf16.msra.mxu0 0
      %1617 = vmatpush.bf16.msra.mxu0 0
      %1618 = vmatpush.bf16.msra.mxu0 %v1606
      %1619 = vmatpush.bf16.msra.mxu0 %v1605
      %1620 = vmatmul.bf16.gmra.mxu0 %v1610
      %v1621 = vpop.f32.mrf.mxu0
      %v1622 = vadd.f32 0.0, %v1621
      %v1623 = vpop.f32.mrf.mxu0
      %1624 = vdwg.mxu0
      %v1625 = vadd.f32 %v1591, %v1622
      %v1626 = vld [vmem:[%s428] sm:$0xf]
      %v1627 = vld [vmem:[%s428 + $0x4] sm:$0xf]
      %v1628 = vld [vmem:[%s428 + $0x8] sm:$0xf]
      %v1629 = vld [vmem:[%s428 + $0xc] sm:$0xf]
      %v1631 = vunpack.c.l.b16 %v1592
      %v1632 = vpack.c.b16 %v1631, %v1631
      %v1634 = vshrl.u32 %v1632, 16
      %v1636 = vshll.u32 %v1632, 16
      %v1638 = vrot.slane %v1636, 1
      %v1639 = vor.u32 %v1634, %v1638
      %v1644 = vunpack.c.l.b16 %v1626
      %v1645 = vunpack.c.l.b16 %v1627
      %v1646 = vunpack.c.l.b16 %v1628
      %v1647 = vunpack.c.l.b16 %v1629
      %v1648 = vpack.c.b16 %v1645, %v1644
      %v1649 = vpack.c.b16 %v1647, %v1646
      %v1653 = vsel %vm273, %v1639, 0
      %1655 = vmatpush.bf16.msra.mxu0 0
      %1656 = vmatpush.bf16.msra.mxu0 0
      %1657 = vmatpush.bf16.msra.mxu0 0
      %1658 = vmatpush.bf16.msra.mxu0 0
      %1659 = vmatpush.bf16.msra.mxu0 0
      %1660 = vmatpush.bf16.msra.mxu0 0
      %1661 = vmatpush.bf16.msra.mxu0 %v1649
      %1662 = vmatpush.bf16.msra.mxu0 %v1648
      %1663 = vmatmul.bf16.gmra.mxu0 %v1653
      %v1664 = vpop.f32.mrf.mxu0
      %v1665 = vadd.f32 0.0, %v1664
      %v1666 = vpop.f32.mrf.mxu0
      %1667 = vdwg.mxu0
      %v1668 = vadd.f32 %v1625, %v1665
      %v1669 = vld [vmem:[%s472] sm:$0xf]
      %v1670 = vld [vmem:[%s472 + $0x4] sm:$0xf]
      %v1671 = vld [vmem:[%s472 + $0x8] sm:$0xf]
      %v1672 = vld [vmem:[%s472 + $0xc] sm:$0xf]
      %v1673 = vrot.slane %v1632, 1
      %v1678 = vunpack.c.l.b16 %v1669
      %v1679 = vunpack.c.l.b16 %v1670
      %v1680 = vunpack.c.l.b16 %v1671
      %v1681 = vunpack.c.l.b16 %v1672
      %v1682 = vpack.c.b16 %v1679, %v1678
      %v1683 = vpack.c.b16 %v1681, %v1680
      %v1687 = vsel %vm273, %v1673, 0
      %1689 = vmatpush.bf16.msra.mxu0 0
      %1690 = vmatpush.bf16.msra.mxu0 0
      %1691 = vmatpush.bf16.msra.mxu0 0
      %1692 = vmatpush.bf16.msra.mxu0 0
      %1693 = vmatpush.bf16.msra.mxu0 0
      %1694 = vmatpush.bf16.msra.mxu0 0
      %1695 = vmatpush.bf16.msra.mxu0 %v1683
      %1696 = vmatpush.bf16.msra.mxu0 %v1682
      %1697 = vmatmul.bf16.gmra.mxu0 %v1687
      %v1698 = vpop.f32.mrf.mxu0
      %v1699 = vadd.f32 0.0, %v1698
      %v1700 = vpop.f32.mrf.mxu0
      %1701 = vdwg.mxu0
      %v1702 = vadd.f32 %v1668, %v1699
      %v1703 = vld [vmem:[%s507] sm:$0xf]
      %v1704 = vld [vmem:[%s507 + $0x4] sm:$0xf]
      %v1705 = vld [vmem:[%s507 + $0x8] sm:$0xf]
      %v1706 = vld [vmem:[%s507 + $0xc] sm:$0xf]
      %v1707 = vrot.slane %v1634, 1
      %v1708 = vrot.slane %v1636, 2
      %v1709 = vor.u32 %v1707, %v1708
      %v1714 = vunpack.c.l.b16 %v1703
      %v1715 = vunpack.c.l.b16 %v1704
      %v1716 = vunpack.c.l.b16 %v1705
      %v1717 = vunpack.c.l.b16 %v1706
      %v1718 = vpack.c.b16 %v1715, %v1714
      %v1719 = vpack.c.b16 %v1717, %v1716
      %v1723 = vsel %vm273, %v1709, 0
      %1725 = vmatpush.bf16.msra.mxu0 0
      %1726 = vmatpush.bf16.msra.mxu0 0
      %1727 = vmatpush.bf16.msra.mxu0 0
      %1728 = vmatpush.bf16.msra.mxu0 0
      %1729 = vmatpush.bf16.msra.mxu0 0
      %1730 = vmatpush.bf16.msra.mxu0 0
      %1731 = vmatpush.bf16.msra.mxu0 %v1719
      %1732 = vmatpush.bf16.msra.mxu0 %v1718
      %1733 = vmatmul.bf16.gmra.mxu0 %v1723
      %v1734 = vpop.f32.mrf.mxu0
      %v1735 = vadd.f32 0.0, %v1734
      %v1736 = vpop.f32.mrf.mxu0
      %1737 = vdwg.mxu0
      %v1738 = vadd.f32 %v1702, %v1735
      %v1739 = vld [vmem:[%s1296] sm:$0x7]
      %v1740 = vld [vmem:[%s548] sm:$0xf]
      %v1741 = vld [vmem:[%s548 + $0x4] sm:$0xf]
      %v1742 = vld [vmem:[%s548 + $0x8] sm:$0xf]
      %v1743 = vld [vmem:[%s548 + $0xc] sm:$0xf]
      %v1748 = vunpack.c.l.b16 %v1740
      %v1749 = vunpack.c.l.b16 %v1741
      %v1750 = vunpack.c.l.b16 %v1742
      %v1751 = vunpack.c.l.b16 %v1743
      %v1752 = vpack.c.b16 %v1749, %v1748
      %v1753 = vpack.c.b16 %v1751, %v1750
      %v1757 = vsel %vm273, %v1739, 0
      %1759 = vmatpush.bf16.msra.mxu0 0
      %1760 = vmatpush.bf16.msra.mxu0 0
      %1761 = vmatpush.bf16.msra.mxu0 0
      %1762 = vmatpush.bf16.msra.mxu0 0
      %1763 = vmatpush.bf16.msra.mxu0 0
      %1764 = vmatpush.bf16.msra.mxu0 0
      %1765 = vmatpush.bf16.msra.mxu0 %v1753
      %1766 = vmatpush.bf16.msra.mxu0 %v1752
      %1767 = vmatmul.bf16.gmra.mxu0 %v1757
      %v1768 = vpop.f32.mrf.mxu0
      %v1769 = vadd.f32 0.0, %v1768
      %v1770 = vpop.f32.mrf.mxu0
      %1771 = vdwg.mxu0
      %v1772 = vadd.f32 %v1738, %v1769
      %v1773 = vld [vmem:[%s582] sm:$0xf]
      %v1774 = vld [vmem:[%s582 + $0x4] sm:$0xf]
      %v1775 = vld [vmem:[%s582 + $0x8] sm:$0xf]
      %v1776 = vld [vmem:[%s582 + $0xc] sm:$0xf]
      %v1778 = vunpack.c.l.b16 %v1739
      %v1779 = vpack.c.b16 %v1778, %v1778
      %v1781 = vshrl.u32 %v1779, 16
      %v1783 = vshll.u32 %v1779, 16
      %v1785 = vrot.slane %v1783, 1
      %v1786 = vor.u32 %v1781, %v1785
      %v1791 = vunpack.c.l.b16 %v1773
      %v1792 = vunpack.c.l.b16 %v1774
      %v1793 = vunpack.c.l.b16 %v1775
      %v1794 = vunpack.c.l.b16 %v1776
      %v1795 = vpack.c.b16 %v1792, %v1791
      %v1796 = vpack.c.b16 %v1794, %v1793
      %v1800 = vsel %vm273, %v1786, 0
      %1802 = vmatpush.bf16.msra.mxu0 0
      %1803 = vmatpush.bf16.msra.mxu0 0
      %1804 = vmatpush.bf16.msra.mxu0 0
      %1805 = vmatpush.bf16.msra.mxu0 0
      %1806 = vmatpush.bf16.msra.mxu0 0
      %1807 = vmatpush.bf16.msra.mxu0 0
      %1808 = vmatpush.bf16.msra.mxu0 %v1796
      %1809 = vmatpush.bf16.msra.mxu0 %v1795
      %1810 = vmatmul.bf16.gmra.mxu0 %v1800
      %v1811 = vpop.f32.mrf.mxu0
      %v1812 = vadd.f32 0.0, %v1811
      %v1813 = vpop.f32.mrf.mxu0
      %1814 = vdwg.mxu0
      %v1815 = vadd.f32 %v1772, %v1812
      %v1816 = vld [vmem:[%s626] sm:$0xf]
      %v1817 = vld [vmem:[%s626 + $0x4] sm:$0xf]
      %v1818 = vld [vmem:[%s626 + $0x8] sm:$0xf]
      %v1819 = vld [vmem:[%s626 + $0xc] sm:$0xf]
      %v1820 = vrot.slane %v1779, 1
      %v1825 = vunpack.c.l.b16 %v1816
      %v1826 = vunpack.c.l.b16 %v1817
      %v1827 = vunpack.c.l.b16 %v1818
      %v1828 = vunpack.c.l.b16 %v1819
      %v1829 = vpack.c.b16 %v1826, %v1825
      %v1830 = vpack.c.b16 %v1828, %v1827
      %v1834 = vsel %vm273, %v1820, 0
      %1836 = vmatpush.bf16.msra.mxu0 0
      %1837 = vmatpush.bf16.msra.mxu0 0
      %1838 = vmatpush.bf16.msra.mxu0 0
      %1839 = vmatpush.bf16.msra.mxu0 0
      %1840 = vmatpush.bf16.msra.mxu0 0
      %1841 = vmatpush.bf16.msra.mxu0 0
      %1842 = vmatpush.bf16.msra.mxu0 %v1830
      %1843 = vmatpush.bf16.msra.mxu0 %v1829
      %1844 = vmatmul.bf16.gmra.mxu0 %v1834
      %v1845 = vpop.f32.mrf.mxu0
      %v1846 = vadd.f32 0.0, %v1845
      %v1847 = vpop.f32.mrf.mxu0
      %1848 = vdwg.mxu0
      %v1849 = vadd.f32 %v1815, %v1846
      %v1850 = vld [vmem:[%s661] sm:$0xf]
      %v1851 = vld [vmem:[%s661 + $0x4] sm:$0xf]
      %v1852 = vld [vmem:[%s661 + $0x8] sm:$0xf]
      %v1853 = vld [vmem:[%s661 + $0xc] sm:$0xf]
      %v1854 = vrot.slane %v1781, 1
      %v1855 = vrot.slane %v1783, 2
      %v1856 = vor.u32 %v1854, %v1855
      %v1861 = vunpack.c.l.b16 %v1850
      %v1862 = vunpack.c.l.b16 %v1851
      %v1863 = vunpack.c.l.b16 %v1852
      %v1864 = vunpack.c.l.b16 %v1853
      %v1865 = vpack.c.b16 %v1862, %v1861
      %v1866 = vpack.c.b16 %v1864, %v1863
      %v1870 = vsel %vm273, %v1856, 0
      %1872 = vmatpush.bf16.msra.mxu0 0
      %1873 = vmatpush.bf16.msra.mxu0 0
      %1874 = vmatpush.bf16.msra.mxu0 0
      %1875 = vmatpush.bf16.msra.mxu0 0
      %1876 = vmatpush.bf16.msra.mxu0 0
      %1877 = vmatpush.bf16.msra.mxu0 0
      %1878 = vmatpush.bf16.msra.mxu0 %v1866
      %1879 = vmatpush.bf16.msra.mxu0 %v1865
      %1880 = vmatmul.bf16.gmra.mxu0 %v1870
      %v1881 = vpop.f32.mrf.mxu0
      %v1882 = vadd.f32 0.0, %v1881
      %v1883 = vpop.f32.mrf.mxu0
      %1884 = vdwg.mxu0
      %v1885 = vadd.f32 %v1849, %v1882
      %s1886 = sadd.s32 %s238, 5
      %s1887 = smul.addr %s1886, 4
      %s1888 = scalar_lea.vmem %s231, %s1887
      %v1889 = vld [vmem:[%s1888] sm:$0x7]
      %v1890 = vld [vmem:[%s702] sm:$0xf]
      %v1891 = vld [vmem:[%s702 + $0x4] sm:$0xf]
      %v1892 = vld [vmem:[%s702 + $0x8] sm:$0xf]
      %v1893 = vld [vmem:[%s702 + $0xc] sm:$0xf]
      %v1898 = vunpack.c.l.b16 %v1890
      %v1899 = vunpack.c.l.b16 %v1891
      %v1900 = vunpack.c.l.b16 %v1892
      %v1901 = vunpack.c.l.b16 %v1893
      %v1902 = vpack.c.b16 %v1899, %v1898
      %v1903 = vpack.c.b16 %v1901, %v1900
      %v1907 = vsel %vm273, %v1889, 0
      %1909 = vmatpush.bf16.msra.mxu0 0
      %1910 = vmatpush.bf16.msra.mxu0 0
      %1911 = vmatpush.bf16.msra.mxu0 0
      %1912 = vmatpush.bf16.msra.mxu0 0
      %1913 = vmatpush.bf16.msra.mxu0 0
      %1914 = vmatpush.bf16.msra.mxu0 0
      %1915 = vmatpush.bf16.msra.mxu0 %v1903
      %1916 = vmatpush.bf16.msra.mxu0 %v1902
      %1917 = vmatmul.bf16.gmra.mxu0 %v1907
      %v1918 = vpop.f32.mrf.mxu0
      %v1919 = vadd.f32 0.0, %v1918
      %v1920 = vpop.f32.mrf.mxu0
      %1921 = vdwg.mxu0
      %v1922 = vadd.f32 %v1885, %v1919
      %v1923 = vld [vmem:[%s736] sm:$0xf]
      %v1924 = vld [vmem:[%s736 + $0x4] sm:$0xf]
      %v1925 = vld [vmem:[%s736 + $0x8] sm:$0xf]
      %v1926 = vld [vmem:[%s736 + $0xc] sm:$0xf]
      %v1928 = vunpack.c.l.b16 %v1889
      %v1929 = vpack.c.b16 %v1928, %v1928
      %v1931 = vshrl.u32 %v1929, 16
      %v1933 = vshll.u32 %v1929, 16
      %v1935 = vrot.slane %v1933, 1
      %v1936 = vor.u32 %v1931, %v1935
      %v1941 = vunpack.c.l.b16 %v1923
      %v1942 = vunpack.c.l.b16 %v1924
      %v1943 = vunpack.c.l.b16 %v1925
      %v1944 = vunpack.c.l.b16 %v1926
      %v1945 = vpack.c.b16 %v1942, %v1941
      %v1946 = vpack.c.b16 %v1944, %v1943
      %v1950 = vsel %vm273, %v1936, 0
      %1952 = vmatpush.bf16.msra.mxu0 0
      %1953 = vmatpush.bf16.msra.mxu0 0
      %1954 = vmatpush.bf16.msra.mxu0 0
      %1955 = vmatpush.bf16.msra.mxu0 0
      %1956 = vmatpush.bf16.msra.mxu0 0
      %1957 = vmatpush.bf16.msra.mxu0 0
      %1958 = vmatpush.bf16.msra.mxu0 %v1946
      %1959 = vmatpush.bf16.msra.mxu0 %v1945
      %1960 = vmatmul.bf16.gmra.mxu0 %v1950
      %v1961 = vpop.f32.mrf.mxu0
      %v1962 = vadd.f32 0.0, %v1961
      %v1963 = vpop.f32.mrf.mxu0
      %1964 = vdwg.mxu0
      %v1965 = vadd.f32 %v1922, %v1962
      %v1966 = vld [vmem:[%s780] sm:$0xf]
      %v1967 = vld [vmem:[%s780 + $0x4] sm:$0xf]
      %v1968 = vld [vmem:[%s780 + $0x8] sm:$0xf]
      %v1969 = vld [vmem:[%s780 + $0xc] sm:$0xf]
      %v1970 = vrot.slane %v1929, 1
      %v1975 = vunpack.c.l.b16 %v1966
      %v1976 = vunpack.c.l.b16 %v1967
      %v1977 = vunpack.c.l.b16 %v1968
      %v1978 = vunpack.c.l.b16 %v1969
      %v1979 = vpack.c.b16 %v1976, %v1975
      %v1980 = vpack.c.b16 %v1978, %v1977
      %v1984 = vsel %vm273, %v1970, 0
      %1986 = vmatpush.bf16.msra.mxu0 0
      %1987 = vmatpush.bf16.msra.mxu0 0
      %1988 = vmatpush.bf16.msra.mxu0 0
      %1989 = vmatpush.bf16.msra.mxu0 0
      %1990 = vmatpush.bf16.msra.mxu0 0
      %1991 = vmatpush.bf16.msra.mxu0 0
      %1992 = vmatpush.bf16.msra.mxu0 %v1980
      %1993 = vmatpush.bf16.msra.mxu0 %v1979
      %1994 = vmatmul.bf16.gmra.mxu0 %v1984
      %v1995 = vpop.f32.mrf.mxu0
      %v1996 = vadd.f32 0.0, %v1995
      %v1997 = vpop.f32.mrf.mxu0
      %1998 = vdwg.mxu0
      %v1999 = vadd.f32 %v1965, %v1996
      %v2000 = vld [vmem:[%s815] sm:$0xf]
      %v2001 = vld [vmem:[%s815 + $0x4] sm:$0xf]
      %v2002 = vld [vmem:[%s815 + $0x8] sm:$0xf]
      %v2003 = vld [vmem:[%s815 + $0xc] sm:$0xf]
      %v2004 = vrot.slane %v1931, 1
      %v2005 = vrot.slane %v1933, 2
      %v2006 = vor.u32 %v2004, %v2005
      %v2011 = vunpack.c.l.b16 %v2000
      %v2012 = vunpack.c.l.b16 %v2001
      %v2013 = vunpack.c.l.b16 %v2002
      %v2014 = vunpack.c.l.b16 %v2003
      %v2015 = vpack.c.b16 %v2012, %v2011
      %v2016 = vpack.c.b16 %v2014, %v2013
      %v2020 = vsel %vm273, %v2006, 0
      %2022 = vmatpush.bf16.msra.mxu0 0
      %2023 = vmatpush.bf16.msra.mxu0 0
      %2024 = vmatpush.bf16.msra.mxu0 0
      %2025 = vmatpush.bf16.msra.mxu0 0
      %2026 = vmatpush.bf16.msra.mxu0 0
      %2027 = vmatpush.bf16.msra.mxu0 0
      %2028 = vmatpush.bf16.msra.mxu0 %v2016
      %2029 = vmatpush.bf16.msra.mxu0 %v2015
      %2030 = vmatmul.bf16.gmra.mxu0 %v2020
      %v2031 = vpop.f32.mrf.mxu0
      %v2032 = vadd.f32 0.0, %v2031
      %v2033 = vpop.f32.mrf.mxu0
      %2034 = vdwg.mxu0
      %v2035 = vadd.f32 %v1999, %v2032
      %s2036 = smul.u32 %s544, 4
      %s2037 = scalar_lea.vmem [#allocation2], %s2036
      %2038 = vst [vmem:[%s2037] sm:$0x7] %v2035
      %p2039 = scmp.eq.s32.totalorder %s21, 0
      // Predicated region
      $region41: #{discriminator_forward.7} parent=39 // pred_check
        %p2040 = pneg %p2039
      $region42: #{discriminator_forward.7} parent=39 // pred_check_branch
        %2042 = sbr.rel (%p2040) target = $region44
      $region43: #{discriminator_forward.7} parent=39 // pred_region
        %v2043 = vld [vmem:[#allocation2] sm:$0x7]
        %v2044 = vld [vmem:[#allocation2 + $0x4] sm:$0x7]
        %v2045 = vld [vmem:[#allocation2 + $0x8] sm:$0x7]
        %v2046 = vld [vmem:[%s2] sm:$0x1]
        %v2048 = vperm.slane %v2046, 0
        %v2050 = vadd.f32 %v2043, %v2048
        %v2051 = vadd.f32 %v2044, %v2048
        %v2052 = vadd.f32 %v2045, %v2048
        %vm2053 = vcmask 1042432
        %v2054 = vsel %vm2053, %v2050, 0.0
        %v2055 = vrot.slane %v2054, 4
        %v2056 = vadd.f32 %v2054, %v2055
        %v2057 = vrot.slane %v2056, 2
        %v2058 = vadd.f32 %v2056, %v2057
        %v2059 = vrot.slane %v2058, 1
        %v2060 = vadd.f32 %v2058, %v2059
        %v2061 = vsel %vm2053, %v2051, 0.0
        %v2062 = vrot.slane %v2061, 4
        %v2063 = vadd.f32 %v2061, %v2062
        %v2064 = vrot.slane %v2063, 2
        %v2065 = vadd.f32 %v2063, %v2064
        %v2066 = vrot.slane %v2065, 1
        %v2067 = vadd.f32 %v2065, %v2066
        %v2068 = vsel %vm2053, %v2052, 0.0
        %v2069 = vrot.slane %v2068, 4
        %v2070 = vadd.f32 %v2068, %v2069
        %v2071 = vrot.slane %v2070, 2
        %v2072 = vadd.f32 %v2070, %v2071
        %v2073 = vrot.slane %v2072, 1
        %v2074 = vadd.f32 %v2072, %v2073
        %v2075 = vadd.f32 %v2060, %v2067
        %v2076 = vadd.f32 %v2075, %v2074
        %v2077 = vrcp.pop 9.0
        %v2078 = vmul.f32 9.0, %v2077
        %v2079 = vsub.f32 1.0, %v2078
        %v2080 = vmul.f32 %v2077, %v2079
        %v2081 = vadd.f32 %v2077, %v2080
        %vm2082 = vweird.f32 %v2077
        %v2083 = vsel %vm2082, %v2077, %v2081
        %v2084 = vmul.f32 %v2076, %v2083
        %v2085 = vsub.f32 %v2050, %v2084
        %v2086 = vsub.f32 %v2051, %v2084
        %v2087 = vsub.f32 %v2052, %v2084
        %v2088 = vmul.f32 %v2085, %v2085
        %v2089 = vmul.f32 %v2086, %v2086
        %v2090 = vmul.f32 %v2087, %v2087
        %v2091 = vsel %vm2053, %v2088, 0.0
        %v2092 = vrot.slane %v2091, 4
        %v2093 = vadd.f32 %v2091, %v2092
        %v2094 = vrot.slane %v2093, 2
        %v2095 = vadd.f32 %v2093, %v2094
        %v2096 = vrot.slane %v2095, 1
        %v2097 = vadd.f32 %v2095, %v2096
        %v2098 = vsel %vm2053, %v2089, 0.0
        %v2099 = vrot.slane %v2098, 4
        %v2100 = vadd.f32 %v2098, %v2099
        %v2101 = vrot.slane %v2100, 2
        %v2102 = vadd.f32 %v2100, %v2101
        %v2103 = vrot.slane %v2102, 1
        %v2104 = vadd.f32 %v2102, %v2103
        %v2105 = vsel %vm2053, %v2090, 0.0
        %v2106 = vrot.slane %v2105, 4
        %v2107 = vadd.f32 %v2105, %v2106
        %v2108 = vrot.slane %v2107, 2
        %v2109 = vadd.f32 %v2107, %v2108
        %v2110 = vrot.slane %v2109, 1
        %v2111 = vadd.f32 %v2109, %v2110
        %v2112 = vadd.f32 %v2097, %v2104
        %v2113 = vadd.f32 %v2112, %v2111
        %v2114 = vmul.f32 %v2113, %v2083
        %v2115 = vadd.f32 %v2114, 1e-05
        %v2116 = vrsqrt.pop %v2115
        %v2117 = vmul.f32 %v2116, %v2115
        %v2118 = vmul.f32 %v2117, %v2116
        %v2119 = vmul.f32 0.5, %v2118
        %v2120 = vsub.f32 1.5, %v2119
        %v2121 = vmul.f32 %v2116, %v2120
        %vm2122 = vweird.f32 %v2115
        %vm2123 = vweird.f32 %v2116
        %vm2124 = vmor %vm2122, %vm2123
        %v2125 = vsel %vm2124, %v2116, %v2121
        %v2126 = vmul.f32 %v2085, %v2125
        %v2127 = vmul.f32 %v2086, %v2125
        %v2128 = vmul.f32 %v2087, %v2125
        %vm2129 = vcmp.ge.f32.partialorder %v2126, 0.0
        %vm2130 = vcmp.ge.f32.partialorder %v2127, 0.0
        %vm2131 = vcmp.ge.f32.partialorder %v2128, 0.0
        %v2132 = vmul.f32 %v2126, 0.2
        %v2133 = vmul.f32 %v2127, 0.2
        %v2134 = vmul.f32 %v2128, 0.2
        %v2135 = vsel %vm2129, %v2126, %v2132
        %v2136 = vsel %vm2130, %v2127, %v2133
        %v2137 = vsel %vm2131, %v2128, %v2134
        %2138 = vst [vmem:[#allocation3] sm:$0x1f] 0.0
        %2139 = vst [vmem:[#allocation3 + $0x8] sm:$0x1f] 0.0
        %2140 = vst [vmem:[#allocation3 + $0x10] sm:$0x1f] 0.0
        %2141 = vst [vmem:[#allocation3 + $0x18] sm:$0x1f] 0.0
        %2142 = vst [vmem:[#allocation3 + $0x20] sm:$0x1f] 0.0
        %s2143 = scalar_lea.vmem [#allocation3], 8
        %2144 = vst [vmem:[%s2143 + $0x1] sm:$0x7] %v2135
        %2145 = vst [vmem:[%s2143 + $0x9] sm:$0x7] %v2136
        %2146 = vst [vmem:[%s2143 + $0x11] sm:$0x7] %v2137
        %v2147 = vld [vmem:[#allocation3] sm:$0x3]
        %v2148 = vpack.c.bf16 %v2147, %v2147
        %v2149 = vld [vmem:[%s3] sm:$0xf]
        %v2150 = vld [vmem:[%s3 + $0x4] sm:$0xf]
        %v2151 = vld [vmem:[%s3 + $0x8] sm:$0xf]
        %v2152 = vld [vmem:[%s3 + $0xc] sm:$0xf]
        %v2153 = vld [vmem:[%s3 + $0x10] sm:$0xf]
        %v2154 = vld [vmem:[%s3 + $0x14] sm:$0xf]
        %v2155 = vld [vmem:[%s3 + $0x18] sm:$0xf]
        %v2156 = vld [vmem:[%s3 + $0x1c] sm:$0xf]
        %v2157 = vld [vmem:[%s3 + $0x20] sm:$0xf]
        %v2158 = vld [vmem:[%s3 + $0x24] sm:$0xf]
        %v2159 = vld [vmem:[%s3 + $0x28] sm:$0xf]
        %v2160 = vld [vmem:[%s3 + $0x2c] sm:$0xf]
        %v2161 = vld [vmem:[%s3 + $0x30] sm:$0xf]
        %v2162 = vld [vmem:[%s3 + $0x34] sm:$0xf]
        %v2163 = vld [vmem:[%s3 + $0x38] sm:$0xf]
        %v2164 = vld [vmem:[%s3 + $0x3c] sm:$0xf]
        %v2165 = vld [vmem:[#allocation3 + $0x1] sm:$0x3]
        %v2166 = vpack.c.bf16 %v2165, %v2165
        %s2167 = scalar_lea.vmem %s3, 64
        %v2168 = vld [vmem:[%s2167] sm:$0xf]
        %v2169 = vld [vmem:[%s2167 + $0x4] sm:$0xf]
        %v2170 = vld [vmem:[%s2167 + $0x8] sm:$0xf]
        %v2171 = vld [vmem:[%s2167 + $0xc] sm:$0xf]
        %v2172 = vld [vmem:[%s2167 + $0x10] sm:$0xf]
        %v2173 = vld [vmem:[%s2167 + $0x14] sm:$0xf]
        %v2174 = vld [vmem:[%s2167 + $0x18] sm:$0xf]
        %v2175 = vld [vmem:[%s2167 + $0x1c] sm:$0xf]
        %v2176 = vld [vmem:[%s2167 + $0x20] sm:$0xf]
        %v2177 = vld [vmem:[%s2167 + $0x24] sm:$0xf]
        %v2178 = vld [vmem:[%s2167 + $0x28] sm:$0xf]
        %v2179 = vld [vmem:[%s2167 + $0x2c] sm:$0xf]
        %v2180 = vld [vmem:[%s2167 + $0x30] sm:$0xf]
        %v2181 = vld [vmem:[%s2167 + $0x34] sm:$0xf]
        %v2182 = vld [vmem:[%s2167 + $0x38] sm:$0xf]
        %v2183 = vld [vmem:[%s2167 + $0x3c] sm:$0xf]
        %v2200 = vunpack.c.l.b16 %v2168
        %v2201 = vunpack.c.l.b16 %v2169
        %v2202 = vunpack.c.l.b16 %v2170
        %v2203 = vunpack.c.l.b16 %v2171
        %v2204 = vunpack.c.l.b16 %v2172
        %v2205 = vunpack.c.l.b16 %v2173
        %v2206 = vunpack.c.l.b16 %v2174
        %v2207 = vunpack.c.l.b16 %v2175
        %v2208 = vunpack.c.l.b16 %v2176
        %v2209 = vunpack.c.l.b16 %v2177
        %v2210 = vunpack.c.l.b16 %v2178
        %v2211 = vunpack.c.l.b16 %v2179
        %v2212 = vunpack.c.l.b16 %v2180
        %v2213 = vunpack.c.l.b16 %v2181
        %v2214 = vunpack.c.l.b16 %v2182
        %v2215 = vunpack.c.l.b16 %v2183
        %v2216 = vpack.c.b16 %v2201, %v2200
        %v2217 = vpack.c.b16 %v2203, %v2202
        %v2218 = vpack.c.b16 %v2205, %v2204
        %v2219 = vpack.c.b16 %v2207, %v2206
        %v2220 = vpack.c.b16 %v2209, %v2208
        %v2221 = vpack.c.b16 %v2211, %v2210
        %v2222 = vpack.c.b16 %v2213, %v2212
        %v2223 = vpack.c.b16 %v2215, %v2214
        %2232 = vmatpush.bf16.msra.mxu0 %v2223
        %2233 = vmatpush.bf16.msra.mxu0 %v2222
        %2234 = vmatpush.bf16.msra.mxu0 %v2221
        %2235 = vmatpush.bf16.msra.mxu0 %v2220
        %2236 = vmatpush.bf16.msra.mxu0 %v2219
        %2237 = vmatpush.bf16.msra.mxu0 %v2218
        %2238 = vmatpush.bf16.msra.mxu0 %v2217
        %2239 = vmatpush.bf16.msra.mxu0 %v2216
        %2240 = vmatmul.bf16.gmra.mxu0 %v2166
        %v2241 = vpop.f32.mrf.mxu0
        %v2242 = vadd.f32 0.0, %v2241
        %v2243 = vpop.f32.mrf.mxu0
        %2244 = vdwg.mxu0
        %v2261 = vunpack.c.l.b16 %v2149
        %v2262 = vunpack.c.l.b16 %v2150
        %v2263 = vunpack.c.l.b16 %v2151
        %v2264 = vunpack.c.l.b16 %v2152
        %v2265 = vunpack.c.l.b16 %v2153
        %v2266 = vunpack.c.l.b16 %v2154
        %v2267 = vunpack.c.l.b16 %v2155
        %v2268 = vunpack.c.l.b16 %v2156
        %v2269 = vunpack.c.l.b16 %v2157
        %v2270 = vunpack.c.l.b16 %v2158
        %v2271 = vunpack.c.l.b16 %v2159
        %v2272 = vunpack.c.l.b16 %v2160
        %v2273 = vunpack.c.l.b16 %v2161
        %v2274 = vunpack.c.l.b16 %v2162
        %v2275 = vunpack.c.l.b16 %v2163
        %v2276 = vunpack.c.l.b16 %v2164
        %v2277 = vpack.c.b16 %v2262, %v2261
        %v2278 = vpack.c.b16 %v2264, %v2263
        %v2279 = vpack.c.b16 %v2266, %v2265
        %v2280 = vpack.c.b16 %v2268, %v2267
        %v2281 = vpack.c.b16 %v2270, %v2269
        %v2282 = vpack.c.b16 %v2272, %v2271
        %v2283 = vpack.c.b16 %v2274, %v2273
        %v2284 = vpack.c.b16 %v2276, %v2275
        %2293 = vmatpush.bf16.msra.mxu0 %v2284
        %2294 = vmatpush.bf16.msra.mxu0 %v2283
        %2295 = vmatpush.bf16.msra.mxu0 %v2282
        %2296 = vmatpush.bf16.msra.mxu0 %v2281
        %2297 = vmatpush.bf16.msra.mxu0 %v2280
        %2298 = vmatpush.bf16.msra.mxu0 %v2279
        %2299 = vmatpush.bf16.msra.mxu0 %v2278
        %2300 = vmatpush.bf16.msra.mxu0 %v2277
        %2301 = vmatmul.bf16.gmra.mxu0 %v2148
        %v2302 = vpop.f32.mrf.mxu0
        %v2303 = vadd.f32 %v2242, %v2302
        %v2304 = vpop.f32.mrf.mxu0
        %2305 = vdwg.mxu0
        %v2306 = vld [vmem:[#allocation3 + $0x2] sm:$0x3]
        %v2307 = vpack.c.bf16 %v2306, %v2306
        %s2308 = scalar_lea.vmem %s3, 128
        %v2309 = vld [vmem:[%s2308] sm:$0xf]
        %v2310 = vld [vmem:[%s2308 + $0x4] sm:$0xf]
        %v2311 = vld [vmem:[%s2308 + $0x8] sm:$0xf]
        %v2312 = vld [vmem:[%s2308 + $0xc] sm:$0xf]
        %v2313 = vld [vmem:[%s2308 + $0x10] sm:$0xf]
        %v2314 = vld [vmem:[%s2308 + $0x14] sm:$0xf]
        %v2315 = vld [vmem:[%s2308 + $0x18] sm:$0xf]
        %v2316 = vld [vmem:[%s2308 + $0x1c] sm:$0xf]
        %v2317 = vld [vmem:[%s2308 + $0x20] sm:$0xf]
        %v2318 = vld [vmem:[%s2308 + $0x24] sm:$0xf]
        %v2319 = vld [vmem:[%s2308 + $0x28] sm:$0xf]
        %v2320 = vld [vmem:[%s2308 + $0x2c] sm:$0xf]
        %v2321 = vld [vmem:[%s2308 + $0x30] sm:$0xf]
        %v2322 = vld [vmem:[%s2308 + $0x34] sm:$0xf]
        %v2323 = vld [vmem:[%s2308 + $0x38] sm:$0xf]
        %v2324 = vld [vmem:[%s2308 + $0x3c] sm:$0xf]
        %v2341 = vunpack.c.l.b16 %v2309
        %v2342 = vunpack.c.l.b16 %v2310
        %v2343 = vunpack.c.l.b16 %v2311
        %v2344 = vunpack.c.l.b16 %v2312
        %v2345 = vunpack.c.l.b16 %v2313
        %v2346 = vunpack.c.l.b16 %v2314
        %v2347 = vunpack.c.l.b16 %v2315
        %v2348 = vunpack.c.l.b16 %v2316
        %v2349 = vunpack.c.l.b16 %v2317
        %v2350 = vunpack.c.l.b16 %v2318
        %v2351 = vunpack.c.l.b16 %v2319
        %v2352 = vunpack.c.l.b16 %v2320
        %v2353 = vunpack.c.l.b16 %v2321
        %v2354 = vunpack.c.l.b16 %v2322
        %v2355 = vunpack.c.l.b16 %v2323
        %v2356 = vunpack.c.l.b16 %v2324
        %v2357 = vpack.c.b16 %v2342, %v2341
        %v2358 = vpack.c.b16 %v2344, %v2343
        %v2359 = vpack.c.b16 %v2346, %v2345
        %v2360 = vpack.c.b16 %v2348, %v2347
        %v2361 = vpack.c.b16 %v2350, %v2349
        %v2362 = vpack.c.b16 %v2352, %v2351
        %v2363 = vpack.c.b16 %v2354, %v2353
        %v2364 = vpack.c.b16 %v2356, %v2355
        %2373 = vmatpush.bf16.msra.mxu0 %v2364
        %2374 = vmatpush.bf16.msra.mxu0 %v2363
        %2375 = vmatpush.bf16.msra.mxu0 %v2362
        %2376 = vmatpush.bf16.msra.mxu0 %v2361
        %2377 = vmatpush.bf16.msra.mxu0 %v2360
        %2378 = vmatpush.bf16.msra.mxu0 %v2359
        %2379 = vmatpush.bf16.msra.mxu0 %v2358
        %2380 = vmatpush.bf16.msra.mxu0 %v2357
        %2381 = vmatmul.bf16.gmra.mxu0 %v2307
        %v2382 = vpop.f32.mrf.mxu0
        %v2383 = vadd.f32 0.0, %v2382
        %v2384 = vpop.f32.mrf.mxu0
        %2385 = vdwg.mxu0
        %v2386 = vadd.f32 %v2303, %v2383
        %v2387 = vld [vmem:[#allocation3 + $0x3] sm:$0x3]
        %v2388 = vpack.c.bf16 %v2387, %v2387
        %s2389 = scalar_lea.vmem %s3, 192
        %v2390 = vld [vmem:[%s2389] sm:$0xf]
        %v2391 = vld [vmem:[%s2389 + $0x4] sm:$0xf]
        %v2392 = vld [vmem:[%s2389 + $0x8] sm:$0xf]
        %v2393 = vld [vmem:[%s2389 + $0xc] sm:$0xf]
        %v2394 = vld [vmem:[%s2389 + $0x10] sm:$0xf]
        %v2395 = vld [vmem:[%s2389 + $0x14] sm:$0xf]
        %v2396 = vld [vmem:[%s2389 + $0x18] sm:$0xf]
        %v2397 = vld [vmem:[%s2389 + $0x1c] sm:$0xf]
        %v2398 = vld [vmem:[%s2389 + $0x20] sm:$0xf]
        %v2399 = vld [vmem:[%s2389 + $0x24] sm:$0xf]
        %v2400 = vld [vmem:[%s2389 + $0x28] sm:$0xf]
        %v2401 = vld [vmem:[%s2389 + $0x2c] sm:$0xf]
        %v2402 = vld [vmem:[%s2389 + $0x30] sm:$0xf]
        %v2403 = vld [vmem:[%s2389 + $0x34] sm:$0xf]
        %v2404 = vld [vmem:[%s2389 + $0x38] sm:$0xf]
        %v2405 = vld [vmem:[%s2389 + $0x3c] sm:$0xf]
        %v2422 = vunpack.c.l.b16 %v2390
        %v2423 = vunpack.c.l.b16 %v2391
        %v2424 = vunpack.c.l.b16 %v2392
        %v2425 = vunpack.c.l.b16 %v2393
        %v2426 = vunpack.c.l.b16 %v2394
        %v2427 = vunpack.c.l.b16 %v2395
        %v2428 = vunpack.c.l.b16 %v2396
        %v2429 = vunpack.c.l.b16 %v2397
        %v2430 = vunpack.c.l.b16 %v2398
        %v2431 = vunpack.c.l.b16 %v2399
        %v2432 = vunpack.c.l.b16 %v2400
        %v2433 = vunpack.c.l.b16 %v2401
        %v2434 = vunpack.c.l.b16 %v2402
        %v2435 = vunpack.c.l.b16 %v2403
        %v2436 = vunpack.c.l.b16 %v2404
        %v2437 = vunpack.c.l.b16 %v2405
        %v2438 = vpack.c.b16 %v2423, %v2422
        %v2439 = vpack.c.b16 %v2425, %v2424
        %v2440 = vpack.c.b16 %v2427, %v2426
        %v2441 = vpack.c.b16 %v2429, %v2428
        %v2442 = vpack.c.b16 %v2431, %v2430
        %v2443 = vpack.c.b16 %v2433, %v2432
        %v2444 = vpack.c.b16 %v2435, %v2434
        %v2445 = vpack.c.b16 %v2437, %v2436
        %2454 = vmatpush.bf16.msra.mxu0 %v2445
        %2455 = vmatpush.bf16.msra.mxu0 %v2444
        %2456 = vmatpush.bf16.msra.mxu0 %v2443
        %2457 = vmatpush.bf16.msra.mxu0 %v2442
        %2458 = vmatpush.bf16.msra.mxu0 %v2441
        %2459 = vmatpush.bf16.msra.mxu0 %v2440
        %2460 = vmatpush.bf16.msra.mxu0 %v2439
        %2461 = vmatpush.bf16.msra.mxu0 %v2438
        %2462 = vmatmul.bf16.gmra.mxu0 %v2388
        %v2463 = vpop.f32.mrf.mxu0
        %v2464 = vadd.f32 0.0, %v2463
        %v2465 = vpop.f32.mrf.mxu0
        %2466 = vdwg.mxu0
        %v2467 = vadd.f32 %v2386, %v2464
        %v2468 = vld [vmem:[%s2143] sm:$0x3]
        %v2469 = vpack.c.bf16 %v2468, %v2468
        %s2470 = scalar_lea.vmem %s3, 256
        %v2471 = vld [vmem:[%s2470] sm:$0xf]
        %v2472 = vld [vmem:[%s2470 + $0x4] sm:$0xf]
        %v2473 = vld [vmem:[%s2470 + $0x8] sm:$0xf]
        %v2474 = vld [vmem:[%s2470 + $0xc] sm:$0xf]
        %v2475 = vld [vmem:[%s2470 + $0x10] sm:$0xf]
        %v2476 = vld [vmem:[%s2470 + $0x14] sm:$0xf]
        %v2477 = vld [vmem:[%s2470 + $0x18] sm:$0xf]
        %v2478 = vld [vmem:[%s2470 + $0x1c] sm:$0xf]
        %v2479 = vld [vmem:[%s2470 + $0x20] sm:$0xf]
        %v2480 = vld [vmem:[%s2470 + $0x24] sm:$0xf]
        %v2481 = vld [vmem:[%s2470 + $0x28] sm:$0xf]
        %v2482 = vld [vmem:[%s2470 + $0x2c] sm:$0xf]
        %v2483 = vld [vmem:[%s2470 + $0x30] sm:$0xf]
        %v2484 = vld [vmem:[%s2470 + $0x34] sm:$0xf]
        %v2485 = vld [vmem:[%s2470 + $0x38] sm:$0xf]
        %v2486 = vld [vmem:[%s2470 + $0x3c] sm:$0xf]
        %v2503 = vunpack.c.l.b16 %v2471
        %v2504 = vunpack.c.l.b16 %v2472
        %v2505 = vunpack.c.l.b16 %v2473
        %v2506 = vunpack.c.l.b16 %v2474
        %v2507 = vunpack.c.l.b16 %v2475
        %v2508 = vunpack.c.l.b16 %v2476
        %v2509 = vunpack.c.l.b16 %v2477
        %v2510 = vunpack.c.l.b16 %v2478
        %v2511 = vunpack.c.l.b16 %v2479
        %v2512 = vunpack.c.l.b16 %v2480
        %v2513 = vunpack.c.l.b16 %v2481
        %v2514 = vunpack.c.l.b16 %v2482
        %v2515 = vunpack.c.l.b16 %v2483
        %v2516 = vunpack.c.l.b16 %v2484
        %v2517 = vunpack.c.l.b16 %v2485
        %v2518 = vunpack.c.l.b16 %v2486
        %v2519 = vpack.c.b16 %v2504, %v2503
        %v2520 = vpack.c.b16 %v2506, %v2505
        %v2521 = vpack.c.b16 %v2508, %v2507
        %v2522 = vpack.c.b16 %v2510, %v2509
        %v2523 = vpack.c.b16 %v2512, %v2511
        %v2524 = vpack.c.b16 %v2514, %v2513
        %v2525 = vpack.c.b16 %v2516, %v2515
        %v2526 = vpack.c.b16 %v2518, %v2517
        %2535 = vmatpush.bf16.msra.mxu0 %v2526
        %2536 = vmatpush.bf16.msra.mxu0 %v2525
        %2537 = vmatpush.bf16.msra.mxu0 %v2524
        %2538 = vmatpush.bf16.msra.mxu0 %v2523
        %2539 = vmatpush.bf16.msra.mxu0 %v2522
        %2540 = vmatpush.bf16.msra.mxu0 %v2521
        %2541 = vmatpush.bf16.msra.mxu0 %v2520
        %2542 = vmatpush.bf16.msra.mxu0 %v2519
        %2543 = vmatmul.bf16.gmra.mxu0 %v2469
        %v2544 = vpop.f32.mrf.mxu0
        %v2545 = vadd.f32 0.0, %v2544
        %v2546 = vpop.f32.mrf.mxu0
        %2547 = vdwg.mxu0
        %v2548 = vadd.f32 %v2467, %v2545
        %v2549 = vld [vmem:[%s2143 + $0x1] sm:$0x3]
        %v2550 = vpack.c.bf16 %v2549, %v2549
        %s2551 = scalar_lea.vmem %s3, 320
        %v2552 = vld [vmem:[%s2551] sm:$0xf]
        %v2553 = vld [vmem:[%s2551 + $0x4] sm:$0xf]
        %v2554 = vld [vmem:[%s2551 + $0x8] sm:$0xf]
        %v2555 = vld [vmem:[%s2551 + $0xc] sm:$0xf]
        %v2556 = vld [vmem:[%s2551 + $0x10] sm:$0xf]
        %v2557 = vld [vmem:[%s2551 + $0x14] sm:$0xf]
        %v2558 = vld [vmem:[%s2551 + $0x18] sm:$0xf]
        %v2559 = vld [vmem:[%s2551 + $0x1c] sm:$0xf]
        %v2560 = vld [vmem:[%s2551 + $0x20] sm:$0xf]
        %v2561 = vld [vmem:[%s2551 + $0x24] sm:$0xf]
        %v2562 = vld [vmem:[%s2551 + $0x28] sm:$0xf]
        %v2563 = vld [vmem:[%s2551 + $0x2c] sm:$0xf]
        %v2564 = vld [vmem:[%s2551 + $0x30] sm:$0xf]
        %v2565 = vld [vmem:[%s2551 + $0x34] sm:$0xf]
        %v2566 = vld [vmem:[%s2551 + $0x38] sm:$0xf]
        %v2567 = vld [vmem:[%s2551 + $0x3c] sm:$0xf]
        %v2584 = vunpack.c.l.b16 %v2552
        %v2585 = vunpack.c.l.b16 %v2553
        %v2586 = vunpack.c.l.b16 %v2554
        %v2587 = vunpack.c.l.b16 %v2555
        %v2588 = vunpack.c.l.b16 %v2556
        %v2589 = vunpack.c.l.b16 %v2557
        %v2590 = vunpack.c.l.b16 %v2558
        %v2591 = vunpack.c.l.b16 %v2559
        %v2592 = vunpack.c.l.b16 %v2560
        %v2593 = vunpack.c.l.b16 %v2561
        %v2594 = vunpack.c.l.b16 %v2562
        %v2595 = vunpack.c.l.b16 %v2563
        %v2596 = vunpack.c.l.b16 %v2564
        %v2597 = vunpack.c.l.b16 %v2565
        %v2598 = vunpack.c.l.b16 %v2566
        %v2599 = vunpack.c.l.b16 %v2567
        %v2600 = vpack.c.b16 %v2585, %v2584
        %v2601 = vpack.c.b16 %v2587, %v2586
        %v2602 = vpack.c.b16 %v2589, %v2588
        %v2603 = vpack.c.b16 %v2591, %v2590
        %v2604 = vpack.c.b16 %v2593, %v2592
        %v2605 = vpack.c.b16 %v2595, %v2594
        %v2606 = vpack.c.b16 %v2597, %v2596
        %v2607 = vpack.c.b16 %v2599, %v2598
        %2616 = vmatpush.bf16.msra.mxu0 %v2607
        %2617 = vmatpush.bf16.msra.mxu0 %v2606
        %2618 = vmatpush.bf16.msra.mxu0 %v2605
        %2619 = vmatpush.bf16.msra.mxu0 %v2604
        %2620 = vmatpush.bf16.msra.mxu0 %v2603
        %2621 = vmatpush.bf16.msra.mxu0 %v2602
        %2622 = vmatpush.bf16.msra.mxu0 %v2601
        %2623 = vmatpush.bf16.msra.mxu0 %v2600
        %2624 = vmatmul.bf16.gmra.mxu0 %v2550
        %v2625 = vpop.f32.mrf.mxu0
        %v2626 = vadd.f32 0.0, %v2625
        %v2627 = vpop.f32.mrf.mxu0
        %2628 = vdwg.mxu0
        %v2629 = vadd.f32 %v2548, %v2626
        %v2630 = vld [vmem:[%s2143 + $0x2] sm:$0x3]
        %v2631 = vpack.c.bf16 %v2630, %v2630
        %s2632 = scalar_lea.vmem %s3, 384
        %v2633 = vld [vmem:[%s2632] sm:$0xf]
        %v2634 = vld [vmem:[%s2632 + $0x4] sm:$0xf]
        %v2635 = vld [vmem:[%s2632 + $0x8] sm:$0xf]
        %v2636 = vld [vmem:[%s2632 + $0xc] sm:$0xf]
        %v2637 = vld [vmem:[%s2632 + $0x10] sm:$0xf]
        %v2638 = vld [vmem:[%s2632 + $0x14] sm:$0xf]
        %v2639 = vld [vmem:[%s2632 + $0x18] sm:$0xf]
        %v2640 = vld [vmem:[%s2632 + $0x1c] sm:$0xf]
        %v2641 = vld [vmem:[%s2632 + $0x20] sm:$0xf]
        %v2642 = vld [vmem:[%s2632 + $0x24] sm:$0xf]
        %v2643 = vld [vmem:[%s2632 + $0x28] sm:$0xf]
        %v2644 = vld [vmem:[%s2632 + $0x2c] sm:$0xf]
        %v2645 = vld [vmem:[%s2632 + $0x30] sm:$0xf]
        %v2646 = vld [vmem:[%s2632 + $0x34] sm:$0xf]
        %v2647 = vld [vmem:[%s2632 + $0x38] sm:$0xf]
        %v2648 = vld [vmem:[%s2632 + $0x3c] sm:$0xf]
        %v2665 = vunpack.c.l.b16 %v2633
        %v2666 = vunpack.c.l.b16 %v2634
        %v2667 = vunpack.c.l.b16 %v2635
        %v2668 = vunpack.c.l.b16 %v2636
        %v2669 = vunpack.c.l.b16 %v2637
        %v2670 = vunpack.c.l.b16 %v2638
        %v2671 = vunpack.c.l.b16 %v2639
        %v2672 = vunpack.c.l.b16 %v2640
        %v2673 = vunpack.c.l.b16 %v2641
        %v2674 = vunpack.c.l.b16 %v2642
        %v2675 = vunpack.c.l.b16 %v2643
        %v2676 = vunpack.c.l.b16 %v2644
        %v2677 = vunpack.c.l.b16 %v2645
        %v2678 = vunpack.c.l.b16 %v2646
        %v2679 = vunpack.c.l.b16 %v2647
        %v2680 = vunpack.c.l.b16 %v2648
        %v2681 = vpack.c.b16 %v2666, %v2665
        %v2682 = vpack.c.b16 %v2668, %v2667
        %v2683 = vpack.c.b16 %v2670, %v2669
        %v2684 = vpack.c.b16 %v2672, %v2671
        %v2685 = vpack.c.b16 %v2674, %v2673
        %v2686 = vpack.c.b16 %v2676, %v2675
        %v2687 = vpack.c.b16 %v2678, %v2677
        %v2688 = vpack.c.b16 %v2680, %v2679
        %2697 = vmatpush.bf16.msra.mxu0 %v2688
        %2698 = vmatpush.bf16.msra.mxu0 %v2687
        %2699 = vmatpush.bf16.msra.mxu0 %v2686
        %2700 = vmatpush.bf16.msra.mxu0 %v2685
        %2701 = vmatpush.bf16.msra.mxu0 %v2684
        %2702 = vmatpush.bf16.msra.mxu0 %v2683
        %2703 = vmatpush.bf16.msra.mxu0 %v2682
        %2704 = vmatpush.bf16.msra.mxu0 %v2681
        %2705 = vmatmul.bf16.gmra.mxu0 %v2631
        %v2706 = vpop.f32.mrf.mxu0
        %v2707 = vadd.f32 0.0, %v2706
        %v2708 = vpop.f32.mrf.mxu0
        %2709 = vdwg.mxu0
        %v2710 = vadd.f32 %v2629, %v2707
        %v2711 = vld [vmem:[%s2143 + $0x3] sm:$0x3]
        %v2712 = vpack.c.bf16 %v2711, %v2711
        %s2713 = scalar_lea.vmem %s3, 448
        %v2714 = vld [vmem:[%s2713] sm:$0xf]
        %v2715 = vld [vmem:[%s2713 + $0x4] sm:$0xf]
        %v2716 = vld [vmem:[%s2713 + $0x8] sm:$0xf]
        %v2717 = vld [vmem:[%s2713 + $0xc] sm:$0xf]
        %v2718 = vld [vmem:[%s2713 + $0x10] sm:$0xf]
        %v2719 = vld [vmem:[%s2713 + $0x14] sm:$0xf]
        %v2720 = vld [vmem:[%s2713 + $0x18] sm:$0xf]
        %v2721 = vld [vmem:[%s2713 + $0x1c] sm:$0xf]
        %v2722 = vld [vmem:[%s2713 + $0x20] sm:$0xf]
        %v2723 = vld [vmem:[%s2713 + $0x24] sm:$0xf]
        %v2724 = vld [vmem:[%s2713 + $0x28] sm:$0xf]
        %v2725 = vld [vmem:[%s2713 + $0x2c] sm:$0xf]
        %v2726 = vld [vmem:[%s2713 + $0x30] sm:$0xf]
        %v2727 = vld [vmem:[%s2713 + $0x34] sm:$0xf]
        %v2728 = vld [vmem:[%s2713 + $0x38] sm:$0xf]
        %v2729 = vld [vmem:[%s2713 + $0x3c] sm:$0xf]
        %v2746 = vunpack.c.l.b16 %v2714
        %v2747 = vunpack.c.l.b16 %v2715
        %v2748 = vunpack.c.l.b16 %v2716
        %v2749 = vunpack.c.l.b16 %v2717
        %v2750 = vunpack.c.l.b16 %v2718
        %v2751 = vunpack.c.l.b16 %v2719
        %v2752 = vunpack.c.l.b16 %v2720
        %v2753 = vunpack.c.l.b16 %v2721
        %v2754 = vunpack.c.l.b16 %v2722
        %v2755 = vunpack.c.l.b16 %v2723
        %v2756 = vunpack.c.l.b16 %v2724
        %v2757 = vunpack.c.l.b16 %v2725
        %v2758 = vunpack.c.l.b16 %v2726
        %v2759 = vunpack.c.l.b16 %v2727
        %v2760 = vunpack.c.l.b16 %v2728
        %v2761 = vunpack.c.l.b16 %v2729
        %v2762 = vpack.c.b16 %v2747, %v2746
        %v2763 = vpack.c.b16 %v2749, %v2748
        %v2764 = vpack.c.b16 %v2751, %v2750
        %v2765 = vpack.c.b16 %v2753, %v2752
        %v2766 = vpack.c.b16 %v2755, %v2754
        %v2767 = vpack.c.b16 %v2757, %v2756
        %v2768 = vpack.c.b16 %v2759, %v2758
        %v2769 = vpack.c.b16 %v2761, %v2760
        %2778 = vmatpush.bf16.msra.mxu0 %v2769
        %2779 = vmatpush.bf16.msra.mxu0 %v2768
        %2780 = vmatpush.bf16.msra.mxu0 %v2767
        %2781 = vmatpush.bf16.msra.mxu0 %v2766
        %2782 = vmatpush.bf16.msra.mxu0 %v2765
        %2783 = vmatpush.bf16.msra.mxu0 %v2764
        %2784 = vmatpush.bf16.msra.mxu0 %v2763
        %2785 = vmatpush.bf16.msra.mxu0 %v2762
        %2786 = vmatmul.bf16.gmra.mxu0 %v2712
        %v2787 = vpop.f32.mrf.mxu0
        %v2788 = vadd.f32 0.0, %v2787
        %v2789 = vpop.f32.mrf.mxu0
        %2790 = vdwg.mxu0
        %v2791 = vadd.f32 %v2710, %v2788
        %s2792 = scalar_lea.vmem [#allocation3], 16
        %v2793 = vld [vmem:[%s2792] sm:$0x3]
        %v2794 = vpack.c.bf16 %v2793, %v2793
        %s2795 = scalar_lea.vmem %s3, 512
        %v2796 = vld [vmem:[%s2795] sm:$0xf]
        %v2797 = vld [vmem:[%s2795 + $0x4] sm:$0xf]
        %v2798 = vld [vmem:[%s2795 + $0x8] sm:$0xf]
        %v2799 = vld [vmem:[%s2795 + $0xc] sm:$0xf]
        %v2800 = vld [vmem:[%s2795 + $0x10] sm:$0xf]
        %v2801 = vld [vmem:[%s2795 + $0x14] sm:$0xf]
        %v2802 = vld [vmem:[%s2795 + $0x18] sm:$0xf]
        %v2803 = vld [vmem:[%s2795 + $0x1c] sm:$0xf]
        %v2804 = vld [vmem:[%s2795 + $0x20] sm:$0xf]
        %v2805 = vld [vmem:[%s2795 + $0x24] sm:$0xf]
        %v2806 = vld [vmem:[%s2795 + $0x28] sm:$0xf]
        %v2807 = vld [vmem:[%s2795 + $0x2c] sm:$0xf]
        %v2808 = vld [vmem:[%s2795 + $0x30] sm:$0xf]
        %v2809 = vld [vmem:[%s2795 + $0x34] sm:$0xf]
        %v2810 = vld [vmem:[%s2795 + $0x38] sm:$0xf]
        %v2811 = vld [vmem:[%s2795 + $0x3c] sm:$0xf]
        %v2828 = vunpack.c.l.b16 %v2796
        %v2829 = vunpack.c.l.b16 %v2797
        %v2830 = vunpack.c.l.b16 %v2798
        %v2831 = vunpack.c.l.b16 %v2799
        %v2832 = vunpack.c.l.b16 %v2800
        %v2833 = vunpack.c.l.b16 %v2801
        %v2834 = vunpack.c.l.b16 %v2802
        %v2835 = vunpack.c.l.b16 %v2803
        %v2836 = vunpack.c.l.b16 %v2804
        %v2837 = vunpack.c.l.b16 %v2805
        %v2838 = vunpack.c.l.b16 %v2806
        %v2839 = vunpack.c.l.b16 %v2807
        %v2840 = vunpack.c.l.b16 %v2808
        %v2841 = vunpack.c.l.b16 %v2809
        %v2842 = vunpack.c.l.b16 %v2810
        %v2843 = vunpack.c.l.b16 %v2811
        %v2844 = vpack.c.b16 %v2829, %v2828
        %v2845 = vpack.c.b16 %v2831, %v2830
        %v2846 = vpack.c.b16 %v2833, %v2832
        %v2847 = vpack.c.b16 %v2835, %v2834
        %v2848 = vpack.c.b16 %v2837, %v2836
        %v2849 = vpack.c.b16 %v2839, %v2838
        %v2850 = vpack.c.b16 %v2841, %v2840
        %v2851 = vpack.c.b16 %v2843, %v2842
        %2860 = vmatpush.bf16.msra.mxu0 %v2851
        %2861 = vmatpush.bf16.msra.mxu0 %v2850
        %2862 = vmatpush.bf16.msra.mxu0 %v2849
        %2863 = vmatpush.bf16.msra.mxu0 %v2848
        %2864 = vmatpush.bf16.msra.mxu0 %v2847
        %2865 = vmatpush.bf16.msra.mxu0 %v2846
        %2866 = vmatpush.bf16.msra.mxu0 %v2845
        %2867 = vmatpush.bf16.msra.mxu0 %v2844
        %2868 = vmatmul.bf16.gmra.mxu0 %v2794
        %v2869 = vpop.f32.mrf.mxu0
        %v2870 = vadd.f32 0.0, %v2869
        %v2871 = vpop.f32.mrf.mxu0
        %2872 = vdwg.mxu0
        %v2873 = vadd.f32 %v2791, %v2870
        %v2874 = vld [vmem:[%s2792 + $0x1] sm:$0x3]
        %v2875 = vpack.c.bf16 %v2874, %v2874
        %s2876 = scalar_lea.vmem %s3, 576
        %v2877 = vld [vmem:[%s2876] sm:$0xf]
        %v2878 = vld [vmem:[%s2876 + $0x4] sm:$0xf]
        %v2879 = vld [vmem:[%s2876 + $0x8] sm:$0xf]
        %v2880 = vld [vmem:[%s2876 + $0xc] sm:$0xf]
        %v2881 = vld [vmem:[%s2876 + $0x10] sm:$0xf]
        %v2882 = vld [vmem:[%s2876 + $0x14] sm:$0xf]
        %v2883 = vld [vmem:[%s2876 + $0x18] sm:$0xf]
        %v2884 = vld [vmem:[%s2876 + $0x1c] sm:$0xf]
        %v2885 = vld [vmem:[%s2876 + $0x20] sm:$0xf]
        %v2886 = vld [vmem:[%s2876 + $0x24] sm:$0xf]
        %v2887 = vld [vmem:[%s2876 + $0x28] sm:$0xf]
        %v2888 = vld [vmem:[%s2876 + $0x2c] sm:$0xf]
        %v2889 = vld [vmem:[%s2876 + $0x30] sm:$0xf]
        %v2890 = vld [vmem:[%s2876 + $0x34] sm:$0xf]
        %v2891 = vld [vmem:[%s2876 + $0x38] sm:$0xf]
        %v2892 = vld [vmem:[%s2876 + $0x3c] sm:$0xf]
        %v2909 = vunpack.c.l.b16 %v2877
        %v2910 = vunpack.c.l.b16 %v2878
        %v2911 = vunpack.c.l.b16 %v2879
        %v2912 = vunpack.c.l.b16 %v2880
        %v2913 = vunpack.c.l.b16 %v2881
        %v2914 = vunpack.c.l.b16 %v2882
        %v2915 = vunpack.c.l.b16 %v2883
        %v2916 = vunpack.c.l.b16 %v2884
        %v2917 = vunpack.c.l.b16 %v2885
        %v2918 = vunpack.c.l.b16 %v2886
        %v2919 = vunpack.c.l.b16 %v2887
        %v2920 = vunpack.c.l.b16 %v2888
        %v2921 = vunpack.c.l.b16 %v2889
        %v2922 = vunpack.c.l.b16 %v2890
        %v2923 = vunpack.c.l.b16 %v2891
        %v2924 = vunpack.c.l.b16 %v2892
        %v2925 = vpack.c.b16 %v2910, %v2909
        %v2926 = vpack.c.b16 %v2912, %v2911
        %v2927 = vpack.c.b16 %v2914, %v2913
        %v2928 = vpack.c.b16 %v2916, %v2915
        %v2929 = vpack.c.b16 %v2918, %v2917
        %v2930 = vpack.c.b16 %v2920, %v2919
        %v2931 = vpack.c.b16 %v2922, %v2921
        %v2932 = vpack.c.b16 %v2924, %v2923
        %2941 = vmatpush.bf16.msra.mxu0 %v2932
        %2942 = vmatpush.bf16.msra.mxu0 %v2931
        %2943 = vmatpush.bf16.msra.mxu0 %v2930
        %2944 = vmatpush.bf16.msra.mxu0 %v2929
        %2945 = vmatpush.bf16.msra.mxu0 %v2928
        %2946 = vmatpush.bf16.msra.mxu0 %v2927
        %2947 = vmatpush.bf16.msra.mxu0 %v2926
        %2948 = vmatpush.bf16.msra.mxu0 %v2925
        %2949 = vmatmul.bf16.gmra.mxu0 %v2875
        %v2950 = vpop.f32.mrf.mxu0
        %v2951 = vadd.f32 0.0, %v2950
        %v2952 = vpop.f32.mrf.mxu0
        %2953 = vdwg.mxu0
        %v2954 = vadd.f32 %v2873, %v2951
        %v2955 = vld [vmem:[%s2792 + $0x2] sm:$0x3]
        %v2956 = vpack.c.bf16 %v2955, %v2955
        %s2957 = scalar_lea.vmem %s3, 640
        %v2958 = vld [vmem:[%s2957] sm:$0xf]
        %v2959 = vld [vmem:[%s2957 + $0x4] sm:$0xf]
        %v2960 = vld [vmem:[%s2957 + $0x8] sm:$0xf]
        %v2961 = vld [vmem:[%s2957 + $0xc] sm:$0xf]
        %v2962 = vld [vmem:[%s2957 + $0x10] sm:$0xf]
        %v2963 = vld [vmem:[%s2957 + $0x14] sm:$0xf]
        %v2964 = vld [vmem:[%s2957 + $0x18] sm:$0xf]
        %v2965 = vld [vmem:[%s2957 + $0x1c] sm:$0xf]
        %v2966 = vld [vmem:[%s2957 + $0x20] sm:$0xf]
        %v2967 = vld [vmem:[%s2957 + $0x24] sm:$0xf]
        %v2968 = vld [vmem:[%s2957 + $0x28] sm:$0xf]
        %v2969 = vld [vmem:[%s2957 + $0x2c] sm:$0xf]
        %v2970 = vld [vmem:[%s2957 + $0x30] sm:$0xf]
        %v2971 = vld [vmem:[%s2957 + $0x34] sm:$0xf]
        %v2972 = vld [vmem:[%s2957 + $0x38] sm:$0xf]
        %v2973 = vld [vmem:[%s2957 + $0x3c] sm:$0xf]
        %v2990 = vunpack.c.l.b16 %v2958
        %v2991 = vunpack.c.l.b16 %v2959
        %v2992 = vunpack.c.l.b16 %v2960
        %v2993 = vunpack.c.l.b16 %v2961
        %v2994 = vunpack.c.l.b16 %v2962
        %v2995 = vunpack.c.l.b16 %v2963
        %v2996 = vunpack.c.l.b16 %v2964
        %v2997 = vunpack.c.l.b16 %v2965
        %v2998 = vunpack.c.l.b16 %v2966
        %v2999 = vunpack.c.l.b16 %v2967
        %v3000 = vunpack.c.l.b16 %v2968
        %v3001 = vunpack.c.l.b16 %v2969
        %v3002 = vunpack.c.l.b16 %v2970
        %v3003 = vunpack.c.l.b16 %v2971
        %v3004 = vunpack.c.l.b16 %v2972
        %v3005 = vunpack.c.l.b16 %v2973
        %v3006 = vpack.c.b16 %v2991, %v2990
        %v3007 = vpack.c.b16 %v2993, %v2992
        %v3008 = vpack.c.b16 %v2995, %v2994
        %v3009 = vpack.c.b16 %v2997, %v2996
        %v3010 = vpack.c.b16 %v2999, %v2998
        %v3011 = vpack.c.b16 %v3001, %v3000
        %v3012 = vpack.c.b16 %v3003, %v3002
        %v3013 = vpack.c.b16 %v3005, %v3004
        %3022 = vmatpush.bf16.msra.mxu0 %v3013
        %3023 = vmatpush.bf16.msra.mxu0 %v3012
        %3024 = vmatpush.bf16.msra.mxu0 %v3011
        %3025 = vmatpush.bf16.msra.mxu0 %v3010
        %3026 = vmatpush.bf16.msra.mxu0 %v3009
        %3027 = vmatpush.bf16.msra.mxu0 %v3008
        %3028 = vmatpush.bf16.msra.mxu0 %v3007
        %3029 = vmatpush.bf16.msra.mxu0 %v3006
        %3030 = vmatmul.bf16.gmra.mxu0 %v2956
        %v3031 = vpop.f32.mrf.mxu0
        %v3032 = vadd.f32 0.0, %v3031
        %v3033 = vpop.f32.mrf.mxu0
        %3034 = vdwg.mxu0
        %v3035 = vadd.f32 %v2954, %v3032
        %v3036 = vld [vmem:[%s2792 + $0x3] sm:$0x3]
        %v3037 = vpack.c.bf16 %v3036, %v3036
        %s3038 = scalar_lea.vmem %s3, 704
        %v3039 = vld [vmem:[%s3038] sm:$0xf]
        %v3040 = vld [vmem:[%s3038 + $0x4] sm:$0xf]
        %v3041 = vld [vmem:[%s3038 + $0x8] sm:$0xf]
        %v3042 = vld [vmem:[%s3038 + $0xc] sm:$0xf]
        %v3043 = vld [vmem:[%s3038 + $0x10] sm:$0xf]
        %v3044 = vld [vmem:[%s3038 + $0x14] sm:$0xf]
        %v3045 = vld [vmem:[%s3038 + $0x18] sm:$0xf]
        %v3046 = vld [vmem:[%s3038 + $0x1c] sm:$0xf]
        %v3047 = vld [vmem:[%s3038 + $0x20] sm:$0xf]
        %v3048 = vld [vmem:[%s3038 + $0x24] sm:$0xf]
        %v3049 = vld [vmem:[%s3038 + $0x28] sm:$0xf]
        %v3050 = vld [vmem:[%s3038 + $0x2c] sm:$0xf]
        %v3051 = vld [vmem:[%s3038 + $0x30] sm:$0xf]
        %v3052 = vld [vmem:[%s3038 + $0x34] sm:$0xf]
        %v3053 = vld [vmem:[%s3038 + $0x38] sm:$0xf]
        %v3054 = vld [vmem:[%s3038 + $0x3c] sm:$0xf]
        %v3071 = vunpack.c.l.b16 %v3039
        %v3072 = vunpack.c.l.b16 %v3040
        %v3073 = vunpack.c.l.b16 %v3041
        %v3074 = vunpack.c.l.b16 %v3042
        %v3075 = vunpack.c.l.b16 %v3043
        %v3076 = vunpack.c.l.b16 %v3044
        %v3077 = vunpack.c.l.b16 %v3045
        %v3078 = vunpack.c.l.b16 %v3046
        %v3079 = vunpack.c.l.b16 %v3047
        %v3080 = vunpack.c.l.b16 %v3048
        %v3081 = vunpack.c.l.b16 %v3049
        %v3082 = vunpack.c.l.b16 %v3050
        %v3083 = vunpack.c.l.b16 %v3051
        %v3084 = vunpack.c.l.b16 %v3052
        %v3085 = vunpack.c.l.b16 %v3053
        %v3086 = vunpack.c.l.b16 %v3054
        %v3087 = vpack.c.b16 %v3072, %v3071
        %v3088 = vpack.c.b16 %v3074, %v3073
        %v3089 = vpack.c.b16 %v3076, %v3075
        %v3090 = vpack.c.b16 %v3078, %v3077
        %v3091 = vpack.c.b16 %v3080, %v3079
        %v3092 = vpack.c.b16 %v3082, %v3081
        %v3093 = vpack.c.b16 %v3084, %v3083
        %v3094 = vpack.c.b16 %v3086, %v3085
        %3103 = vmatpush.bf16.msra.mxu0 %v3094
        %3104 = vmatpush.bf16.msra.mxu0 %v3093
        %3105 = vmatpush.bf16.msra.mxu0 %v3092
        %3106 = vmatpush.bf16.msra.mxu0 %v3091
        %3107 = vmatpush.bf16.msra.mxu0 %v3090
        %3108 = vmatpush.bf16.msra.mxu0 %v3089
        %3109 = vmatpush.bf16.msra.mxu0 %v3088
        %3110 = vmatpush.bf16.msra.mxu0 %v3087
        %3111 = vmatmul.bf16.gmra.mxu0 %v3037
        %v3112 = vpop.f32.mrf.mxu0
        %v3113 = vadd.f32 0.0, %v3112
        %v3114 = vpop.f32.mrf.mxu0
        %3115 = vdwg.mxu0
        %v3116 = vadd.f32 %v3035, %v3113
        %s3117 = scalar_lea.vmem [#allocation3], 24
        %v3118 = vld [vmem:[%s3117] sm:$0x3]
        %v3119 = vpack.c.bf16 %v3118, %v3118
        %s3120 = scalar_lea.vmem %s3, 768
        %v3121 = vld [vmem:[%s3120] sm:$0xf]
        %v3122 = vld [vmem:[%s3120 + $0x4] sm:$0xf]
        %v3123 = vld [vmem:[%s3120 + $0x8] sm:$0xf]
        %v3124 = vld [vmem:[%s3120 + $0xc] sm:$0xf]
        %v3125 = vld [vmem:[%s3120 + $0x10] sm:$0xf]
        %v3126 = vld [vmem:[%s3120 + $0x14] sm:$0xf]
        %v3127 = vld [vmem:[%s3120 + $0x18] sm:$0xf]
        %v3128 = vld [vmem:[%s3120 + $0x1c] sm:$0xf]
        %v3129 = vld [vmem:[%s3120 + $0x20] sm:$0xf]
        %v3130 = vld [vmem:[%s3120 + $0x24] sm:$0xf]
        %v3131 = vld [vmem:[%s3120 + $0x28] sm:$0xf]
        %v3132 = vld [vmem:[%s3120 + $0x2c] sm:$0xf]
        %v3133 = vld [vmem:[%s3120 + $0x30] sm:$0xf]
        %v3134 = vld [vmem:[%s3120 + $0x34] sm:$0xf]
        %v3135 = vld [vmem:[%s3120 + $0x38] sm:$0xf]
        %v3136 = vld [vmem:[%s3120 + $0x3c] sm:$0xf]
        %v3153 = vunpack.c.l.b16 %v3121
        %v3154 = vunpack.c.l.b16 %v3122
        %v3155 = vunpack.c.l.b16 %v3123
        %v3156 = vunpack.c.l.b16 %v3124
        %v3157 = vunpack.c.l.b16 %v3125
        %v3158 = vunpack.c.l.b16 %v3126
        %v3159 = vunpack.c.l.b16 %v3127
        %v3160 = vunpack.c.l.b16 %v3128
        %v3161 = vunpack.c.l.b16 %v3129
        %v3162 = vunpack.c.l.b16 %v3130
        %v3163 = vunpack.c.l.b16 %v3131
        %v3164 = vunpack.c.l.b16 %v3132
        %v3165 = vunpack.c.l.b16 %v3133
        %v3166 = vunpack.c.l.b16 %v3134
        %v3167 = vunpack.c.l.b16 %v3135
        %v3168 = vunpack.c.l.b16 %v3136
        %v3169 = vpack.c.b16 %v3154, %v3153
        %v3170 = vpack.c.b16 %v3156, %v3155
        %v3171 = vpack.c.b16 %v3158, %v3157
        %v3172 = vpack.c.b16 %v3160, %v3159
        %v3173 = vpack.c.b16 %v3162, %v3161
        %v3174 = vpack.c.b16 %v3164, %v3163
        %v3175 = vpack.c.b16 %v3166, %v3165
        %v3176 = vpack.c.b16 %v3168, %v3167
        %3185 = vmatpush.bf16.msra.mxu0 %v3176
        %3186 = vmatpush.bf16.msra.mxu0 %v3175
        %3187 = vmatpush.bf16.msra.mxu0 %v3174
        %3188 = vmatpush.bf16.msra.mxu0 %v3173
        %3189 = vmatpush.bf16.msra.mxu0 %v3172
        %3190 = vmatpush.bf16.msra.mxu0 %v3171
        %3191 = vmatpush.bf16.msra.mxu0 %v3170
        %3192 = vmatpush.bf16.msra.mxu0 %v3169
        %3193 = vmatmul.bf16.gmra.mxu0 %v3119
        %v3194 = vpop.f32.mrf.mxu0
        %v3195 = vadd.f32 0.0, %v3194
        %v3196 = vpop.f32.mrf.mxu0
        %3197 = vdwg.mxu0
        %v3198 = vadd.f32 %v3116, %v3195
        %v3199 = vld [vmem:[%s3117 + $0x1] sm:$0x3]
        %v3200 = vpack.c.bf16 %v3199, %v3199
        %s3201 = scalar_lea.vmem %s3, 832
        %v3202 = vld [vmem:[%s3201] sm:$0xf]
        %v3203 = vld [vmem:[%s3201 + $0x4] sm:$0xf]
        %v3204 = vld [vmem:[%s3201 + $0x8] sm:$0xf]
        %v3205 = vld [vmem:[%s3201 + $0xc] sm:$0xf]
        %v3206 = vld [vmem:[%s3201 + $0x10] sm:$0xf]
        %v3207 = vld [vmem:[%s3201 + $0x14] sm:$0xf]
        %v3208 = vld [vmem:[%s3201 + $0x18] sm:$0xf]
        %v3209 = vld [vmem:[%s3201 + $0x1c] sm:$0xf]
        %v3210 = vld [vmem:[%s3201 + $0x20] sm:$0xf]
        %v3211 = vld [vmem:[%s3201 + $0x24] sm:$0xf]
        %v3212 = vld [vmem:[%s3201 + $0x28] sm:$0xf]
        %v3213 = vld [vmem:[%s3201 + $0x2c] sm:$0xf]
        %v3214 = vld [vmem:[%s3201 + $0x30] sm:$0xf]
        %v3215 = vld [vmem:[%s3201 + $0x34] sm:$0xf]
        %v3216 = vld [vmem:[%s3201 + $0x38] sm:$0xf]
        %v3217 = vld [vmem:[%s3201 + $0x3c] sm:$0xf]
        %v3234 = vunpack.c.l.b16 %v3202
        %v3235 = vunpack.c.l.b16 %v3203
        %v3236 = vunpack.c.l.b16 %v3204
        %v3237 = vunpack.c.l.b16 %v3205
        %v3238 = vunpack.c.l.b16 %v3206
        %v3239 = vunpack.c.l.b16 %v3207
        %v3240 = vunpack.c.l.b16 %v3208
        %v3241 = vunpack.c.l.b16 %v3209
        %v3242 = vunpack.c.l.b16 %v3210
        %v3243 = vunpack.c.l.b16 %v3211
        %v3244 = vunpack.c.l.b16 %v3212
        %v3245 = vunpack.c.l.b16 %v3213
        %v3246 = vunpack.c.l.b16 %v3214
        %v3247 = vunpack.c.l.b16 %v3215
        %v3248 = vunpack.c.l.b16 %v3216
        %v3249 = vunpack.c.l.b16 %v3217
        %v3250 = vpack.c.b16 %v3235, %v3234
        %v3251 = vpack.c.b16 %v3237, %v3236
        %v3252 = vpack.c.b16 %v3239, %v3238
        %v3253 = vpack.c.b16 %v3241, %v3240
        %v3254 = vpack.c.b16 %v3243, %v3242
        %v3255 = vpack.c.b16 %v3245, %v3244
        %v3256 = vpack.c.b16 %v3247, %v3246
        %v3257 = vpack.c.b16 %v3249, %v3248
        %3266 = vmatpush.bf16.msra.mxu0 %v3257
        %3267 = vmatpush.bf16.msra.mxu0 %v3256
        %3268 = vmatpush.bf16.msra.mxu0 %v3255
        %3269 = vmatpush.bf16.msra.mxu0 %v3254
        %3270 = vmatpush.bf16.msra.mxu0 %v3253
        %3271 = vmatpush.bf16.msra.mxu0 %v3252
        %3272 = vmatpush.bf16.msra.mxu0 %v3251
        %3273 = vmatpush.bf16.msra.mxu0 %v3250
        %3274 = vmatmul.bf16.gmra.mxu0 %v3200
        %v3275 = vpop.f32.mrf.mxu0
        %v3276 = vadd.f32 0.0, %v3275
        %v3277 = vpop.f32.mrf.mxu0
        %3278 = vdwg.mxu0
        %v3279 = vadd.f32 %v3198, %v3276
        %v3280 = vld [vmem:[%s3117 + $0x2] sm:$0x3]
        %v3281 = vpack.c.bf16 %v3280, %v3280
        %s3282 = scalar_lea.vmem %s3, 896
        %v3283 = vld [vmem:[%s3282] sm:$0xf]
        %v3284 = vld [vmem:[%s3282 + $0x4] sm:$0xf]
        %v3285 = vld [vmem:[%s3282 + $0x8] sm:$0xf]
        %v3286 = vld [vmem:[%s3282 + $0xc] sm:$0xf]
        %v3287 = vld [vmem:[%s3282 + $0x10] sm:$0xf]
        %v3288 = vld [vmem:[%s3282 + $0x14] sm:$0xf]
        %v3289 = vld [vmem:[%s3282 + $0x18] sm:$0xf]
        %v3290 = vld [vmem:[%s3282 + $0x1c] sm:$0xf]
        %v3291 = vld [vmem:[%s3282 + $0x20] sm:$0xf]
        %v3292 = vld [vmem:[%s3282 + $0x24] sm:$0xf]
        %v3293 = vld [vmem:[%s3282 + $0x28] sm:$0xf]
        %v3294 = vld [vmem:[%s3282 + $0x2c] sm:$0xf]
        %v3295 = vld [vmem:[%s3282 + $0x30] sm:$0xf]
        %v3296 = vld [vmem:[%s3282 + $0x34] sm:$0xf]
        %v3297 = vld [vmem:[%s3282 + $0x38] sm:$0xf]
        %v3298 = vld [vmem:[%s3282 + $0x3c] sm:$0xf]
        %v3315 = vunpack.c.l.b16 %v3283
        %v3316 = vunpack.c.l.b16 %v3284
        %v3317 = vunpack.c.l.b16 %v3285
        %v3318 = vunpack.c.l.b16 %v3286
        %v3319 = vunpack.c.l.b16 %v3287
        %v3320 = vunpack.c.l.b16 %v3288
        %v3321 = vunpack.c.l.b16 %v3289
        %v3322 = vunpack.c.l.b16 %v3290
        %v3323 = vunpack.c.l.b16 %v3291
        %v3324 = vunpack.c.l.b16 %v3292
        %v3325 = vunpack.c.l.b16 %v3293
        %v3326 = vunpack.c.l.b16 %v3294
        %v3327 = vunpack.c.l.b16 %v3295
        %v3328 = vunpack.c.l.b16 %v3296
        %v3329 = vunpack.c.l.b16 %v3297
        %v3330 = vunpack.c.l.b16 %v3298
        %v3331 = vpack.c.b16 %v3316, %v3315
        %v3332 = vpack.c.b16 %v3318, %v3317
        %v3333 = vpack.c.b16 %v3320, %v3319
        %v3334 = vpack.c.b16 %v3322, %v3321
        %v3335 = vpack.c.b16 %v3324, %v3323
        %v3336 = vpack.c.b16 %v3326, %v3325
        %v3337 = vpack.c.b16 %v3328, %v3327
        %v3338 = vpack.c.b16 %v3330, %v3329
        %3347 = vmatpush.bf16.msra.mxu0 %v3338
        %3348 = vmatpush.bf16.msra.mxu0 %v3337
        %3349 = vmatpush.bf16.msra.mxu0 %v3336
        %3350 = vmatpush.bf16.msra.mxu0 %v3335
        %3351 = vmatpush.bf16.msra.mxu0 %v3334
        %3352 = vmatpush.bf16.msra.mxu0 %v3333
        %3353 = vmatpush.bf16.msra.mxu0 %v3332
        %3354 = vmatpush.bf16.msra.mxu0 %v3331
        %3355 = vmatmul.bf16.gmra.mxu0 %v3281
        %v3356 = vpop.f32.mrf.mxu0
        %v3357 = vadd.f32 0.0, %v3356
        %v3358 = vpop.f32.mrf.mxu0
        %3359 = vdwg.mxu0
        %v3360 = vadd.f32 %v3279, %v3357
        %v3361 = vld [vmem:[%s3117 + $0x3] sm:$0x3]
        %v3362 = vpack.c.bf16 %v3361, %v3361
        %s3363 = scalar_lea.vmem %s3, 960
        %v3364 = vld [vmem:[%s3363] sm:$0xf]
        %v3365 = vld [vmem:[%s3363 + $0x4] sm:$0xf]
        %v3366 = vld [vmem:[%s3363 + $0x8] sm:$0xf]
        %v3367 = vld [vmem:[%s3363 + $0xc] sm:$0xf]
        %v3368 = vld [vmem:[%s3363 + $0x10] sm:$0xf]
        %v3369 = vld [vmem:[%s3363 + $0x14] sm:$0xf]
        %v3370 = vld [vmem:[%s3363 + $0x18] sm:$0xf]
        %v3371 = vld [vmem:[%s3363 + $0x1c] sm:$0xf]
        %v3372 = vld [vmem:[%s3363 + $0x20] sm:$0xf]
        %v3373 = vld [vmem:[%s3363 + $0x24] sm:$0xf]
        %v3374 = vld [vmem:[%s3363 + $0x28] sm:$0xf]
        %v3375 = vld [vmem:[%s3363 + $0x2c] sm:$0xf]
        %v3376 = vld [vmem:[%s3363 + $0x30] sm:$0xf]
        %v3377 = vld [vmem:[%s3363 + $0x34] sm:$0xf]
        %v3378 = vld [vmem:[%s3363 + $0x38] sm:$0xf]
        %v3379 = vld [vmem:[%s3363 + $0x3c] sm:$0xf]
        %v3396 = vunpack.c.l.b16 %v3364
        %v3397 = vunpack.c.l.b16 %v3365
        %v3398 = vunpack.c.l.b16 %v3366
        %v3399 = vunpack.c.l.b16 %v3367
        %v3400 = vunpack.c.l.b16 %v3368
        %v3401 = vunpack.c.l.b16 %v3369
        %v3402 = vunpack.c.l.b16 %v3370
        %v3403 = vunpack.c.l.b16 %v3371
        %v3404 = vunpack.c.l.b16 %v3372
        %v3405 = vunpack.c.l.b16 %v3373
        %v3406 = vunpack.c.l.b16 %v3374
        %v3407 = vunpack.c.l.b16 %v3375
        %v3408 = vunpack.c.l.b16 %v3376
        %v3409 = vunpack.c.l.b16 %v3377
        %v3410 = vunpack.c.l.b16 %v3378
        %v3411 = vunpack.c.l.b16 %v3379
        %v3412 = vpack.c.b16 %v3397, %v3396
        %v3413 = vpack.c.b16 %v3399, %v3398
        %v3414 = vpack.c.b16 %v3401, %v3400
        %v3415 = vpack.c.b16 %v3403, %v3402
        %v3416 = vpack.c.b16 %v3405, %v3404
        %v3417 = vpack.c.b16 %v3407, %v3406
        %v3418 = vpack.c.b16 %v3409, %v3408
        %v3419 = vpack.c.b16 %v3411, %v3410
        %3428 = vmatpush.bf16.msra.mxu0 %v3419
        %3429 = vmatpush.bf16.msra.mxu0 %v3418
        %3430 = vmatpush.bf16.msra.mxu0 %v3417
        %3431 = vmatpush.bf16.msra.mxu0 %v3416
        %3432 = vmatpush.bf16.msra.mxu0 %v3415
        %3433 = vmatpush.bf16.msra.mxu0 %v3414
        %3434 = vmatpush.bf16.msra.mxu0 %v3413
        %3435 = vmatpush.bf16.msra.mxu0 %v3412
        %3436 = vmatmul.bf16.gmra.mxu0 %v3362
        %v3437 = vpop.f32.mrf.mxu0
        %v3438 = vadd.f32 0.0, %v3437
        %v3439 = vpop.f32.mrf.mxu0
        %3440 = vdwg.mxu0
        %v3441 = vadd.f32 %v3360, %v3438
        %v3442 = vld [vmem:[%s4] sm:$0x1]
        %v3444 = vperm.slane %v3442, 0
        %v3446 = vadd.f32 %v3441, %v3444
        %3447 = vst [vmem:[%s236] sm:$0x3] %v3446
        %v3448 = vld [vmem:[%s2143] sm:$0x3]
        %v3449 = vpack.c.bf16 %v3448, %v3448
        %v3450 = vld [vmem:[%s3] sm:$0xf]
        %v3451 = vld [vmem:[%s3 + $0x4] sm:$0xf]
        %v3452 = vld [vmem:[%s3 + $0x8] sm:$0xf]
        %v3453 = vld [vmem:[%s3 + $0xc] sm:$0xf]
        %v3454 = vld [vmem:[%s3 + $0x10] sm:$0xf]
        %v3455 = vld [vmem:[%s3 + $0x14] sm:$0xf]
        %v3456 = vld [vmem:[%s3 + $0x18] sm:$0xf]
        %v3457 = vld [vmem:[%s3 + $0x1c] sm:$0xf]
        %v3458 = vld [vmem:[%s3 + $0x20] sm:$0xf]
        %v3459 = vld [vmem:[%s3 + $0x24] sm:$0xf]
        %v3460 = vld [vmem:[%s3 + $0x28] sm:$0xf]
        %v3461 = vld [vmem:[%s3 + $0x2c] sm:$0xf]
        %v3462 = vld [vmem:[%s3 + $0x30] sm:$0xf]
        %v3463 = vld [vmem:[%s3 + $0x34] sm:$0xf]
        %v3464 = vld [vmem:[%s3 + $0x38] sm:$0xf]
        %v3465 = vld [vmem:[%s3 + $0x3c] sm:$0xf]
        %v3466 = vld [vmem:[%s2143 + $0x1] sm:$0x3]
        %v3467 = vpack.c.bf16 %v3466, %v3466
        %v3468 = vld [vmem:[%s2167] sm:$0xf]
        %v3469 = vld [vmem:[%s2167 + $0x4] sm:$0xf]
        %v3470 = vld [vmem:[%s2167 + $0x8] sm:$0xf]
        %v3471 = vld [vmem:[%s2167 + $0xc] sm:$0xf]
        %v3472 = vld [vmem:[%s2167 + $0x10] sm:$0xf]
        %v3473 = vld [vmem:[%s2167 + $0x14] sm:$0xf]
        %v3474 = vld [vmem:[%s2167 + $0x18] sm:$0xf]
        %v3475 = vld [vmem:[%s2167 + $0x1c] sm:$0xf]
        %v3476 = vld [vmem:[%s2167 + $0x20] sm:$0xf]
        %v3477 = vld [vmem:[%s2167 + $0x24] sm:$0xf]
        %v3478 = vld [vmem:[%s2167 + $0x28] sm:$0xf]
        %v3479 = vld [vmem:[%s2167 + $0x2c] sm:$0xf]
        %v3480 = vld [vmem:[%s2167 + $0x30] sm:$0xf]
        %v3481 = vld [vmem:[%s2167 + $0x34] sm:$0xf]
        %v3482 = vld [vmem:[%s2167 + $0x38] sm:$0xf]
        %v3483 = vld [vmem:[%s2167 + $0x3c] sm:$0xf]
        %v3500 = vunpack.c.l.b16 %v3468
        %v3501 = vunpack.c.l.b16 %v3469
        %v3502 = vunpack.c.l.b16 %v3470
        %v3503 = vunpack.c.l.b16 %v3471
        %v3504 = vunpack.c.l.b16 %v3472
        %v3505 = vunpack.c.l.b16 %v3473
        %v3506 = vunpack.c.l.b16 %v3474
        %v3507 = vunpack.c.l.b16 %v3475
        %v3508 = vunpack.c.l.b16 %v3476
        %v3509 = vunpack.c.l.b16 %v3477
        %v3510 = vunpack.c.l.b16 %v3478
        %v3511 = vunpack.c.l.b16 %v3479
        %v3512 = vunpack.c.l.b16 %v3480
        %v3513 = vunpack.c.l.b16 %v3481
        %v3514 = vunpack.c.l.b16 %v3482
        %v3515 = vunpack.c.l.b16 %v3483
        %v3516 = vpack.c.b16 %v3501, %v3500
        %v3517 = vpack.c.b16 %v3503, %v3502
        %v3518 = vpack.c.b16 %v3505, %v3504
        %v3519 = vpack.c.b16 %v3507, %v3506
        %v3520 = vpack.c.b16 %v3509, %v3508
        %v3521 = vpack.c.b16 %v3511, %v3510
        %v3522 = vpack.c.b16 %v3513, %v3512
        %v3523 = vpack.c.b16 %v3515, %v3514
        %3532 = vmatpush.bf16.msra.mxu0 %v3523
        %3533 = vmatpush.bf16.msra.mxu0 %v3522
        %3534 = vmatpush.bf16.msra.mxu0 %v3521
        %3535 = vmatpush.bf16.msra.mxu0 %v3520
        %3536 = vmatpush.bf16.msra.mxu0 %v3519
        %3537 = vmatpush.bf16.msra.mxu0 %v3518
        %3538 = vmatpush.bf16.msra.mxu0 %v3517
        %3539 = vmatpush.bf16.msra.mxu0 %v3516
        %3540 = vmatmul.bf16.gmra.mxu0 %v3467
        %v3541 = vpop.f32.mrf.mxu0
        %v3542 = vadd.f32 0.0, %v3541
        %v3543 = vpop.f32.mrf.mxu0
        %3544 = vdwg.mxu0
        %v3561 = vunpack.c.l.b16 %v3450
        %v3562 = vunpack.c.l.b16 %v3451
        %v3563 = vunpack.c.l.b16 %v3452
        %v3564 = vunpack.c.l.b16 %v3453
        %v3565 = vunpack.c.l.b16 %v3454
        %v3566 = vunpack.c.l.b16 %v3455
        %v3567 = vunpack.c.l.b16 %v3456
        %v3568 = vunpack.c.l.b16 %v3457
        %v3569 = vunpack.c.l.b16 %v3458
        %v3570 = vunpack.c.l.b16 %v3459
        %v3571 = vunpack.c.l.b16 %v3460
        %v3572 = vunpack.c.l.b16 %v3461
        %v3573 = vunpack.c.l.b16 %v3462
        %v3574 = vunpack.c.l.b16 %v3463
        %v3575 = vunpack.c.l.b16 %v3464
        %v3576 = vunpack.c.l.b16 %v3465
        %v3577 = vpack.c.b16 %v3562, %v3561
        %v3578 = vpack.c.b16 %v3564, %v3563
        %v3579 = vpack.c.b16 %v3566, %v3565
        %v3580 = vpack.c.b16 %v3568, %v3567
        %v3581 = vpack.c.b16 %v3570, %v3569
        %v3582 = vpack.c.b16 %v3572, %v3571
        %v3583 = vpack.c.b16 %v3574, %v3573
        %v3584 = vpack.c.b16 %v3576, %v3575
        %3593 = vmatpush.bf16.msra.mxu0 %v3584
        %3594 = vmatpush.bf16.msra.mxu0 %v3583
        %3595 = vmatpush.bf16.msra.mxu0 %v3582
        %3596 = vmatpush.bf16.msra.mxu0 %v3581
        %3597 = vmatpush.bf16.msra.mxu0 %v3580
        %3598 = vmatpush.bf16.msra.mxu0 %v3579
        %3599 = vmatpush.bf16.msra.mxu0 %v3578
        %3600 = vmatpush.bf16.msra.mxu0 %v3577
        %3601 = vmatmul.bf16.gmra.mxu0 %v3449
        %v3602 = vpop.f32.mrf.mxu0
        %v3603 = vadd.f32 %v3542, %v3602
        %v3604 = vpop.f32.mrf.mxu0
        %3605 = vdwg.mxu0
        %v3606 = vld [vmem:[%s2143 + $0x2] sm:$0x3]
        %v3607 = vpack.c.bf16 %v3606, %v3606
        %v3608 = vld [vmem:[%s2308] sm:$0xf]
        %v3609 = vld [vmem:[%s2308 + $0x4] sm:$0xf]
        %v3610 = vld [vmem:[%s2308 + $0x8] sm:$0xf]
        %v3611 = vld [vmem:[%s2308 + $0xc] sm:$0xf]
        %v3612 = vld [vmem:[%s2308 + $0x10] sm:$0xf]
        %v3613 = vld [vmem:[%s2308 + $0x14] sm:$0xf]
        %v3614 = vld [vmem:[%s2308 + $0x18] sm:$0xf]
        %v3615 = vld [vmem:[%s2308 + $0x1c] sm:$0xf]
        %v3616 = vld [vmem:[%s2308 + $0x20] sm:$0xf]
        %v3617 = vld [vmem:[%s2308 + $0x24] sm:$0xf]
        %v3618 = vld [vmem:[%s2308 + $0x28] sm:$0xf]
        %v3619 = vld [vmem:[%s2308 + $0x2c] sm:$0xf]
        %v3620 = vld [vmem:[%s2308 + $0x30] sm:$0xf]
        %v3621 = vld [vmem:[%s2308 + $0x34] sm:$0xf]
        %v3622 = vld [vmem:[%s2308 + $0x38] sm:$0xf]
        %v3623 = vld [vmem:[%s2308 + $0x3c] sm:$0xf]
        %v3640 = vunpack.c.l.b16 %v3608
        %v3641 = vunpack.c.l.b16 %v3609
        %v3642 = vunpack.c.l.b16 %v3610
        %v3643 = vunpack.c.l.b16 %v3611
        %v3644 = vunpack.c.l.b16 %v3612
        %v3645 = vunpack.c.l.b16 %v3613
        %v3646 = vunpack.c.l.b16 %v3614
        %v3647 = vunpack.c.l.b16 %v3615
        %v3648 = vunpack.c.l.b16 %v3616
        %v3649 = vunpack.c.l.b16 %v3617
        %v3650 = vunpack.c.l.b16 %v3618
        %v3651 = vunpack.c.l.b16 %v3619
        %v3652 = vunpack.c.l.b16 %v3620
        %v3653 = vunpack.c.l.b16 %v3621
        %v3654 = vunpack.c.l.b16 %v3622
        %v3655 = vunpack.c.l.b16 %v3623
        %v3656 = vpack.c.b16 %v3641, %v3640
        %v3657 = vpack.c.b16 %v3643, %v3642
        %v3658 = vpack.c.b16 %v3645, %v3644
        %v3659 = vpack.c.b16 %v3647, %v3646
        %v3660 = vpack.c.b16 %v3649, %v3648
        %v3661 = vpack.c.b16 %v3651, %v3650
        %v3662 = vpack.c.b16 %v3653, %v3652
        %v3663 = vpack.c.b16 %v3655, %v3654
        %3672 = vmatpush.bf16.msra.mxu0 %v3663
        %3673 = vmatpush.bf16.msra.mxu0 %v3662
        %3674 = vmatpush.bf16.msra.mxu0 %v3661
        %3675 = vmatpush.bf16.msra.mxu0 %v3660
        %3676 = vmatpush.bf16.msra.mxu0 %v3659
        %3677 = vmatpush.bf16.msra.mxu0 %v3658
        %3678 = vmatpush.bf16.msra.mxu0 %v3657
        %3679 = vmatpush.bf16.msra.mxu0 %v3656
        %3680 = vmatmul.bf16.gmra.mxu0 %v3607
        %v3681 = vpop.f32.mrf.mxu0
        %v3682 = vadd.f32 0.0, %v3681
        %v3683 = vpop.f32.mrf.mxu0
        %3684 = vdwg.mxu0
        %v3685 = vadd.f32 %v3603, %v3682
        %v3686 = vld [vmem:[%s2143 + $0x3] sm:$0x3]
        %v3687 = vpack.c.bf16 %v3686, %v3686
        %v3688 = vld [vmem:[%s2389] sm:$0xf]
        %v3689 = vld [vmem:[%s2389 + $0x4] sm:$0xf]
        %v3690 = vld [vmem:[%s2389 + $0x8] sm:$0xf]
        %v3691 = vld [vmem:[%s2389 + $0xc] sm:$0xf]
        %v3692 = vld [vmem:[%s2389 + $0x10] sm:$0xf]
        %v3693 = vld [vmem:[%s2389 + $0x14] sm:$0xf]
        %v3694 = vld [vmem:[%s2389 + $0x18] sm:$0xf]
        %v3695 = vld [vmem:[%s2389 + $0x1c] sm:$0xf]
        %v3696 = vld [vmem:[%s2389 + $0x20] sm:$0xf]
        %v3697 = vld [vmem:[%s2389 + $0x24] sm:$0xf]
        %v3698 = vld [vmem:[%s2389 + $0x28] sm:$0xf]
        %v3699 = vld [vmem:[%s2389 + $0x2c] sm:$0xf]
        %v3700 = vld [vmem:[%s2389 + $0x30] sm:$0xf]
        %v3701 = vld [vmem:[%s2389 + $0x34] sm:$0xf]
        %v3702 = vld [vmem:[%s2389 + $0x38] sm:$0xf]
        %v3703 = vld [vmem:[%s2389 + $0x3c] sm:$0xf]
        %v3720 = vunpack.c.l.b16 %v3688
        %v3721 = vunpack.c.l.b16 %v3689
        %v3722 = vunpack.c.l.b16 %v3690
        %v3723 = vunpack.c.l.b16 %v3691
        %v3724 = vunpack.c.l.b16 %v3692
        %v3725 = vunpack.c.l.b16 %v3693
        %v3726 = vunpack.c.l.b16 %v3694
        %v3727 = vunpack.c.l.b16 %v3695
        %v3728 = vunpack.c.l.b16 %v3696
        %v3729 = vunpack.c.l.b16 %v3697
        %v3730 = vunpack.c.l.b16 %v3698
        %v3731 = vunpack.c.l.b16 %v3699
        %v3732 = vunpack.c.l.b16 %v3700
        %v3733 = vunpack.c.l.b16 %v3701
        %v3734 = vunpack.c.l.b16 %v3702
        %v3735 = vunpack.c.l.b16 %v3703
        %v3736 = vpack.c.b16 %v3721, %v3720
        %v3737 = vpack.c.b16 %v3723, %v3722
        %v3738 = vpack.c.b16 %v3725, %v3724
        %v3739 = vpack.c.b16 %v3727, %v3726
        %v3740 = vpack.c.b16 %v3729, %v3728
        %v3741 = vpack.c.b16 %v3731, %v3730
        %v3742 = vpack.c.b16 %v3733, %v3732
        %v3743 = vpack.c.b16 %v3735, %v3734
        %3752 = vmatpush.bf16.msra.mxu0 %v3743
        %3753 = vmatpush.bf16.msra.mxu0 %v3742
        %3754 = vmatpush.bf16.msra.mxu0 %v3741
        %3755 = vmatpush.bf16.msra.mxu0 %v3740
        %3756 = vmatpush.bf16.msra.mxu0 %v3739
        %3757 = vmatpush.bf16.msra.mxu0 %v3738
        %3758 = vmatpush.bf16.msra.mxu0 %v3737
        %3759 = vmatpush.bf16.msra.mxu0 %v3736
        %3760 = vmatmul.bf16.gmra.mxu0 %v3687
        %v3761 = vpop.f32.mrf.mxu0
        %v3762 = vadd.f32 0.0, %v3761
        %v3763 = vpop.f32.mrf.mxu0
        %3764 = vdwg.mxu0
        %v3765 = vadd.f32 %v3685, %v3762
        %v3766 = vld [vmem:[%s2792] sm:$0x3]
        %v3767 = vpack.c.bf16 %v3766, %v3766
        %v3768 = vld [vmem:[%s2470] sm:$0xf]
        %v3769 = vld [vmem:[%s2470 + $0x4] sm:$0xf]
        %v3770 = vld [vmem:[%s2470 + $0x8] sm:$0xf]
        %v3771 = vld [vmem:[%s2470 + $0xc] sm:$0xf]
        %v3772 = vld [vmem:[%s2470 + $0x10] sm:$0xf]
        %v3773 = vld [vmem:[%s2470 + $0x14] sm:$0xf]
        %v3774 = vld [vmem:[%s2470 + $0x18] sm:$0xf]
        %v3775 = vld [vmem:[%s2470 + $0x1c] sm:$0xf]
        %v3776 = vld [vmem:[%s2470 + $0x20] sm:$0xf]
        %v3777 = vld [vmem:[%s2470 + $0x24] sm:$0xf]
        %v3778 = vld [vmem:[%s2470 + $0x28] sm:$0xf]
        %v3779 = vld [vmem:[%s2470 + $0x2c] sm:$0xf]
        %v3780 = vld [vmem:[%s2470 + $0x30] sm:$0xf]
        %v3781 = vld [vmem:[%s2470 + $0x34] sm:$0xf]
        %v3782 = vld [vmem:[%s2470 + $0x38] sm:$0xf]
        %v3783 = vld [vmem:[%s2470 + $0x3c] sm:$0xf]
        %v3800 = vunpack.c.l.b16 %v3768
        %v3801 = vunpack.c.l.b16 %v3769
        %v3802 = vunpack.c.l.b16 %v3770
        %v3803 = vunpack.c.l.b16 %v3771
        %v3804 = vunpack.c.l.b16 %v3772
        %v3805 = vunpack.c.l.b16 %v3773
        %v3806 = vunpack.c.l.b16 %v3774
        %v3807 = vunpack.c.l.b16 %v3775
        %v3808 = vunpack.c.l.b16 %v3776
        %v3809 = vunpack.c.l.b16 %v3777
        %v3810 = vunpack.c.l.b16 %v3778
        %v3811 = vunpack.c.l.b16 %v3779
        %v3812 = vunpack.c.l.b16 %v3780
        %v3813 = vunpack.c.l.b16 %v3781
        %v3814 = vunpack.c.l.b16 %v3782
        %v3815 = vunpack.c.l.b16 %v3783
        %v3816 = vpack.c.b16 %v3801, %v3800
        %v3817 = vpack.c.b16 %v3803, %v3802
        %v3818 = vpack.c.b16 %v3805, %v3804
        %v3819 = vpack.c.b16 %v3807, %v3806
        %v3820 = vpack.c.b16 %v3809, %v3808
        %v3821 = vpack.c.b16 %v3811, %v3810
        %v3822 = vpack.c.b16 %v3813, %v3812
        %v3823 = vpack.c.b16 %v3815, %v3814
        %3832 = vmatpush.bf16.msra.mxu0 %v3823
        %3833 = vmatpush.bf16.msra.mxu0 %v3822
        %3834 = vmatpush.bf16.msra.mxu0 %v3821
        %3835 = vmatpush.bf16.msra.mxu0 %v3820
        %3836 = vmatpush.bf16.msra.mxu0 %v3819
        %3837 = vmatpush.bf16.msra.mxu0 %v3818
        %3838 = vmatpush.bf16.msra.mxu0 %v3817
        %3839 = vmatpush.bf16.msra.mxu0 %v3816
        %3840 = vmatmul.bf16.gmra.mxu0 %v3767
        %v3841 = vpop.f32.mrf.mxu0
        %v3842 = vadd.f32 0.0, %v3841
        %v3843 = vpop.f32.mrf.mxu0
        %3844 = vdwg.mxu0
        %v3845 = vadd.f32 %v3765, %v3842
        %v3846 = vld [vmem:[%s2792 + $0x1] sm:$0x3]
        %v3847 = vpack.c.bf16 %v3846, %v3846
        %v3848 = vld [vmem:[%s2551] sm:$0xf]
        %v3849 = vld [vmem:[%s2551 + $0x4] sm:$0xf]
        %v3850 = vld [vmem:[%s2551 + $0x8] sm:$0xf]
        %v3851 = vld [vmem:[%s2551 + $0xc] sm:$0xf]
        %v3852 = vld [vmem:[%s2551 + $0x10] sm:$0xf]
        %v3853 = vld [vmem:[%s2551 + $0x14] sm:$0xf]
        %v3854 = vld [vmem:[%s2551 + $0x18] sm:$0xf]
        %v3855 = vld [vmem:[%s2551 + $0x1c] sm:$0xf]
        %v3856 = vld [vmem:[%s2551 + $0x20] sm:$0xf]
        %v3857 = vld [vmem:[%s2551 + $0x24] sm:$0xf]
        %v3858 = vld [vmem:[%s2551 + $0x28] sm:$0xf]
        %v3859 = vld [vmem:[%s2551 + $0x2c] sm:$0xf]
        %v3860 = vld [vmem:[%s2551 + $0x30] sm:$0xf]
        %v3861 = vld [vmem:[%s2551 + $0x34] sm:$0xf]
        %v3862 = vld [vmem:[%s2551 + $0x38] sm:$0xf]
        %v3863 = vld [vmem:[%s2551 + $0x3c] sm:$0xf]
        %v3880 = vunpack.c.l.b16 %v3848
        %v3881 = vunpack.c.l.b16 %v3849
        %v3882 = vunpack.c.l.b16 %v3850
        %v3883 = vunpack.c.l.b16 %v3851
        %v3884 = vunpack.c.l.b16 %v3852
        %v3885 = vunpack.c.l.b16 %v3853
        %v3886 = vunpack.c.l.b16 %v3854
        %v3887 = vunpack.c.l.b16 %v3855
        %v3888 = vunpack.c.l.b16 %v3856
        %v3889 = vunpack.c.l.b16 %v3857
        %v3890 = vunpack.c.l.b16 %v3858
        %v3891 = vunpack.c.l.b16 %v3859
        %v3892 = vunpack.c.l.b16 %v3860
        %v3893 = vunpack.c.l.b16 %v3861
        %v3894 = vunpack.c.l.b16 %v3862
        %v3895 = vunpack.c.l.b16 %v3863
        %v3896 = vpack.c.b16 %v3881, %v3880
        %v3897 = vpack.c.b16 %v3883, %v3882
        %v3898 = vpack.c.b16 %v3885, %v3884
        %v3899 = vpack.c.b16 %v3887, %v3886
        %v3900 = vpack.c.b16 %v3889, %v3888
        %v3901 = vpack.c.b16 %v3891, %v3890
        %v3902 = vpack.c.b16 %v3893, %v3892
        %v3903 = vpack.c.b16 %v3895, %v3894
        %3912 = vmatpush.bf16.msra.mxu0 %v3903
        %3913 = vmatpush.bf16.msra.mxu0 %v3902
        %3914 = vmatpush.bf16.msra.mxu0 %v3901
        %3915 = vmatpush.bf16.msra.mxu0 %v3900
        %3916 = vmatpush.bf16.msra.mxu0 %v3899
        %3917 = vmatpush.bf16.msra.mxu0 %v3898
        %3918 = vmatpush.bf16.msra.mxu0 %v3897
        %3919 = vmatpush.bf16.msra.mxu0 %v3896
        %3920 = vmatmul.bf16.gmra.mxu0 %v3847
        %v3921 = vpop.f32.mrf.mxu0
        %v3922 = vadd.f32 0.0, %v3921
        %v3923 = vpop.f32.mrf.mxu0
        %3924 = vdwg.mxu0
        %v3925 = vadd.f32 %v3845, %v3922
        %v3926 = vld [vmem:[%s2792 + $0x2] sm:$0x3]
        %v3927 = vpack.c.bf16 %v3926, %v3926
        %v3928 = vld [vmem:[%s2632] sm:$0xf]
        %v3929 = vld [vmem:[%s2632 + $0x4] sm:$0xf]
        %v3930 = vld [vmem:[%s2632 + $0x8] sm:$0xf]
        %v3931 = vld [vmem:[%s2632 + $0xc] sm:$0xf]
        %v3932 = vld [vmem:[%s2632 + $0x10] sm:$0xf]
        %v3933 = vld [vmem:[%s2632 + $0x14] sm:$0xf]
        %v3934 = vld [vmem:[%s2632 + $0x18] sm:$0xf]
        %v3935 = vld [vmem:[%s2632 + $0x1c] sm:$0xf]
        %v3936 = vld [vmem:[%s2632 + $0x20] sm:$0xf]
        %v3937 = vld [vmem:[%s2632 + $0x24] sm:$0xf]
        %v3938 = vld [vmem:[%s2632 + $0x28] sm:$0xf]
        %v3939 = vld [vmem:[%s2632 + $0x2c] sm:$0xf]
        %v3940 = vld [vmem:[%s2632 + $0x30] sm:$0xf]
        %v3941 = vld [vmem:[%s2632 + $0x34] sm:$0xf]
        %v3942 = vld [vmem:[%s2632 + $0x38] sm:$0xf]
        %v3943 = vld [vmem:[%s2632 + $0x3c] sm:$0xf]
        %v3960 = vunpack.c.l.b16 %v3928
        %v3961 = vunpack.c.l.b16 %v3929
        %v3962 = vunpack.c.l.b16 %v3930
        %v3963 = vunpack.c.l.b16 %v3931
        %v3964 = vunpack.c.l.b16 %v3932
        %v3965 = vunpack.c.l.b16 %v3933
        %v3966 = vunpack.c.l.b16 %v3934
        %v3967 = vunpack.c.l.b16 %v3935
        %v3968 = vunpack.c.l.b16 %v3936
        %v3969 = vunpack.c.l.b16 %v3937
        %v3970 = vunpack.c.l.b16 %v3938
        %v3971 = vunpack.c.l.b16 %v3939
        %v3972 = vunpack.c.l.b16 %v3940
        %v3973 = vunpack.c.l.b16 %v3941
        %v3974 = vunpack.c.l.b16 %v3942
        %v3975 = vunpack.c.l.b16 %v3943
        %v3976 = vpack.c.b16 %v3961, %v3960
        %v3977 = vpack.c.b16 %v3963, %v3962
        %v3978 = vpack.c.b16 %v3965, %v3964
        %v3979 = vpack.c.b16 %v3967, %v3966
        %v3980 = vpack.c.b16 %v3969, %v3968
        %v3981 = vpack.c.b16 %v3971, %v3970
        %v3982 = vpack.c.b16 %v3973, %v3972
        %v3983 = vpack.c.b16 %v3975, %v3974
        %3992 = vmatpush.bf16.msra.mxu0 %v3983
        %3993 = vmatpush.bf16.msra.mxu0 %v3982
        %3994 = vmatpush.bf16.msra.mxu0 %v3981
        %3995 = vmatpush.bf16.msra.mxu0 %v3980
        %3996 = vmatpush.bf16.msra.mxu0 %v3979
        %3997 = vmatpush.bf16.msra.mxu0 %v3978
        %3998 = vmatpush.bf16.msra.mxu0 %v3977
        %3999 = vmatpush.bf16.msra.mxu0 %v3976
        %4000 = vmatmul.bf16.gmra.mxu0 %v3927
        %v4001 = vpop.f32.mrf.mxu0
        %v4002 = vadd.f32 0.0, %v4001
        %v4003 = vpop.f32.mrf.mxu0
        %4004 = vdwg.mxu0
        %v4005 = vadd.f32 %v3925, %v4002
        %v4006 = vld [vmem:[%s2792 + $0x3] sm:$0x3]
        %v4007 = vpack.c.bf16 %v4006, %v4006
        %v4008 = vld [vmem:[%s2713] sm:$0xf]
        %v4009 = vld [vmem:[%s2713 + $0x4] sm:$0xf]
        %v4010 = vld [vmem:[%s2713 + $0x8] sm:$0xf]
        %v4011 = vld [vmem:[%s2713 + $0xc] sm:$0xf]
        %v4012 = vld [vmem:[%s2713 + $0x10] sm:$0xf]
        %v4013 = vld [vmem:[%s2713 + $0x14] sm:$0xf]
        %v4014 = vld [vmem:[%s2713 + $0x18] sm:$0xf]
        %v4015 = vld [vmem:[%s2713 + $0x1c] sm:$0xf]
        %v4016 = vld [vmem:[%s2713 + $0x20] sm:$0xf]
        %v4017 = vld [vmem:[%s2713 + $0x24] sm:$0xf]
        %v4018 = vld [vmem:[%s2713 + $0x28] sm:$0xf]
        %v4019 = vld [vmem:[%s2713 + $0x2c] sm:$0xf]
        %v4020 = vld [vmem:[%s2713 + $0x30] sm:$0xf]
        %v4021 = vld [vmem:[%s2713 + $0x34] sm:$0xf]
        %v4022 = vld [vmem:[%s2713 + $0x38] sm:$0xf]
        %v4023 = vld [vmem:[%s2713 + $0x3c] sm:$0xf]
        %v4040 = vunpack.c.l.b16 %v4008
        %v4041 = vunpack.c.l.b16 %v4009
        %v4042 = vunpack.c.l.b16 %v4010
        %v4043 = vunpack.c.l.b16 %v4011
        %v4044 = vunpack.c.l.b16 %v4012
        %v4045 = vunpack.c.l.b16 %v4013
        %v4046 = vunpack.c.l.b16 %v4014
        %v4047 = vunpack.c.l.b16 %v4015
        %v4048 = vunpack.c.l.b16 %v4016
        %v4049 = vunpack.c.l.b16 %v4017
        %v4050 = vunpack.c.l.b16 %v4018
        %v4051 = vunpack.c.l.b16 %v4019
        %v4052 = vunpack.c.l.b16 %v4020
        %v4053 = vunpack.c.l.b16 %v4021
        %v4054 = vunpack.c.l.b16 %v4022
        %v4055 = vunpack.c.l.b16 %v4023
        %v4056 = vpack.c.b16 %v4041, %v4040
        %v4057 = vpack.c.b16 %v4043, %v4042
        %v4058 = vpack.c.b16 %v4045, %v4044
        %v4059 = vpack.c.b16 %v4047, %v4046
        %v4060 = vpack.c.b16 %v4049, %v4048
        %v4061 = vpack.c.b16 %v4051, %v4050
        %v4062 = vpack.c.b16 %v4053, %v4052
        %v4063 = vpack.c.b16 %v4055, %v4054
        %4072 = vmatpush.bf16.msra.mxu0 %v4063
        %4073 = vmatpush.bf16.msra.mxu0 %v4062
        %4074 = vmatpush.bf16.msra.mxu0 %v4061
        %4075 = vmatpush.bf16.msra.mxu0 %v4060
        %4076 = vmatpush.bf16.msra.mxu0 %v4059
        %4077 = vmatpush.bf16.msra.mxu0 %v4058
        %4078 = vmatpush.bf16.msra.mxu0 %v4057
        %4079 = vmatpush.bf16.msra.mxu0 %v4056
        %4080 = vmatmul.bf16.gmra.mxu0 %v4007
        %v4081 = vpop.f32.mrf.mxu0
        %v4082 = vadd.f32 0.0, %v4081
        %v4083 = vpop.f32.mrf.mxu0
        %4084 = vdwg.mxu0
        %v4085 = vadd.f32 %v4005, %v4082
        %v4086 = vld [vmem:[%s3117] sm:$0x3]
        %v4087 = vpack.c.bf16 %v4086, %v4086
        %v4088 = vld [vmem:[%s2795] sm:$0xf]
        %v4089 = vld [vmem:[%s2795 + $0x4] sm:$0xf]
        %v4090 = vld [vmem:[%s2795 + $0x8] sm:$0xf]
        %v4091 = vld [vmem:[%s2795 + $0xc] sm:$0xf]
        %v4092 = vld [vmem:[%s2795 + $0x10] sm:$0xf]
        %v4093 = vld [vmem:[%s2795 + $0x14] sm:$0xf]
        %v4094 = vld [vmem:[%s2795 + $0x18] sm:$0xf]
        %v4095 = vld [vmem:[%s2795 + $0x1c] sm:$0xf]
        %v4096 = vld [vmem:[%s2795 + $0x20] sm:$0xf]
        %v4097 = vld [vmem:[%s2795 + $0x24] sm:$0xf]
        %v4098 = vld [vmem:[%s2795 + $0x28] sm:$0xf]
        %v4099 = vld [vmem:[%s2795 + $0x2c] sm:$0xf]
        %v4100 = vld [vmem:[%s2795 + $0x30] sm:$0xf]
        %v4101 = vld [vmem:[%s2795 + $0x34] sm:$0xf]
        %v4102 = vld [vmem:[%s2795 + $0x38] sm:$0xf]
        %v4103 = vld [vmem:[%s2795 + $0x3c] sm:$0xf]
        %v4120 = vunpack.c.l.b16 %v4088
        %v4121 = vunpack.c.l.b16 %v4089
        %v4122 = vunpack.c.l.b16 %v4090
        %v4123 = vunpack.c.l.b16 %v4091
        %v4124 = vunpack.c.l.b16 %v4092
        %v4125 = vunpack.c.l.b16 %v4093
        %v4126 = vunpack.c.l.b16 %v4094
        %v4127 = vunpack.c.l.b16 %v4095
        %v4128 = vunpack.c.l.b16 %v4096
        %v4129 = vunpack.c.l.b16 %v4097
        %v4130 = vunpack.c.l.b16 %v4098
        %v4131 = vunpack.c.l.b16 %v4099
        %v4132 = vunpack.c.l.b16 %v4100
        %v4133 = vunpack.c.l.b16 %v4101
        %v4134 = vunpack.c.l.b16 %v4102
        %v4135 = vunpack.c.l.b16 %v4103
        %v4136 = vpack.c.b16 %v4121, %v4120
        %v4137 = vpack.c.b16 %v4123, %v4122
        %v4138 = vpack.c.b16 %v4125, %v4124
        %v4139 = vpack.c.b16 %v4127, %v4126
        %v4140 = vpack.c.b16 %v4129, %v4128
        %v4141 = vpack.c.b16 %v4131, %v4130
        %v4142 = vpack.c.b16 %v4133, %v4132
        %v4143 = vpack.c.b16 %v4135, %v4134
        %4152 = vmatpush.bf16.msra.mxu0 %v4143
        %4153 = vmatpush.bf16.msra.mxu0 %v4142
        %4154 = vmatpush.bf16.msra.mxu0 %v4141
        %4155 = vmatpush.bf16.msra.mxu0 %v4140
        %4156 = vmatpush.bf16.msra.mxu0 %v4139
        %4157 = vmatpush.bf16.msra.mxu0 %v4138
        %4158 = vmatpush.bf16.msra.mxu0 %v4137
        %4159 = vmatpush.bf16.msra.mxu0 %v4136
        %4160 = vmatmul.bf16.gmra.mxu0 %v4087
        %v4161 = vpop.f32.mrf.mxu0
        %v4162 = vadd.f32 0.0, %v4161
        %v4163 = vpop.f32.mrf.mxu0
        %4164 = vdwg.mxu0
        %v4165 = vadd.f32 %v4085, %v4162
        %v4166 = vld [vmem:[%s3117 + $0x1] sm:$0x3]
        %v4167 = vpack.c.bf16 %v4166, %v4166
        %v4168 = vld [vmem:[%s2876] sm:$0xf]
        %v4169 = vld [vmem:[%s2876 + $0x4] sm:$0xf]
        %v4170 = vld [vmem:[%s2876 + $0x8] sm:$0xf]
        %v4171 = vld [vmem:[%s2876 + $0xc] sm:$0xf]
        %v4172 = vld [vmem:[%s2876 + $0x10] sm:$0xf]
        %v4173 = vld [vmem:[%s2876 + $0x14] sm:$0xf]
        %v4174 = vld [vmem:[%s2876 + $0x18] sm:$0xf]
        %v4175 = vld [vmem:[%s2876 + $0x1c] sm:$0xf]
        %v4176 = vld [vmem:[%s2876 + $0x20] sm:$0xf]
        %v4177 = vld [vmem:[%s2876 + $0x24] sm:$0xf]
        %v4178 = vld [vmem:[%s2876 + $0x28] sm:$0xf]
        %v4179 = vld [vmem:[%s2876 + $0x2c] sm:$0xf]
        %v4180 = vld [vmem:[%s2876 + $0x30] sm:$0xf]
        %v4181 = vld [vmem:[%s2876 + $0x34] sm:$0xf]
        %v4182 = vld [vmem:[%s2876 + $0x38] sm:$0xf]
        %v4183 = vld [vmem:[%s2876 + $0x3c] sm:$0xf]
        %v4200 = vunpack.c.l.b16 %v4168
        %v4201 = vunpack.c.l.b16 %v4169
        %v4202 = vunpack.c.l.b16 %v4170
        %v4203 = vunpack.c.l.b16 %v4171
        %v4204 = vunpack.c.l.b16 %v4172
        %v4205 = vunpack.c.l.b16 %v4173
        %v4206 = vunpack.c.l.b16 %v4174
        %v4207 = vunpack.c.l.b16 %v4175
        %v4208 = vunpack.c.l.b16 %v4176
        %v4209 = vunpack.c.l.b16 %v4177
        %v4210 = vunpack.c.l.b16 %v4178
        %v4211 = vunpack.c.l.b16 %v4179
        %v4212 = vunpack.c.l.b16 %v4180
        %v4213 = vunpack.c.l.b16 %v4181
        %v4214 = vunpack.c.l.b16 %v4182
        %v4215 = vunpack.c.l.b16 %v4183
        %v4216 = vpack.c.b16 %v4201, %v4200
        %v4217 = vpack.c.b16 %v4203, %v4202
        %v4218 = vpack.c.b16 %v4205, %v4204
        %v4219 = vpack.c.b16 %v4207, %v4206
        %v4220 = vpack.c.b16 %v4209, %v4208
        %v4221 = vpack.c.b16 %v4211, %v4210
        %v4222 = vpack.c.b16 %v4213, %v4212
        %v4223 = vpack.c.b16 %v4215, %v4214
        %4232 = vmatpush.bf16.msra.mxu0 %v4223
        %4233 = vmatpush.bf16.msra.mxu0 %v4222
        %4234 = vmatpush.bf16.msra.mxu0 %v4221
        %4235 = vmatpush.bf16.msra.mxu0 %v4220
        %4236 = vmatpush.bf16.msra.mxu0 %v4219
        %4237 = vmatpush.bf16.msra.mxu0 %v4218
        %4238 = vmatpush.bf16.msra.mxu0 %v4217
        %4239 = vmatpush.bf16.msra.mxu0 %v4216
        %4240 = vmatmul.bf16.gmra.mxu0 %v4167
        %v4241 = vpop.f32.mrf.mxu0
        %v4242 = vadd.f32 0.0, %v4241
        %v4243 = vpop.f32.mrf.mxu0
        %4244 = vdwg.mxu0
        %v4245 = vadd.f32 %v4165, %v4242
        %v4246 = vld [vmem:[%s3117 + $0x2] sm:$0x3]
        %v4247 = vpack.c.bf16 %v4246, %v4246
        %v4248 = vld [vmem:[%s2957] sm:$0xf]
        %v4249 = vld [vmem:[%s2957 + $0x4] sm:$0xf]
        %v4250 = vld [vmem:[%s2957 + $0x8] sm:$0xf]
        %v4251 = vld [vmem:[%s2957 + $0xc] sm:$0xf]
        %v4252 = vld [vmem:[%s2957 + $0x10] sm:$0xf]
        %v4253 = vld [vmem:[%s2957 + $0x14] sm:$0xf]
        %v4254 = vld [vmem:[%s2957 + $0x18] sm:$0xf]
        %v4255 = vld [vmem:[%s2957 + $0x1c] sm:$0xf]
        %v4256 = vld [vmem:[%s2957 + $0x20] sm:$0xf]
        %v4257 = vld [vmem:[%s2957 + $0x24] sm:$0xf]
        %v4258 = vld [vmem:[%s2957 + $0x28] sm:$0xf]
        %v4259 = vld [vmem:[%s2957 + $0x2c] sm:$0xf]
        %v4260 = vld [vmem:[%s2957 + $0x30] sm:$0xf]
        %v4261 = vld [vmem:[%s2957 + $0x34] sm:$0xf]
        %v4262 = vld [vmem:[%s2957 + $0x38] sm:$0xf]
        %v4263 = vld [vmem:[%s2957 + $0x3c] sm:$0xf]
        %v4280 = vunpack.c.l.b16 %v4248
        %v4281 = vunpack.c.l.b16 %v4249
        %v4282 = vunpack.c.l.b16 %v4250
        %v4283 = vunpack.c.l.b16 %v4251
        %v4284 = vunpack.c.l.b16 %v4252
        %v4285 = vunpack.c.l.b16 %v4253
        %v4286 = vunpack.c.l.b16 %v4254
        %v4287 = vunpack.c.l.b16 %v4255
        %v4288 = vunpack.c.l.b16 %v4256
        %v4289 = vunpack.c.l.b16 %v4257
        %v4290 = vunpack.c.l.b16 %v4258
        %v4291 = vunpack.c.l.b16 %v4259
        %v4292 = vunpack.c.l.b16 %v4260
        %v4293 = vunpack.c.l.b16 %v4261
        %v4294 = vunpack.c.l.b16 %v4262
        %v4295 = vunpack.c.l.b16 %v4263
        %v4296 = vpack.c.b16 %v4281, %v4280
        %v4297 = vpack.c.b16 %v4283, %v4282
        %v4298 = vpack.c.b16 %v4285, %v4284
        %v4299 = vpack.c.b16 %v4287, %v4286
        %v4300 = vpack.c.b16 %v4289, %v4288
        %v4301 = vpack.c.b16 %v4291, %v4290
        %v4302 = vpack.c.b16 %v4293, %v4292
        %v4303 = vpack.c.b16 %v4295, %v4294
        %4312 = vmatpush.bf16.msra.mxu0 %v4303
        %4313 = vmatpush.bf16.msra.mxu0 %v4302
        %4314 = vmatpush.bf16.msra.mxu0 %v4301
        %4315 = vmatpush.bf16.msra.mxu0 %v4300
        %4316 = vmatpush.bf16.msra.mxu0 %v4299
        %4317 = vmatpush.bf16.msra.mxu0 %v4298
        %4318 = vmatpush.bf16.msra.mxu0 %v4297
        %4319 = vmatpush.bf16.msra.mxu0 %v4296
        %4320 = vmatmul.bf16.gmra.mxu0 %v4247
        %v4321 = vpop.f32.mrf.mxu0
        %v4322 = vadd.f32 0.0, %v4321
        %v4323 = vpop.f32.mrf.mxu0
        %4324 = vdwg.mxu0
        %v4325 = vadd.f32 %v4245, %v4322
        %v4326 = vld [vmem:[%s3117 + $0x3] sm:$0x3]
        %v4327 = vpack.c.bf16 %v4326, %v4326
        %v4328 = vld [vmem:[%s3038] sm:$0xf]
        %v4329 = vld [vmem:[%s3038 + $0x4] sm:$0xf]
        %v4330 = vld [vmem:[%s3038 + $0x8] sm:$0xf]
        %v4331 = vld [vmem:[%s3038 + $0xc] sm:$0xf]
        %v4332 = vld [vmem:[%s3038 + $0x10] sm:$0xf]
        %v4333 = vld [vmem:[%s3038 + $0x14] sm:$0xf]
        %v4334 = vld [vmem:[%s3038 + $0x18] sm:$0xf]
        %v4335 = vld [vmem:[%s3038 + $0x1c] sm:$0xf]
        %v4336 = vld [vmem:[%s3038 + $0x20] sm:$0xf]
        %v4337 = vld [vmem:[%s3038 + $0x24] sm:$0xf]
        %v4338 = vld [vmem:[%s3038 + $0x28] sm:$0xf]
        %v4339 = vld [vmem:[%s3038 + $0x2c] sm:$0xf]
        %v4340 = vld [vmem:[%s3038 + $0x30] sm:$0xf]
        %v4341 = vld [vmem:[%s3038 + $0x34] sm:$0xf]
        %v4342 = vld [vmem:[%s3038 + $0x38] sm:$0xf]
        %v4343 = vld [vmem:[%s3038 + $0x3c] sm:$0xf]
        %v4360 = vunpack.c.l.b16 %v4328
        %v4361 = vunpack.c.l.b16 %v4329
        %v4362 = vunpack.c.l.b16 %v4330
        %v4363 = vunpack.c.l.b16 %v4331
        %v4364 = vunpack.c.l.b16 %v4332
        %v4365 = vunpack.c.l.b16 %v4333
        %v4366 = vunpack.c.l.b16 %v4334
        %v4367 = vunpack.c.l.b16 %v4335
        %v4368 = vunpack.c.l.b16 %v4336
        %v4369 = vunpack.c.l.b16 %v4337
        %v4370 = vunpack.c.l.b16 %v4338
        %v4371 = vunpack.c.l.b16 %v4339
        %v4372 = vunpack.c.l.b16 %v4340
        %v4373 = vunpack.c.l.b16 %v4341
        %v4374 = vunpack.c.l.b16 %v4342
        %v4375 = vunpack.c.l.b16 %v4343
        %v4376 = vpack.c.b16 %v4361, %v4360
        %v4377 = vpack.c.b16 %v4363, %v4362
        %v4378 = vpack.c.b16 %v4365, %v4364
        %v4379 = vpack.c.b16 %v4367, %v4366
        %v4380 = vpack.c.b16 %v4369, %v4368
        %v4381 = vpack.c.b16 %v4371, %v4370
        %v4382 = vpack.c.b16 %v4373, %v4372
        %v4383 = vpack.c.b16 %v4375, %v4374
        %4392 = vmatpush.bf16.msra.mxu0 %v4383
        %4393 = vmatpush.bf16.msra.mxu0 %v4382
        %4394 = vmatpush.bf16.msra.mxu0 %v4381
        %4395 = vmatpush.bf16.msra.mxu0 %v4380
        %4396 = vmatpush.bf16.msra.mxu0 %v4379
        %4397 = vmatpush.bf16.msra.mxu0 %v4378
        %4398 = vmatpush.bf16.msra.mxu0 %v4377
        %4399 = vmatpush.bf16.msra.mxu0 %v4376
        %4400 = vmatmul.bf16.gmra.mxu0 %v4327
        %v4401 = vpop.f32.mrf.mxu0
        %v4402 = vadd.f32 0.0, %v4401
        %v4403 = vpop.f32.mrf.mxu0
        %4404 = vdwg.mxu0
        %v4405 = vadd.f32 %v4325, %v4402
        %s4406 = scalar_lea.vmem [#allocation3], 32
        %v4407 = vld [vmem:[%s4406] sm:$0x3]
        %v4408 = vpack.c.bf16 %v4407, %v4407
        %v4409 = vld [vmem:[%s3120] sm:$0xf]
        %v4410 = vld [vmem:[%s3120 + $0x4] sm:$0xf]
        %v4411 = vld [vmem:[%s3120 + $0x8] sm:$0xf]
        %v4412 = vld [vmem:[%s3120 + $0xc] sm:$0xf]
        %v4413 = vld [vmem:[%s3120 + $0x10] sm:$0xf]
        %v4414 = vld [vmem:[%s3120 + $0x14] sm:$0xf]
        %v4415 = vld [vmem:[%s3120 + $0x18] sm:$0xf]
        %v4416 = vld [vmem:[%s3120 + $0x1c] sm:$0xf]
        %v4417 = vld [vmem:[%s3120 + $0x20] sm:$0xf]
        %v4418 = vld [vmem:[%s3120 + $0x24] sm:$0xf]
        %v4419 = vld [vmem:[%s3120 + $0x28] sm:$0xf]
        %v4420 = vld [vmem:[%s3120 + $0x2c] sm:$0xf]
        %v4421 = vld [vmem:[%s3120 + $0x30] sm:$0xf]
        %v4422 = vld [vmem:[%s3120 + $0x34] sm:$0xf]
        %v4423 = vld [vmem:[%s3120 + $0x38] sm:$0xf]
        %v4424 = vld [vmem:[%s3120 + $0x3c] sm:$0xf]
        %v4441 = vunpack.c.l.b16 %v4409
        %v4442 = vunpack.c.l.b16 %v4410
        %v4443 = vunpack.c.l.b16 %v4411
        %v4444 = vunpack.c.l.b16 %v4412
        %v4445 = vunpack.c.l.b16 %v4413
        %v4446 = vunpack.c.l.b16 %v4414
        %v4447 = vunpack.c.l.b16 %v4415
        %v4448 = vunpack.c.l.b16 %v4416
        %v4449 = vunpack.c.l.b16 %v4417
        %v4450 = vunpack.c.l.b16 %v4418
        %v4451 = vunpack.c.l.b16 %v4419
        %v4452 = vunpack.c.l.b16 %v4420
        %v4453 = vunpack.c.l.b16 %v4421
        %v4454 = vunpack.c.l.b16 %v4422
        %v4455 = vunpack.c.l.b16 %v4423
        %v4456 = vunpack.c.l.b16 %v4424
        %v4457 = vpack.c.b16 %v4442, %v4441
        %v4458 = vpack.c.b16 %v4444, %v4443
        %v4459 = vpack.c.b16 %v4446, %v4445
        %v4460 = vpack.c.b16 %v4448, %v4447
        %v4461 = vpack.c.b16 %v4450, %v4449
        %v4462 = vpack.c.b16 %v4452, %v4451
        %v4463 = vpack.c.b16 %v4454, %v4453
        %v4464 = vpack.c.b16 %v4456, %v4455
        %4473 = vmatpush.bf16.msra.mxu0 %v4464
        %4474 = vmatpush.bf16.msra.mxu0 %v4463
        %4475 = vmatpush.bf16.msra.mxu0 %v4462
        %4476 = vmatpush.bf16.msra.mxu0 %v4461
        %4477 = vmatpush.bf16.msra.mxu0 %v4460
        %4478 = vmatpush.bf16.msra.mxu0 %v4459
        %4479 = vmatpush.bf16.msra.mxu0 %v4458
        %4480 = vmatpush.bf16.msra.mxu0 %v4457
        %4481 = vmatmul.bf16.gmra.mxu0 %v4408
        %v4482 = vpop.f32.mrf.mxu0
        %v4483 = vadd.f32 0.0, %v4482
        %v4484 = vpop.f32.mrf.mxu0
        %4485 = vdwg.mxu0
        %v4486 = vadd.f32 %v4405, %v4483
        %v4487 = vld [vmem:[%s4406 + $0x1] sm:$0x3]
        %v4488 = vpack.c.bf16 %v4487, %v4487
        %v4489 = vld [vmem:[%s3201] sm:$0xf]
        %v4490 = vld [vmem:[%s3201 + $0x4] sm:$0xf]
        %v4491 = vld [vmem:[%s3201 + $0x8] sm:$0xf]
        %v4492 = vld [vmem:[%s3201 + $0xc] sm:$0xf]
        %v4493 = vld [vmem:[%s3201 + $0x10] sm:$0xf]
        %v4494 = vld [vmem:[%s3201 + $0x14] sm:$0xf]
        %v4495 = vld [vmem:[%s3201 + $0x18] sm:$0xf]
        %v4496 = vld [vmem:[%s3201 + $0x1c] sm:$0xf]
        %v4497 = vld [vmem:[%s3201 + $0x20] sm:$0xf]
        %v4498 = vld [vmem:[%s3201 + $0x24] sm:$0xf]
        %v4499 = vld [vmem:[%s3201 + $0x28] sm:$0xf]
        %v4500 = vld [vmem:[%s3201 + $0x2c] sm:$0xf]
        %v4501 = vld [vmem:[%s3201 + $0x30] sm:$0xf]
        %v4502 = vld [vmem:[%s3201 + $0x34] sm:$0xf]
        %v4503 = vld [vmem:[%s3201 + $0x38] sm:$0xf]
        %v4504 = vld [vmem:[%s3201 + $0x3c] sm:$0xf]
        %v4521 = vunpack.c.l.b16 %v4489
        %v4522 = vunpack.c.l.b16 %v4490
        %v4523 = vunpack.c.l.b16 %v4491
        %v4524 = vunpack.c.l.b16 %v4492
        %v4525 = vunpack.c.l.b16 %v4493
        %v4526 = vunpack.c.l.b16 %v4494
        %v4527 = vunpack.c.l.b16 %v4495
        %v4528 = vunpack.c.l.b16 %v4496
        %v4529 = vunpack.c.l.b16 %v4497
        %v4530 = vunpack.c.l.b16 %v4498
        %v4531 = vunpack.c.l.b16 %v4499
        %v4532 = vunpack.c.l.b16 %v4500
        %v4533 = vunpack.c.l.b16 %v4501
        %v4534 = vunpack.c.l.b16 %v4502
        %v4535 = vunpack.c.l.b16 %v4503
        %v4536 = vunpack.c.l.b16 %v4504
        %v4537 = vpack.c.b16 %v4522, %v4521
        %v4538 = vpack.c.b16 %v4524, %v4523
        %v4539 = vpack.c.b16 %v4526, %v4525
        %v4540 = vpack.c.b16 %v4528, %v4527
        %v4541 = vpack.c.b16 %v4530, %v4529
        %v4542 = vpack.c.b16 %v4532, %v4531
        %v4543 = vpack.c.b16 %v4534, %v4533
        %v4544 = vpack.c.b16 %v4536, %v4535
        %4553 = vmatpush.bf16.msra.mxu0 %v4544
        %4554 = vmatpush.bf16.msra.mxu0 %v4543
        %4555 = vmatpush.bf16.msra.mxu0 %v4542
        %4556 = vmatpush.bf16.msra.mxu0 %v4541
        %4557 = vmatpush.bf16.msra.mxu0 %v4540
        %4558 = vmatpush.bf16.msra.mxu0 %v4539
        %4559 = vmatpush.bf16.msra.mxu0 %v4538
        %4560 = vmatpush.bf16.msra.mxu0 %v4537
        %4561 = vmatmul.bf16.gmra.mxu0 %v4488
        %v4562 = vpop.f32.mrf.mxu0
        %v4563 = vadd.f32 0.0, %v4562
        %v4564 = vpop.f32.mrf.mxu0
        %4565 = vdwg.mxu0
        %v4566 = vadd.f32 %v4486, %v4563
        %v4567 = vld [vmem:[%s4406 + $0x2] sm:$0x3]
        %v4568 = vpack.c.bf16 %v4567, %v4567
        %v4569 = vld [vmem:[%s3282] sm:$0xf]
        %v4570 = vld [vmem:[%s3282 + $0x4] sm:$0xf]
        %v4571 = vld [vmem:[%s3282 + $0x8] sm:$0xf]
        %v4572 = vld [vmem:[%s3282 + $0xc] sm:$0xf]
        %v4573 = vld [vmem:[%s3282 + $0x10] sm:$0xf]
        %v4574 = vld [vmem:[%s3282 + $0x14] sm:$0xf]
        %v4575 = vld [vmem:[%s3282 + $0x18] sm:$0xf]
        %v4576 = vld [vmem:[%s3282 + $0x1c] sm:$0xf]
        %v4577 = vld [vmem:[%s3282 + $0x20] sm:$0xf]
        %v4578 = vld [vmem:[%s3282 + $0x24] sm:$0xf]
        %v4579 = vld [vmem:[%s3282 + $0x28] sm:$0xf]
        %v4580 = vld [vmem:[%s3282 + $0x2c] sm:$0xf]
        %v4581 = vld [vmem:[%s3282 + $0x30] sm:$0xf]
        %v4582 = vld [vmem:[%s3282 + $0x34] sm:$0xf]
        %v4583 = vld [vmem:[%s3282 + $0x38] sm:$0xf]
        %v4584 = vld [vmem:[%s3282 + $0x3c] sm:$0xf]
        %v4601 = vunpack.c.l.b16 %v4569
        %v4602 = vunpack.c.l.b16 %v4570
        %v4603 = vunpack.c.l.b16 %v4571
        %v4604 = vunpack.c.l.b16 %v4572
        %v4605 = vunpack.c.l.b16 %v4573
        %v4606 = vunpack.c.l.b16 %v4574
        %v4607 = vunpack.c.l.b16 %v4575
        %v4608 = vunpack.c.l.b16 %v4576
        %v4609 = vunpack.c.l.b16 %v4577
        %v4610 = vunpack.c.l.b16 %v4578
        %v4611 = vunpack.c.l.b16 %v4579
        %v4612 = vunpack.c.l.b16 %v4580
        %v4613 = vunpack.c.l.b16 %v4581
        %v4614 = vunpack.c.l.b16 %v4582
        %v4615 = vunpack.c.l.b16 %v4583
        %v4616 = vunpack.c.l.b16 %v4584
        %v4617 = vpack.c.b16 %v4602, %v4601
        %v4618 = vpack.c.b16 %v4604, %v4603
        %v4619 = vpack.c.b16 %v4606, %v4605
        %v4620 = vpack.c.b16 %v4608, %v4607
        %v4621 = vpack.c.b16 %v4610, %v4609
        %v4622 = vpack.c.b16 %v4612, %v4611
        %v4623 = vpack.c.b16 %v4614, %v4613
        %v4624 = vpack.c.b16 %v4616, %v4615
        %4633 = vmatpush.bf16.msra.mxu0 %v4624
        %4634 = vmatpush.bf16.msra.mxu0 %v4623
        %4635 = vmatpush.bf16.msra.mxu0 %v4622
        %4636 = vmatpush.bf16.msra.mxu0 %v4621
        %4637 = vmatpush.bf16.msra.mxu0 %v4620
        %4638 = vmatpush.bf16.msra.mxu0 %v4619
        %4639 = vmatpush.bf16.msra.mxu0 %v4618
        %4640 = vmatpush.bf16.msra.mxu0 %v4617
        %4641 = vmatmul.bf16.gmra.mxu0 %v4568
        %v4642 = vpop.f32.mrf.mxu0
        %v4643 = vadd.f32 0.0, %v4642
        %v4644 = vpop.f32.mrf.mxu0
        %4645 = vdwg.mxu0
        %v4646 = vadd.f32 %v4566, %v4643
        %v4647 = vld [vmem:[%s4406 + $0x3] sm:$0x3]
        %v4648 = vpack.c.bf16 %v4647, %v4647
        %v4649 = vld [vmem:[%s3363] sm:$0xf]
        %v4650 = vld [vmem:[%s3363 + $0x4] sm:$0xf]
        %v4651 = vld [vmem:[%s3363 + $0x8] sm:$0xf]
        %v4652 = vld [vmem:[%s3363 + $0xc] sm:$0xf]
        %v4653 = vld [vmem:[%s3363 + $0x10] sm:$0xf]
        %v4654 = vld [vmem:[%s3363 + $0x14] sm:$0xf]
        %v4655 = vld [vmem:[%s3363 + $0x18] sm:$0xf]
        %v4656 = vld [vmem:[%s3363 + $0x1c] sm:$0xf]
        %v4657 = vld [vmem:[%s3363 + $0x20] sm:$0xf]
        %v4658 = vld [vmem:[%s3363 + $0x24] sm:$0xf]
        %v4659 = vld [vmem:[%s3363 + $0x28] sm:$0xf]
        %v4660 = vld [vmem:[%s3363 + $0x2c] sm:$0xf]
        %v4661 = vld [vmem:[%s3363 + $0x30] sm:$0xf]
        %v4662 = vld [vmem:[%s3363 + $0x34] sm:$0xf]
        %v4663 = vld [vmem:[%s3363 + $0x38] sm:$0xf]
        %v4664 = vld [vmem:[%s3363 + $0x3c] sm:$0xf]
        %v4681 = vunpack.c.l.b16 %v4649
        %v4682 = vunpack.c.l.b16 %v4650
        %v4683 = vunpack.c.l.b16 %v4651
        %v4684 = vunpack.c.l.b16 %v4652
        %v4685 = vunpack.c.l.b16 %v4653
        %v4686 = vunpack.c.l.b16 %v4654
        %v4687 = vunpack.c.l.b16 %v4655
        %v4688 = vunpack.c.l.b16 %v4656
        %v4689 = vunpack.c.l.b16 %v4657
        %v4690 = vunpack.c.l.b16 %v4658
        %v4691 = vunpack.c.l.b16 %v4659
        %v4692 = vunpack.c.l.b16 %v4660
        %v4693 = vunpack.c.l.b16 %v4661
        %v4694 = vunpack.c.l.b16 %v4662
        %v4695 = vunpack.c.l.b16 %v4663
        %v4696 = vunpack.c.l.b16 %v4664
        %v4697 = vpack.c.b16 %v4682, %v4681
        %v4698 = vpack.c.b16 %v4684, %v4683
        %v4699 = vpack.c.b16 %v4686, %v4685
        %v4700 = vpack.c.b16 %v4688, %v4687
        %v4701 = vpack.c.b16 %v4690, %v4689
        %v4702 = vpack.c.b16 %v4692, %v4691
        %v4703 = vpack.c.b16 %v4694, %v4693
        %v4704 = vpack.c.b16 %v4696, %v4695
        %4713 = vmatpush.bf16.msra.mxu0 %v4704
        %4714 = vmatpush.bf16.msra.mxu0 %v4703
        %4715 = vmatpush.bf16.msra.mxu0 %v4702
        %4716 = vmatpush.bf16.msra.mxu0 %v4701
        %4717 = vmatpush.bf16.msra.mxu0 %v4700
        %4718 = vmatpush.bf16.msra.mxu0 %v4699
        %4719 = vmatpush.bf16.msra.mxu0 %v4698
        %4720 = vmatpush.bf16.msra.mxu0 %v4697
        %4721 = vmatmul.bf16.gmra.mxu0 %v4648
        %v4722 = vpop.f32.mrf.mxu0
        %v4723 = vadd.f32 0.0, %v4722
        %v4724 = vpop.f32.mrf.mxu0
        %4725 = vdwg.mxu0
        %v4726 = vadd.f32 %v4646, %v4723
        %v4727 = vld [vmem:[%s4] sm:$0x1]
        %v4729 = vperm.slane %v4727, 0
        %v4731 = vadd.f32 %v4726, %v4729
        %s4732 = scalar_lea.vmem %s236, 2
        %4733 = vst [vmem:[%s4732] sm:$0x3] %v4731
      $region44: #{discriminator_forward.7} parent=39 // pred_fallthru
        _
      %p4734 = scmp.lt.s32.totalorder %s20, 1
      %s4735 = scalar_select %p4734, %s20, 1
      %s4736 = smul.addr %s4735, 2
      %s4737 = smul.addr %s4736, 2
      %s4738 = scalar_lea.vmem %s5, %s4737
      // Predicated region
      $region45: #{discriminator_forward.7} parent=39 // pred_check
        %p4739 = pneg %p156
      $region46: #{discriminator_forward.7} parent=39 // pred_check_branch
        %4741 = sbr.rel (%p4739) target = $region48
      $region47: #{discriminator_forward.7} parent=39 // pred_region
        _
      $region48: #{discriminator_forward.7} parent=39 // pred_fallthru
        _
    $region40: #{discriminator_forward.7} parent=5 // pred_fallthru
      _
    %p4742 = scmp.le.s32.totalorder 2, %s11
    // Predicated region
    $region49: #{discriminator_forward.7} parent=5 // pred_check
      %p4743 = pneg %p4742
    $region50: #{discriminator_forward.7} parent=5 // pred_check_branch
      %4745 = sbr.rel (%p4743) target = $region52
    $region51: #{discriminator_forward.7} parent=5 // pred_region
      %s4746 = ssub.s32 %s11, 2
      // Predicated region
      $region53: #{discriminator_forward.7} parent=51 // pred_check
        %p4747 = pneg %p162
      $region54: #{discriminator_forward.7} parent=51 // pred_check_branch
        %4749 = sbr.rel (%p4747) target = $region56
      $region55: #{discriminator_forward.7} parent=51 // pred_region
        %p4750 = scmp.lt.s32.totalorder %s22, 1
        %s4751 = scalar_select %p4750, %s22, 1
        %s4752 = smul.addr %s4751, 2
        %s4753 = smul.addr %s4752, 2
        %s4754 = scalar_lea.vmem %s5, %s4753
      $region56: #{discriminator_forward.7} parent=51 // pred_fallthru
        _
    $region52: #{discriminator_forward.7} parent=5 // pred_fallthru
      _
  $region6: #{discriminator_forward.7} parent=0 // loop_footer
    %s15 = sadd.s32 1, %s11
  $region7: #{discriminator_forward.7} parent=0 // loop_footer_branch
    %10 = sbr.rel target = $region3
  $region8: #{discriminator_forward.7} parent=0 // loop_exit
    _

</llo_original>
